<compile_context>
chip_gen: v6e
topology: v6e:2x2x1
jax: 0.10.0
libtpu: 0.0.40
codegen_flags: <defaults>
</compile_context>

<pallas_src>
import math

import jax
import jax.numpy as jnp
from jax.experimental import pallas as pl
from jax.experimental.pallas import tpu as pltpu

# ------------------------- scaled-down BERT config -------------------------
VOCAB = 100
TYPE_VOCAB = 2
MAX_POS = 16
HIDDEN = 128          # BERT-base would be 768; scaled down, lane-aligned (128)
N_HEADS = 4
HEAD_DIM = HIDDEN // N_HEADS
FFN = 256
N_LAYERS = 2
OUT = 3               # output_size=3 from the PyTorch module
OUT_PAD = 128         # lane-dense padded classifier output width
LN_EPS = 1e-12        # BERT LayerNorm eps


# ------------------------------ kernel helpers ------------------------------
def _layernorm(x, g, b):
    mu = jnp.mean(x, axis=-1, keepdims=True)
    var = jnp.mean(jnp.square(x - mu), axis=-1, keepdims=True)
    return (x - mu) * jax.lax.rsqrt(var + LN_EPS) * g + b


def _gelu(x):
    # tanh-approx GELU (EUP tanh); HF BERT default is erf-GELU -> tiny numeric drift.
    c = math.sqrt(2.0 / math.pi)
    return 0.5 * x * (1.0 + jnp.tanh(c * (x + 0.044715 * x * x * x)))


def _bf16(x):
    return x.astype(jnp.bfloat16)


def _vmem_specs(n):
    return [pl.BlockSpec(memory_space=pltpu.MemorySpace.VMEM) for _ in range(n)]


# ------------------------------- fused kernel --------------------------------
def bert_fused_kernel(emb_ref, bias_ref, emb_g_ref, emb_b_ref,
                      wq_ref, wk_ref, wv_ref, bq_ref, bk_ref, bv_ref,
                      wo_ref, bo_ref, ln1g_ref, ln1b_ref,
                      w1_ref, b1_ref, w2_ref, b2_ref, ln2g_ref, ln2b_ref,
                      wp_ref, bp_ref, wc_ref, bc_ref, o_ref):
    B, S, H = emb_ref.shape
    scale = 1.0 / math.sqrt(HEAD_DIM)

    # Embedding LayerNorm (f32 elementwise)
    h = _layernorm(emb_ref[...], emb_g_ref[...], emb_b_ref[...])        # (B, S, H) f32
    attn_bias = bias_ref[...]                                           # (B, 1, S) f32, hoisted

    for l in range(N_LAYERS):            # static unroll — weights stay VMEM-resident
        x2 = h.reshape(B * S, H)
        x2b = _bf16(x2)                  # bf16 MXU operands, f32 accumulation
        attn_acc = jnp.zeros((B * S, H), jnp.float32)

        for hd in range(N_HEADS):        # per-head weight blocks pre-split host-side:
            i = l * N_HEADS + hd         # no lane-axis activation slicing / concat in-kernel
            qh = (jnp.dot(x2b, wq_ref[i], preferred_element_type=jnp.float32)
                  + bq_ref[i]).reshape(B, S, HEAD_DIM)
            kh = (jnp.dot(x2b, wk_ref[i], preferred_element_type=jnp.float32)
                  + bk_ref[i]).reshape(B, S, HEAD_DIM)
            vh = (jnp.dot(x2b, wv_ref[i], preferred_element_type=jnp.float32)
                  + bv_ref[i]).reshape(B, S, HEAD_DIM)

            s = jnp.einsum('bqd,bkd->bqk', _bf16(qh), _bf16(kh),
                           preferred_element_type=jnp.float32) * scale + attn_bias
            s = s - jnp.max(s, axis=-1, keepdims=True)
            p = jnp.exp(s)                                               # f32 softmax math
            p = p * pl.reciprocal(jnp.sum(p, axis=-1, keepdims=True), approx=True)

            ctx = jnp.einsum('bqk,bkd->bqd', _bf16(p), _bf16(vh),
                             preferred_element_type=jnp.float32)         # (B, S, HEAD_DIM)
            # accumulate the output projection head-by-head (avoids last-axis concat)
            attn_acc = attn_acc + jnp.dot(_bf16(ctx.reshape(B * S, HEAD_DIM)),
                                          wo_ref[i],
                                          preferred_element_type=jnp.float32)

        attn_out = (attn_acc + bo_ref[l]).reshape(B, S, H)
        h1 = _layernorm(h + attn_out, ln1g_ref[l], ln1b_ref[l])

        ff = jnp.dot(_bf16(h1.reshape(B * S, H)), w1_ref[l],
                     preferred_element_type=jnp.float32) + b1_ref[l]
        ff = _gelu(ff)                                                   # f32 elementwise
        ff = (jnp.dot(_bf16(ff), w2_ref[l],
                      preferred_element_type=jnp.float32) + b2_ref[l]).reshape(B, S, H)
        h = _layernorm(h1 + ff, ln2g_ref[l], ln2b_ref[l])

    # Pooler: tanh(W_p @ hidden[CLS] + b_p) -> dropout (eval: identity) -> classifier.
    # TODO(synk): Dropout(p=0.3) modeled in eval mode (identity); training-mode masking omitted.
    cls = h[:, 0, :]                                                     # (B, H) [CLS] token
    pooled = jnp.tanh(jnp.dot(_bf16(cls), wp_ref[...],
                              preferred_element_type=jnp.float32) + bp_ref[...])
    # Lane-dense output: classifier weights are padded to 128 lanes; sliced to 3 outside.
    o_ref[...] = (jnp.dot(_bf16(pooled), wc_ref[...],
                          preferred_element_type=jnp.float32) + bc_ref[...])


# --------------------------- pallas_call wrapper ----------------------------
def bert_fused_call(emb, attn_bias, kp):
    B, S, H = emb.shape
    args = (emb, attn_bias, kp['emb_ln_g'], kp['emb_ln_b'],
            kp['wq_h'], kp['wk_h'], kp['wv_h'],
            kp['bq_h'], kp['bk_h'], kp['bv_h'],
            kp['wo_h'], kp['bo'], kp['ln1_g'], kp['ln1_b'],
            kp['w1'], kp['b1'], kp['w2'], kp['b2'], kp['ln2_g'], kp['ln2_b'],
            kp['pool_w'], kp['pool_b'], kp['cls_w_pad'], kp['cls_b_pad'])
    return pl.pallas_call(
        bert_fused_kernel,
        out_shape=jax.ShapeDtypeStruct((B, OUT_PAD), jnp.float32),
        in_specs=_vmem_specs(len(args)),
        out_specs=pl.BlockSpec(memory_space=pltpu.MemorySpace.VMEM),
    )(*args)


# ------------------------------ parameter init ------------------------------
def init_params(key):
    n_keys = 4 + N_LAYERS * 6 + 2
    keys = iter(jax.random.split(key, n_keys))

    def dense(fan_in, fan_out):
        return jax.random.normal(next(keys), (fan_in, fan_out), jnp.float32) * 0.02

    params = {
        'word_emb': jax.random.normal(next(keys), (VOCAB, HIDDEN), jnp.float32) * 0.02,
        'pos_emb': jax.random.normal(next(keys), (MAX_POS, HIDDEN), jnp.float32) * 0.02,
        'type_emb': jax.random.normal(next(keys), (TYPE_VOCAB, HIDDEN), jnp.float32) * 0.02,
        'emb_ln_g': jnp.ones((1, HIDDEN), jnp.float32),
        'emb_ln_b': jnp.zeros((1, HIDDEN), jnp.float32),
        'layers': [],
    }
    _ = next(keys)  # keep split count stable

    for _layer in range(N_LAYERS):
        params['layers'].append({
            'wq': dense(HIDDEN, HIDDEN), 'bq': jnp.zeros((1, HIDDEN), jnp.float32),
            'wk': dense(HIDDEN, HIDDEN), 'bk': jnp.zeros((1, HIDDEN), jnp.float32),
            'wv': dense(HIDDEN, HIDDEN), 'bv': jnp.zeros((1, HIDDEN), jnp.float32),
            'wo': dense(HIDDEN, HIDDEN), 'bo': jnp.zeros((1, HIDDEN), jnp.float32),
            'ln1_g': jnp.ones((1, HIDDEN), jnp.float32),
            'ln1_b': jnp.zeros((1, HIDDEN), jnp.float32),
            'w1': dense(HIDDEN, FFN), 'b1': jnp.zeros((1, FFN), jnp.float32),
            'w2': dense(FFN, HIDDEN), 'b2': jnp.zeros((1, HIDDEN), jnp.float32),
            'ln2_g': jnp.ones((1, HIDDEN), jnp.float32),
            'ln2_b': jnp.zeros((1, HIDDEN), jnp.float32),
        })

    params['pool_w'] = dense(HIDDEN, HIDDEN)
    params['pool_b'] = jnp.zeros((1, HIDDEN), jnp.float32)
    params['cls_w'] = dense(HIDDEN, OUT)
    params['cls_b'] = jnp.zeros((1, OUT), jnp.float32)
    return params


def pack_params(p):
    """Host-side packing: per-head weight splits, layer stacking, bf16 casts, lane padding."""
    wq_h, wk_h, wv_h, bq_h, bk_h, bv_h, wo_h = ([] for _ in range(7))
    stacked = {k: [] for k in ('bo', 'ln1_g', 'ln1_b', 'w1', 'b1', 'w2', 'b2',
                               'ln2_g', 'ln2_b')}
    for layer in p['layers']:
        for h in range(N_HEADS):
            lo, hi = h * HEAD_DIM, (h + 1) * HEAD_DIM
            wq_h.append(layer['wq'][:, lo:hi]); bq_h.append(layer['bq'][:, lo:hi])
            wk_h.append(layer['wk'][:, lo:hi]); bk_h.append(layer['bk'][:, lo:hi])
            wv_h.append(layer['wv'][:, lo:hi]); bv_h.append(layer['bv'][:, lo:hi])
            wo_h.append(layer['wo'][lo:hi, :])
        for k in stacked:
            stacked[k].append(layer[k])

    bf = lambda xs: jnp.stack(xs).astype(jnp.bfloat16)
    f32s = lambda xs: jnp.stack(xs).astype(jnp.float32)

    cls_w_pad = jnp.zeros((HIDDEN, OUT_PAD), jnp.float32).at[:, :OUT].set(p['cls_w'])
    cls_b_pad = jnp.zeros((1, OUT_PAD), jnp.float32).at[:, :OUT].set(p['cls_b'])

    return {
        'word_emb': p['word_emb'], 'pos_emb': p['pos_emb'], 'type_emb': p['type_emb'],
        'emb_ln_g': p['emb_ln_g'], 'emb_ln_b': p['emb_ln_b'],
        'wq_h': bf(wq_h), 'wk_h': bf(wk_h), 'wv_h': bf(wv_h),   # (L*NH, H, HEAD_DIM) bf16
        'bq_h': f32s(bq_h), 'bk_h': f32s(bk_h), 'bv_h': f32s(bv_h),  # (L*NH, 1, HEAD_DIM) f32
        'wo_h': bf(wo_h),                                        # (L*NH, HEAD_DIM, H) bf16
        'bo': f32s(stacked['bo']),
        'ln1_g': f32s(stacked['ln1_g']), 'ln1_b': f32s(stacked['ln1_b']),
        'w1': bf(stacked['w1']), 'b1': f32s(stacked['b1']),
        'w2': bf(stacked['w2']), 'b2': f32s(stacked['b2']),
        'ln2_g': f32s(stacked['ln2_g']), 'ln2_b': f32s(stacked['ln2_b']),
        'pool_w': p['pool_w'].astype(jnp.bfloat16), 'pool_b': p['pool_b'],
        'cls_w_pad': cls_w_pad.astype(jnp.bfloat16), 'cls_b_pad': cls_b_pad,
    }


# ------------------------------- forward pass --------------------------------
@jax.jit
def bert_class_forward(kp, input_ids, attn_mask, token_type_ids):
    B, S = input_ids.shape
    # Embedding gathers (word + position + token_type) — plain-JAX glue.
    word = jnp.take(kp['word_emb'], input_ids, axis=0)             # (B, S, H)
    pos = kp['pos_emb'][:S][None, :, :]                            # (1, S, H)
    typ = jnp.take(kp['type_emb'], token_type_ids, axis=0)         # (B, S, H)
    emb = word + pos + typ

    # Attention additive bias: computed once, reused by every layer inside the fused kernel.
    attn_bias = (1.0 - attn_mask.astype(jnp.float32))[:, None, :] * (-1e9)   # (B, 1, S)

    logits_pad = bert_fused_call(emb, attn_bias, kp)               # (B, OUT_PAD) lane-dense
    return logits_pad[:, :OUT]


# ----------------------------------- main ------------------------------------
if __name__ == "__main__":
    key = jax.random.PRNGKey(0)
    k_params, k_ids = jax.random.split(key)

    B, S = 2, 8
    params = init_params(k_params)
    kernel_params = pack_params(params)

    input_ids = jax.random.randint(k_ids, (B, S), 0, VOCAB, dtype=jnp.int32)
    attn_mask = jnp.ones((B, S), dtype=jnp.int32)
    token_type_ids = jnp.zeros((B, S), dtype=jnp.int32)

    logits = bert_class_forward(kernel_params, input_ids, attn_mask, token_type_ids)
    logits = jax.block_until_ready(logits)

    assert logits.shape == (B, OUT), logits.shape
    assert logits.dtype == jnp.float32
    print("KERNEL_OK")
</pallas_src>

<mosaic_0001>
module attributes {stable_mosaic.version = 11 : i64} {
  func.func @bert_fused_kernel(%arg0: memref<2x8x128xf32, #tpu.memory_space<vmem>>, %arg1: memref<2x1x8xf32, #tpu.memory_space<vmem>>, %arg2: memref<1x128xf32, #tpu.memory_space<vmem>>, %arg3: memref<1x128xf32, #tpu.memory_space<vmem>>, %arg4: memref<8x128x32xbf16, #tpu.memory_space<vmem>>, %arg5: memref<8x128x32xbf16, #tpu.memory_space<vmem>>, %arg6: memref<8x128x32xbf16, #tpu.memory_space<vmem>>, %arg7: memref<8x1x32xf32, #tpu.memory_space<vmem>>, %arg8: memref<8x1x32xf32, #tpu.memory_space<vmem>>, %arg9: memref<8x1x32xf32, #tpu.memory_space<vmem>>, %arg10: memref<8x32x128xbf16, #tpu.memory_space<vmem>>, %arg11: memref<2x1x128xf32, #tpu.memory_space<vmem>>, %arg12: memref<2x1x128xf32, #tpu.memory_space<vmem>>, %arg13: memref<2x1x128xf32, #tpu.memory_space<vmem>>, %arg14: memref<2x128x256xbf16, #tpu.memory_space<vmem>>, %arg15: memref<2x1x256xf32, #tpu.memory_space<vmem>>, %arg16: memref<2x256x128xbf16, #tpu.memory_space<vmem>>, %arg17: memref<2x1x128xf32, #tpu.memory_space<vmem>>, %arg18: memref<2x1x128xf32, #tpu.memory_space<vmem>>, %arg19: memref<2x1x128xf32, #tpu.memory_space<vmem>>, %arg20: memref<128x128xbf16, #tpu.memory_space<vmem>>, %arg21: memref<1x128xf32, #tpu.memory_space<vmem>>, %arg22: memref<128x128xbf16, #tpu.memory_space<vmem>>, %arg23: memref<1x128xf32, #tpu.memory_space<vmem>>, %arg24: memref<2x128xf32, #tpu.memory_space<vmem>>) attributes {dimension_semantics = [], scalar_prefetch = 0 : i64, scratch_operands = 0 : i64, tpu.core_type = #tpu.core_type<tc>} {
    %c0 = arith.constant 0 : index
    %c0_0 = arith.constant 0 : index
    %c0_1 = arith.constant 0 : index
    %0 = vector.load %arg0[%c0, %c0_0, %c0_1] : memref<2x8x128xf32, #tpu.memory_space<vmem>>, vector<2x8x128xf32>
    %c0_2 = arith.constant 0 : index
    %c0_3 = arith.constant 0 : index
    %1 = vector.load %arg2[%c0_2, %c0_3] : memref<1x128xf32, #tpu.memory_space<vmem>>, vector<1x128xf32>
    %c0_4 = arith.constant 0 : index
    %c0_5 = arith.constant 0 : index
    %2 = vector.load %arg3[%c0_4, %c0_5] : memref<1x128xf32, #tpu.memory_space<vmem>>, vector<1x128xf32>
    %cst = arith.constant dense<0.000000e+00> : vector<2x8xf32>
    %3 = vector.multi_reduction <add>, %0, %cst [2] : vector<2x8x128xf32> to vector<2x8xf32>
    %4 = vector.shape_cast %3 : vector<2x8xf32> to vector<2x8x1xf32>
    %cst_6 = arith.constant 1.280000e+02 : f32
    %5 = vector.broadcast %cst_6 : f32 to vector<2x8x1xf32>
    %6 = arith.divf %4, %5 : vector<2x8x1xf32>
    %7 = vector.broadcast %6 : vector<2x8x1xf32> to vector<2x8x128xf32>
    %8 = arith.subf %0, %7 : vector<2x8x128xf32>
    %9 = arith.mulf %8, %8 : vector<2x8x128xf32>
    %cst_7 = arith.constant dense<0.000000e+00> : vector<2x8xf32>
    %10 = vector.multi_reduction <add>, %9, %cst_7 [2] : vector<2x8x128xf32> to vector<2x8xf32>
    %11 = vector.shape_cast %10 : vector<2x8xf32> to vector<2x8x1xf32>
    %cst_8 = arith.constant 1.280000e+02 : f32
    %12 = vector.broadcast %cst_8 : f32 to vector<2x8x1xf32>
    %13 = arith.divf %11, %12 : vector<2x8x1xf32>
    %14 = vector.broadcast %6 : vector<2x8x1xf32> to vector<2x8x128xf32>
    %15 = arith.subf %0, %14 : vector<2x8x128xf32>
    %cst_9 = arith.constant 9.99999996E-13 : f32
    %16 = vector.broadcast %cst_9 : f32 to vector<2x8x1xf32>
    %17 = arith.addf %13, %16 : vector<2x8x1xf32>
    %18 = math.rsqrt %17 : vector<2x8x1xf32>
    %19 = vector.broadcast %18 : vector<2x8x1xf32> to vector<2x8x128xf32>
    %20 = arith.mulf %15, %19 : vector<2x8x128xf32>
    %21 = vector.shape_cast %1 : vector<1x128xf32> to vector<1x1x128xf32>
    %22 = vector.broadcast %21 : vector<1x1x128xf32> to vector<2x8x128xf32>
    %23 = arith.mulf %20, %22 : vector<2x8x128xf32>
    %24 = vector.shape_cast %2 : vector<1x128xf32> to vector<1x1x128xf32>
    %25 = vector.broadcast %24 : vector<1x1x128xf32> to vector<2x8x128xf32>
    %26 = arith.addf %23, %25 : vector<2x8x128xf32>
    %c0_10 = arith.constant 0 : index
    %c0_11 = arith.constant 0 : index
    %c0_12 = arith.constant 0 : index
    %27 = vector.load %arg1[%c0_10, %c0_11, %c0_12] : memref<2x1x8xf32, #tpu.memory_space<vmem>>, vector<2x1x8xf32>
    %28 = vector.shape_cast %26 : vector<2x8x128xf32> to vector<16x128xf32>
    %29 = arith.truncf %28 : vector<16x128xf32> to vector<16x128xbf16>
    %cst_13 = arith.constant 0.000000e+00 : f32
    %30 = vector.broadcast %cst_13 : f32 to vector<16x128xf32>
    %c0_14 = arith.constant 0 : index
    %c0_15 = arith.constant 0 : index
    %c0_16 = arith.constant 0 : index
    %31 = vector.load %arg4[%c0_14, %c0_15, %c0_16] : memref<8x128x32xbf16, #tpu.memory_space<vmem>>, vector<1x128x32xbf16>
    %32 = vector.shape_cast %31 : vector<1x128x32xbf16> to vector<128x32xbf16>
    %cst_17 = arith.constant dense<0.000000e+00> : vector<16x32xf32>
    %33 = tpu.matmul %29, %32, %cst_17 {dimension_numbers = #tpu.dot_dimension_numbers<[1], [0], [0], [1], [0, 0, 1, 1], [], []>} : vector<16x128xbf16>, vector<128x32xbf16>, vector<16x32xf32> -> vector<16x32xf32>
    %c0_18 = arith.constant 0 : index
    %c0_19 = arith.constant 0 : index
    %c0_20 = arith.constant 0 : index
    %34 = vector.load %arg7[%c0_18, %c0_19, %c0_20] : memref<8x1x32xf32, #tpu.memory_space<vmem>>, vector<1x1x32xf32>
    %35 = vector.shape_cast %34 : vector<1x1x32xf32> to vector<1x32xf32>
    %36 = vector.broadcast %35 : vector<1x32xf32> to vector<16x32xf32>
    %37 = arith.addf %33, %36 : vector<16x32xf32>
    %38 = vector.shape_cast %37 : vector<16x32xf32> to vector<2x8x32xf32>
    %c0_21 = arith.constant 0 : index
    %c0_22 = arith.constant 0 : index
    %c0_23 = arith.constant 0 : index
    %39 = vector.load %arg5[%c0_21, %c0_22, %c0_23] : memref<8x128x32xbf16, #tpu.memory_space<vmem>>, vector<1x128x32xbf16>
    %40 = vector.shape_cast %39 : vector<1x128x32xbf16> to vector<128x32xbf16>
    %cst_24 = arith.constant dense<0.000000e+00> : vector<16x32xf32>
    %41 = tpu.matmul %29, %40, %cst_24 {dimension_numbers = #tpu.dot_dimension_numbers<[1], [0], [0], [1], [0, 0, 1, 1], [], []>} : vector<16x128xbf16>, vector<128x32xbf16>, vector<16x32xf32> -> vector<16x32xf32>
    %c0_25 = arith.constant 0 : index
    %c0_26 = arith.constant 0 : index
    %c0_27 = arith.constant 0 : index
    %42 = vector.load %arg8[%c0_25, %c0_26, %c0_27] : memref<8x1x32xf32, #tpu.memory_space<vmem>>, vector<1x1x32xf32>
    %43 = vector.shape_cast %42 : vector<1x1x32xf32> to vector<1x32xf32>
    %44 = vector.broadcast %43 : vector<1x32xf32> to vector<16x32xf32>
    %45 = arith.addf %41, %44 : vector<16x32xf32>
    %46 = vector.shape_cast %45 : vector<16x32xf32> to vector<2x8x32xf32>
    %c0_28 = arith.constant 0 : index
    %c0_29 = arith.constant 0 : index
    %c0_30 = arith.constant 0 : index
    %47 = vector.load %arg6[%c0_28, %c0_29, %c0_30] : memref<8x128x32xbf16, #tpu.memory_space<vmem>>, vector<1x128x32xbf16>
    %48 = vector.shape_cast %47 : vector<1x128x32xbf16> to vector<128x32xbf16>
    %cst_31 = arith.constant dense<0.000000e+00> : vector<16x32xf32>
    %49 = tpu.matmul %29, %48, %cst_31 {dimension_numbers = #tpu.dot_dimension_numbers<[1], [0], [0], [1], [0, 0, 1, 1], [], []>} : vector<16x128xbf16>, vector<128x32xbf16>, vector<16x32xf32> -> vector<16x32xf32>
    %c0_32 = arith.constant 0 : index
    %c0_33 = arith.constant 0 : index
    %c0_34 = arith.constant 0 : index
    %50 = vector.load %arg9[%c0_32, %c0_33, %c0_34] : memref<8x1x32xf32, #tpu.memory_space<vmem>>, vector<1x1x32xf32>
    %51 = vector.shape_cast %50 : vector<1x1x32xf32> to vector<1x32xf32>
    %52 = vector.broadcast %51 : vector<1x32xf32> to vector<16x32xf32>
    %53 = arith.addf %49, %52 : vector<16x32xf32>
    %54 = vector.shape_cast %53 : vector<16x32xf32> to vector<2x8x32xf32>
    %55 = arith.truncf %38 : vector<2x8x32xf32> to vector<2x8x32xbf16>
    %56 = arith.truncf %46 : vector<2x8x32xf32> to vector<2x8x32xbf16>
    "tpu.trace_start"() <{level = 10 : i32, message = "bqd,bkd->bqk"}> : () -> ()
    %cst_35 = arith.constant dense<0.000000e+00> : vector<2x8x8xf32>
    %57 = tpu.matmul %55, %56, %cst_35 {dimension_numbers = #tpu.dot_dimension_numbers<[2], [2], [1], [1], [0, 0, 0, 1, 1, 1], [0], [0]>} : vector<2x8x32xbf16>, vector<2x8x32xbf16>, vector<2x8x8xf32> -> vector<2x8x8xf32>
    "tpu.trace_stop"() : () -> ()
    %cst_36 = arith.constant 0.176776692 : f32
    %58 = vector.broadcast %cst_36 : f32 to vector<2x8x8xf32>
    %59 = arith.mulf %57, %58 : vector<2x8x8xf32>
    %60 = vector.broadcast %27 : vector<2x1x8xf32> to vector<2x8x8xf32>
    %61 = arith.addf %59, %60 : vector<2x8x8xf32>
    %cst_37 = arith.constant dense<0xFF800000> : vector<2x8xf32>
    %62 = vector.multi_reduction <maximumf>, %61, %cst_37 [2] : vector<2x8x8xf32> to vector<2x8xf32>
    %63 = vector.shape_cast %62 : vector<2x8xf32> to vector<2x8x1xf32>
    %64 = vector.broadcast %63 : vector<2x8x1xf32> to vector<2x8x8xf32>
    %65 = arith.subf %61, %64 : vector<2x8x8xf32>
    %66 = math.exp %65 : vector<2x8x8xf32>
    %cst_38 = arith.constant dense<0.000000e+00> : vector<2x8xf32>
    %67 = vector.multi_reduction <add>, %66, %cst_38 [2] : vector<2x8x8xf32> to vector<2x8xf32>
    %68 = vector.shape_cast %67 : vector<2x8xf32> to vector<2x8x1xf32>
    %69 = tpu.reciprocal %68 {approx = true} : vector<2x8x1xf32> -> vector<2x8x1xf32>
    %70 = vector.broadcast %69 : vector<2x8x1xf32> to vector<2x8x8xf32>
    %71 = arith.mulf %66, %70 : vector<2x8x8xf32>
    %72 = arith.truncf %71 : vector<2x8x8xf32> to vector<2x8x8xbf16>
    %73 = arith.truncf %54 : vector<2x8x32xf32> to vector<2x8x32xbf16>
    "tpu.trace_start"() <{level = 10 : i32, message = "bqk,bkd->bqd"}> : () -> ()
    %cst_39 = arith.constant dense<0.000000e+00> : vector<2x8x32xf32>
    %74 = tpu.matmul %72, %73, %cst_39 {dimension_numbers = #tpu.dot_dimension_numbers<[2], [1], [1], [2], [0, 0, 0, 1, 1, 2], [0], [0]>} : vector<2x8x8xbf16>, vector<2x8x32xbf16>, vector<2x8x32xf32> -> vector<2x8x32xf32>
    "tpu.trace_stop"() : () -> ()
    %75 = vector.shape_cast %74 : vector<2x8x32xf32> to vector<16x32xf32>
    %76 = arith.truncf %75 : vector<16x32xf32> to vector<16x32xbf16>
    %c0_40 = arith.constant 0 : index
    %c0_41 = arith.constant 0 : index
    %c0_42 = arith.constant 0 : index
    %77 = vector.load %arg10[%c0_40, %c0_41, %c0_42] : memref<8x32x128xbf16, #tpu.memory_space<vmem>>, vector<1x32x128xbf16>
    %78 = vector.shape_cast %77 : vector<1x32x128xbf16> to vector<32x128xbf16>
    %cst_43 = arith.constant dense<0.000000e+00> : vector<16x128xf32>
    %79 = tpu.matmul %76, %78, %cst_43 {dimension_numbers = #tpu.dot_dimension_numbers<[1], [0], [0], [1], [0, 0, 1, 1], [], []>} : vector<16x32xbf16>, vector<32x128xbf16>, vector<16x128xf32> -> vector<16x128xf32>
    %80 = arith.addf %30, %79 : vector<16x128xf32>
    %c1 = arith.constant 1 : index
    %c0_44 = arith.constant 0 : index
    %c0_45 = arith.constant 0 : index
    %81 = vector.load %arg4[%c1, %c0_44, %c0_45] : memref<8x128x32xbf16, #tpu.memory_space<vmem>>, vector<1x128x32xbf16>
    %82 = vector.shape_cast %81 : vector<1x128x32xbf16> to vector<128x32xbf16>
    %cst_46 = arith.constant dense<0.000000e+00> : vector<16x32xf32>
    %83 = tpu.matmul %29, %82, %cst_46 {dimension_numbers = #tpu.dot_dimension_numbers<[1], [0], [0], [1], [0, 0, 1, 1], [], []>} : vector<16x128xbf16>, vector<128x32xbf16>, vector<16x32xf32> -> vector<16x32xf32>
    %c1_47 = arith.constant 1 : index
    %c0_48 = arith.constant 0 : index
    %c0_49 = arith.constant 0 : index
    %84 = vector.load %arg7[%c1_47, %c0_48, %c0_49] : memref<8x1x32xf32, #tpu.memory_space<vmem>>, vector<1x1x32xf32>
    %85 = vector.shape_cast %84 : vector<1x1x32xf32> to vector<1x32xf32>
    %86 = vector.broadcast %85 : vector<1x32xf32> to vector<16x32xf32>
    %87 = arith.addf %83, %86 : vector<16x32xf32>
    %88 = vector.shape_cast %87 : vector<16x32xf32> to vector<2x8x32xf32>
    %c1_50 = arith.constant 1 : index
    %c0_51 = arith.constant 0 : index
    %c0_52 = arith.constant 0 : index
    %89 = vector.load %arg5[%c1_50, %c0_51, %c0_52] : memref<8x128x32xbf16, #tpu.memory_space<vmem>>, vector<1x128x32xbf16>
    %90 = vector.shape_cast %89 : vector<1x128x32xbf16> to vector<128x32xbf16>
    %cst_53 = arith.constant dense<0.000000e+00> : vector<16x32xf32>
    %91 = tpu.matmul %29, %90, %cst_53 {dimension_numbers = #tpu.dot_dimension_numbers<[1], [0], [0], [1], [0, 0, 1, 1], [], []>} : vector<16x128xbf16>, vector<128x32xbf16>, vector<16x32xf32> -> vector<16x32xf32>
    %c1_54 = arith.constant 1 : index
    %c0_55 = arith.constant 0 : index
    %c0_56 = arith.constant 0 : index
    %92 = vector.load %arg8[%c1_54, %c0_55, %c0_56] : memref<8x1x32xf32, #tpu.memory_space<vmem>>, vector<1x1x32xf32>
    %93 = vector.shape_cast %92 : vector<1x1x32xf32> to vector<1x32xf32>
    %94 = vector.broadcast %93 : vector<1x32xf32> to vector<16x32xf32>
    %95 = arith.addf %91, %94 : vector<16x32xf32>
    %96 = vector.shape_cast %95 : vector<16x32xf32> to vector<2x8x32xf32>
    %c1_57 = arith.constant 1 : index
    %c0_58 = arith.constant 0 : index
    %c0_59 = arith.constant 0 : index
    %97 = vector.load %arg6[%c1_57, %c0_58, %c0_59] : memref<8x128x32xbf16, #tpu.memory_space<vmem>>, vector<1x128x32xbf16>
    %98 = vector.shape_cast %97 : vector<1x128x32xbf16> to vector<128x32xbf16>
    %cst_60 = arith.constant dense<0.000000e+00> : vector<16x32xf32>
    %99 = tpu.matmul %29, %98, %cst_60 {dimension_numbers = #tpu.dot_dimension_numbers<[1], [0], [0], [1], [0, 0, 1, 1], [], []>} : vector<16x128xbf16>, vector<128x32xbf16>, vector<16x32xf32> -> vector<16x32xf32>
    %c1_61 = arith.constant 1 : index
    %c0_62 = arith.constant 0 : index
    %c0_63 = arith.constant 0 : index
    %100 = vector.load %arg9[%c1_61, %c0_62, %c0_63] : memref<8x1x32xf32, #tpu.memory_space<vmem>>, vector<1x1x32xf32>
    %101 = vector.shape_cast %100 : vector<1x1x32xf32> to vector<1x32xf32>
    %102 = vector.broadcast %101 : vector<1x32xf32> to vector<16x32xf32>
    %103 = arith.addf %99, %102 : vector<16x32xf32>
    %104 = vector.shape_cast %103 : vector<16x32xf32> to vector<2x8x32xf32>
    %105 = arith.truncf %88 : vector<2x8x32xf32> to vector<2x8x32xbf16>
    %106 = arith.truncf %96 : vector<2x8x32xf32> to vector<2x8x32xbf16>
    "tpu.trace_start"() <{level = 10 : i32, message = "bqd,bkd->bqk"}> : () -> ()
    %cst_64 = arith.constant dense<0.000000e+00> : vector<2x8x8xf32>
    %107 = tpu.matmul %105, %106, %cst_64 {dimension_numbers = #tpu.dot_dimension_numbers<[2], [2], [1], [1], [0, 0, 0, 1, 1, 1], [0], [0]>} : vector<2x8x32xbf16>, vector<2x8x32xbf16>, vector<2x8x8xf32> -> vector<2x8x8xf32>
    "tpu.trace_stop"() : () -> ()
    %cst_65 = arith.constant 0.176776692 : f32
    %108 = vector.broadcast %cst_65 : f32 to vector<2x8x8xf32>
    %109 = arith.mulf %107, %108 : vector<2x8x8xf32>
    %110 = vector.broadcast %27 : vector<2x1x8xf32> to vector<2x8x8xf32>
    %111 = arith.addf %109, %110 : vector<2x8x8xf32>
    %cst_66 = arith.constant dense<0xFF800000> : vector<2x8xf32>
    %112 = vector.multi_reduction <maximumf>, %111, %cst_66 [2] : vector<2x8x8xf32> to vector<2x8xf32>
    %113 = vector.shape_cast %112 : vector<2x8xf32> to vector<2x8x1xf32>
    %114 = vector.broadcast %113 : vector<2x8x1xf32> to vector<2x8x8xf32>
    %115 = arith.subf %111, %114 : vector<2x8x8xf32>
    %116 = math.exp %115 : vector<2x8x8xf32>
    %cst_67 = arith.constant dense<0.000000e+00> : vector<2x8xf32>
    %117 = vector.multi_reduction <add>, %116, %cst_67 [2] : vector<2x8x8xf32> to vector<2x8xf32>
    %118 = vector.shape_cast %117 : vector<2x8xf32> to vector<2x8x1xf32>
    %119 = tpu.reciprocal %118 {approx = true} : vector<2x8x1xf32> -> vector<2x8x1xf32>
    %120 = vector.broadcast %119 : vector<2x8x1xf32> to vector<2x8x8xf32>
    %121 = arith.mulf %116, %120 : vector<2x8x8xf32>
    %122 = arith.truncf %121 : vector<2x8x8xf32> to vector<2x8x8xbf16>
    %123 = arith.truncf %104 : vector<2x8x32xf32> to vector<2x8x32xbf16>
    "tpu.trace_start"() <{level = 10 : i32, message = "bqk,bkd->bqd"}> : () -> ()
    %cst_68 = arith.constant dense<0.000000e+00> : vector<2x8x32xf32>
    %124 = tpu.matmul %122, %123, %cst_68 {dimension_numbers = #tpu.dot_dimension_numbers<[2], [1], [1], [2], [0, 0, 0, 1, 1, 2], [0], [0]>} : vector<2x8x8xbf16>, vector<2x8x32xbf16>, vector<2x8x32xf32> -> vector<2x8x32xf32>
    "tpu.trace_stop"() : () -> ()
    %125 = vector.shape_cast %124 : vector<2x8x32xf32> to vector<16x32xf32>
    %126 = arith.truncf %125 : vector<16x32xf32> to vector<16x32xbf16>
    %c1_69 = arith.constant 1 : index
    %c0_70 = arith.constant 0 : index
    %c0_71 = arith.constant 0 : index
    %127 = vector.load %arg10[%c1_69, %c0_70, %c0_71] : memref<8x32x128xbf16, #tpu.memory_space<vmem>>, vector<1x32x128xbf16>
    %128 = vector.shape_cast %127 : vector<1x32x128xbf16> to vector<32x128xbf16>
    %cst_72 = arith.constant dense<0.000000e+00> : vector<16x128xf32>
    %129 = tpu.matmul %126, %128, %cst_72 {dimension_numbers = #tpu.dot_dimension_numbers<[1], [0], [0], [1], [0, 0, 1, 1], [], []>} : vector<16x32xbf16>, vector<32x128xbf16>, vector<16x128xf32> -> vector<16x128xf32>
    %130 = arith.addf %80, %129 : vector<16x128xf32>
    %c2 = arith.constant 2 : index
    %c0_73 = arith.constant 0 : index
    %c0_74 = arith.constant 0 : index
    %131 = vector.load %arg4[%c2, %c0_73, %c0_74] : memref<8x128x32xbf16, #tpu.memory_space<vmem>>, vector<1x128x32xbf16>
    %132 = vector.shape_cast %131 : vector<1x128x32xbf16> to vector<128x32xbf16>
    %cst_75 = arith.constant dense<0.000000e+00> : vector<16x32xf32>
    %133 = tpu.matmul %29, %132, %cst_75 {dimension_numbers = #tpu.dot_dimension_numbers<[1], [0], [0], [1], [0, 0, 1, 1], [], []>} : vector<16x128xbf16>, vector<128x32xbf16>, vector<16x32xf32> -> vector<16x32xf32>
    %c2_76 = arith.constant 2 : index
    %c0_77 = arith.constant 0 : index
    %c0_78 = arith.constant 0 : index
    %134 = vector.load %arg7[%c2_76, %c0_77, %c0_78] : memref<8x1x32xf32, #tpu.memory_space<vmem>>, vector<1x1x32xf32>
    %135 = vector.shape_cast %134 : vector<1x1x32xf32> to vector<1x32xf32>
    %136 = vector.broadcast %135 : vector<1x32xf32> to vector<16x32xf32>
    %137 = arith.addf %133, %136 : vector<16x32xf32>
    %138 = vector.shape_cast %137 : vector<16x32xf32> to vector<2x8x32xf32>
    %c2_79 = arith.constant 2 : index
    %c0_80 = arith.constant 0 : index
    %c0_81 = arith.constant 0 : index
    %139 = vector.load %arg5[%c2_79, %c0_80, %c0_81] : memref<8x128x32xbf16, #tpu.memory_space<vmem>>, vector<1x128x32xbf16>
    %140 = vector.shape_cast %139 : vector<1x128x32xbf16> to vector<128x32xbf16>
    %cst_82 = arith.constant dense<0.000000e+00> : vector<16x32xf32>
    %141 = tpu.matmul %29, %140, %cst_82 {dimension_numbers = #tpu.dot_dimension_numbers<[1], [0], [0], [1], [0, 0, 1, 1], [], []>} : vector<16x128xbf16>, vector<128x32xbf16>, vector<16x32xf32> -> vector<16x32xf32>
    %c2_83 = arith.constant 2 : index
    %c0_84 = arith.constant 0 : index
    %c0_85 = arith.constant 0 : index
    %142 = vector.load %arg8[%c2_83, %c0_84, %c0_85] : memref<8x1x32xf32, #tpu.memory_space<vmem>>, vector<1x1x32xf32>
    %143 = vector.shape_cast %142 : vector<1x1x32xf32> to vector<1x32xf32>
    %144 = vector.broadcast %143 : vector<1x32xf32> to vector<16x32xf32>
    %145 = arith.addf %141, %144 : vector<16x32xf32>
    %146 = vector.shape_cast %145 : vector<16x32xf32> to vector<2x8x32xf32>
    %c2_86 = arith.constant 2 : index
    %c0_87 = arith.constant 0 : index
    %c0_88 = arith.constant 0 : index
    %147 = vector.load %arg6[%c2_86, %c0_87, %c0_88] : memref<8x128x32xbf16, #tpu.memory_space<vmem>>, vector<1x128x32xbf16>
    %148 = vector.shape_cast %147 : vector<1x128x32xbf16> to vector<128x32xbf16>
    %cst_89 = arith.constant dense<0.000000e+00> : vector<16x32xf32>
    %149 = tpu.matmul %29, %148, %cst_89 {dimension_numbers = #tpu.dot_dimension_numbers<[1], [0], [0], [1], [0, 0, 1, 1], [], []>} : vector<16x128xbf16>, vector<128x32xbf16>, vector<16x32xf32> -> vector<16x32xf32>
    %c2_90 = arith.constant 2 : index
    %c0_91 = arith.constant 0 : index
    %c0_92 = arith.constant 0 : index
    %150 = vector.load %arg9[%c2_90, %c0_91, %c0_92] : memref<8x1x32xf32, #tpu.memory_space<vmem>>, vector<1x1x32xf32>
    %151 = vector.shape_cast %150 : vector<1x1x32xf32> to vector<1x32xf32>
    %152 = vector.broadcast %151 : vector<1x32xf32> to vector<16x32xf32>
    %153 = arith.addf %149, %152 : vector<16x32xf32>
    %154 = vector.shape_cast %153 : vector<16x32xf32> to vector<2x8x32xf32>
    %155 = arith.truncf %138 : vector<2x8x32xf32> to vector<2x8x32xbf16>
    %156 = arith.truncf %146 : vector<2x8x32xf32> to vector<2x8x32xbf16>
    "tpu.trace_start"() <{level = 10 : i32, message = "bqd,bkd->bqk"}> : () -> ()
    %cst_93 = arith.constant dense<0.000000e+00> : vector<2x8x8xf32>
    %157 = tpu.matmul %155, %156, %cst_93 {dimension_numbers = #tpu.dot_dimension_numbers<[2], [2], [1], [1], [0, 0, 0, 1, 1, 1], [0], [0]>} : vector<2x8x32xbf16>, vector<2x8x32xbf16>, vector<2x8x8xf32> -> vector<2x8x8xf32>
    "tpu.trace_stop"() : () -> ()
    %cst_94 = arith.constant 0.176776692 : f32
    %158 = vector.broadcast %cst_94 : f32 to vector<2x8x8xf32>
    %159 = arith.mulf %157, %158 : vector<2x8x8xf32>
    %160 = vector.broadcast %27 : vector<2x1x8xf32> to vector<2x8x8xf32>
    %161 = arith.addf %159, %160 : vector<2x8x8xf32>
    %cst_95 = arith.constant dense<0xFF800000> : vector<2x8xf32>
    %162 = vector.multi_reduction <maximumf>, %161, %cst_95 [2] : vector<2x8x8xf32> to vector<2x8xf32>
    %163 = vector.shape_cast %162 : vector<2x8xf32> to vector<2x8x1xf32>
    %164 = vector.broadcast %163 : vector<2x8x1xf32> to vector<2x8x8xf32>
    %165 = arith.subf %161, %164 : vector<2x8x8xf32>
    %166 = math.exp %165 : vector<2x8x8xf32>
    %cst_96 = arith.constant dense<0.000000e+00> : vector<2x8xf32>
    %167 = vector.multi_reduction <add>, %166, %cst_96 [2] : vector<2x8x8xf32> to vector<2x8xf32>
    %168 = vector.shape_cast %167 : vector<2x8xf32> to vector<2x8x1xf32>
    %169 = tpu.reciprocal %168 {approx = true} : vector<2x8x1xf32> -> vector<2x8x1xf32>
    %170 = vector.broadcast %169 : vector<2x8x1xf32> to vector<2x8x8xf32>
    %171 = arith.mulf %166, %170 : vector<2x8x8xf32>
    %172 = arith.truncf %171 : vector<2x8x8xf32> to vector<2x8x8xbf16>
    %173 = arith.truncf %154 : vector<2x8x32xf32> to vector<2x8x32xbf16>
    "tpu.trace_start"() <{level = 10 : i32, message = "bqk,bkd->bqd"}> : () -> ()
    %cst_97 = arith.constant dense<0.000000e+00> : vector<2x8x32xf32>
    %174 = tpu.matmul %172, %173, %cst_97 {dimension_numbers = #tpu.dot_dimension_numbers<[2], [1], [1], [2], [0, 0, 0, 1, 1, 2], [0], [0]>} : vector<2x8x8xbf16>, vector<2x8x32xbf16>, vector<2x8x32xf32> -> vector<2x8x32xf32>
    "tpu.trace_stop"() : () -> ()
    %175 = vector.shape_cast %174 : vector<2x8x32xf32> to vector<16x32xf32>
    %176 = arith.truncf %175 : vector<16x32xf32> to vector<16x32xbf16>
    %c2_98 = arith.constant 2 : index
    %c0_99 = arith.constant 0 : index
    %c0_100 = arith.constant 0 : index
    %177 = vector.load %arg10[%c2_98, %c0_99, %c0_100] : memref<8x32x128xbf16, #tpu.memory_space<vmem>>, vector<1x32x128xbf16>
    %178 = vector.shape_cast %177 : vector<1x32x128xbf16> to vector<32x128xbf16>
    %cst_101 = arith.constant dense<0.000000e+00> : vector<16x128xf32>
    %179 = tpu.matmul %176, %178, %cst_101 {dimension_numbers = #tpu.dot_dimension_numbers<[1], [0], [0], [1], [0, 0, 1, 1], [], []>} : vector<16x32xbf16>, vector<32x128xbf16>, vector<16x128xf32> -> vector<16x128xf32>
    %180 = arith.addf %130, %179 : vector<16x128xf32>
    %c3 = arith.constant 3 : index
    %c0_102 = arith.constant 0 : index
    %c0_103 = arith.constant 0 : index
    %181 = vector.load %arg4[%c3, %c0_102, %c0_103] : memref<8x128x32xbf16, #tpu.memory_space<vmem>>, vector<1x128x32xbf16>
    %182 = vector.shape_cast %181 : vector<1x128x32xbf16> to vector<128x32xbf16>
    %cst_104 = arith.constant dense<0.000000e+00> : vector<16x32xf32>
    %183 = tpu.matmul %29, %182, %cst_104 {dimension_numbers = #tpu.dot_dimension_numbers<[1], [0], [0], [1], [0, 0, 1, 1], [], []>} : vector<16x128xbf16>, vector<128x32xbf16>, vector<16x32xf32> -> vector<16x32xf32>
    %c3_105 = arith.constant 3 : index
    %c0_106 = arith.constant 0 : index
    %c0_107 = arith.constant 0 : index
    %184 = vector.load %arg7[%c3_105, %c0_106, %c0_107] : memref<8x1x32xf32, #tpu.memory_space<vmem>>, vector<1x1x32xf32>
    %185 = vector.shape_cast %184 : vector<1x1x32xf32> to vector<1x32xf32>
    %186 = vector.broadcast %185 : vector<1x32xf32> to vector<16x32xf32>
    %187 = arith.addf %183, %186 : vector<16x32xf32>
    %188 = vector.shape_cast %187 : vector<16x32xf32> to vector<2x8x32xf32>
    %c3_108 = arith.constant 3 : index
    %c0_109 = arith.constant 0 : index
    %c0_110 = arith.constant 0 : index
    %189 = vector.load %arg5[%c3_108, %c0_109, %c0_110] : memref<8x128x32xbf16, #tpu.memory_space<vmem>>, vector<1x128x32xbf16>
    %190 = vector.shape_cast %189 : vector<1x128x32xbf16> to vector<128x32xbf16>
    %cst_111 = arith.constant dense<0.000000e+00> : vector<16x32xf32>
    %191 = tpu.matmul %29, %190, %cst_111 {dimension_numbers = #tpu.dot_dimension_numbers<[1], [0], [0], [1], [0, 0, 1, 1], [], []>} : vector<16x128xbf16>, vector<128x32xbf16>, vector<16x32xf32> -> vector<16x32xf32>
    %c3_112 = arith.constant 3 : index
    %c0_113 = arith.constant 0 : index
    %c0_114 = arith.constant 0 : index
    %192 = vector.load %arg8[%c3_112, %c0_113, %c0_114] : memref<8x1x32xf32, #tpu.memory_space<vmem>>, vector<1x1x32xf32>
    %193 = vector.shape_cast %192 : vector<1x1x32xf32> to vector<1x32xf32>
    %194 = vector.broadcast %193 : vector<1x32xf32> to vector<16x32xf32>
    %195 = arith.addf %191, %194 : vector<16x32xf32>
    %196 = vector.shape_cast %195 : vector<16x32xf32> to vector<2x8x32xf32>
    %c3_115 = arith.constant 3 : index
    %c0_116 = arith.constant 0 : index
    %c0_117 = arith.constant 0 : index
    %197 = vector.load %arg6[%c3_115, %c0_116, %c0_117] : memref<8x128x32xbf16, #tpu.memory_space<vmem>>, vector<1x128x32xbf16>
    %198 = vector.shape_cast %197 : vector<1x128x32xbf16> to vector<128x32xbf16>
    %cst_118 = arith.constant dense<0.000000e+00> : vector<16x32xf32>
    %199 = tpu.matmul %29, %198, %cst_118 {dimension_numbers = #tpu.dot_dimension_numbers<[1], [0], [0], [1], [0, 0, 1, 1], [], []>} : vector<16x128xbf16>, vector<128x32xbf16>, vector<16x32xf32> -> vector<16x32xf32>
    %c3_119 = arith.constant 3 : index
    %c0_120 = arith.constant 0 : index
    %c0_121 = arith.constant 0 : index
    %200 = vector.load %arg9[%c3_119, %c0_120, %c0_121] : memref<8x1x32xf32, #tpu.memory_space<vmem>>, vector<1x1x32xf32>
    %201 = vector.shape_cast %200 : vector<1x1x32xf32> to vector<1x32xf32>
    %202 = vector.broadcast %201 : vector<1x32xf32> to vector<16x32xf32>
    %203 = arith.addf %199, %202 : vector<16x32xf32>
    %204 = vector.shape_cast %203 : vector<16x32xf32> to vector<2x8x32xf32>
    %205 = arith.truncf %188 : vector<2x8x32xf32> to vector<2x8x32xbf16>
    %206 = arith.truncf %196 : vector<2x8x32xf32> to vector<2x8x32xbf16>
    "tpu.trace_start"() <{level = 10 : i32, message = "bqd,bkd->bqk"}> : () -> ()
    %cst_122 = arith.constant dense<0.000000e+00> : vector<2x8x8xf32>
    %207 = tpu.matmul %205, %206, %cst_122 {dimension_numbers = #tpu.dot_dimension_numbers<[2], [2], [1], [1], [0, 0, 0, 1, 1, 1], [0], [0]>} : vector<2x8x32xbf16>, vector<2x8x32xbf16>, vector<2x8x8xf32> -> vector<2x8x8xf32>
    "tpu.trace_stop"() : () -> ()
    %cst_123 = arith.constant 0.176776692 : f32
    %208 = vector.broadcast %cst_123 : f32 to vector<2x8x8xf32>
    %209 = arith.mulf %207, %208 : vector<2x8x8xf32>
    %210 = vector.broadcast %27 : vector<2x1x8xf32> to vector<2x8x8xf32>
    %211 = arith.addf %209, %210 : vector<2x8x8xf32>
    %cst_124 = arith.constant dense<0xFF800000> : vector<2x8xf32>
    %212 = vector.multi_reduction <maximumf>, %211, %cst_124 [2] : vector<2x8x8xf32> to vector<2x8xf32>
    %213 = vector.shape_cast %212 : vector<2x8xf32> to vector<2x8x1xf32>
    %214 = vector.broadcast %213 : vector<2x8x1xf32> to vector<2x8x8xf32>
    %215 = arith.subf %211, %214 : vector<2x8x8xf32>
    %216 = math.exp %215 : vector<2x8x8xf32>
    %cst_125 = arith.constant dense<0.000000e+00> : vector<2x8xf32>
    %217 = vector.multi_reduction <add>, %216, %cst_125 [2] : vector<2x8x8xf32> to vector<2x8xf32>
    %218 = vector.shape_cast %217 : vector<2x8xf32> to vector<2x8x1xf32>
    %219 = tpu.reciprocal %218 {approx = true} : vector<2x8x1xf32> -> vector<2x8x1xf32>
    %220 = vector.broadcast %219 : vector<2x8x1xf32> to vector<2x8x8xf32>
    %221 = arith.mulf %216, %220 : vector<2x8x8xf32>
    %222 = arith.truncf %221 : vector<2x8x8xf32> to vector<2x8x8xbf16>
    %223 = arith.truncf %204 : vector<2x8x32xf32> to vector<2x8x32xbf16>
    "tpu.trace_start"() <{level = 10 : i32, message = "bqk,bkd->bqd"}> : () -> ()
    %cst_126 = arith.constant dense<0.000000e+00> : vector<2x8x32xf32>
    %224 = tpu.matmul %222, %223, %cst_126 {dimension_numbers = #tpu.dot_dimension_numbers<[2], [1], [1], [2], [0, 0, 0, 1, 1, 2], [0], [0]>} : vector<2x8x8xbf16>, vector<2x8x32xbf16>, vector<2x8x32xf32> -> vector<2x8x32xf32>
    "tpu.trace_stop"() : () -> ()
    %225 = vector.shape_cast %224 : vector<2x8x32xf32> to vector<16x32xf32>
    %226 = arith.truncf %225 : vector<16x32xf32> to vector<16x32xbf16>
    %c3_127 = arith.constant 3 : index
    %c0_128 = arith.constant 0 : index
    %c0_129 = arith.constant 0 : index
    %227 = vector.load %arg10[%c3_127, %c0_128, %c0_129] : memref<8x32x128xbf16, #tpu.memory_space<vmem>>, vector<1x32x128xbf16>
    %228 = vector.shape_cast %227 : vector<1x32x128xbf16> to vector<32x128xbf16>
    %cst_130 = arith.constant dense<0.000000e+00> : vector<16x128xf32>
    %229 = tpu.matmul %226, %228, %cst_130 {dimension_numbers = #tpu.dot_dimension_numbers<[1], [0], [0], [1], [0, 0, 1, 1], [], []>} : vector<16x32xbf16>, vector<32x128xbf16>, vector<16x128xf32> -> vector<16x128xf32>
    %230 = arith.addf %180, %229 : vector<16x128xf32>
    %c0_131 = arith.constant 0 : index
    %c0_132 = arith.constant 0 : index
    %c0_133 = arith.constant 0 : index
    %231 = vector.load %arg11[%c0_131, %c0_132, %c0_133] : memref<2x1x128xf32, #tpu.memory_space<vmem>>, vector<1x1x128xf32>
    %232 = vector.shape_cast %231 : vector<1x1x128xf32> to vector<1x128xf32>
    %233 = vector.broadcast %232 : vector<1x128xf32> to vector<16x128xf32>
    %234 = arith.addf %230, %233 : vector<16x128xf32>
    %235 = vector.shape_cast %234 : vector<16x128xf32> to vector<2x8x128xf32>
    %236 = arith.addf %26, %235 : vector<2x8x128xf32>
    %c0_134 = arith.constant 0 : index
    %c0_135 = arith.constant 0 : index
    %c0_136 = arith.constant 0 : index
    %237 = vector.load %arg12[%c0_134, %c0_135, %c0_136] : memref<2x1x128xf32, #tpu.memory_space<vmem>>, vector<1x1x128xf32>
    %238 = vector.shape_cast %237 : vector<1x1x128xf32> to vector<1x128xf32>
    %c0_137 = arith.constant 0 : index
    %c0_138 = arith.constant 0 : index
    %c0_139 = arith.constant 0 : index
    %239 = vector.load %arg13[%c0_137, %c0_138, %c0_139] : memref<2x1x128xf32, #tpu.memory_space<vmem>>, vector<1x1x128xf32>
    %240 = vector.shape_cast %239 : vector<1x1x128xf32> to vector<1x128xf32>
    %cst_140 = arith.constant dense<0.000000e+00> : vector<2x8xf32>
    %241 = vector.multi_reduction <add>, %236, %cst_140 [2] : vector<2x8x128xf32> to vector<2x8xf32>
    %242 = vector.shape_cast %241 : vector<2x8xf32> to vector<2x8x1xf32>
    %cst_141 = arith.constant 1.280000e+02 : f32
    %243 = vector.broadcast %cst_141 : f32 to vector<2x8x1xf32>
    %244 = arith.divf %242, %243 : vector<2x8x1xf32>
    %245 = vector.broadcast %244 : vector<2x8x1xf32> to vector<2x8x128xf32>
    %246 = arith.subf %236, %245 : vector<2x8x128xf32>
    %247 = arith.mulf %246, %246 : vector<2x8x128xf32>
    %cst_142 = arith.constant dense<0.000000e+00> : vector<2x8xf32>
    %248 = vector.multi_reduction <add>, %247, %cst_142 [2] : vector<2x8x128xf32> to vector<2x8xf32>
    %249 = vector.shape_cast %248 : vector<2x8xf32> to vector<2x8x1xf32>
    %cst_143 = arith.constant 1.280000e+02 : f32
    %250 = vector.broadcast %cst_143 : f32 to vector<2x8x1xf32>
    %251 = arith.divf %249, %250 : vector<2x8x1xf32>
    %252 = vector.broadcast %244 : vector<2x8x1xf32> to vector<2x8x128xf32>
    %253 = arith.subf %236, %252 : vector<2x8x128xf32>
    %cst_144 = arith.constant 9.99999996E-13 : f32
    %254 = vector.broadcast %cst_144 : f32 to vector<2x8x1xf32>
    %255 = arith.addf %251, %254 : vector<2x8x1xf32>
    %256 = math.rsqrt %255 : vector<2x8x1xf32>
    %257 = vector.broadcast %256 : vector<2x8x1xf32> to vector<2x8x128xf32>
    %258 = arith.mulf %253, %257 : vector<2x8x128xf32>
    %259 = vector.shape_cast %238 : vector<1x128xf32> to vector<1x1x128xf32>
    %260 = vector.broadcast %259 : vector<1x1x128xf32> to vector<2x8x128xf32>
    %261 = arith.mulf %258, %260 : vector<2x8x128xf32>
    %262 = vector.shape_cast %240 : vector<1x128xf32> to vector<1x1x128xf32>
    %263 = vector.broadcast %262 : vector<1x1x128xf32> to vector<2x8x128xf32>
    %264 = arith.addf %261, %263 : vector<2x8x128xf32>
    %265 = vector.shape_cast %264 : vector<2x8x128xf32> to vector<16x128xf32>
    %266 = arith.truncf %265 : vector<16x128xf32> to vector<16x128xbf16>
    %c0_145 = arith.constant 0 : index
    %c0_146 = arith.constant 0 : index
    %c0_147 = arith.constant 0 : index
    %267 = vector.load %arg14[%c0_145, %c0_146, %c0_147] : memref<2x128x256xbf16, #tpu.memory_space<vmem>>, vector<1x128x256xbf16>
    %268 = vector.shape_cast %267 : vector<1x128x256xbf16> to vector<128x256xbf16>
    %cst_148 = arith.constant dense<0.000000e+00> : vector<16x256xf32>
    %269 = tpu.matmul %266, %268, %cst_148 {dimension_numbers = #tpu.dot_dimension_numbers<[1], [0], [0], [1], [0, 0, 1, 1], [], []>} : vector<16x128xbf16>, vector<128x256xbf16>, vector<16x256xf32> -> vector<16x256xf32>
    %c0_149 = arith.constant 0 : index
    %c0_150 = arith.constant 0 : index
    %c0_151 = arith.constant 0 : index
    %270 = vector.load %arg15[%c0_149, %c0_150, %c0_151] : memref<2x1x256xf32, #tpu.memory_space<vmem>>, vector<1x1x256xf32>
    %271 = vector.shape_cast %270 : vector<1x1x256xf32> to vector<1x256xf32>
    %272 = vector.broadcast %271 : vector<1x256xf32> to vector<16x256xf32>
    %273 = arith.addf %269, %272 : vector<16x256xf32>
    %cst_152 = arith.constant 5.000000e-01 : f32
    %274 = vector.broadcast %cst_152 : f32 to vector<16x256xf32>
    %275 = arith.mulf %274, %273 : vector<16x256xf32>
    %cst_153 = arith.constant 4.471500e-02 : f32
    %276 = vector.broadcast %cst_153 : f32 to vector<16x256xf32>
    %277 = arith.mulf %276, %273 : vector<16x256xf32>
    %278 = arith.mulf %277, %273 : vector<16x256xf32>
    %279 = arith.mulf %278, %273 : vector<16x256xf32>
    %280 = arith.addf %273, %279 : vector<16x256xf32>
    %cst_154 = arith.constant 0.797884583 : f32
    %281 = vector.broadcast %cst_154 : f32 to vector<16x256xf32>
    %282 = arith.mulf %281, %280 : vector<16x256xf32>
    %283 = math.tanh %282 : vector<16x256xf32>
    %cst_155 = arith.constant 1.000000e+00 : f32
    %284 = vector.broadcast %cst_155 : f32 to vector<16x256xf32>
    %285 = arith.addf %284, %283 : vector<16x256xf32>
    %286 = arith.mulf %275, %285 : vector<16x256xf32>
    %287 = arith.truncf %286 : vector<16x256xf32> to vector<16x256xbf16>
    %c0_156 = arith.constant 0 : index
    %c0_157 = arith.constant 0 : index
    %c0_158 = arith.constant 0 : index
    %288 = vector.load %arg16[%c0_156, %c0_157, %c0_158] : memref<2x256x128xbf16, #tpu.memory_space<vmem>>, vector<1x256x128xbf16>
    %289 = vector.shape_cast %288 : vector<1x256x128xbf16> to vector<256x128xbf16>
    %cst_159 = arith.constant dense<0.000000e+00> : vector<16x128xf32>
    %290 = tpu.matmul %287, %289, %cst_159 {dimension_numbers = #tpu.dot_dimension_numbers<[1], [0], [0], [1], [0, 0, 1, 1], [], []>} : vector<16x256xbf16>, vector<256x128xbf16>, vector<16x128xf32> -> vector<16x128xf32>
    %c0_160 = arith.constant 0 : index
    %c0_161 = arith.constant 0 : index
    %c0_162 = arith.constant 0 : index
    %291 = vector.load %arg17[%c0_160, %c0_161, %c0_162] : memref<2x1x128xf32, #tpu.memory_space<vmem>>, vector<1x1x128xf32>
    %292 = vector.shape_cast %291 : vector<1x1x128xf32> to vector<1x128xf32>
    %293 = vector.broadcast %292 : vector<1x128xf32> to vector<16x128xf32>
    %294 = arith.addf %290, %293 : vector<16x128xf32>
    %295 = vector.shape_cast %294 : vector<16x128xf32> to vector<2x8x128xf32>
    %296 = arith.addf %264, %295 : vector<2x8x128xf32>
    %c0_163 = arith.constant 0 : index
    %c0_164 = arith.constant 0 : index
    %c0_165 = arith.constant 0 : index
    %297 = vector.load %arg18[%c0_163, %c0_164, %c0_165] : memref<2x1x128xf32, #tpu.memory_space<vmem>>, vector<1x1x128xf32>
    %298 = vector.shape_cast %297 : vector<1x1x128xf32> to vector<1x128xf32>
    %c0_166 = arith.constant 0 : index
    %c0_167 = arith.constant 0 : index
    %c0_168 = arith.constant 0 : index
    %299 = vector.load %arg19[%c0_166, %c0_167, %c0_168] : memref<2x1x128xf32, #tpu.memory_space<vmem>>, vector<1x1x128xf32>
    %300 = vector.shape_cast %299 : vector<1x1x128xf32> to vector<1x128xf32>
    %cst_169 = arith.constant dense<0.000000e+00> : vector<2x8xf32>
    %301 = vector.multi_reduction <add>, %296, %cst_169 [2] : vector<2x8x128xf32> to vector<2x8xf32>
    %302 = vector.shape_cast %301 : vector<2x8xf32> to vector<2x8x1xf32>
    %cst_170 = arith.constant 1.280000e+02 : f32
    %303 = vector.broadcast %cst_170 : f32 to vector<2x8x1xf32>
    %304 = arith.divf %302, %303 : vector<2x8x1xf32>
    %305 = vector.broadcast %304 : vector<2x8x1xf32> to vector<2x8x128xf32>
    %306 = arith.subf %296, %305 : vector<2x8x128xf32>
    %307 = arith.mulf %306, %306 : vector<2x8x128xf32>
    %cst_171 = arith.constant dense<0.000000e+00> : vector<2x8xf32>
    %308 = vector.multi_reduction <add>, %307, %cst_171 [2] : vector<2x8x128xf32> to vector<2x8xf32>
    %309 = vector.shape_cast %308 : vector<2x8xf32> to vector<2x8x1xf32>
    %cst_172 = arith.constant 1.280000e+02 : f32
    %310 = vector.broadcast %cst_172 : f32 to vector<2x8x1xf32>
    %311 = arith.divf %309, %310 : vector<2x8x1xf32>
    %312 = vector.broadcast %304 : vector<2x8x1xf32> to vector<2x8x128xf32>
    %313 = arith.subf %296, %312 : vector<2x8x128xf32>
    %cst_173 = arith.constant 9.99999996E-13 : f32
    %314 = vector.broadcast %cst_173 : f32 to vector<2x8x1xf32>
    %315 = arith.addf %311, %314 : vector<2x8x1xf32>
    %316 = math.rsqrt %315 : vector<2x8x1xf32>
    %317 = vector.broadcast %316 : vector<2x8x1xf32> to vector<2x8x128xf32>
    %318 = arith.mulf %313, %317 : vector<2x8x128xf32>
    %319 = vector.shape_cast %298 : vector<1x128xf32> to vector<1x1x128xf32>
    %320 = vector.broadcast %319 : vector<1x1x128xf32> to vector<2x8x128xf32>
    %321 = arith.mulf %318, %320 : vector<2x8x128xf32>
    %322 = vector.shape_cast %300 : vector<1x128xf32> to vector<1x1x128xf32>
    %323 = vector.broadcast %322 : vector<1x1x128xf32> to vector<2x8x128xf32>
    %324 = arith.addf %321, %323 : vector<2x8x128xf32>
    %325 = vector.shape_cast %324 : vector<2x8x128xf32> to vector<16x128xf32>
    %326 = arith.truncf %325 : vector<16x128xf32> to vector<16x128xbf16>
    %cst_174 = arith.constant 0.000000e+00 : f32
    %327 = vector.broadcast %cst_174 : f32 to vector<16x128xf32>
    %c4 = arith.constant 4 : index
    %c0_175 = arith.constant 0 : index
    %c0_176 = arith.constant 0 : index
    %328 = vector.load %arg4[%c4, %c0_175, %c0_176] : memref<8x128x32xbf16, #tpu.memory_space<vmem>>, vector<1x128x32xbf16>
    %329 = vector.shape_cast %328 : vector<1x128x32xbf16> to vector<128x32xbf16>
    %cst_177 = arith.constant dense<0.000000e+00> : vector<16x32xf32>
    %330 = tpu.matmul %326, %329, %cst_177 {dimension_numbers = #tpu.dot_dimension_numbers<[1], [0], [0], [1], [0, 0, 1, 1], [], []>} : vector<16x128xbf16>, vector<128x32xbf16>, vector<16x32xf32> -> vector<16x32xf32>
    %c4_178 = arith.constant 4 : index
    %c0_179 = arith.constant 0 : index
    %c0_180 = arith.constant 0 : index
    %331 = vector.load %arg7[%c4_178, %c0_179, %c0_180] : memref<8x1x32xf32, #tpu.memory_space<vmem>>, vector<1x1x32xf32>
    %332 = vector.shape_cast %331 : vector<1x1x32xf32> to vector<1x32xf32>
    %333 = vector.broadcast %332 : vector<1x32xf32> to vector<16x32xf32>
    %334 = arith.addf %330, %333 : vector<16x32xf32>
    %335 = vector.shape_cast %334 : vector<16x32xf32> to vector<2x8x32xf32>
    %c4_181 = arith.constant 4 : index
    %c0_182 = arith.constant 0 : index
    %c0_183 = arith.constant 0 : index
    %336 = vector.load %arg5[%c4_181, %c0_182, %c0_183] : memref<8x128x32xbf16, #tpu.memory_space<vmem>>, vector<1x128x32xbf16>
    %337 = vector.shape_cast %336 : vector<1x128x32xbf16> to vector<128x32xbf16>
    %cst_184 = arith.constant dense<0.000000e+00> : vector<16x32xf32>
    %338 = tpu.matmul %326, %337, %cst_184 {dimension_numbers = #tpu.dot_dimension_numbers<[1], [0], [0], [1], [0, 0, 1, 1], [], []>} : vector<16x128xbf16>, vector<128x32xbf16>, vector<16x32xf32> -> vector<16x32xf32>
    %c4_185 = arith.constant 4 : index
    %c0_186 = arith.constant 0 : index
    %c0_187 = arith.constant 0 : index
    %339 = vector.load %arg8[%c4_185, %c0_186, %c0_187] : memref<8x1x32xf32, #tpu.memory_space<vmem>>, vector<1x1x32xf32>
    %340 = vector.shape_cast %339 : vector<1x1x32xf32> to vector<1x32xf32>
    %341 = vector.broadcast %340 : vector<1x32xf32> to vector<16x32xf32>
    %342 = arith.addf %338, %341 : vector<16x32xf32>
    %343 = vector.shape_cast %342 : vector<16x32xf32> to vector<2x8x32xf32>
    %c4_188 = arith.constant 4 : index
    %c0_189 = arith.constant 0 : index
    %c0_190 = arith.constant 0 : index
    %344 = vector.load %arg6[%c4_188, %c0_189, %c0_190] : memref<8x128x32xbf16, #tpu.memory_space<vmem>>, vector<1x128x32xbf16>
    %345 = vector.shape_cast %344 : vector<1x128x32xbf16> to vector<128x32xbf16>
    %cst_191 = arith.constant dense<0.000000e+00> : vector<16x32xf32>
    %346 = tpu.matmul %326, %345, %cst_191 {dimension_numbers = #tpu.dot_dimension_numbers<[1], [0], [0], [1], [0, 0, 1, 1], [], []>} : vector<16x128xbf16>, vector<128x32xbf16>, vector<16x32xf32> -> vector<16x32xf32>
    %c4_192 = arith.constant 4 : index
    %c0_193 = arith.constant 0 : index
    %c0_194 = arith.constant 0 : index
    %347 = vector.load %arg9[%c4_192, %c0_193, %c0_194] : memref<8x1x32xf32, #tpu.memory_space<vmem>>, vector<1x1x32xf32>
    %348 = vector.shape_cast %347 : vector<1x1x32xf32> to vector<1x32xf32>
    %349 = vector.broadcast %348 : vector<1x32xf32> to vector<16x32xf32>
    %350 = arith.addf %346, %349 : vector<16x32xf32>
    %351 = vector.shape_cast %350 : vector<16x32xf32> to vector<2x8x32xf32>
    %352 = arith.truncf %335 : vector<2x8x32xf32> to vector<2x8x32xbf16>
    %353 = arith.truncf %343 : vector<2x8x32xf32> to vector<2x8x32xbf16>
    "tpu.trace_start"() <{level = 10 : i32, message = "bqd,bkd->bqk"}> : () -> ()
    %cst_195 = arith.constant dense<0.000000e+00> : vector<2x8x8xf32>
    %354 = tpu.matmul %352, %353, %cst_195 {dimension_numbers = #tpu.dot_dimension_numbers<[2], [2], [1], [1], [0, 0, 0, 1, 1, 1], [0], [0]>} : vector<2x8x32xbf16>, vector<2x8x32xbf16>, vector<2x8x8xf32> -> vector<2x8x8xf32>
    "tpu.trace_stop"() : () -> ()
    %cst_196 = arith.constant 0.176776692 : f32
    %355 = vector.broadcast %cst_196 : f32 to vector<2x8x8xf32>
    %356 = arith.mulf %354, %355 : vector<2x8x8xf32>
    %357 = vector.broadcast %27 : vector<2x1x8xf32> to vector<2x8x8xf32>
    %358 = arith.addf %356, %357 : vector<2x8x8xf32>
    %cst_197 = arith.constant dense<0xFF800000> : vector<2x8xf32>
    %359 = vector.multi_reduction <maximumf>, %358, %cst_197 [2] : vector<2x8x8xf32> to vector<2x8xf32>
    %360 = vector.shape_cast %359 : vector<2x8xf32> to vector<2x8x1xf32>
    %361 = vector.broadcast %360 : vector<2x8x1xf32> to vector<2x8x8xf32>
    %362 = arith.subf %358, %361 : vector<2x8x8xf32>
    %363 = math.exp %362 : vector<2x8x8xf32>
    %cst_198 = arith.constant dense<0.000000e+00> : vector<2x8xf32>
    %364 = vector.multi_reduction <add>, %363, %cst_198 [2] : vector<2x8x8xf32> to vector<2x8xf32>
    %365 = vector.shape_cast %364 : vector<2x8xf32> to vector<2x8x1xf32>
    %366 = tpu.reciprocal %365 {approx = true} : vector<2x8x1xf32> -> vector<2x8x1xf32>
    %367 = vector.broadcast %366 : vector<2x8x1xf32> to vector<2x8x8xf32>
    %368 = arith.mulf %363, %367 : vector<2x8x8xf32>
    %369 = arith.truncf %368 : vector<2x8x8xf32> to vector<2x8x8xbf16>
    %370 = arith.truncf %351 : vector<2x8x32xf32> to vector<2x8x32xbf16>
    "tpu.trace_start"() <{level = 10 : i32, message = "bqk,bkd->bqd"}> : () -> ()
    %cst_199 = arith.constant dense<0.000000e+00> : vector<2x8x32xf32>
    %371 = tpu.matmul %369, %370, %cst_199 {dimension_numbers = #tpu.dot_dimension_numbers<[2], [1], [1], [2], [0, 0, 0, 1, 1, 2], [0], [0]>} : vector<2x8x8xbf16>, vector<2x8x32xbf16>, vector<2x8x32xf32> -> vector<2x8x32xf32>
    "tpu.trace_stop"() : () -> ()
    %372 = vector.shape_cast %371 : vector<2x8x32xf32> to vector<16x32xf32>
    %373 = arith.truncf %372 : vector<16x32xf32> to vector<16x32xbf16>
    %c4_200 = arith.constant 4 : index
    %c0_201 = arith.constant 0 : index
    %c0_202 = arith.constant 0 : index
    %374 = vector.load %arg10[%c4_200, %c0_201, %c0_202] : memref<8x32x128xbf16, #tpu.memory_space<vmem>>, vector<1x32x128xbf16>
    %375 = vector.shape_cast %374 : vector<1x32x128xbf16> to vector<32x128xbf16>
    %cst_203 = arith.constant dense<0.000000e+00> : vector<16x128xf32>
    %376 = tpu.matmul %373, %375, %cst_203 {dimension_numbers = #tpu.dot_dimension_numbers<[1], [0], [0], [1], [0, 0, 1, 1], [], []>} : vector<16x32xbf16>, vector<32x128xbf16>, vector<16x128xf32> -> vector<16x128xf32>
    %377 = arith.addf %327, %376 : vector<16x128xf32>
    %c5 = arith.constant 5 : index
    %c0_204 = arith.constant 0 : index
    %c0_205 = arith.constant 0 : index
    %378 = vector.load %arg4[%c5, %c0_204, %c0_205] : memref<8x128x32xbf16, #tpu.memory_space<vmem>>, vector<1x128x32xbf16>
    %379 = vector.shape_cast %378 : vector<1x128x32xbf16> to vector<128x32xbf16>
    %cst_206 = arith.constant dense<0.000000e+00> : vector<16x32xf32>
    %380 = tpu.matmul %326, %379, %cst_206 {dimension_numbers = #tpu.dot_dimension_numbers<[1], [0], [0], [1], [0, 0, 1, 1], [], []>} : vector<16x128xbf16>, vector<128x32xbf16>, vector<16x32xf32> -> vector<16x32xf32>
    %c5_207 = arith.constant 5 : index
    %c0_208 = arith.constant 0 : index
    %c0_209 = arith.constant 0 : index
    %381 = vector.load %arg7[%c5_207, %c0_208, %c0_209] : memref<8x1x32xf32, #tpu.memory_space<vmem>>, vector<1x1x32xf32>
    %382 = vector.shape_cast %381 : vector<1x1x32xf32> to vector<1x32xf32>
    %383 = vector.broadcast %382 : vector<1x32xf32> to vector<16x32xf32>
    %384 = arith.addf %380, %383 : vector<16x32xf32>
    %385 = vector.shape_cast %384 : vector<16x32xf32> to vector<2x8x32xf32>
    %c5_210 = arith.constant 5 : index
    %c0_211 = arith.constant 0 : index
    %c0_212 = arith.constant 0 : index
    %386 = vector.load %arg5[%c5_210, %c0_211, %c0_212] : memref<8x128x32xbf16, #tpu.memory_space<vmem>>, vector<1x128x32xbf16>
    %387 = vector.shape_cast %386 : vector<1x128x32xbf16> to vector<128x32xbf16>
    %cst_213 = arith.constant dense<0.000000e+00> : vector<16x32xf32>
    %388 = tpu.matmul %326, %387, %cst_213 {dimension_numbers = #tpu.dot_dimension_numbers<[1], [0], [0], [1], [0, 0, 1, 1], [], []>} : vector<16x128xbf16>, vector<128x32xbf16>, vector<16x32xf32> -> vector<16x32xf32>
    %c5_214 = arith.constant 5 : index
    %c0_215 = arith.constant 0 : index
    %c0_216 = arith.constant 0 : index
    %389 = vector.load %arg8[%c5_214, %c0_215, %c0_216] : memref<8x1x32xf32, #tpu.memory_space<vmem>>, vector<1x1x32xf32>
    %390 = vector.shape_cast %389 : vector<1x1x32xf32> to vector<1x32xf32>
    %391 = vector.broadcast %390 : vector<1x32xf32> to vector<16x32xf32>
    %392 = arith.addf %388, %391 : vector<16x32xf32>
    %393 = vector.shape_cast %392 : vector<16x32xf32> to vector<2x8x32xf32>
    %c5_217 = arith.constant 5 : index
    %c0_218 = arith.constant 0 : index
    %c0_219 = arith.constant 0 : index
    %394 = vector.load %arg6[%c5_217, %c0_218, %c0_219] : memref<8x128x32xbf16, #tpu.memory_space<vmem>>, vector<1x128x32xbf16>
    %395 = vector.shape_cast %394 : vector<1x128x32xbf16> to vector<128x32xbf16>
    %cst_220 = arith.constant dense<0.000000e+00> : vector<16x32xf32>
    %396 = tpu.matmul %326, %395, %cst_220 {dimension_numbers = #tpu.dot_dimension_numbers<[1], [0], [0], [1], [0, 0, 1, 1], [], []>} : vector<16x128xbf16>, vector<128x32xbf16>, vector<16x32xf32> -> vector<16x32xf32>
    %c5_221 = arith.constant 5 : index
    %c0_222 = arith.constant 0 : index
    %c0_223 = arith.constant 0 : index
    %397 = vector.load %arg9[%c5_221, %c0_222, %c0_223] : memref<8x1x32xf32, #tpu.memory_space<vmem>>, vector<1x1x32xf32>
    %398 = vector.shape_cast %397 : vector<1x1x32xf32> to vector<1x32xf32>
    %399 = vector.broadcast %398 : vector<1x32xf32> to vector<16x32xf32>
    %400 = arith.addf %396, %399 : vector<16x32xf32>
    %401 = vector.shape_cast %400 : vector<16x32xf32> to vector<2x8x32xf32>
    %402 = arith.truncf %385 : vector<2x8x32xf32> to vector<2x8x32xbf16>
    %403 = arith.truncf %393 : vector<2x8x32xf32> to vector<2x8x32xbf16>
    "tpu.trace_start"() <{level = 10 : i32, message = "bqd,bkd->bqk"}> : () -> ()
    %cst_224 = arith.constant dense<0.000000e+00> : vector<2x8x8xf32>
    %404 = tpu.matmul %402, %403, %cst_224 {dimension_numbers = #tpu.dot_dimension_numbers<[2], [2], [1], [1], [0, 0, 0, 1, 1, 1], [0], [0]>} : vector<2x8x32xbf16>, vector<2x8x32xbf16>, vector<2x8x8xf32> -> vector<2x8x8xf32>
    "tpu.trace_stop"() : () -> ()
    %cst_225 = arith.constant 0.176776692 : f32
    %405 = vector.broadcast %cst_225 : f32 to vector<2x8x8xf32>
    %406 = arith.mulf %404, %405 : vector<2x8x8xf32>
    %407 = vector.broadcast %27 : vector<2x1x8xf32> to vector<2x8x8xf32>
    %408 = arith.addf %406, %407 : vector<2x8x8xf32>
    %cst_226 = arith.constant dense<0xFF800000> : vector<2x8xf32>
    %409 = vector.multi_reduction <maximumf>, %408, %cst_226 [2] : vector<2x8x8xf32> to vector<2x8xf32>
    %410 = vector.shape_cast %409 : vector<2x8xf32> to vector<2x8x1xf32>
    %411 = vector.broadcast %410 : vector<2x8x1xf32> to vector<2x8x8xf32>
    %412 = arith.subf %408, %411 : vector<2x8x8xf32>
    %413 = math.exp %412 : vector<2x8x8xf32>
    %cst_227 = arith.constant dense<0.000000e+00> : vector<2x8xf32>
    %414 = vector.multi_reduction <add>, %413, %cst_227 [2] : vector<2x8x8xf32> to vector<2x8xf32>
    %415 = vector.shape_cast %414 : vector<2x8xf32> to vector<2x8x1xf32>
    %416 = tpu.reciprocal %415 {approx = true} : vector<2x8x1xf32> -> vector<2x8x1xf32>
    %417 = vector.broadcast %416 : vector<2x8x1xf32> to vector<2x8x8xf32>
    %418 = arith.mulf %413, %417 : vector<2x8x8xf32>
    %419 = arith.truncf %418 : vector<2x8x8xf32> to vector<2x8x8xbf16>
    %420 = arith.truncf %401 : vector<2x8x32xf32> to vector<2x8x32xbf16>
    "tpu.trace_start"() <{level = 10 : i32, message = "bqk,bkd->bqd"}> : () -> ()
    %cst_228 = arith.constant dense<0.000000e+00> : vector<2x8x32xf32>
    %421 = tpu.matmul %419, %420, %cst_228 {dimension_numbers = #tpu.dot_dimension_numbers<[2], [1], [1], [2], [0, 0, 0, 1, 1, 2], [0], [0]>} : vector<2x8x8xbf16>, vector<2x8x32xbf16>, vector<2x8x32xf32> -> vector<2x8x32xf32>
    "tpu.trace_stop"() : () -> ()
    %422 = vector.shape_cast %421 : vector<2x8x32xf32> to vector<16x32xf32>
    %423 = arith.truncf %422 : vector<16x32xf32> to vector<16x32xbf16>
    %c5_229 = arith.constant 5 : index
    %c0_230 = arith.constant 0 : index
    %c0_231 = arith.constant 0 : index
    %424 = vector.load %arg10[%c5_229, %c0_230, %c0_231] : memref<8x32x128xbf16, #tpu.memory_space<vmem>>, vector<1x32x128xbf16>
    %425 = vector.shape_cast %424 : vector<1x32x128xbf16> to vector<32x128xbf16>
    %cst_232 = arith.constant dense<0.000000e+00> : vector<16x128xf32>
    %426 = tpu.matmul %423, %425, %cst_232 {dimension_numbers = #tpu.dot_dimension_numbers<[1], [0], [0], [1], [0, 0, 1, 1], [], []>} : vector<16x32xbf16>, vector<32x128xbf16>, vector<16x128xf32> -> vector<16x128xf32>
    %427 = arith.addf %377, %426 : vector<16x128xf32>
    %c6 = arith.constant 6 : index
    %c0_233 = arith.constant 0 : index
    %c0_234 = arith.constant 0 : index
    %428 = vector.load %arg4[%c6, %c0_233, %c0_234] : memref<8x128x32xbf16, #tpu.memory_space<vmem>>, vector<1x128x32xbf16>
    %429 = vector.shape_cast %428 : vector<1x128x32xbf16> to vector<128x32xbf16>
    %cst_235 = arith.constant dense<0.000000e+00> : vector<16x32xf32>
    %430 = tpu.matmul %326, %429, %cst_235 {dimension_numbers = #tpu.dot_dimension_numbers<[1], [0], [0], [1], [0, 0, 1, 1], [], []>} : vector<16x128xbf16>, vector<128x32xbf16>, vector<16x32xf32> -> vector<16x32xf32>
    %c6_236 = arith.constant 6 : index
    %c0_237 = arith.constant 0 : index
    %c0_238 = arith.constant 0 : index
    %431 = vector.load %arg7[%c6_236, %c0_237, %c0_238] : memref<8x1x32xf32, #tpu.memory_space<vmem>>, vector<1x1x32xf32>
    %432 = vector.shape_cast %431 : vector<1x1x32xf32> to vector<1x32xf32>
    %433 = vector.broadcast %432 : vector<1x32xf32> to vector<16x32xf32>
    %434 = arith.addf %430, %433 : vector<16x32xf32>
    %435 = vector.shape_cast %434 : vector<16x32xf32> to vector<2x8x32xf32>
    %c6_239 = arith.constant 6 : index
    %c0_240 = arith.constant 0 : index
    %c0_241 = arith.constant 0 : index
    %436 = vector.load %arg5[%c6_239, %c0_240, %c0_241] : memref<8x128x32xbf16, #tpu.memory_space<vmem>>, vector<1x128x32xbf16>
    %437 = vector.shape_cast %436 : vector<1x128x32xbf16> to vector<128x32xbf16>
    %cst_242 = arith.constant dense<0.000000e+00> : vector<16x32xf32>
    %438 = tpu.matmul %326, %437, %cst_242 {dimension_numbers = #tpu.dot_dimension_numbers<[1], [0], [0], [1], [0, 0, 1, 1], [], []>} : vector<16x128xbf16>, vector<128x32xbf16>, vector<16x32xf32> -> vector<16x32xf32>
    %c6_243 = arith.constant 6 : index
    %c0_244 = arith.constant 0 : index
    %c0_245 = arith.constant 0 : index
    %439 = vector.load %arg8[%c6_243, %c0_244, %c0_245] : memref<8x1x32xf32, #tpu.memory_space<vmem>>, vector<1x1x32xf32>
    %440 = vector.shape_cast %439 : vector<1x1x32xf32> to vector<1x32xf32>
    %441 = vector.broadcast %440 : vector<1x32xf32> to vector<16x32xf32>
    %442 = arith.addf %438, %441 : vector<16x32xf32>
    %443 = vector.shape_cast %442 : vector<16x32xf32> to vector<2x8x32xf32>
    %c6_246 = arith.constant 6 : index
    %c0_247 = arith.constant 0 : index
    %c0_248 = arith.constant 0 : index
    %444 = vector.load %arg6[%c6_246, %c0_247, %c0_248] : memref<8x128x32xbf16, #tpu.memory_space<vmem>>, vector<1x128x32xbf16>
    %445 = vector.shape_cast %444 : vector<1x128x32xbf16> to vector<128x32xbf16>
    %cst_249 = arith.constant dense<0.000000e+00> : vector<16x32xf32>
    %446 = tpu.matmul %326, %445, %cst_249 {dimension_numbers = #tpu.dot_dimension_numbers<[1], [0], [0], [1], [0, 0, 1, 1], [], []>} : vector<16x128xbf16>, vector<128x32xbf16>, vector<16x32xf32> -> vector<16x32xf32>
    %c6_250 = arith.constant 6 : index
    %c0_251 = arith.constant 0 : index
    %c0_252 = arith.constant 0 : index
    %447 = vector.load %arg9[%c6_250, %c0_251, %c0_252] : memref<8x1x32xf32, #tpu.memory_space<vmem>>, vector<1x1x32xf32>
    %448 = vector.shape_cast %447 : vector<1x1x32xf32> to vector<1x32xf32>
    %449 = vector.broadcast %448 : vector<1x32xf32> to vector<16x32xf32>
    %450 = arith.addf %446, %449 : vector<16x32xf32>
    %451 = vector.shape_cast %450 : vector<16x32xf32> to vector<2x8x32xf32>
    %452 = arith.truncf %435 : vector<2x8x32xf32> to vector<2x8x32xbf16>
    %453 = arith.truncf %443 : vector<2x8x32xf32> to vector<2x8x32xbf16>
    "tpu.trace_start"() <{level = 10 : i32, message = "bqd,bkd->bqk"}> : () -> ()
    %cst_253 = arith.constant dense<0.000000e+00> : vector<2x8x8xf32>
    %454 = tpu.matmul %452, %453, %cst_253 {dimension_numbers = #tpu.dot_dimension_numbers<[2], [2], [1], [1], [0, 0, 0, 1, 1, 1], [0], [0]>} : vector<2x8x32xbf16>, vector<2x8x32xbf16>, vector<2x8x8xf32> -> vector<2x8x8xf32>
    "tpu.trace_stop"() : () -> ()
    %cst_254 = arith.constant 0.176776692 : f32
    %455 = vector.broadcast %cst_254 : f32 to vector<2x8x8xf32>
    %456 = arith.mulf %454, %455 : vector<2x8x8xf32>
    %457 = vector.broadcast %27 : vector<2x1x8xf32> to vector<2x8x8xf32>
    %458 = arith.addf %456, %457 : vector<2x8x8xf32>
    %cst_255 = arith.constant dense<0xFF800000> : vector<2x8xf32>
    %459 = vector.multi_reduction <maximumf>, %458, %cst_255 [2] : vector<2x8x8xf32> to vector<2x8xf32>
    %460 = vector.shape_cast %459 : vector<2x8xf32> to vector<2x8x1xf32>
    %461 = vector.broadcast %460 : vector<2x8x1xf32> to vector<2x8x8xf32>
    %462 = arith.subf %458, %461 : vector<2x8x8xf32>
    %463 = math.exp %462 : vector<2x8x8xf32>
    %cst_256 = arith.constant dense<0.000000e+00> : vector<2x8xf32>
    %464 = vector.multi_reduction <add>, %463, %cst_256 [2] : vector<2x8x8xf32> to vector<2x8xf32>
    %465 = vector.shape_cast %464 : vector<2x8xf32> to vector<2x8x1xf32>
    %466 = tpu.reciprocal %465 {approx = true} : vector<2x8x1xf32> -> vector<2x8x1xf32>
    %467 = vector.broadcast %466 : vector<2x8x1xf32> to vector<2x8x8xf32>
    %468 = arith.mulf %463, %467 : vector<2x8x8xf32>
    %469 = arith.truncf %468 : vector<2x8x8xf32> to vector<2x8x8xbf16>
    %470 = arith.truncf %451 : vector<2x8x32xf32> to vector<2x8x32xbf16>
    "tpu.trace_start"() <{level = 10 : i32, message = "bqk,bkd->bqd"}> : () -> ()
    %cst_257 = arith.constant dense<0.000000e+00> : vector<2x8x32xf32>
    %471 = tpu.matmul %469, %470, %cst_257 {dimension_numbers = #tpu.dot_dimension_numbers<[2], [1], [1], [2], [0, 0, 0, 1, 1, 2], [0], [0]>} : vector<2x8x8xbf16>, vector<2x8x32xbf16>, vector<2x8x32xf32> -> vector<2x8x32xf32>
    "tpu.trace_stop"() : () -> ()
    %472 = vector.shape_cast %471 : vector<2x8x32xf32> to vector<16x32xf32>
    %473 = arith.truncf %472 : vector<16x32xf32> to vector<16x32xbf16>
    %c6_258 = arith.constant 6 : index
    %c0_259 = arith.constant 0 : index
    %c0_260 = arith.constant 0 : index
    %474 = vector.load %arg10[%c6_258, %c0_259, %c0_260] : memref<8x32x128xbf16, #tpu.memory_space<vmem>>, vector<1x32x128xbf16>
    %475 = vector.shape_cast %474 : vector<1x32x128xbf16> to vector<32x128xbf16>
    %cst_261 = arith.constant dense<0.000000e+00> : vector<16x128xf32>
    %476 = tpu.matmul %473, %475, %cst_261 {dimension_numbers = #tpu.dot_dimension_numbers<[1], [0], [0], [1], [0, 0, 1, 1], [], []>} : vector<16x32xbf16>, vector<32x128xbf16>, vector<16x128xf32> -> vector<16x128xf32>
    %477 = arith.addf %427, %476 : vector<16x128xf32>
    %c7 = arith.constant 7 : index
    %c0_262 = arith.constant 0 : index
    %c0_263 = arith.constant 0 : index
    %478 = vector.load %arg4[%c7, %c0_262, %c0_263] : memref<8x128x32xbf16, #tpu.memory_space<vmem>>, vector<1x128x32xbf16>
    %479 = vector.shape_cast %478 : vector<1x128x32xbf16> to vector<128x32xbf16>
    %cst_264 = arith.constant dense<0.000000e+00> : vector<16x32xf32>
    %480 = tpu.matmul %326, %479, %cst_264 {dimension_numbers = #tpu.dot_dimension_numbers<[1], [0], [0], [1], [0, 0, 1, 1], [], []>} : vector<16x128xbf16>, vector<128x32xbf16>, vector<16x32xf32> -> vector<16x32xf32>
    %c7_265 = arith.constant 7 : index
    %c0_266 = arith.constant 0 : index
    %c0_267 = arith.constant 0 : index
    %481 = vector.load %arg7[%c7_265, %c0_266, %c0_267] : memref<8x1x32xf32, #tpu.memory_space<vmem>>, vector<1x1x32xf32>
    %482 = vector.shape_cast %481 : vector<1x1x32xf32> to vector<1x32xf32>
    %483 = vector.broadcast %482 : vector<1x32xf32> to vector<16x32xf32>
    %484 = arith.addf %480, %483 : vector<16x32xf32>
    %485 = vector.shape_cast %484 : vector<16x32xf32> to vector<2x8x32xf32>
    %c7_268 = arith.constant 7 : index
    %c0_269 = arith.constant 0 : index
    %c0_270 = arith.constant 0 : index
    %486 = vector.load %arg5[%c7_268, %c0_269, %c0_270] : memref<8x128x32xbf16, #tpu.memory_space<vmem>>, vector<1x128x32xbf16>
    %487 = vector.shape_cast %486 : vector<1x128x32xbf16> to vector<128x32xbf16>
    %cst_271 = arith.constant dense<0.000000e+00> : vector<16x32xf32>
    %488 = tpu.matmul %326, %487, %cst_271 {dimension_numbers = #tpu.dot_dimension_numbers<[1], [0], [0], [1], [0, 0, 1, 1], [], []>} : vector<16x128xbf16>, vector<128x32xbf16>, vector<16x32xf32> -> vector<16x32xf32>
    %c7_272 = arith.constant 7 : index
    %c0_273 = arith.constant 0 : index
    %c0_274 = arith.constant 0 : index
    %489 = vector.load %arg8[%c7_272, %c0_273, %c0_274] : memref<8x1x32xf32, #tpu.memory_space<vmem>>, vector<1x1x32xf32>
    %490 = vector.shape_cast %489 : vector<1x1x32xf32> to vector<1x32xf32>
    %491 = vector.broadcast %490 : vector<1x32xf32> to vector<16x32xf32>
    %492 = arith.addf %488, %491 : vector<16x32xf32>
    %493 = vector.shape_cast %492 : vector<16x32xf32> to vector<2x8x32xf32>
    %c7_275 = arith.constant 7 : index
    %c0_276 = arith.constant 0 : index
    %c0_277 = arith.constant 0 : index
    %494 = vector.load %arg6[%c7_275, %c0_276, %c0_277] : memref<8x128x32xbf16, #tpu.memory_space<vmem>>, vector<1x128x32xbf16>
    %495 = vector.shape_cast %494 : vector<1x128x32xbf16> to vector<128x32xbf16>
    %cst_278 = arith.constant dense<0.000000e+00> : vector<16x32xf32>
    %496 = tpu.matmul %326, %495, %cst_278 {dimension_numbers = #tpu.dot_dimension_numbers<[1], [0], [0], [1], [0, 0, 1, 1], [], []>} : vector<16x128xbf16>, vector<128x32xbf16>, vector<16x32xf32> -> vector<16x32xf32>
    %c7_279 = arith.constant 7 : index
    %c0_280 = arith.constant 0 : index
    %c0_281 = arith.constant 0 : index
    %497 = vector.load %arg9[%c7_279, %c0_280, %c0_281] : memref<8x1x32xf32, #tpu.memory_space<vmem>>, vector<1x1x32xf32>
    %498 = vector.shape_cast %497 : vector<1x1x32xf32> to vector<1x32xf32>
    %499 = vector.broadcast %498 : vector<1x32xf32> to vector<16x32xf32>
    %500 = arith.addf %496, %499 : vector<16x32xf32>
    %501 = vector.shape_cast %500 : vector<16x32xf32> to vector<2x8x32xf32>
    %502 = arith.truncf %485 : vector<2x8x32xf32> to vector<2x8x32xbf16>
    %503 = arith.truncf %493 : vector<2x8x32xf32> to vector<2x8x32xbf16>
    "tpu.trace_start"() <{level = 10 : i32, message = "bqd,bkd->bqk"}> : () -> ()
    %cst_282 = arith.constant dense<0.000000e+00> : vector<2x8x8xf32>
    %504 = tpu.matmul %502, %503, %cst_282 {dimension_numbers = #tpu.dot_dimension_numbers<[2], [2], [1], [1], [0, 0, 0, 1, 1, 1], [0], [0]>} : vector<2x8x32xbf16>, vector<2x8x32xbf16>, vector<2x8x8xf32> -> vector<2x8x8xf32>
    "tpu.trace_stop"() : () -> ()
    %cst_283 = arith.constant 0.176776692 : f32
    %505 = vector.broadcast %cst_283 : f32 to vector<2x8x8xf32>
    %506 = arith.mulf %504, %505 : vector<2x8x8xf32>
    %507 = vector.broadcast %27 : vector<2x1x8xf32> to vector<2x8x8xf32>
    %508 = arith.addf %506, %507 : vector<2x8x8xf32>
    %cst_284 = arith.constant dense<0xFF800000> : vector<2x8xf32>
    %509 = vector.multi_reduction <maximumf>, %508, %cst_284 [2] : vector<2x8x8xf32> to vector<2x8xf32>
    %510 = vector.shape_cast %509 : vector<2x8xf32> to vector<2x8x1xf32>
    %511 = vector.broadcast %510 : vector<2x8x1xf32> to vector<2x8x8xf32>
    %512 = arith.subf %508, %511 : vector<2x8x8xf32>
    %513 = math.exp %512 : vector<2x8x8xf32>
    %cst_285 = arith.constant dense<0.000000e+00> : vector<2x8xf32>
    %514 = vector.multi_reduction <add>, %513, %cst_285 [2] : vector<2x8x8xf32> to vector<2x8xf32>
    %515 = vector.shape_cast %514 : vector<2x8xf32> to vector<2x8x1xf32>
    %516 = tpu.reciprocal %515 {approx = true} : vector<2x8x1xf32> -> vector<2x8x1xf32>
    %517 = vector.broadcast %516 : vector<2x8x1xf32> to vector<2x8x8xf32>
    %518 = arith.mulf %513, %517 : vector<2x8x8xf32>
    %519 = arith.truncf %518 : vector<2x8x8xf32> to vector<2x8x8xbf16>
    %520 = arith.truncf %501 : vector<2x8x32xf32> to vector<2x8x32xbf16>
    "tpu.trace_start"() <{level = 10 : i32, message = "bqk,bkd->bqd"}> : () -> ()
    %cst_286 = arith.constant dense<0.000000e+00> : vector<2x8x32xf32>
    %521 = tpu.matmul %519, %520, %cst_286 {dimension_numbers = #tpu.dot_dimension_numbers<[2], [1], [1], [2], [0, 0, 0, 1, 1, 2], [0], [0]>} : vector<2x8x8xbf16>, vector<2x8x32xbf16>, vector<2x8x32xf32> -> vector<2x8x32xf32>
    "tpu.trace_stop"() : () -> ()
    %522 = vector.shape_cast %521 : vector<2x8x32xf32> to vector<16x32xf32>
    %523 = arith.truncf %522 : vector<16x32xf32> to vector<16x32xbf16>
    %c7_287 = arith.constant 7 : index
    %c0_288 = arith.constant 0 : index
    %c0_289 = arith.constant 0 : index
    %524 = vector.load %arg10[%c7_287, %c0_288, %c0_289] : memref<8x32x128xbf16, #tpu.memory_space<vmem>>, vector<1x32x128xbf16>
    %525 = vector.shape_cast %524 : vector<1x32x128xbf16> to vector<32x128xbf16>
    %cst_290 = arith.constant dense<0.000000e+00> : vector<16x128xf32>
    %526 = tpu.matmul %523, %525, %cst_290 {dimension_numbers = #tpu.dot_dimension_numbers<[1], [0], [0], [1], [0, 0, 1, 1], [], []>} : vector<16x32xbf16>, vector<32x128xbf16>, vector<16x128xf32> -> vector<16x128xf32>
    %527 = arith.addf %477, %526 : vector<16x128xf32>
    %c1_291 = arith.constant 1 : index
    %c0_292 = arith.constant 0 : index
    %c0_293 = arith.constant 0 : index
    %528 = vector.load %arg11[%c1_291, %c0_292, %c0_293] : memref<2x1x128xf32, #tpu.memory_space<vmem>>, vector<1x1x128xf32>
    %529 = vector.shape_cast %528 : vector<1x1x128xf32> to vector<1x128xf32>
    %530 = vector.broadcast %529 : vector<1x128xf32> to vector<16x128xf32>
    %531 = arith.addf %527, %530 : vector<16x128xf32>
    %532 = vector.shape_cast %531 : vector<16x128xf32> to vector<2x8x128xf32>
    %533 = arith.addf %324, %532 : vector<2x8x128xf32>
    %c1_294 = arith.constant 1 : index
    %c0_295 = arith.constant 0 : index
    %c0_296 = arith.constant 0 : index
    %534 = vector.load %arg12[%c1_294, %c0_295, %c0_296] : memref<2x1x128xf32, #tpu.memory_space<vmem>>, vector<1x1x128xf32>
    %535 = vector.shape_cast %534 : vector<1x1x128xf32> to vector<1x128xf32>
    %c1_297 = arith.constant 1 : index
    %c0_298 = arith.constant 0 : index
    %c0_299 = arith.constant 0 : index
    %536 = vector.load %arg13[%c1_297, %c0_298, %c0_299] : memref<2x1x128xf32, #tpu.memory_space<vmem>>, vector<1x1x128xf32>
    %537 = vector.shape_cast %536 : vector<1x1x128xf32> to vector<1x128xf32>
    %cst_300 = arith.constant dense<0.000000e+00> : vector<2x8xf32>
    %538 = vector.multi_reduction <add>, %533, %cst_300 [2] : vector<2x8x128xf32> to vector<2x8xf32>
    %539 = vector.shape_cast %538 : vector<2x8xf32> to vector<2x8x1xf32>
    %cst_301 = arith.constant 1.280000e+02 : f32
    %540 = vector.broadcast %cst_301 : f32 to vector<2x8x1xf32>
    %541 = arith.divf %539, %540 : vector<2x8x1xf32>
    %542 = vector.broadcast %541 : vector<2x8x1xf32> to vector<2x8x128xf32>
    %543 = arith.subf %533, %542 : vector<2x8x128xf32>
    %544 = arith.mulf %543, %543 : vector<2x8x128xf32>
    %cst_302 = arith.constant dense<0.000000e+00> : vector<2x8xf32>
    %545 = vector.multi_reduction <add>, %544, %cst_302 [2] : vector<2x8x128xf32> to vector<2x8xf32>
    %546 = vector.shape_cast %545 : vector<2x8xf32> to vector<2x8x1xf32>
    %cst_303 = arith.constant 1.280000e+02 : f32
    %547 = vector.broadcast %cst_303 : f32 to vector<2x8x1xf32>
    %548 = arith.divf %546, %547 : vector<2x8x1xf32>
    %549 = vector.broadcast %541 : vector<2x8x1xf32> to vector<2x8x128xf32>
    %550 = arith.subf %533, %549 : vector<2x8x128xf32>
    %cst_304 = arith.constant 9.99999996E-13 : f32
    %551 = vector.broadcast %cst_304 : f32 to vector<2x8x1xf32>
    %552 = arith.addf %548, %551 : vector<2x8x1xf32>
    %553 = math.rsqrt %552 : vector<2x8x1xf32>
    %554 = vector.broadcast %553 : vector<2x8x1xf32> to vector<2x8x128xf32>
    %555 = arith.mulf %550, %554 : vector<2x8x128xf32>
    %556 = vector.shape_cast %535 : vector<1x128xf32> to vector<1x1x128xf32>
    %557 = vector.broadcast %556 : vector<1x1x128xf32> to vector<2x8x128xf32>
    %558 = arith.mulf %555, %557 : vector<2x8x128xf32>
    %559 = vector.shape_cast %537 : vector<1x128xf32> to vector<1x1x128xf32>
    %560 = vector.broadcast %559 : vector<1x1x128xf32> to vector<2x8x128xf32>
    %561 = arith.addf %558, %560 : vector<2x8x128xf32>
    %562 = vector.shape_cast %561 : vector<2x8x128xf32> to vector<16x128xf32>
    %563 = arith.truncf %562 : vector<16x128xf32> to vector<16x128xbf16>
    %c1_305 = arith.constant 1 : index
    %c0_306 = arith.constant 0 : index
    %c0_307 = arith.constant 0 : index
    %564 = vector.load %arg14[%c1_305, %c0_306, %c0_307] : memref<2x128x256xbf16, #tpu.memory_space<vmem>>, vector<1x128x256xbf16>
    %565 = vector.shape_cast %564 : vector<1x128x256xbf16> to vector<128x256xbf16>
    %cst_308 = arith.constant dense<0.000000e+00> : vector<16x256xf32>
    %566 = tpu.matmul %563, %565, %cst_308 {dimension_numbers = #tpu.dot_dimension_numbers<[1], [0], [0], [1], [0, 0, 1, 1], [], []>} : vector<16x128xbf16>, vector<128x256xbf16>, vector<16x256xf32> -> vector<16x256xf32>
    %c1_309 = arith.constant 1 : index
    %c0_310 = arith.constant 0 : index
    %c0_311 = arith.constant 0 : index
    %567 = vector.load %arg15[%c1_309, %c0_310, %c0_311] : memref<2x1x256xf32, #tpu.memory_space<vmem>>, vector<1x1x256xf32>
    %568 = vector.shape_cast %567 : vector<1x1x256xf32> to vector<1x256xf32>
    %569 = vector.broadcast %568 : vector<1x256xf32> to vector<16x256xf32>
    %570 = arith.addf %566, %569 : vector<16x256xf32>
    %cst_312 = arith.constant 5.000000e-01 : f32
    %571 = vector.broadcast %cst_312 : f32 to vector<16x256xf32>
    %572 = arith.mulf %571, %570 : vector<16x256xf32>
    %cst_313 = arith.constant 4.471500e-02 : f32
    %573 = vector.broadcast %cst_313 : f32 to vector<16x256xf32>
    %574 = arith.mulf %573, %570 : vector<16x256xf32>
    %575 = arith.mulf %574, %570 : vector<16x256xf32>
    %576 = arith.mulf %575, %570 : vector<16x256xf32>
    %577 = arith.addf %570, %576 : vector<16x256xf32>
    %cst_314 = arith.constant 0.797884583 : f32
    %578 = vector.broadcast %cst_314 : f32 to vector<16x256xf32>
    %579 = arith.mulf %578, %577 : vector<16x256xf32>
    %580 = math.tanh %579 : vector<16x256xf32>
    %cst_315 = arith.constant 1.000000e+00 : f32
    %581 = vector.broadcast %cst_315 : f32 to vector<16x256xf32>
    %582 = arith.addf %581, %580 : vector<16x256xf32>
    %583 = arith.mulf %572, %582 : vector<16x256xf32>
    %584 = arith.truncf %583 : vector<16x256xf32> to vector<16x256xbf16>
    %c1_316 = arith.constant 1 : index
    %c0_317 = arith.constant 0 : index
    %c0_318 = arith.constant 0 : index
    %585 = vector.load %arg16[%c1_316, %c0_317, %c0_318] : memref<2x256x128xbf16, #tpu.memory_space<vmem>>, vector<1x256x128xbf16>
    %586 = vector.shape_cast %585 : vector<1x256x128xbf16> to vector<256x128xbf16>
    %cst_319 = arith.constant dense<0.000000e+00> : vector<16x128xf32>
    %587 = tpu.matmul %584, %586, %cst_319 {dimension_numbers = #tpu.dot_dimension_numbers<[1], [0], [0], [1], [0, 0, 1, 1], [], []>} : vector<16x256xbf16>, vector<256x128xbf16>, vector<16x128xf32> -> vector<16x128xf32>
    %c1_320 = arith.constant 1 : index
    %c0_321 = arith.constant 0 : index
    %c0_322 = arith.constant 0 : index
    %588 = vector.load %arg17[%c1_320, %c0_321, %c0_322] : memref<2x1x128xf32, #tpu.memory_space<vmem>>, vector<1x1x128xf32>
    %589 = vector.shape_cast %588 : vector<1x1x128xf32> to vector<1x128xf32>
    %590 = vector.broadcast %589 : vector<1x128xf32> to vector<16x128xf32>
    %591 = arith.addf %587, %590 : vector<16x128xf32>
    %592 = vector.shape_cast %591 : vector<16x128xf32> to vector<2x8x128xf32>
    %593 = arith.addf %561, %592 : vector<2x8x128xf32>
    %c1_323 = arith.constant 1 : index
    %c0_324 = arith.constant 0 : index
    %c0_325 = arith.constant 0 : index
    %594 = vector.load %arg18[%c1_323, %c0_324, %c0_325] : memref<2x1x128xf32, #tpu.memory_space<vmem>>, vector<1x1x128xf32>
    %595 = vector.shape_cast %594 : vector<1x1x128xf32> to vector<1x128xf32>
    %c1_326 = arith.constant 1 : index
    %c0_327 = arith.constant 0 : index
    %c0_328 = arith.constant 0 : index
    %596 = vector.load %arg19[%c1_326, %c0_327, %c0_328] : memref<2x1x128xf32, #tpu.memory_space<vmem>>, vector<1x1x128xf32>
    %597 = vector.shape_cast %596 : vector<1x1x128xf32> to vector<1x128xf32>
    %cst_329 = arith.constant dense<0.000000e+00> : vector<2x8xf32>
    %598 = vector.multi_reduction <add>, %593, %cst_329 [2] : vector<2x8x128xf32> to vector<2x8xf32>
    %599 = vector.shape_cast %598 : vector<2x8xf32> to vector<2x8x1xf32>
    %cst_330 = arith.constant 1.280000e+02 : f32
    %600 = vector.broadcast %cst_330 : f32 to vector<2x8x1xf32>
    %601 = arith.divf %599, %600 : vector<2x8x1xf32>
    %602 = vector.broadcast %601 : vector<2x8x1xf32> to vector<2x8x128xf32>
    %603 = arith.subf %593, %602 : vector<2x8x128xf32>
    %604 = arith.mulf %603, %603 : vector<2x8x128xf32>
    %cst_331 = arith.constant dense<0.000000e+00> : vector<2x8xf32>
    %605 = vector.multi_reduction <add>, %604, %cst_331 [2] : vector<2x8x128xf32> to vector<2x8xf32>
    %606 = vector.shape_cast %605 : vector<2x8xf32> to vector<2x8x1xf32>
    %cst_332 = arith.constant 1.280000e+02 : f32
    %607 = vector.broadcast %cst_332 : f32 to vector<2x8x1xf32>
    %608 = arith.divf %606, %607 : vector<2x8x1xf32>
    %609 = vector.broadcast %601 : vector<2x8x1xf32> to vector<2x8x128xf32>
    %610 = arith.subf %593, %609 : vector<2x8x128xf32>
    %cst_333 = arith.constant 9.99999996E-13 : f32
    %611 = vector.broadcast %cst_333 : f32 to vector<2x8x1xf32>
    %612 = arith.addf %608, %611 : vector<2x8x1xf32>
    %613 = math.rsqrt %612 : vector<2x8x1xf32>
    %614 = vector.broadcast %613 : vector<2x8x1xf32> to vector<2x8x128xf32>
    %615 = arith.mulf %610, %614 : vector<2x8x128xf32>
    %616 = vector.shape_cast %595 : vector<1x128xf32> to vector<1x1x128xf32>
    %617 = vector.broadcast %616 : vector<1x1x128xf32> to vector<2x8x128xf32>
    %618 = arith.mulf %615, %617 : vector<2x8x128xf32>
    %619 = vector.shape_cast %597 : vector<1x128xf32> to vector<1x1x128xf32>
    %620 = vector.broadcast %619 : vector<1x1x128xf32> to vector<2x8x128xf32>
    %621 = arith.addf %618, %620 : vector<2x8x128xf32>
    %622 = vector.extract_strided_slice %621 {offsets = [0, 0, 0], sizes = [2, 1, 128], strides = [1, 1, 1]} : vector<2x8x128xf32> to vector<2x1x128xf32>
    %623 = vector.shape_cast %622 : vector<2x1x128xf32> to vector<2x128xf32>
    %624 = arith.truncf %623 : vector<2x128xf32> to vector<2x128xbf16>
    %c0_334 = arith.constant 0 : index
    %c0_335 = arith.constant 0 : index
    %625 = vector.load %arg20[%c0_334, %c0_335] : memref<128x128xbf16, #tpu.memory_space<vmem>>, vector<128x128xbf16>
    %cst_336 = arith.constant dense<0.000000e+00> : vector<2x128xf32>
    %626 = tpu.matmul %624, %625, %cst_336 {dimension_numbers = #tpu.dot_dimension_numbers<[1], [0], [0], [1], [0, 0, 1, 1], [], []>} : vector<2x128xbf16>, vector<128x128xbf16>, vector<2x128xf32> -> vector<2x128xf32>
    %c0_337 = arith.constant 0 : index
    %c0_338 = arith.constant 0 : index
    %627 = vector.load %arg21[%c0_337, %c0_338] : memref<1x128xf32, #tpu.memory_space<vmem>>, vector<1x128xf32>
    %628 = vector.broadcast %627 : vector<1x128xf32> to vector<2x128xf32>
    %629 = arith.addf %626, %628 : vector<2x128xf32>
    %630 = math.tanh %629 : vector<2x128xf32>
    %631 = arith.truncf %630 : vector<2x128xf32> to vector<2x128xbf16>
    %c0_339 = arith.constant 0 : index
    %c0_340 = arith.constant 0 : index
    %632 = vector.load %arg22[%c0_339, %c0_340] : memref<128x128xbf16, #tpu.memory_space<vmem>>, vector<128x128xbf16>
    %cst_341 = arith.constant dense<0.000000e+00> : vector<2x128xf32>
    %633 = tpu.matmul %631, %632, %cst_341 {dimension_numbers = #tpu.dot_dimension_numbers<[1], [0], [0], [1], [0, 0, 1, 1], [], []>} : vector<2x128xbf16>, vector<128x128xbf16>, vector<2x128xf32> -> vector<2x128xf32>
    %c0_342 = arith.constant 0 : index
    %c0_343 = arith.constant 0 : index
    %634 = vector.load %arg23[%c0_342, %c0_343] : memref<1x128xf32, #tpu.memory_space<vmem>>, vector<1x128xf32>
    %635 = vector.broadcast %634 : vector<1x128xf32> to vector<2x128xf32>
    %636 = arith.addf %633, %635 : vector<2x128xf32>
    %c0_344 = arith.constant 0 : index
    %c0_345 = arith.constant 0 : index
    %637 = vector.load %arg24[%c0_344, %c0_345] : memref<2x128xf32, #tpu.memory_space<vmem>>, vector<2x128xf32>
    tpu.vector_store %arg24[%c0_344, %c0_345], %636 {strides = array<i32>} : memref<2x128xf32, #tpu.memory_space<vmem>>, vector<2x128xf32>,
    return
  }
}

</mosaic_0001>

<llo_original>
// kernel: bert_class_forward.1
$region0: #{bert_class_forward.1}
  #allocation0 [shape = 'u32[]', space=smem, size = 0x4, offset = 0x4, fixed_abs, tag = 'smem constant byte address 0x4 - core index']
  #allocation1 [shape = 'u32[144,128]{1,0:T(1,128)}', space=vmem, size = 0x12000, scoped, tag = 'internal scratch']
  %s0 = inlined_call_operand.vmem [shape: f32[2,8,128], index: 0, kind: input, shape index: {}]
  %s1 = inlined_call_operand.vmem [shape: f32[2,1,8], index: 1, kind: input, shape index: {}]
  %s2 = inlined_call_operand.vmem [shape: f32[1,128], index: 2, kind: input, shape index: {}]
  %s3 = inlined_call_operand.vmem [shape: f32[1,128], index: 3, kind: input, shape index: {}]
  %s4 = inlined_call_operand.vmem [shape: bf16[8,128,32], index: 4, kind: input, shape index: {}]
  %s5 = inlined_call_operand.vmem [shape: bf16[8,128,32], index: 5, kind: input, shape index: {}]
  %s6 = inlined_call_operand.vmem [shape: bf16[8,128,32], index: 6, kind: input, shape index: {}]
  %s7 = inlined_call_operand.vmem [shape: f32[8,1,32], index: 7, kind: input, shape index: {}]
  %s8 = inlined_call_operand.vmem [shape: f32[8,1,32], index: 8, kind: input, shape index: {}]
  %s9 = inlined_call_operand.vmem [shape: f32[8,1,32], index: 9, kind: input, shape index: {}]
  %s10 = inlined_call_operand.vmem [shape: bf16[8,32,128], index: 10, kind: input, shape index: {}]
  %s11 = inlined_call_operand.vmem [shape: f32[2,1,128], index: 11, kind: input, shape index: {}]
  %s12 = inlined_call_operand.vmem [shape: f32[2,1,128], index: 12, kind: input, shape index: {}]
  %s13 = inlined_call_operand.vmem [shape: f32[2,1,128], index: 13, kind: input, shape index: {}]
  %s14 = inlined_call_operand.vmem [shape: bf16[2,128,256], index: 14, kind: input, shape index: {}]
  %s15 = inlined_call_operand.vmem [shape: f32[2,1,256], index: 15, kind: input, shape index: {}]
  %s16 = inlined_call_operand.vmem [shape: bf16[2,256,128], index: 16, kind: input, shape index: {}]
  %s17 = inlined_call_operand.vmem [shape: f32[2,1,128], index: 17, kind: input, shape index: {}]
  %s18 = inlined_call_operand.vmem [shape: f32[2,1,128], index: 18, kind: input, shape index: {}]
  %s19 = inlined_call_operand.vmem [shape: f32[2,1,128], index: 19, kind: input, shape index: {}]
  %s20 = inlined_call_operand.vmem [shape: bf16[128,128], index: 20, kind: input, shape index: {}]
  %s21 = inlined_call_operand.vmem [shape: f32[1,128], index: 21, kind: input, shape index: {}]
  %s22 = inlined_call_operand.vmem [shape: bf16[128,128], index: 22, kind: input, shape index: {}]
  %s23 = inlined_call_operand.vmem [shape: f32[1,128], index: 23, kind: input, shape index: {}]
  %s24 = inlined_call_operand.hbm [shape: f32[2,128], index: 24, kind: output, shape index: {}]
  %s25 = sld [smem:[#allocation0]]
  $region106: #{bert_class_forward.1} parent=0
    _
  %s27 = ssub.s32 1, %s25
  %s28 = scalar_select 0, %s27, %s25
  $region1: #{bert_class_forward.1} parent=0
    #allocation2 [shape = 'u8[1024]{0}', space=vmem, size = 0x400, scoped, tag = 'output window, operand 0, single buffered']
    #allocation3 [shape = 's32[1]{0}', space=sflag, size = 0x4, scoped, tag = 'scoped memory for bert_class_forward.1']
    %29 = vsyncpa [#allocation3], 0
    // Predicated region
    $region2: #{bert_class_forward.1} parent=1 // pred_check
      _
    $region3: #{bert_class_forward.1} parent=1 // pred_check_branch
      %31 = sbr.rel (0) target = $region5
    $region4: #{bert_class_forward.1} parent=1 // pred_region
      _
    $region5: #{bert_class_forward.1} parent=1 // pred_fallthru
      _
    // Predicated region
    $region6: #{bert_class_forward.1} parent=1 // pred_check
      _
    $region7: #{bert_class_forward.1} parent=1 // pred_check_branch
      %33 = sbr.rel (0) target = $region9
    $region8: #{bert_class_forward.1} parent=1 // pred_region
      _
    $region9: #{bert_class_forward.1} parent=1 // pred_fallthru
      _
    // Predicated region
    $region10: #{bert_class_forward.1} parent=1 // pred_check
      _
    $region11: #{bert_class_forward.1} parent=1 // pred_check_branch
      %35 = sbr.rel (0) target = $region13
    $region12: #{bert_class_forward.1} parent=1 // pred_region
      _
    $region13: #{bert_class_forward.1} parent=1 // pred_fallthru
      _
    // Predicated region
    $region14: #{bert_class_forward.1} parent=1 // pred_check
      _
    $region15: #{bert_class_forward.1} parent=1 // pred_check_branch
      %37 = sbr.rel (0) target = $region17
    $region16: #{bert_class_forward.1} parent=1 // pred_region
      _
    $region17: #{bert_class_forward.1} parent=1 // pred_fallthru
      _
    // Predicated region
    $region18: #{bert_class_forward.1} parent=1 // pred_check
      _
    $region19: #{bert_class_forward.1} parent=1 // pred_check_branch
      %39 = sbr.rel (0) target = $region21
    $region20: #{bert_class_forward.1} parent=1 // pred_region
      _
    $region21: #{bert_class_forward.1} parent=1 // pred_fallthru
      _
    // Predicated region
    $region22: #{bert_class_forward.1} parent=1 // pred_check
      _
    $region23: #{bert_class_forward.1} parent=1 // pred_check_branch
      %41 = sbr.rel (0) target = $region25
    $region24: #{bert_class_forward.1} parent=1 // pred_region
      _
    $region25: #{bert_class_forward.1} parent=1 // pred_fallthru
      _
    // Predicated region
    $region26: #{bert_class_forward.1} parent=1 // pred_check
      _
    $region27: #{bert_class_forward.1} parent=1 // pred_check_branch
      %43 = sbr.rel (0) target = $region29
    $region28: #{bert_class_forward.1} parent=1 // pred_region
      _
    $region29: #{bert_class_forward.1} parent=1 // pred_fallthru
      _
    // Predicated region
    $region30: #{bert_class_forward.1} parent=1 // pred_check
      _
    $region31: #{bert_class_forward.1} parent=1 // pred_check_branch
      %45 = sbr.rel (0) target = $region33
    $region32: #{bert_class_forward.1} parent=1 // pred_region
      _
    $region33: #{bert_class_forward.1} parent=1 // pred_fallthru
      _
    // Predicated region
    $region34: #{bert_class_forward.1} parent=1 // pred_check
      _
    $region35: #{bert_class_forward.1} parent=1 // pred_check_branch
      %47 = sbr.rel (0) target = $region37
    $region36: #{bert_class_forward.1} parent=1 // pred_region
      _
    $region37: #{bert_class_forward.1} parent=1 // pred_fallthru
      _
    // Predicated region
    $region38: #{bert_class_forward.1} parent=1 // pred_check
      _
    $region39: #{bert_class_forward.1} parent=1 // pred_check_branch
      %49 = sbr.rel (0) target = $region41
    $region40: #{bert_class_forward.1} parent=1 // pred_region
      _
    $region41: #{bert_class_forward.1} parent=1 // pred_fallthru
      _
    // Predicated region
    $region42: #{bert_class_forward.1} parent=1 // pred_check
      _
    $region43: #{bert_class_forward.1} parent=1 // pred_check_branch
      %51 = sbr.rel (0) target = $region45
    $region44: #{bert_class_forward.1} parent=1 // pred_region
      _
    $region45: #{bert_class_forward.1} parent=1 // pred_fallthru
      _
    // Predicated region
    $region46: #{bert_class_forward.1} parent=1 // pred_check
      _
    $region47: #{bert_class_forward.1} parent=1 // pred_check_branch
      %53 = sbr.rel (0) target = $region49
    $region48: #{bert_class_forward.1} parent=1 // pred_region
      _
    $region49: #{bert_class_forward.1} parent=1 // pred_fallthru
      _
    // Predicated region
    $region50: #{bert_class_forward.1} parent=1 // pred_check
      _
    $region51: #{bert_class_forward.1} parent=1 // pred_check_branch
      %55 = sbr.rel (0) target = $region53
    $region52: #{bert_class_forward.1} parent=1 // pred_region
      _
    $region53: #{bert_class_forward.1} parent=1 // pred_fallthru
      _
    // Predicated region
    $region54: #{bert_class_forward.1} parent=1 // pred_check
      _
    $region55: #{bert_class_forward.1} parent=1 // pred_check_branch
      %57 = sbr.rel (0) target = $region57
    $region56: #{bert_class_forward.1} parent=1 // pred_region
      _
    $region57: #{bert_class_forward.1} parent=1 // pred_fallthru
      _
    // Predicated region
    $region58: #{bert_class_forward.1} parent=1 // pred_check
      _
    $region59: #{bert_class_forward.1} parent=1 // pred_check_branch
      %59 = sbr.rel (0) target = $region61
    $region60: #{bert_class_forward.1} parent=1 // pred_region
      _
    $region61: #{bert_class_forward.1} parent=1 // pred_fallthru
      _
    // Predicated region
    $region62: #{bert_class_forward.1} parent=1 // pred_check
      _
    $region63: #{bert_class_forward.1} parent=1 // pred_check_branch
      %61 = sbr.rel (0) target = $region65
    $region64: #{bert_class_forward.1} parent=1 // pred_region
      _
    $region65: #{bert_class_forward.1} parent=1 // pred_fallthru
      _
    // Predicated region
    $region66: #{bert_class_forward.1} parent=1 // pred_check
      _
    $region67: #{bert_class_forward.1} parent=1 // pred_check_branch
      %63 = sbr.rel (0) target = $region69
    $region68: #{bert_class_forward.1} parent=1 // pred_region
      _
    $region69: #{bert_class_forward.1} parent=1 // pred_fallthru
      _
    // Predicated region
    $region70: #{bert_class_forward.1} parent=1 // pred_check
      _
    $region71: #{bert_class_forward.1} parent=1 // pred_check_branch
      %65 = sbr.rel (0) target = $region73
    $region72: #{bert_class_forward.1} parent=1 // pred_region
      _
    $region73: #{bert_class_forward.1} parent=1 // pred_fallthru
      _
    // Predicated region
    $region74: #{bert_class_forward.1} parent=1 // pred_check
      _
    $region75: #{bert_class_forward.1} parent=1 // pred_check_branch
      %67 = sbr.rel (0) target = $region77
    $region76: #{bert_class_forward.1} parent=1 // pred_region
      _
    $region77: #{bert_class_forward.1} parent=1 // pred_fallthru
      _
    // Predicated region
    $region78: #{bert_class_forward.1} parent=1 // pred_check
      _
    $region79: #{bert_class_forward.1} parent=1 // pred_check_branch
      %69 = sbr.rel (0) target = $region81
    $region80: #{bert_class_forward.1} parent=1 // pred_region
      _
    $region81: #{bert_class_forward.1} parent=1 // pred_fallthru
      _
    // Predicated region
    $region82: #{bert_class_forward.1} parent=1 // pred_check
      _
    $region83: #{bert_class_forward.1} parent=1 // pred_check_branch
      %71 = sbr.rel (0) target = $region85
    $region84: #{bert_class_forward.1} parent=1 // pred_region
      _
    $region85: #{bert_class_forward.1} parent=1 // pred_fallthru
      _
    // Predicated region
    $region86: #{bert_class_forward.1} parent=1 // pred_check
      _
    $region87: #{bert_class_forward.1} parent=1 // pred_check_branch
      %73 = sbr.rel (0) target = $region89
    $region88: #{bert_class_forward.1} parent=1 // pred_region
      _
    $region89: #{bert_class_forward.1} parent=1 // pred_fallthru
      _
    // Predicated region
    $region90: #{bert_class_forward.1} parent=1 // pred_check
      _
    $region91: #{bert_class_forward.1} parent=1 // pred_check_branch
      %75 = sbr.rel (0) target = $region93
    $region92: #{bert_class_forward.1} parent=1 // pred_region
      _
    $region93: #{bert_class_forward.1} parent=1 // pred_fallthru
      _
    // Predicated region
    $region94: #{bert_class_forward.1} parent=1 // pred_check
      _
    $region95: #{bert_class_forward.1} parent=1 // pred_check_branch
      %77 = sbr.rel (0) target = $region97
    $region96: #{bert_class_forward.1} parent=1 // pred_region
      _
    $region97: #{bert_class_forward.1} parent=1 // pred_fallthru
      _
    %v79 = vld [vmem:[%s0] sm:$0xff]
    %v80 = vld [vmem:[%s0 + $0x8] sm:$0xff]
    %v81 = vld [vmem:[%s2] sm:$0x1]
    %v82 = vld [vmem:[%s3] sm:$0x1]
    %83 = vadd.xlane.f32.xlu0 %v79
    %v84 = vpop.xlane.xlu0 %83
    %85 = vadd.xlane.f32.xlu0 %v80
    %v86 = vpop.xlane.xlu0 %85
    %v87 = vrcp.pop 128.0
    %v88 = vmul.f32 %v84, %v87
    %v89 = vmul.f32 %v86, %v87
    %v90 = vsub.f32 %v79, %v88
    %v91 = vsub.f32 %v80, %v89
    %v92 = vmul.f32 %v90, %v90
    %v93 = vmul.f32 %v91, %v91
    %94 = vadd.xlane.f32.xlu0 %v92
    %v95 = vpop.xlane.xlu0 %94
    %96 = vadd.xlane.f32.xlu0 %v93
    %v97 = vpop.xlane.xlu0 %96
    %v98 = vmul.f32 %v95, %v87
    %v99 = vmul.f32 %v97, %v87
    %v100 = vadd.f32 %v98, 1e-12
    %v101 = vadd.f32 %v99, 1e-12
    %v102 = vrsqrt.pop %v100
    %v103 = vrsqrt.pop %v101
    %v104 = vmul.f32 %v90, %v102
    %v105 = vmul.f32 %v91, %v103
    %v107 = vlaneseq
    %v108 = vshrl.u32 %v107, 7
    %v109 = vsub.s32 0, %v108
    %v110 = vrot.slane %v81, %v109
    %v112 = vmul.f32 %v104, %v110
    %v113 = vmul.f32 %v105, %v110
    %v115 = vlaneseq
    %v116 = vshrl.u32 %v115, 7
    %v117 = vsub.s32 0, %v116
    %v118 = vrot.slane %v82, %v117
    %v120 = vadd.f32 %v112, %v118
    %v121 = vadd.f32 %v113, %v118
    %v122 = vld [vmem:[%s1] sm:$0x1]
    %v123 = vld [vmem:[%s1 + $0x1] sm:$0x1]
    %v124 = vpack.c.bf16 %v121, %v120
    %v125 = vld [vmem:[%s4] sm:$0xf]
    %v126 = vld [vmem:[%s4 + $0x4] sm:$0xf]
    %v127 = vld [vmem:[%s4 + $0x8] sm:$0xf]
    %v128 = vld [vmem:[%s4 + $0xc] sm:$0xf]
    %v129 = vld [vmem:[%s4 + $0x10] sm:$0xf]
    %v130 = vld [vmem:[%s4 + $0x14] sm:$0xf]
    %v131 = vld [vmem:[%s4 + $0x18] sm:$0xf]
    %v132 = vld [vmem:[%s4 + $0x1c] sm:$0xf]
    %v133 = vld [vmem:[%s4 + $0x20] sm:$0xf]
    %v134 = vld [vmem:[%s4 + $0x24] sm:$0xf]
    %v135 = vld [vmem:[%s4 + $0x28] sm:$0xf]
    %v136 = vld [vmem:[%s4 + $0x2c] sm:$0xf]
    %v137 = vld [vmem:[%s4 + $0x30] sm:$0xf]
    %v138 = vld [vmem:[%s4 + $0x34] sm:$0xf]
    %v139 = vld [vmem:[%s4 + $0x38] sm:$0xf]
    %v140 = vld [vmem:[%s4 + $0x3c] sm:$0xf]
    %v141 = vld [vmem:[%s7] sm:$0x1]
    %v143 = vlaneseq
    %v144 = vshrl.u32 %v143, 7
    %v145 = vsub.s32 0, %v144
    %v146 = vrot.slane %v141, %v145
    %v164 = vunpack.c.l.b16 %v125
    %v165 = vunpack.c.l.b16 %v126
    %v166 = vunpack.c.l.b16 %v127
    %v167 = vunpack.c.l.b16 %v128
    %v168 = vunpack.c.l.b16 %v129
    %v169 = vunpack.c.l.b16 %v130
    %v170 = vunpack.c.l.b16 %v131
    %v171 = vunpack.c.l.b16 %v132
    %v172 = vunpack.c.l.b16 %v133
    %v173 = vunpack.c.l.b16 %v134
    %v174 = vunpack.c.l.b16 %v135
    %v175 = vunpack.c.l.b16 %v136
    %v176 = vunpack.c.l.b16 %v137
    %v177 = vunpack.c.l.b16 %v138
    %v178 = vunpack.c.l.b16 %v139
    %v179 = vunpack.c.l.b16 %v140
    %v180 = vpack.c.b16 %v165, %v164
    %v181 = vpack.c.b16 %v167, %v166
    %v182 = vpack.c.b16 %v169, %v168
    %v183 = vpack.c.b16 %v171, %v170
    %v184 = vpack.c.b16 %v173, %v172
    %v185 = vpack.c.b16 %v175, %v174
    %v186 = vpack.c.b16 %v177, %v176
    %v187 = vpack.c.b16 %v179, %v178
    %196 = vmatprep.subr.bf16.mxu0 0
    %197 = vmatpush1.bf16.msra.mxu0 %v187
    %198 = vmatprep.subr.bf16.mxu0 0
    %199 = vmatpush1.bf16.msra.mxu0 %v186
    %200 = vmatprep.subr.bf16.mxu0 0
    %201 = vmatpush1.bf16.msra.mxu0 %v185
    %202 = vmatprep.subr.bf16.mxu0 0
    %203 = vmatpush1.bf16.msra.mxu0 %v184
    %204 = vmatprep.subr.bf16.mxu0 0
    %205 = vmatpush1.bf16.msra.mxu0 %v183
    %206 = vmatprep.subr.bf16.mxu0 0
    %207 = vmatpush1.bf16.msra.mxu0 %v182
    %208 = vmatprep.subr.bf16.mxu0 0
    %209 = vmatpush1.bf16.msra.mxu0 %v181
    %210 = vmatprep.subr.bf16.mxu0 0
    %211 = vmatpush1.bf16.msra.mxu0 %v180
    %212 = vmatprep.subr.bf16.mxu0 0
    %213 = vmatpush2.bf16.msra.mxu0 0
    %214 = vmatprep.subr.bf16.mxu0 0
    %215 = vmatpush2.bf16.msra.mxu0 0
    %216 = vmatprep.subr.bf16.mxu0 0
    %217 = vmatpush2.bf16.msra.mxu0 0
    %218 = vmatprep.subr.bf16.mxu0 0
    %219 = vmatpush2.bf16.msra.mxu0 0
    %220 = vmatprep.subr.bf16.mxu0 0
    %221 = vmatpush2.bf16.msra.mxu0 0
    %222 = vmatprep.subr.bf16.mxu0 0
    %223 = vmatpush2.bf16.msra.mxu0 0
    %224 = vmatprep.subr.bf16.mxu0 0
    %225 = vmatpush2.bf16.msra.mxu0 0
    %226 = vmatprep.subr.bf16.mxu0 0
    %227 = vmatpush2.bf16.msra.mxu0 0
    %228 = vmatprep.mubr.bf16.mxu0 0
    %229 = vmatmul.mubr.bf16.gmra.mxu0 %v124
    %v230 = vpop.f32.mrf.mxu0
    %v231 = vadd.f32 %v146, %v230
    %v232 = vpop.f32.mrf.mxu0
    %v233 = vpop.f32.mrf.mxu0
    %v234 = vadd.f32 %v146, %v233
    %v235 = vpop.f32.mrf.mxu0
    %236 = vdwg.mxu0
    %v237 = vld [vmem:[%s5] sm:$0xf]
    %v238 = vld [vmem:[%s5 + $0x4] sm:$0xf]
    %v239 = vld [vmem:[%s5 + $0x8] sm:$0xf]
    %v240 = vld [vmem:[%s5 + $0xc] sm:$0xf]
    %v241 = vld [vmem:[%s5 + $0x10] sm:$0xf]
    %v242 = vld [vmem:[%s5 + $0x14] sm:$0xf]
    %v243 = vld [vmem:[%s5 + $0x18] sm:$0xf]
    %v244 = vld [vmem:[%s5 + $0x1c] sm:$0xf]
    %v245 = vld [vmem:[%s5 + $0x20] sm:$0xf]
    %v246 = vld [vmem:[%s5 + $0x24] sm:$0xf]
    %v247 = vld [vmem:[%s5 + $0x28] sm:$0xf]
    %v248 = vld [vmem:[%s5 + $0x2c] sm:$0xf]
    %v249 = vld [vmem:[%s5 + $0x30] sm:$0xf]
    %v250 = vld [vmem:[%s5 + $0x34] sm:$0xf]
    %v251 = vld [vmem:[%s5 + $0x38] sm:$0xf]
    %v252 = vld [vmem:[%s5 + $0x3c] sm:$0xf]
    %v253 = vld [vmem:[%s8] sm:$0x1]
    %v255 = vlaneseq
    %v256 = vshrl.u32 %v255, 7
    %v257 = vsub.s32 0, %v256
    %v258 = vrot.slane %v253, %v257
    %v276 = vunpack.c.l.b16 %v237
    %v277 = vunpack.c.l.b16 %v238
    %v278 = vunpack.c.l.b16 %v239
    %v279 = vunpack.c.l.b16 %v240
    %v280 = vunpack.c.l.b16 %v241
    %v281 = vunpack.c.l.b16 %v242
    %v282 = vunpack.c.l.b16 %v243
    %v283 = vunpack.c.l.b16 %v244
    %v284 = vunpack.c.l.b16 %v245
    %v285 = vunpack.c.l.b16 %v246
    %v286 = vunpack.c.l.b16 %v247
    %v287 = vunpack.c.l.b16 %v248
    %v288 = vunpack.c.l.b16 %v249
    %v289 = vunpack.c.l.b16 %v250
    %v290 = vunpack.c.l.b16 %v251
    %v291 = vunpack.c.l.b16 %v252
    %v292 = vpack.c.b16 %v277, %v276
    %v293 = vpack.c.b16 %v279, %v278
    %v294 = vpack.c.b16 %v281, %v280
    %v295 = vpack.c.b16 %v283, %v282
    %v296 = vpack.c.b16 %v285, %v284
    %v297 = vpack.c.b16 %v287, %v286
    %v298 = vpack.c.b16 %v289, %v288
    %v299 = vpack.c.b16 %v291, %v290
    %308 = vmatprep.subr.bf16.mxu0 0
    %309 = vmatpush1.bf16.msra.mxu0 %v299
    %310 = vmatprep.subr.bf16.mxu0 0
    %311 = vmatpush1.bf16.msra.mxu0 %v298
    %312 = vmatprep.subr.bf16.mxu0 0
    %313 = vmatpush1.bf16.msra.mxu0 %v297
    %314 = vmatprep.subr.bf16.mxu0 0
    %315 = vmatpush1.bf16.msra.mxu0 %v296
    %316 = vmatprep.subr.bf16.mxu0 0
    %317 = vmatpush1.bf16.msra.mxu0 %v295
    %318 = vmatprep.subr.bf16.mxu0 0
    %319 = vmatpush1.bf16.msra.mxu0 %v294
    %320 = vmatprep.subr.bf16.mxu0 0
    %321 = vmatpush1.bf16.msra.mxu0 %v293
    %322 = vmatprep.subr.bf16.mxu0 0
    %323 = vmatpush1.bf16.msra.mxu0 %v292
    %324 = vmatprep.subr.bf16.mxu0 0
    %325 = vmatpush2.bf16.msra.mxu0 0
    %326 = vmatprep.subr.bf16.mxu0 0
    %327 = vmatpush2.bf16.msra.mxu0 0
    %328 = vmatprep.subr.bf16.mxu0 0
    %329 = vmatpush2.bf16.msra.mxu0 0
    %330 = vmatprep.subr.bf16.mxu0 0
    %331 = vmatpush2.bf16.msra.mxu0 0
    %332 = vmatprep.subr.bf16.mxu0 0
    %333 = vmatpush2.bf16.msra.mxu0 0
    %334 = vmatprep.subr.bf16.mxu0 0
    %335 = vmatpush2.bf16.msra.mxu0 0
    %336 = vmatprep.subr.bf16.mxu0 0
    %337 = vmatpush2.bf16.msra.mxu0 0
    %338 = vmatprep.subr.bf16.mxu0 0
    %339 = vmatpush2.bf16.msra.mxu0 0
    %340 = vmatprep.mubr.bf16.mxu0 0
    %341 = vmatmul.mubr.bf16.gmra.mxu0 %v124
    %v342 = vpop.f32.mrf.mxu0
    %v343 = vadd.f32 %v258, %v342
    %v344 = vpop.f32.mrf.mxu0
    %v345 = vpop.f32.mrf.mxu0
    %v346 = vadd.f32 %v258, %v345
    %v347 = vpop.f32.mrf.mxu0
    %348 = vdwg.mxu0
    %v349 = vld [vmem:[%s6] sm:$0xf]
    %v350 = vld [vmem:[%s6 + $0x4] sm:$0xf]
    %v351 = vld [vmem:[%s6 + $0x8] sm:$0xf]
    %v352 = vld [vmem:[%s6 + $0xc] sm:$0xf]
    %v353 = vld [vmem:[%s6 + $0x10] sm:$0xf]
    %v354 = vld [vmem:[%s6 + $0x14] sm:$0xf]
    %v355 = vld [vmem:[%s6 + $0x18] sm:$0xf]
    %v356 = vld [vmem:[%s6 + $0x1c] sm:$0xf]
    %v357 = vld [vmem:[%s6 + $0x20] sm:$0xf]
    %v358 = vld [vmem:[%s6 + $0x24] sm:$0xf]
    %v359 = vld [vmem:[%s6 + $0x28] sm:$0xf]
    %v360 = vld [vmem:[%s6 + $0x2c] sm:$0xf]
    %v361 = vld [vmem:[%s6 + $0x30] sm:$0xf]
    %v362 = vld [vmem:[%s6 + $0x34] sm:$0xf]
    %v363 = vld [vmem:[%s6 + $0x38] sm:$0xf]
    %v364 = vld [vmem:[%s6 + $0x3c] sm:$0xf]
    %v365 = vld [vmem:[%s9] sm:$0x1]
    %v367 = vlaneseq
    %v368 = vshrl.u32 %v367, 7
    %v369 = vsub.s32 0, %v368
    %v370 = vrot.slane %v365, %v369
    %v388 = vunpack.c.l.b16 %v349
    %v389 = vunpack.c.l.b16 %v350
    %v390 = vunpack.c.l.b16 %v351
    %v391 = vunpack.c.l.b16 %v352
    %v392 = vunpack.c.l.b16 %v353
    %v393 = vunpack.c.l.b16 %v354
    %v394 = vunpack.c.l.b16 %v355
    %v395 = vunpack.c.l.b16 %v356
    %v396 = vunpack.c.l.b16 %v357
    %v397 = vunpack.c.l.b16 %v358
    %v398 = vunpack.c.l.b16 %v359
    %v399 = vunpack.c.l.b16 %v360
    %v400 = vunpack.c.l.b16 %v361
    %v401 = vunpack.c.l.b16 %v362
    %v402 = vunpack.c.l.b16 %v363
    %v403 = vunpack.c.l.b16 %v364
    %v404 = vpack.c.b16 %v389, %v388
    %v405 = vpack.c.b16 %v391, %v390
    %v406 = vpack.c.b16 %v393, %v392
    %v407 = vpack.c.b16 %v395, %v394
    %v408 = vpack.c.b16 %v397, %v396
    %v409 = vpack.c.b16 %v399, %v398
    %v410 = vpack.c.b16 %v401, %v400
    %v411 = vpack.c.b16 %v403, %v402
    %420 = vmatprep.subr.bf16.mxu0 0
    %421 = vmatpush1.bf16.msra.mxu0 %v411
    %422 = vmatprep.subr.bf16.mxu0 0
    %423 = vmatpush1.bf16.msra.mxu0 %v410
    %424 = vmatprep.subr.bf16.mxu0 0
    %425 = vmatpush1.bf16.msra.mxu0 %v409
    %426 = vmatprep.subr.bf16.mxu0 0
    %427 = vmatpush1.bf16.msra.mxu0 %v408
    %428 = vmatprep.subr.bf16.mxu0 0
    %429 = vmatpush1.bf16.msra.mxu0 %v407
    %430 = vmatprep.subr.bf16.mxu0 0
    %431 = vmatpush1.bf16.msra.mxu0 %v406
    %432 = vmatprep.subr.bf16.mxu0 0
    %433 = vmatpush1.bf16.msra.mxu0 %v405
    %434 = vmatprep.subr.bf16.mxu0 0
    %435 = vmatpush1.bf16.msra.mxu0 %v404
    %436 = vmatprep.subr.bf16.mxu0 0
    %437 = vmatpush2.bf16.msra.mxu0 0
    %438 = vmatprep.subr.bf16.mxu0 0
    %439 = vmatpush2.bf16.msra.mxu0 0
    %440 = vmatprep.subr.bf16.mxu0 0
    %441 = vmatpush2.bf16.msra.mxu0 0
    %442 = vmatprep.subr.bf16.mxu0 0
    %443 = vmatpush2.bf16.msra.mxu0 0
    %444 = vmatprep.subr.bf16.mxu0 0
    %445 = vmatpush2.bf16.msra.mxu0 0
    %446 = vmatprep.subr.bf16.mxu0 0
    %447 = vmatpush2.bf16.msra.mxu0 0
    %448 = vmatprep.subr.bf16.mxu0 0
    %449 = vmatpush2.bf16.msra.mxu0 0
    %450 = vmatprep.subr.bf16.mxu0 0
    %451 = vmatpush2.bf16.msra.mxu0 0
    %452 = vmatprep.mubr.bf16.mxu0 0
    %453 = vmatmul.mubr.bf16.gmra.mxu0 %v124
    %v454 = vpop.f32.mrf.mxu0
    %v455 = vadd.f32 %v370, %v454
    %v456 = vpop.f32.mrf.mxu0
    %v457 = vpop.f32.mrf.mxu0
    %v458 = vadd.f32 %v370, %v457
    %v459 = vpop.f32.mrf.mxu0
    %460 = vdwg.mxu0
    %v461 = vpack.c.bf16 %v231, %v231
    %v462 = vpack.c.bf16 %v234, %v234
    %v463 = vpack.c.bf16 %v343, %v343
    %v464 = vpack.c.bf16 %v346, %v346
    %vm465 = vcmask 261120
    %v467 = vsel %vm465, %v461, 0
    %v470 = vsel %vm465, %v463, 0
    %472 = vmatprep.subr.bf16.mxu0 0
    %473 = vmatpush1.bf16.xpose.msra.mxu0 0
    %474 = vmatprep.subr.bf16.mxu0 0
    %475 = vmatpush1.bf16.xpose.msra.mxu0 0
    %476 = vmatprep.subr.bf16.mxu0 0
    %477 = vmatpush1.bf16.xpose.msra.mxu0 0
    %478 = vmatprep.subr.bf16.mxu0 0
    %479 = vmatpush1.bf16.xpose.msra.mxu0 0
    %480 = vmatprep.subr.bf16.mxu0 0
    %481 = vmatpush1.bf16.xpose.msra.mxu0 0
    %482 = vmatprep.subr.bf16.mxu0 0
    %483 = vmatpush1.bf16.xpose.msra.mxu0 0
    %484 = vmatprep.subr.bf16.mxu0 0
    %485 = vmatpush1.bf16.xpose.msra.mxu0 0
    %486 = vmatprep.subr.bf16.mxu0 0
    %487 = vmatpush1.bf16.xpose.msra.mxu0 %v470
    %488 = vmatprep.subr.bf16.mxu0 0
    %489 = vmatpush2.bf16.xpose.msra.mxu0 0
    %490 = vmatprep.subr.bf16.mxu0 0
    %491 = vmatpush2.bf16.xpose.msra.mxu0 0
    %492 = vmatprep.subr.bf16.mxu0 0
    %493 = vmatpush2.bf16.xpose.msra.mxu0 0
    %494 = vmatprep.subr.bf16.mxu0 0
    %495 = vmatpush2.bf16.xpose.msra.mxu0 0
    %496 = vmatprep.subr.bf16.mxu0 0
    %497 = vmatpush2.bf16.xpose.msra.mxu0 0
    %498 = vmatprep.subr.bf16.mxu0 0
    %499 = vmatpush2.bf16.xpose.msra.mxu0 0
    %500 = vmatprep.subr.bf16.mxu0 0
    %501 = vmatpush2.bf16.xpose.msra.mxu0 0
    %502 = vmatprep.subr.bf16.mxu0 0
    %503 = vmatpush2.bf16.xpose.msra.mxu0 0
    %504 = vmatprep.mubr.bf16.mxu0 0
    %505 = vmatmul.mubr.bf16.gmra.mxu0 %v467
    %v506 = vpop.f32.mrf.mxu0
    %v507 = vadd.f32 0.0, %v506
    %v508 = vpop.f32.mrf.mxu0
    %v509 = vpop.f32.mrf.mxu0
    %v510 = vpop.f32.mrf.mxu0
    %511 = vdwg.mxu0
    %v513 = vsel %vm465, %v462, 0
    %v516 = vsel %vm465, %v464, 0
    %518 = vmatprep.subr.bf16.mxu0 0
    %519 = vmatpush1.bf16.xpose.msra.mxu0 0
    %520 = vmatprep.subr.bf16.mxu0 0
    %521 = vmatpush1.bf16.xpose.msra.mxu0 0
    %522 = vmatprep.subr.bf16.mxu0 0
    %523 = vmatpush1.bf16.xpose.msra.mxu0 0
    %524 = vmatprep.subr.bf16.mxu0 0
    %525 = vmatpush1.bf16.xpose.msra.mxu0 0
    %526 = vmatprep.subr.bf16.mxu0 0
    %527 = vmatpush1.bf16.xpose.msra.mxu0 0
    %528 = vmatprep.subr.bf16.mxu0 0
    %529 = vmatpush1.bf16.xpose.msra.mxu0 0
    %530 = vmatprep.subr.bf16.mxu0 0
    %531 = vmatpush1.bf16.xpose.msra.mxu0 0
    %532 = vmatprep.subr.bf16.mxu0 0
    %533 = vmatpush1.bf16.xpose.msra.mxu0 %v516
    %534 = vmatprep.subr.bf16.mxu0 0
    %535 = vmatpush2.bf16.xpose.msra.mxu0 0
    %536 = vmatprep.subr.bf16.mxu0 0
    %537 = vmatpush2.bf16.xpose.msra.mxu0 0
    %538 = vmatprep.subr.bf16.mxu0 0
    %539 = vmatpush2.bf16.xpose.msra.mxu0 0
    %540 = vmatprep.subr.bf16.mxu0 0
    %541 = vmatpush2.bf16.xpose.msra.mxu0 0
    %542 = vmatprep.subr.bf16.mxu0 0
    %543 = vmatpush2.bf16.xpose.msra.mxu0 0
    %544 = vmatprep.subr.bf16.mxu0 0
    %545 = vmatpush2.bf16.xpose.msra.mxu0 0
    %546 = vmatprep.subr.bf16.mxu0 0
    %547 = vmatpush2.bf16.xpose.msra.mxu0 0
    %548 = vmatprep.subr.bf16.mxu0 0
    %549 = vmatpush2.bf16.xpose.msra.mxu0 0
    %550 = vmatprep.mubr.bf16.mxu0 0
    %551 = vmatmul.mubr.bf16.gmra.mxu0 %v513
    %v552 = vpop.f32.mrf.mxu0
    %v553 = vadd.f32 0.0, %v552
    %v554 = vpop.f32.mrf.mxu0
    %v555 = vpop.f32.mrf.mxu0
    %v556 = vpop.f32.mrf.mxu0
    %557 = vdwg.mxu0
    %v558 = vmul.f32 %v507, 0.17677669
    %v559 = vmul.f32 %v553, 0.17677669
    %v562 = vlaneseq
    %v563 = vshrl.u32 %v562, 7
    %v564 = vsub.s32 0, %v563
    %v565 = vrot.slane %v122, %v564
    %v566 = vlaneseq
    %v567 = vshrl.u32 %v566, 7
    %v568 = vsub.s32 0, %v567
    %v569 = vrot.slane %v123, %v568
    %v572 = vadd.f32 %v558, %v565
    %v573 = vadd.f32 %v559, %v569
    %vm574 = vcmask 64512
    %v575 = vsel %vm574, %v572, -inf
    %576 = vmax.xlane.f32.xlu0 %v575
    %v577 = vpop.xlane.xlu0 %576
    %v578 = vsel %vm574, %v573, -inf
    %579 = vmax.xlane.f32.xlu0 %v578
    %v580 = vpop.xlane.xlu0 %579
    %v581 = vsub.f32 %v572, %v577
    %v582 = vsub.f32 %v573, %v580
    %v583 = vmul.f32 %v581, 1.442695
    %v584 = vpow.pop %v583
    %v585 = vmul.f32 %v582, 1.442695
    %v586 = vpow.pop %v585
    %v587 = vsel %vm574, %v584, 0.0
    %588 = vadd.xlane.f32.xlu0 %v587
    %v589 = vpop.xlane.xlu0 %588
    %v590 = vsel %vm574, %v586, 0.0
    %591 = vadd.xlane.f32.xlu0 %v590
    %v592 = vpop.xlane.xlu0 %591
    %v593 = vrcp.pop %v589
    %v594 = vrcp.pop %v592
    %v595 = vmul.f32 %v584, %v593
    %v596 = vmul.f32 %v586, %v594
    %v597 = vpack.c.bf16 %v595, %v595
    %v598 = vpack.c.bf16 %v596, %v596
    %v599 = vpack.c.bf16 %v455, %v455
    %v600 = vpack.c.bf16 %v458, %v458
    %v602 = vsel %vm574, %v597, 0
    %vm604 = vcmask 1043456
    %v606 = vsel %vm604, %v599, 0
    %608 = vmatprep.subr.bf16.mxu0 0
    %609 = vmatpush1.bf16.msra.mxu0 0
    %610 = vmatprep.subr.bf16.mxu0 0
    %611 = vmatpush1.bf16.msra.mxu0 0
    %612 = vmatprep.subr.bf16.mxu0 0
    %613 = vmatpush1.bf16.msra.mxu0 0
    %614 = vmatprep.subr.bf16.mxu0 0
    %615 = vmatpush1.bf16.msra.mxu0 0
    %616 = vmatprep.subr.bf16.mxu0 0
    %617 = vmatpush1.bf16.msra.mxu0 0
    %618 = vmatprep.subr.bf16.mxu0 0
    %619 = vmatpush1.bf16.msra.mxu0 0
    %620 = vmatprep.subr.bf16.mxu0 0
    %621 = vmatpush1.bf16.msra.mxu0 0
    %622 = vmatprep.subr.bf16.mxu0 0
    %623 = vmatpush1.bf16.msra.mxu0 %v606
    %624 = vmatprep.subr.bf16.mxu0 0
    %625 = vmatpush2.bf16.msra.mxu0 0
    %626 = vmatprep.subr.bf16.mxu0 0
    %627 = vmatpush2.bf16.msra.mxu0 0
    %628 = vmatprep.subr.bf16.mxu0 0
    %629 = vmatpush2.bf16.msra.mxu0 0
    %630 = vmatprep.subr.bf16.mxu0 0
    %631 = vmatpush2.bf16.msra.mxu0 0
    %632 = vmatprep.subr.bf16.mxu0 0
    %633 = vmatpush2.bf16.msra.mxu0 0
    %634 = vmatprep.subr.bf16.mxu0 0
    %635 = vmatpush2.bf16.msra.mxu0 0
    %636 = vmatprep.subr.bf16.mxu0 0
    %637 = vmatpush2.bf16.msra.mxu0 0
    %638 = vmatprep.subr.bf16.mxu0 0
    %639 = vmatpush2.bf16.msra.mxu0 0
    %640 = vmatprep.mubr.bf16.mxu0 0
    %641 = vmatmul.mubr.bf16.gmra.mxu0 %v602
    %v642 = vpop.f32.mrf.mxu0
    %v643 = vadd.f32 0.0, %v642
    %v644 = vpop.f32.mrf.mxu0
    %v645 = vpop.f32.mrf.mxu0
    %v646 = vpop.f32.mrf.mxu0
    %647 = vdwg.mxu0
    %v649 = vsel %vm574, %v598, 0
    %v652 = vsel %vm604, %v600, 0
    %654 = vmatprep.subr.bf16.mxu0 0
    %655 = vmatpush1.bf16.msra.mxu0 0
    %656 = vmatprep.subr.bf16.mxu0 0
    %657 = vmatpush1.bf16.msra.mxu0 0
    %658 = vmatprep.subr.bf16.mxu0 0
    %659 = vmatpush1.bf16.msra.mxu0 0
    %660 = vmatprep.subr.bf16.mxu0 0
    %661 = vmatpush1.bf16.msra.mxu0 0
    %662 = vmatprep.subr.bf16.mxu0 0
    %663 = vmatpush1.bf16.msra.mxu0 0
    %664 = vmatprep.subr.bf16.mxu0 0
    %665 = vmatpush1.bf16.msra.mxu0 0
    %666 = vmatprep.subr.bf16.mxu0 0
    %667 = vmatpush1.bf16.msra.mxu0 0
    %668 = vmatprep.subr.bf16.mxu0 0
    %669 = vmatpush1.bf16.msra.mxu0 %v652
    %670 = vmatprep.subr.bf16.mxu0 0
    %671 = vmatpush2.bf16.msra.mxu0 0
    %672 = vmatprep.subr.bf16.mxu0 0
    %673 = vmatpush2.bf16.msra.mxu0 0
    %674 = vmatprep.subr.bf16.mxu0 0
    %675 = vmatpush2.bf16.msra.mxu0 0
    %676 = vmatprep.subr.bf16.mxu0 0
    %677 = vmatpush2.bf16.msra.mxu0 0
    %678 = vmatprep.subr.bf16.mxu0 0
    %679 = vmatpush2.bf16.msra.mxu0 0
    %680 = vmatprep.subr.bf16.mxu0 0
    %681 = vmatpush2.bf16.msra.mxu0 0
    %682 = vmatprep.subr.bf16.mxu0 0
    %683 = vmatpush2.bf16.msra.mxu0 0
    %684 = vmatprep.subr.bf16.mxu0 0
    %685 = vmatpush2.bf16.msra.mxu0 0
    %686 = vmatprep.mubr.bf16.mxu0 0
    %687 = vmatmul.mubr.bf16.gmra.mxu0 %v649
    %v688 = vpop.f32.mrf.mxu0
    %v689 = vadd.f32 0.0, %v688
    %v690 = vpop.f32.mrf.mxu0
    %v691 = vpop.f32.mrf.mxu0
    %v692 = vpop.f32.mrf.mxu0
    %693 = vdwg.mxu0
    %v694 = vpack.c.bf16 %v689, %v643
    %v695 = vld [vmem:[%s10] sm:$0xf]
    %v696 = vld [vmem:[%s10 + $0x4] sm:$0xf]
    %v697 = vld [vmem:[%s10 + $0x8] sm:$0xf]
    %v698 = vld [vmem:[%s10 + $0xc] sm:$0xf]
    %s699 = scalar_lea.vmem %s4, 64
    %v700 = vld [vmem:[%s699] sm:$0xf]
    %v701 = vld [vmem:[%s699 + $0x4] sm:$0xf]
    %v702 = vld [vmem:[%s699 + $0x8] sm:$0xf]
    %v703 = vld [vmem:[%s699 + $0xc] sm:$0xf]
    %v704 = vld [vmem:[%s699 + $0x10] sm:$0xf]
    %v705 = vld [vmem:[%s699 + $0x14] sm:$0xf]
    %v706 = vld [vmem:[%s699 + $0x18] sm:$0xf]
    %v707 = vld [vmem:[%s699 + $0x1c] sm:$0xf]
    %v708 = vld [vmem:[%s699 + $0x20] sm:$0xf]
    %v709 = vld [vmem:[%s699 + $0x24] sm:$0xf]
    %v710 = vld [vmem:[%s699 + $0x28] sm:$0xf]
    %v711 = vld [vmem:[%s699 + $0x2c] sm:$0xf]
    %v712 = vld [vmem:[%s699 + $0x30] sm:$0xf]
    %v713 = vld [vmem:[%s699 + $0x34] sm:$0xf]
    %v714 = vld [vmem:[%s699 + $0x38] sm:$0xf]
    %v715 = vld [vmem:[%s699 + $0x3c] sm:$0xf]
    %s716 = scalar_lea.vmem %s7, 1
    %v717 = vld [vmem:[%s716] sm:$0x1]
    %v719 = vlaneseq
    %v720 = vshrl.u32 %v719, 7
    %v721 = vsub.s32 0, %v720
    %v722 = vrot.slane %v717, %v721
    %v740 = vunpack.c.l.b16 %v700
    %v741 = vunpack.c.l.b16 %v701
    %v742 = vunpack.c.l.b16 %v702
    %v743 = vunpack.c.l.b16 %v703
    %v744 = vunpack.c.l.b16 %v704
    %v745 = vunpack.c.l.b16 %v705
    %v746 = vunpack.c.l.b16 %v706
    %v747 = vunpack.c.l.b16 %v707
    %v748 = vunpack.c.l.b16 %v708
    %v749 = vunpack.c.l.b16 %v709
    %v750 = vunpack.c.l.b16 %v710
    %v751 = vunpack.c.l.b16 %v711
    %v752 = vunpack.c.l.b16 %v712
    %v753 = vunpack.c.l.b16 %v713
    %v754 = vunpack.c.l.b16 %v714
    %v755 = vunpack.c.l.b16 %v715
    %v756 = vpack.c.b16 %v741, %v740
    %v757 = vpack.c.b16 %v743, %v742
    %v758 = vpack.c.b16 %v745, %v744
    %v759 = vpack.c.b16 %v747, %v746
    %v760 = vpack.c.b16 %v749, %v748
    %v761 = vpack.c.b16 %v751, %v750
    %v762 = vpack.c.b16 %v753, %v752
    %v763 = vpack.c.b16 %v755, %v754
    %772 = vmatprep.subr.bf16.mxu0 0
    %773 = vmatpush1.bf16.msra.mxu0 %v763
    %774 = vmatprep.subr.bf16.mxu0 0
    %775 = vmatpush1.bf16.msra.mxu0 %v762
    %776 = vmatprep.subr.bf16.mxu0 0
    %777 = vmatpush1.bf16.msra.mxu0 %v761
    %778 = vmatprep.subr.bf16.mxu0 0
    %779 = vmatpush1.bf16.msra.mxu0 %v760
    %780 = vmatprep.subr.bf16.mxu0 0
    %781 = vmatpush1.bf16.msra.mxu0 %v759
    %782 = vmatprep.subr.bf16.mxu0 0
    %783 = vmatpush1.bf16.msra.mxu0 %v758
    %784 = vmatprep.subr.bf16.mxu0 0
    %785 = vmatpush1.bf16.msra.mxu0 %v757
    %786 = vmatprep.subr.bf16.mxu0 0
    %787 = vmatpush1.bf16.msra.mxu0 %v756
    %788 = vmatprep.subr.bf16.mxu0 0
    %789 = vmatpush2.bf16.msra.mxu0 0
    %790 = vmatprep.subr.bf16.mxu0 0
    %791 = vmatpush2.bf16.msra.mxu0 0
    %792 = vmatprep.subr.bf16.mxu0 0
    %793 = vmatpush2.bf16.msra.mxu0 0
    %794 = vmatprep.subr.bf16.mxu0 0
    %795 = vmatpush2.bf16.msra.mxu0 0
    %796 = vmatprep.subr.bf16.mxu0 0
    %797 = vmatpush2.bf16.msra.mxu0 0
    %798 = vmatprep.subr.bf16.mxu0 0
    %799 = vmatpush2.bf16.msra.mxu0 0
    %800 = vmatprep.subr.bf16.mxu0 0
    %801 = vmatpush2.bf16.msra.mxu0 0
    %802 = vmatprep.subr.bf16.mxu0 0
    %803 = vmatpush2.bf16.msra.mxu0 0
    %804 = vmatprep.mubr.bf16.mxu0 0
    %805 = vmatmul.mubr.bf16.gmra.mxu0 %v124
    %v806 = vpop.f32.mrf.mxu0
    %v807 = vadd.f32 %v722, %v806
    %v808 = vpop.f32.mrf.mxu0
    %v809 = vpop.f32.mrf.mxu0
    %v810 = vadd.f32 %v722, %v809
    %v811 = vpop.f32.mrf.mxu0
    %812 = vdwg.mxu0
    %s813 = scalar_lea.vmem %s5, 64
    %v814 = vld [vmem:[%s813] sm:$0xf]
    %v815 = vld [vmem:[%s813 + $0x4] sm:$0xf]
    %v816 = vld [vmem:[%s813 + $0x8] sm:$0xf]
    %v817 = vld [vmem:[%s813 + $0xc] sm:$0xf]
    %v818 = vld [vmem:[%s813 + $0x10] sm:$0xf]
    %v819 = vld [vmem:[%s813 + $0x14] sm:$0xf]
    %v820 = vld [vmem:[%s813 + $0x18] sm:$0xf]
    %v821 = vld [vmem:[%s813 + $0x1c] sm:$0xf]
    %v822 = vld [vmem:[%s813 + $0x20] sm:$0xf]
    %v823 = vld [vmem:[%s813 + $0x24] sm:$0xf]
    %v824 = vld [vmem:[%s813 + $0x28] sm:$0xf]
    %v825 = vld [vmem:[%s813 + $0x2c] sm:$0xf]
    %v826 = vld [vmem:[%s813 + $0x30] sm:$0xf]
    %v827 = vld [vmem:[%s813 + $0x34] sm:$0xf]
    %v828 = vld [vmem:[%s813 + $0x38] sm:$0xf]
    %v829 = vld [vmem:[%s813 + $0x3c] sm:$0xf]
    %s830 = scalar_lea.vmem %s8, 1
    %v831 = vld [vmem:[%s830] sm:$0x1]
    %v833 = vlaneseq
    %v834 = vshrl.u32 %v833, 7
    %v835 = vsub.s32 0, %v834
    %v836 = vrot.slane %v831, %v835
    %v854 = vunpack.c.l.b16 %v814
    %v855 = vunpack.c.l.b16 %v815
    %v856 = vunpack.c.l.b16 %v816
    %v857 = vunpack.c.l.b16 %v817
    %v858 = vunpack.c.l.b16 %v818
    %v859 = vunpack.c.l.b16 %v819
    %v860 = vunpack.c.l.b16 %v820
    %v861 = vunpack.c.l.b16 %v821
    %v862 = vunpack.c.l.b16 %v822
    %v863 = vunpack.c.l.b16 %v823
    %v864 = vunpack.c.l.b16 %v824
    %v865 = vunpack.c.l.b16 %v825
    %v866 = vunpack.c.l.b16 %v826
    %v867 = vunpack.c.l.b16 %v827
    %v868 = vunpack.c.l.b16 %v828
    %v869 = vunpack.c.l.b16 %v829
    %v870 = vpack.c.b16 %v855, %v854
    %v871 = vpack.c.b16 %v857, %v856
    %v872 = vpack.c.b16 %v859, %v858
    %v873 = vpack.c.b16 %v861, %v860
    %v874 = vpack.c.b16 %v863, %v862
    %v875 = vpack.c.b16 %v865, %v864
    %v876 = vpack.c.b16 %v867, %v866
    %v877 = vpack.c.b16 %v869, %v868
    %886 = vmatprep.subr.bf16.mxu0 0
    %887 = vmatpush1.bf16.msra.mxu0 %v877
    %888 = vmatprep.subr.bf16.mxu0 0
    %889 = vmatpush1.bf16.msra.mxu0 %v876
    %890 = vmatprep.subr.bf16.mxu0 0
    %891 = vmatpush1.bf16.msra.mxu0 %v875
    %892 = vmatprep.subr.bf16.mxu0 0
    %893 = vmatpush1.bf16.msra.mxu0 %v874
    %894 = vmatprep.subr.bf16.mxu0 0
    %895 = vmatpush1.bf16.msra.mxu0 %v873
    %896 = vmatprep.subr.bf16.mxu0 0
    %897 = vmatpush1.bf16.msra.mxu0 %v872
    %898 = vmatprep.subr.bf16.mxu0 0
    %899 = vmatpush1.bf16.msra.mxu0 %v871
    %900 = vmatprep.subr.bf16.mxu0 0
    %901 = vmatpush1.bf16.msra.mxu0 %v870
    %902 = vmatprep.subr.bf16.mxu0 0
    %903 = vmatpush2.bf16.msra.mxu0 0
    %904 = vmatprep.subr.bf16.mxu0 0
    %905 = vmatpush2.bf16.msra.mxu0 0
    %906 = vmatprep.subr.bf16.mxu0 0
    %907 = vmatpush2.bf16.msra.mxu0 0
    %908 = vmatprep.subr.bf16.mxu0 0
    %909 = vmatpush2.bf16.msra.mxu0 0
    %910 = vmatprep.subr.bf16.mxu0 0
    %911 = vmatpush2.bf16.msra.mxu0 0
    %912 = vmatprep.subr.bf16.mxu0 0
    %913 = vmatpush2.bf16.msra.mxu0 0
    %914 = vmatprep.subr.bf16.mxu0 0
    %915 = vmatpush2.bf16.msra.mxu0 0
    %916 = vmatprep.subr.bf16.mxu0 0
    %917 = vmatpush2.bf16.msra.mxu0 0
    %918 = vmatprep.mubr.bf16.mxu0 0
    %919 = vmatmul.mubr.bf16.gmra.mxu0 %v124
    %v920 = vpop.f32.mrf.mxu0
    %v921 = vadd.f32 %v836, %v920
    %v922 = vpop.f32.mrf.mxu0
    %v923 = vpop.f32.mrf.mxu0
    %v924 = vadd.f32 %v836, %v923
    %v925 = vpop.f32.mrf.mxu0
    %926 = vdwg.mxu0
    %s927 = scalar_lea.vmem %s6, 64
    %v928 = vld [vmem:[%s927] sm:$0xf]
    %v929 = vld [vmem:[%s927 + $0x4] sm:$0xf]
    %v930 = vld [vmem:[%s927 + $0x8] sm:$0xf]
    %v931 = vld [vmem:[%s927 + $0xc] sm:$0xf]
    %v932 = vld [vmem:[%s927 + $0x10] sm:$0xf]
    %v933 = vld [vmem:[%s927 + $0x14] sm:$0xf]
    %v934 = vld [vmem:[%s927 + $0x18] sm:$0xf]
    %v935 = vld [vmem:[%s927 + $0x1c] sm:$0xf]
    %v936 = vld [vmem:[%s927 + $0x20] sm:$0xf]
    %v937 = vld [vmem:[%s927 + $0x24] sm:$0xf]
    %v938 = vld [vmem:[%s927 + $0x28] sm:$0xf]
    %v939 = vld [vmem:[%s927 + $0x2c] sm:$0xf]
    %v940 = vld [vmem:[%s927 + $0x30] sm:$0xf]
    %v941 = vld [vmem:[%s927 + $0x34] sm:$0xf]
    %v942 = vld [vmem:[%s927 + $0x38] sm:$0xf]
    %v943 = vld [vmem:[%s927 + $0x3c] sm:$0xf]
    %s944 = scalar_lea.vmem %s9, 1
    %v945 = vld [vmem:[%s944] sm:$0x1]
    %v947 = vlaneseq
    %v948 = vshrl.u32 %v947, 7
    %v949 = vsub.s32 0, %v948
    %v950 = vrot.slane %v945, %v949
    %v968 = vunpack.c.l.b16 %v928
    %v969 = vunpack.c.l.b16 %v929
    %v970 = vunpack.c.l.b16 %v930
    %v971 = vunpack.c.l.b16 %v931
    %v972 = vunpack.c.l.b16 %v932
    %v973 = vunpack.c.l.b16 %v933
    %v974 = vunpack.c.l.b16 %v934
    %v975 = vunpack.c.l.b16 %v935
    %v976 = vunpack.c.l.b16 %v936
    %v977 = vunpack.c.l.b16 %v937
    %v978 = vunpack.c.l.b16 %v938
    %v979 = vunpack.c.l.b16 %v939
    %v980 = vunpack.c.l.b16 %v940
    %v981 = vunpack.c.l.b16 %v941
    %v982 = vunpack.c.l.b16 %v942
    %v983 = vunpack.c.l.b16 %v943
    %v984 = vpack.c.b16 %v969, %v968
    %v985 = vpack.c.b16 %v971, %v970
    %v986 = vpack.c.b16 %v973, %v972
    %v987 = vpack.c.b16 %v975, %v974
    %v988 = vpack.c.b16 %v977, %v976
    %v989 = vpack.c.b16 %v979, %v978
    %v990 = vpack.c.b16 %v981, %v980
    %v991 = vpack.c.b16 %v983, %v982
    %1000 = vmatprep.subr.bf16.mxu0 0
    %1001 = vmatpush1.bf16.msra.mxu0 %v991
    %1002 = vmatprep.subr.bf16.mxu0 0
    %1003 = vmatpush1.bf16.msra.mxu0 %v990
    %1004 = vmatprep.subr.bf16.mxu0 0
    %1005 = vmatpush1.bf16.msra.mxu0 %v989
    %1006 = vmatprep.subr.bf16.mxu0 0
    %1007 = vmatpush1.bf16.msra.mxu0 %v988
    %1008 = vmatprep.subr.bf16.mxu0 0
    %1009 = vmatpush1.bf16.msra.mxu0 %v987
    %1010 = vmatprep.subr.bf16.mxu0 0
    %1011 = vmatpush1.bf16.msra.mxu0 %v986
    %1012 = vmatprep.subr.bf16.mxu0 0
    %1013 = vmatpush1.bf16.msra.mxu0 %v985
    %1014 = vmatprep.subr.bf16.mxu0 0
    %1015 = vmatpush1.bf16.msra.mxu0 %v984
    %1016 = vmatprep.subr.bf16.mxu0 0
    %1017 = vmatpush2.bf16.msra.mxu0 0
    %1018 = vmatprep.subr.bf16.mxu0 0
    %1019 = vmatpush2.bf16.msra.mxu0 0
    %1020 = vmatprep.subr.bf16.mxu0 0
    %1021 = vmatpush2.bf16.msra.mxu0 0
    %1022 = vmatprep.subr.bf16.mxu0 0
    %1023 = vmatpush2.bf16.msra.mxu0 0
    %1024 = vmatprep.subr.bf16.mxu0 0
    %1025 = vmatpush2.bf16.msra.mxu0 0
    %1026 = vmatprep.subr.bf16.mxu0 0
    %1027 = vmatpush2.bf16.msra.mxu0 0
    %1028 = vmatprep.subr.bf16.mxu0 0
    %1029 = vmatpush2.bf16.msra.mxu0 0
    %1030 = vmatprep.subr.bf16.mxu0 0
    %1031 = vmatpush2.bf16.msra.mxu0 0
    %1032 = vmatprep.mubr.bf16.mxu0 0
    %1033 = vmatmul.mubr.bf16.gmra.mxu0 %v124
    %v1034 = vpop.f32.mrf.mxu0
    %v1035 = vadd.f32 %v950, %v1034
    %v1036 = vpop.f32.mrf.mxu0
    %v1037 = vpop.f32.mrf.mxu0
    %v1038 = vadd.f32 %v950, %v1037
    %v1039 = vpop.f32.mrf.mxu0
    %1040 = vdwg.mxu0
    %v1041 = vpack.c.bf16 %v807, %v807
    %v1042 = vpack.c.bf16 %v810, %v810
    %v1043 = vpack.c.bf16 %v921, %v921
    %v1044 = vpack.c.bf16 %v924, %v924
    %v1046 = vsel %vm465, %v1041, 0
    %v1049 = vsel %vm465, %v1043, 0
    %1051 = vmatprep.subr.bf16.mxu0 0
    %1052 = vmatpush1.bf16.xpose.msra.mxu0 0
    %1053 = vmatprep.subr.bf16.mxu0 0
    %1054 = vmatpush1.bf16.xpose.msra.mxu0 0
    %1055 = vmatprep.subr.bf16.mxu0 0
    %1056 = vmatpush1.bf16.xpose.msra.mxu0 0
    %1057 = vmatprep.subr.bf16.mxu0 0
    %1058 = vmatpush1.bf16.xpose.msra.mxu0 0
    %1059 = vmatprep.subr.bf16.mxu0 0
    %1060 = vmatpush1.bf16.xpose.msra.mxu0 0
    %1061 = vmatprep.subr.bf16.mxu0 0
    %1062 = vmatpush1.bf16.xpose.msra.mxu0 0
    %1063 = vmatprep.subr.bf16.mxu0 0
    %1064 = vmatpush1.bf16.xpose.msra.mxu0 0
    %1065 = vmatprep.subr.bf16.mxu0 0
    %1066 = vmatpush1.bf16.xpose.msra.mxu0 %v1049
    %1067 = vmatprep.subr.bf16.mxu0 0
    %1068 = vmatpush2.bf16.xpose.msra.mxu0 0
    %1069 = vmatprep.subr.bf16.mxu0 0
    %1070 = vmatpush2.bf16.xpose.msra.mxu0 0
    %1071 = vmatprep.subr.bf16.mxu0 0
    %1072 = vmatpush2.bf16.xpose.msra.mxu0 0
    %1073 = vmatprep.subr.bf16.mxu0 0
    %1074 = vmatpush2.bf16.xpose.msra.mxu0 0
    %1075 = vmatprep.subr.bf16.mxu0 0
    %1076 = vmatpush2.bf16.xpose.msra.mxu0 0
    %1077 = vmatprep.subr.bf16.mxu0 0
    %1078 = vmatpush2.bf16.xpose.msra.mxu0 0
    %1079 = vmatprep.subr.bf16.mxu0 0
    %1080 = vmatpush2.bf16.xpose.msra.mxu0 0
    %1081 = vmatprep.subr.bf16.mxu0 0
    %1082 = vmatpush2.bf16.xpose.msra.mxu0 0
    %1083 = vmatprep.mubr.bf16.mxu0 0
    %1084 = vmatmul.mubr.bf16.gmra.mxu0 %v1046
    %v1085 = vpop.f32.mrf.mxu0
    %v1086 = vadd.f32 0.0, %v1085
    %v1087 = vpop.f32.mrf.mxu0
    %v1088 = vpop.f32.mrf.mxu0
    %v1089 = vpop.f32.mrf.mxu0
    %1090 = vdwg.mxu0
    %v1092 = vsel %vm465, %v1042, 0
    %v1095 = vsel %vm465, %v1044, 0
    %1097 = vmatprep.subr.bf16.mxu0 0
    %1098 = vmatpush1.bf16.xpose.msra.mxu0 0
    %1099 = vmatprep.subr.bf16.mxu0 0
    %1100 = vmatpush1.bf16.xpose.msra.mxu0 0
    %1101 = vmatprep.subr.bf16.mxu0 0
    %1102 = vmatpush1.bf16.xpose.msra.mxu0 0
    %1103 = vmatprep.subr.bf16.mxu0 0
    %1104 = vmatpush1.bf16.xpose.msra.mxu0 0
    %1105 = vmatprep.subr.bf16.mxu0 0
    %1106 = vmatpush1.bf16.xpose.msra.mxu0 0
    %1107 = vmatprep.subr.bf16.mxu0 0
    %1108 = vmatpush1.bf16.xpose.msra.mxu0 0
    %1109 = vmatprep.subr.bf16.mxu0 0
    %1110 = vmatpush1.bf16.xpose.msra.mxu0 0
    %1111 = vmatprep.subr.bf16.mxu0 0
    %1112 = vmatpush1.bf16.xpose.msra.mxu0 %v1095
    %1113 = vmatprep.subr.bf16.mxu0 0
    %1114 = vmatpush2.bf16.xpose.msra.mxu0 0
    %1115 = vmatprep.subr.bf16.mxu0 0
    %1116 = vmatpush2.bf16.xpose.msra.mxu0 0
    %1117 = vmatprep.subr.bf16.mxu0 0
    %1118 = vmatpush2.bf16.xpose.msra.mxu0 0
    %1119 = vmatprep.subr.bf16.mxu0 0
    %1120 = vmatpush2.bf16.xpose.msra.mxu0 0
    %1121 = vmatprep.subr.bf16.mxu0 0
    %1122 = vmatpush2.bf16.xpose.msra.mxu0 0
    %1123 = vmatprep.subr.bf16.mxu0 0
    %1124 = vmatpush2.bf16.xpose.msra.mxu0 0
    %1125 = vmatprep.subr.bf16.mxu0 0
    %1126 = vmatpush2.bf16.xpose.msra.mxu0 0
    %1127 = vmatprep.subr.bf16.mxu0 0
    %1128 = vmatpush2.bf16.xpose.msra.mxu0 0
    %1129 = vmatprep.mubr.bf16.mxu0 0
    %1130 = vmatmul.mubr.bf16.gmra.mxu0 %v1092
    %v1131 = vpop.f32.mrf.mxu0
    %v1132 = vadd.f32 0.0, %v1131
    %v1133 = vpop.f32.mrf.mxu0
    %v1134 = vpop.f32.mrf.mxu0
    %v1135 = vpop.f32.mrf.mxu0
    %1136 = vdwg.mxu0
    %v1137 = vmul.f32 %v1086, 0.17677669
    %v1138 = vmul.f32 %v1132, 0.17677669
    %v1139 = vadd.f32 %v1137, %v565
    %v1140 = vadd.f32 %v1138, %v569
    %v1141 = vsel %vm574, %v1139, -inf
    %1142 = vmax.xlane.f32.xlu0 %v1141
    %v1143 = vpop.xlane.xlu0 %1142
    %v1144 = vsel %vm574, %v1140, -inf
    %1145 = vmax.xlane.f32.xlu0 %v1144
    %v1146 = vpop.xlane.xlu0 %1145
    %v1147 = vsub.f32 %v1139, %v1143
    %v1148 = vsub.f32 %v1140, %v1146
    %v1149 = vmul.f32 %v1147, 1.442695
    %v1150 = vpow.pop %v1149
    %v1151 = vmul.f32 %v1148, 1.442695
    %v1152 = vpow.pop %v1151
    %v1153 = vsel %vm574, %v1150, 0.0
    %1154 = vadd.xlane.f32.xlu0 %v1153
    %v1155 = vpop.xlane.xlu0 %1154
    %v1156 = vsel %vm574, %v1152, 0.0
    %1157 = vadd.xlane.f32.xlu0 %v1156
    %v1158 = vpop.xlane.xlu0 %1157
    %v1159 = vrcp.pop %v1155
    %v1160 = vrcp.pop %v1158
    %v1161 = vmul.f32 %v1150, %v1159
    %v1162 = vmul.f32 %v1152, %v1160
    %v1163 = vpack.c.bf16 %v1161, %v1161
    %v1164 = vpack.c.bf16 %v1162, %v1162
    %v1165 = vpack.c.bf16 %v1035, %v1035
    %v1166 = vpack.c.bf16 %v1038, %v1038
    %v1168 = vsel %vm574, %v1163, 0
    %v1171 = vsel %vm604, %v1165, 0
    %1173 = vmatprep.subr.bf16.mxu0 0
    %1174 = vmatpush1.bf16.msra.mxu0 0
    %1175 = vmatprep.subr.bf16.mxu0 0
    %1176 = vmatpush1.bf16.msra.mxu0 0
    %1177 = vmatprep.subr.bf16.mxu0 0
    %1178 = vmatpush1.bf16.msra.mxu0 0
    %1179 = vmatprep.subr.bf16.mxu0 0
    %1180 = vmatpush1.bf16.msra.mxu0 0
    %1181 = vmatprep.subr.bf16.mxu0 0
    %1182 = vmatpush1.bf16.msra.mxu0 0
    %1183 = vmatprep.subr.bf16.mxu0 0
    %1184 = vmatpush1.bf16.msra.mxu0 0
    %1185 = vmatprep.subr.bf16.mxu0 0
    %1186 = vmatpush1.bf16.msra.mxu0 0
    %1187 = vmatprep.subr.bf16.mxu0 0
    %1188 = vmatpush1.bf16.msra.mxu0 %v1171
    %1189 = vmatprep.subr.bf16.mxu0 0
    %1190 = vmatpush2.bf16.msra.mxu0 0
    %1191 = vmatprep.subr.bf16.mxu0 0
    %1192 = vmatpush2.bf16.msra.mxu0 0
    %1193 = vmatprep.subr.bf16.mxu0 0
    %1194 = vmatpush2.bf16.msra.mxu0 0
    %1195 = vmatprep.subr.bf16.mxu0 0
    %1196 = vmatpush2.bf16.msra.mxu0 0
    %1197 = vmatprep.subr.bf16.mxu0 0
    %1198 = vmatpush2.bf16.msra.mxu0 0
    %1199 = vmatprep.subr.bf16.mxu0 0
    %1200 = vmatpush2.bf16.msra.mxu0 0
    %1201 = vmatprep.subr.bf16.mxu0 0
    %1202 = vmatpush2.bf16.msra.mxu0 0
    %1203 = vmatprep.subr.bf16.mxu0 0
    %1204 = vmatpush2.bf16.msra.mxu0 0
    %1205 = vmatprep.mubr.bf16.mxu0 0
    %1206 = vmatmul.mubr.bf16.gmra.mxu0 %v1168
    %v1207 = vpop.f32.mrf.mxu0
    %v1208 = vadd.f32 0.0, %v1207
    %v1209 = vpop.f32.mrf.mxu0
    %v1210 = vpop.f32.mrf.mxu0
    %v1211 = vpop.f32.mrf.mxu0
    %1212 = vdwg.mxu0
    %v1214 = vsel %vm574, %v1164, 0
    %v1217 = vsel %vm604, %v1166, 0
    %1219 = vmatprep.subr.bf16.mxu0 0
    %1220 = vmatpush1.bf16.msra.mxu0 0
    %1221 = vmatprep.subr.bf16.mxu0 0
    %1222 = vmatpush1.bf16.msra.mxu0 0
    %1223 = vmatprep.subr.bf16.mxu0 0
    %1224 = vmatpush1.bf16.msra.mxu0 0
    %1225 = vmatprep.subr.bf16.mxu0 0
    %1226 = vmatpush1.bf16.msra.mxu0 0
    %1227 = vmatprep.subr.bf16.mxu0 0
    %1228 = vmatpush1.bf16.msra.mxu0 0
    %1229 = vmatprep.subr.bf16.mxu0 0
    %1230 = vmatpush1.bf16.msra.mxu0 0
    %1231 = vmatprep.subr.bf16.mxu0 0
    %1232 = vmatpush1.bf16.msra.mxu0 0
    %1233 = vmatprep.subr.bf16.mxu0 0
    %1234 = vmatpush1.bf16.msra.mxu0 %v1217
    %1235 = vmatprep.subr.bf16.mxu0 0
    %1236 = vmatpush2.bf16.msra.mxu0 0
    %1237 = vmatprep.subr.bf16.mxu0 0
    %1238 = vmatpush2.bf16.msra.mxu0 0
    %1239 = vmatprep.subr.bf16.mxu0 0
    %1240 = vmatpush2.bf16.msra.mxu0 0
    %1241 = vmatprep.subr.bf16.mxu0 0
    %1242 = vmatpush2.bf16.msra.mxu0 0
    %1243 = vmatprep.subr.bf16.mxu0 0
    %1244 = vmatpush2.bf16.msra.mxu0 0
    %1245 = vmatprep.subr.bf16.mxu0 0
    %1246 = vmatpush2.bf16.msra.mxu0 0
    %1247 = vmatprep.subr.bf16.mxu0 0
    %1248 = vmatpush2.bf16.msra.mxu0 0
    %1249 = vmatprep.subr.bf16.mxu0 0
    %1250 = vmatpush2.bf16.msra.mxu0 0
    %1251 = vmatprep.mubr.bf16.mxu0 0
    %1252 = vmatmul.mubr.bf16.gmra.mxu0 %v1214
    %v1253 = vpop.f32.mrf.mxu0
    %v1254 = vadd.f32 0.0, %v1253
    %v1255 = vpop.f32.mrf.mxu0
    %v1256 = vpop.f32.mrf.mxu0
    %v1257 = vpop.f32.mrf.mxu0
    %1258 = vdwg.mxu0
    %v1259 = vpack.c.bf16 %v1254, %v1208
    %s1260 = scalar_lea.vmem %s10, 16
    %v1261 = vld [vmem:[%s1260] sm:$0xf]
    %v1262 = vld [vmem:[%s1260 + $0x4] sm:$0xf]
    %v1263 = vld [vmem:[%s1260 + $0x8] sm:$0xf]
    %v1264 = vld [vmem:[%s1260 + $0xc] sm:$0xf]
    %v1269 = vunpack.c.l.b16 %v1261
    %v1270 = vunpack.c.l.b16 %v1262
    %v1271 = vunpack.c.l.b16 %v1263
    %v1272 = vunpack.c.l.b16 %v1264
    %v1273 = vpack.c.b16 %v1270, %v1269
    %v1274 = vpack.c.b16 %v1272, %v1271
    %v1278 = vsel %vm465, %v1259, 0
    %1280 = vmatprep.subr.bf16.mxu0 0
    %1281 = vmatpush1.bf16.msra.mxu0 0
    %1282 = vmatprep.subr.bf16.mxu0 0
    %1283 = vmatpush1.bf16.msra.mxu0 0
    %1284 = vmatprep.subr.bf16.mxu0 0
    %1285 = vmatpush1.bf16.msra.mxu0 0
    %1286 = vmatprep.subr.bf16.mxu0 0
    %1287 = vmatpush1.bf16.msra.mxu0 0
    %1288 = vmatprep.subr.bf16.mxu0 0
    %1289 = vmatpush1.bf16.msra.mxu0 0
    %1290 = vmatprep.subr.bf16.mxu0 0
    %1291 = vmatpush1.bf16.msra.mxu0 0
    %1292 = vmatprep.subr.bf16.mxu0 0
    %1293 = vmatpush1.bf16.msra.mxu0 %v1274
    %1294 = vmatprep.subr.bf16.mxu0 0
    %1295 = vmatpush1.bf16.msra.mxu0 %v1273
    %1296 = vmatprep.subr.bf16.mxu0 0
    %1297 = vmatpush2.bf16.msra.mxu0 0
    %1298 = vmatprep.subr.bf16.mxu0 0
    %1299 = vmatpush2.bf16.msra.mxu0 0
    %1300 = vmatprep.subr.bf16.mxu0 0
    %1301 = vmatpush2.bf16.msra.mxu0 0
    %1302 = vmatprep.subr.bf16.mxu0 0
    %1303 = vmatpush2.bf16.msra.mxu0 0
    %1304 = vmatprep.subr.bf16.mxu0 0
    %1305 = vmatpush2.bf16.msra.mxu0 0
    %1306 = vmatprep.subr.bf16.mxu0 0
    %1307 = vmatpush2.bf16.msra.mxu0 0
    %1308 = vmatprep.subr.bf16.mxu0 0
    %1309 = vmatpush2.bf16.msra.mxu0 0
    %1310 = vmatprep.subr.bf16.mxu0 0
    %1311 = vmatpush2.bf16.msra.mxu0 0
    %1312 = vmatprep.mubr.bf16.mxu0 0
    %1313 = vmatmul.mubr.bf16.gmra.mxu0 %v1278
    %v1314 = vpop.f32.mrf.mxu0
    %v1315 = vadd.f32 0.0, %v1314
    %v1316 = vpop.f32.mrf.mxu0
    %v1317 = vpop.f32.mrf.mxu0
    %v1318 = vadd.f32 0.0, %v1317
    %v1319 = vpop.f32.mrf.mxu0
    %1320 = vdwg.mxu0
    %v1325 = vunpack.c.l.b16 %v695
    %v1326 = vunpack.c.l.b16 %v696
    %v1327 = vunpack.c.l.b16 %v697
    %v1328 = vunpack.c.l.b16 %v698
    %v1329 = vpack.c.b16 %v1326, %v1325
    %v1330 = vpack.c.b16 %v1328, %v1327
    %v1334 = vsel %vm465, %v694, 0
    %1336 = vmatprep.subr.bf16.mxu0 0
    %1337 = vmatpush1.bf16.msra.mxu0 0
    %1338 = vmatprep.subr.bf16.mxu0 0
    %1339 = vmatpush1.bf16.msra.mxu0 0
    %1340 = vmatprep.subr.bf16.mxu0 0
    %1341 = vmatpush1.bf16.msra.mxu0 0
    %1342 = vmatprep.subr.bf16.mxu0 0
    %1343 = vmatpush1.bf16.msra.mxu0 0
    %1344 = vmatprep.subr.bf16.mxu0 0
    %1345 = vmatpush1.bf16.msra.mxu0 0
    %1346 = vmatprep.subr.bf16.mxu0 0
    %1347 = vmatpush1.bf16.msra.mxu0 0
    %1348 = vmatprep.subr.bf16.mxu0 0
    %1349 = vmatpush1.bf16.msra.mxu0 %v1330
    %1350 = vmatprep.subr.bf16.mxu0 0
    %1351 = vmatpush1.bf16.msra.mxu0 %v1329
    %1352 = vmatprep.subr.bf16.mxu0 0
    %1353 = vmatpush2.bf16.msra.mxu0 0
    %1354 = vmatprep.subr.bf16.mxu0 0
    %1355 = vmatpush2.bf16.msra.mxu0 0
    %1356 = vmatprep.subr.bf16.mxu0 0
    %1357 = vmatpush2.bf16.msra.mxu0 0
    %1358 = vmatprep.subr.bf16.mxu0 0
    %1359 = vmatpush2.bf16.msra.mxu0 0
    %1360 = vmatprep.subr.bf16.mxu0 0
    %1361 = vmatpush2.bf16.msra.mxu0 0
    %1362 = vmatprep.subr.bf16.mxu0 0
    %1363 = vmatpush2.bf16.msra.mxu0 0
    %1364 = vmatprep.subr.bf16.mxu0 0
    %1365 = vmatpush2.bf16.msra.mxu0 0
    %1366 = vmatprep.subr.bf16.mxu0 0
    %1367 = vmatpush2.bf16.msra.mxu0 0
    %1368 = vmatprep.mubr.bf16.mxu0 0
    %1369 = vmatmul.mubr.bf16.gmra.mxu0 %v1334
    %v1370 = vpop.f32.mrf.mxu0
    %v1371 = vadd.f32 %v1315, %v1370
    %v1372 = vpop.f32.mrf.mxu0
    %v1373 = vpop.f32.mrf.mxu0
    %v1374 = vadd.f32 %v1318, %v1373
    %v1375 = vpop.f32.mrf.mxu0
    %1376 = vdwg.mxu0
    %s1377 = scalar_lea.vmem %s4, 128
    %v1378 = vld [vmem:[%s1377] sm:$0xf]
    %v1379 = vld [vmem:[%s1377 + $0x4] sm:$0xf]
    %v1380 = vld [vmem:[%s1377 + $0x8] sm:$0xf]
    %v1381 = vld [vmem:[%s1377 + $0xc] sm:$0xf]
    %v1382 = vld [vmem:[%s1377 + $0x10] sm:$0xf]
    %v1383 = vld [vmem:[%s1377 + $0x14] sm:$0xf]
    %v1384 = vld [vmem:[%s1377 + $0x18] sm:$0xf]
    %v1385 = vld [vmem:[%s1377 + $0x1c] sm:$0xf]
    %v1386 = vld [vmem:[%s1377 + $0x20] sm:$0xf]
    %v1387 = vld [vmem:[%s1377 + $0x24] sm:$0xf]
    %v1388 = vld [vmem:[%s1377 + $0x28] sm:$0xf]
    %v1389 = vld [vmem:[%s1377 + $0x2c] sm:$0xf]
    %v1390 = vld [vmem:[%s1377 + $0x30] sm:$0xf]
    %v1391 = vld [vmem:[%s1377 + $0x34] sm:$0xf]
    %v1392 = vld [vmem:[%s1377 + $0x38] sm:$0xf]
    %v1393 = vld [vmem:[%s1377 + $0x3c] sm:$0xf]
    %s1394 = scalar_lea.vmem %s7, 2
    %v1395 = vld [vmem:[%s1394] sm:$0x1]
    %v1397 = vlaneseq
    %v1398 = vshrl.u32 %v1397, 7
    %v1399 = vsub.s32 0, %v1398
    %v1400 = vrot.slane %v1395, %v1399
    %v1418 = vunpack.c.l.b16 %v1378
    %v1419 = vunpack.c.l.b16 %v1379
    %v1420 = vunpack.c.l.b16 %v1380
    %v1421 = vunpack.c.l.b16 %v1381
    %v1422 = vunpack.c.l.b16 %v1382
    %v1423 = vunpack.c.l.b16 %v1383
    %v1424 = vunpack.c.l.b16 %v1384
    %v1425 = vunpack.c.l.b16 %v1385
    %v1426 = vunpack.c.l.b16 %v1386
    %v1427 = vunpack.c.l.b16 %v1387
    %v1428 = vunpack.c.l.b16 %v1388
    %v1429 = vunpack.c.l.b16 %v1389
    %v1430 = vunpack.c.l.b16 %v1390
    %v1431 = vunpack.c.l.b16 %v1391
    %v1432 = vunpack.c.l.b16 %v1392
    %v1433 = vunpack.c.l.b16 %v1393
    %v1434 = vpack.c.b16 %v1419, %v1418
    %v1435 = vpack.c.b16 %v1421, %v1420
    %v1436 = vpack.c.b16 %v1423, %v1422
    %v1437 = vpack.c.b16 %v1425, %v1424
    %v1438 = vpack.c.b16 %v1427, %v1426
    %v1439 = vpack.c.b16 %v1429, %v1428
    %v1440 = vpack.c.b16 %v1431, %v1430
    %v1441 = vpack.c.b16 %v1433, %v1432
    %1450 = vmatprep.subr.bf16.mxu0 0
    %1451 = vmatpush1.bf16.msra.mxu0 %v1441
    %1452 = vmatprep.subr.bf16.mxu0 0
    %1453 = vmatpush1.bf16.msra.mxu0 %v1440
    %1454 = vmatprep.subr.bf16.mxu0 0
    %1455 = vmatpush1.bf16.msra.mxu0 %v1439
    %1456 = vmatprep.subr.bf16.mxu0 0
    %1457 = vmatpush1.bf16.msra.mxu0 %v1438
    %1458 = vmatprep.subr.bf16.mxu0 0
    %1459 = vmatpush1.bf16.msra.mxu0 %v1437
    %1460 = vmatprep.subr.bf16.mxu0 0
    %1461 = vmatpush1.bf16.msra.mxu0 %v1436
    %1462 = vmatprep.subr.bf16.mxu0 0
    %1463 = vmatpush1.bf16.msra.mxu0 %v1435
    %1464 = vmatprep.subr.bf16.mxu0 0
    %1465 = vmatpush1.bf16.msra.mxu0 %v1434
    %1466 = vmatprep.subr.bf16.mxu0 0
    %1467 = vmatpush2.bf16.msra.mxu0 0
    %1468 = vmatprep.subr.bf16.mxu0 0
    %1469 = vmatpush2.bf16.msra.mxu0 0
    %1470 = vmatprep.subr.bf16.mxu0 0
    %1471 = vmatpush2.bf16.msra.mxu0 0
    %1472 = vmatprep.subr.bf16.mxu0 0
    %1473 = vmatpush2.bf16.msra.mxu0 0
    %1474 = vmatprep.subr.bf16.mxu0 0
    %1475 = vmatpush2.bf16.msra.mxu0 0
    %1476 = vmatprep.subr.bf16.mxu0 0
    %1477 = vmatpush2.bf16.msra.mxu0 0
    %1478 = vmatprep.subr.bf16.mxu0 0
    %1479 = vmatpush2.bf16.msra.mxu0 0
    %1480 = vmatprep.subr.bf16.mxu0 0
    %1481 = vmatpush2.bf16.msra.mxu0 0
    %1482 = vmatprep.mubr.bf16.mxu0 0
    %1483 = vmatmul.mubr.bf16.gmra.mxu0 %v124
    %v1484 = vpop.f32.mrf.mxu0
    %v1485 = vadd.f32 %v1400, %v1484
    %v1486 = vpop.f32.mrf.mxu0
    %v1487 = vpop.f32.mrf.mxu0
    %v1488 = vadd.f32 %v1400, %v1487
    %v1489 = vpop.f32.mrf.mxu0
    %1490 = vdwg.mxu0
    %s1491 = scalar_lea.vmem %s5, 128
    %v1492 = vld [vmem:[%s1491] sm:$0xf]
    %v1493 = vld [vmem:[%s1491 + $0x4] sm:$0xf]
    %v1494 = vld [vmem:[%s1491 + $0x8] sm:$0xf]
    %v1495 = vld [vmem:[%s1491 + $0xc] sm:$0xf]
    %v1496 = vld [vmem:[%s1491 + $0x10] sm:$0xf]
    %v1497 = vld [vmem:[%s1491 + $0x14] sm:$0xf]
    %v1498 = vld [vmem:[%s1491 + $0x18] sm:$0xf]
    %v1499 = vld [vmem:[%s1491 + $0x1c] sm:$0xf]
    %v1500 = vld [vmem:[%s1491 + $0x20] sm:$0xf]
    %v1501 = vld [vmem:[%s1491 + $0x24] sm:$0xf]
    %v1502 = vld [vmem:[%s1491 + $0x28] sm:$0xf]
    %v1503 = vld [vmem:[%s1491 + $0x2c] sm:$0xf]
    %v1504 = vld [vmem:[%s1491 + $0x30] sm:$0xf]
    %v1505 = vld [vmem:[%s1491 + $0x34] sm:$0xf]
    %v1506 = vld [vmem:[%s1491 + $0x38] sm:$0xf]
    %v1507 = vld [vmem:[%s1491 + $0x3c] sm:$0xf]
    %s1508 = scalar_lea.vmem %s8, 2
    %v1509 = vld [vmem:[%s1508] sm:$0x1]
    %v1511 = vlaneseq
    %v1512 = vshrl.u32 %v1511, 7
    %v1513 = vsub.s32 0, %v1512
    %v1514 = vrot.slane %v1509, %v1513
    %v1532 = vunpack.c.l.b16 %v1492
    %v1533 = vunpack.c.l.b16 %v1493
    %v1534 = vunpack.c.l.b16 %v1494
    %v1535 = vunpack.c.l.b16 %v1495
    %v1536 = vunpack.c.l.b16 %v1496
    %v1537 = vunpack.c.l.b16 %v1497
    %v1538 = vunpack.c.l.b16 %v1498
    %v1539 = vunpack.c.l.b16 %v1499
    %v1540 = vunpack.c.l.b16 %v1500
    %v1541 = vunpack.c.l.b16 %v1501
    %v1542 = vunpack.c.l.b16 %v1502
    %v1543 = vunpack.c.l.b16 %v1503
    %v1544 = vunpack.c.l.b16 %v1504
    %v1545 = vunpack.c.l.b16 %v1505
    %v1546 = vunpack.c.l.b16 %v1506
    %v1547 = vunpack.c.l.b16 %v1507
    %v1548 = vpack.c.b16 %v1533, %v1532
    %v1549 = vpack.c.b16 %v1535, %v1534
    %v1550 = vpack.c.b16 %v1537, %v1536
    %v1551 = vpack.c.b16 %v1539, %v1538
    %v1552 = vpack.c.b16 %v1541, %v1540
    %v1553 = vpack.c.b16 %v1543, %v1542
    %v1554 = vpack.c.b16 %v1545, %v1544
    %v1555 = vpack.c.b16 %v1547, %v1546
    %1564 = vmatprep.subr.bf16.mxu0 0
    %1565 = vmatpush1.bf16.msra.mxu0 %v1555
    %1566 = vmatprep.subr.bf16.mxu0 0
    %1567 = vmatpush1.bf16.msra.mxu0 %v1554
    %1568 = vmatprep.subr.bf16.mxu0 0
    %1569 = vmatpush1.bf16.msra.mxu0 %v1553
    %1570 = vmatprep.subr.bf16.mxu0 0
    %1571 = vmatpush1.bf16.msra.mxu0 %v1552
    %1572 = vmatprep.subr.bf16.mxu0 0
    %1573 = vmatpush1.bf16.msra.mxu0 %v1551
    %1574 = vmatprep.subr.bf16.mxu0 0
    %1575 = vmatpush1.bf16.msra.mxu0 %v1550
    %1576 = vmatprep.subr.bf16.mxu0 0
    %1577 = vmatpush1.bf16.msra.mxu0 %v1549
    %1578 = vmatprep.subr.bf16.mxu0 0
    %1579 = vmatpush1.bf16.msra.mxu0 %v1548
    %1580 = vmatprep.subr.bf16.mxu0 0
    %1581 = vmatpush2.bf16.msra.mxu0 0
    %1582 = vmatprep.subr.bf16.mxu0 0
    %1583 = vmatpush2.bf16.msra.mxu0 0
    %1584 = vmatprep.subr.bf16.mxu0 0
    %1585 = vmatpush2.bf16.msra.mxu0 0
    %1586 = vmatprep.subr.bf16.mxu0 0
    %1587 = vmatpush2.bf16.msra.mxu0 0
    %1588 = vmatprep.subr.bf16.mxu0 0
    %1589 = vmatpush2.bf16.msra.mxu0 0
    %1590 = vmatprep.subr.bf16.mxu0 0
    %1591 = vmatpush2.bf16.msra.mxu0 0
    %1592 = vmatprep.subr.bf16.mxu0 0
    %1593 = vmatpush2.bf16.msra.mxu0 0
    %1594 = vmatprep.subr.bf16.mxu0 0
    %1595 = vmatpush2.bf16.msra.mxu0 0
    %1596 = vmatprep.mubr.bf16.mxu0 0
    %1597 = vmatmul.mubr.bf16.gmra.mxu0 %v124
    %v1598 = vpop.f32.mrf.mxu0
    %v1599 = vadd.f32 %v1514, %v1598
    %v1600 = vpop.f32.mrf.mxu0
    %v1601 = vpop.f32.mrf.mxu0
    %v1602 = vadd.f32 %v1514, %v1601
    %v1603 = vpop.f32.mrf.mxu0
    %1604 = vdwg.mxu0
    %s1605 = scalar_lea.vmem %s6, 128
    %v1606 = vld [vmem:[%s1605] sm:$0xf]
    %v1607 = vld [vmem:[%s1605 + $0x4] sm:$0xf]
    %v1608 = vld [vmem:[%s1605 + $0x8] sm:$0xf]
    %v1609 = vld [vmem:[%s1605 + $0xc] sm:$0xf]
    %v1610 = vld [vmem:[%s1605 + $0x10] sm:$0xf]
    %v1611 = vld [vmem:[%s1605 + $0x14] sm:$0xf]
    %v1612 = vld [vmem:[%s1605 + $0x18] sm:$0xf]
    %v1613 = vld [vmem:[%s1605 + $0x1c] sm:$0xf]
    %v1614 = vld [vmem:[%s1605 + $0x20] sm:$0xf]
    %v1615 = vld [vmem:[%s1605 + $0x24] sm:$0xf]
    %v1616 = vld [vmem:[%s1605 + $0x28] sm:$0xf]
    %v1617 = vld [vmem:[%s1605 + $0x2c] sm:$0xf]
    %v1618 = vld [vmem:[%s1605 + $0x30] sm:$0xf]
    %v1619 = vld [vmem:[%s1605 + $0x34] sm:$0xf]
    %v1620 = vld [vmem:[%s1605 + $0x38] sm:$0xf]
    %v1621 = vld [vmem:[%s1605 + $0x3c] sm:$0xf]
    %s1622 = scalar_lea.vmem %s9, 2
    %v1623 = vld [vmem:[%s1622] sm:$0x1]
    %v1625 = vlaneseq
    %v1626 = vshrl.u32 %v1625, 7
    %v1627 = vsub.s32 0, %v1626
    %v1628 = vrot.slane %v1623, %v1627
    %v1646 = vunpack.c.l.b16 %v1606
    %v1647 = vunpack.c.l.b16 %v1607
    %v1648 = vunpack.c.l.b16 %v1608
    %v1649 = vunpack.c.l.b16 %v1609
    %v1650 = vunpack.c.l.b16 %v1610
    %v1651 = vunpack.c.l.b16 %v1611
    %v1652 = vunpack.c.l.b16 %v1612
    %v1653 = vunpack.c.l.b16 %v1613
    %v1654 = vunpack.c.l.b16 %v1614
    %v1655 = vunpack.c.l.b16 %v1615
    %v1656 = vunpack.c.l.b16 %v1616
    %v1657 = vunpack.c.l.b16 %v1617
    %v1658 = vunpack.c.l.b16 %v1618
    %v1659 = vunpack.c.l.b16 %v1619
    %v1660 = vunpack.c.l.b16 %v1620
    %v1661 = vunpack.c.l.b16 %v1621
    %v1662 = vpack.c.b16 %v1647, %v1646
    %v1663 = vpack.c.b16 %v1649, %v1648
    %v1664 = vpack.c.b16 %v1651, %v1650
    %v1665 = vpack.c.b16 %v1653, %v1652
    %v1666 = vpack.c.b16 %v1655, %v1654
    %v1667 = vpack.c.b16 %v1657, %v1656
    %v1668 = vpack.c.b16 %v1659, %v1658
    %v1669 = vpack.c.b16 %v1661, %v1660
    %1678 = vmatprep.subr.bf16.mxu0 0
    %1679 = vmatpush1.bf16.msra.mxu0 %v1669
    %1680 = vmatprep.subr.bf16.mxu0 0
    %1681 = vmatpush1.bf16.msra.mxu0 %v1668
    %1682 = vmatprep.subr.bf16.mxu0 0
    %1683 = vmatpush1.bf16.msra.mxu0 %v1667
    %1684 = vmatprep.subr.bf16.mxu0 0
    %1685 = vmatpush1.bf16.msra.mxu0 %v1666
    %1686 = vmatprep.subr.bf16.mxu0 0
    %1687 = vmatpush1.bf16.msra.mxu0 %v1665
    %1688 = vmatprep.subr.bf16.mxu0 0
    %1689 = vmatpush1.bf16.msra.mxu0 %v1664
    %1690 = vmatprep.subr.bf16.mxu0 0
    %1691 = vmatpush1.bf16.msra.mxu0 %v1663
    %1692 = vmatprep.subr.bf16.mxu0 0
    %1693 = vmatpush1.bf16.msra.mxu0 %v1662
    %1694 = vmatprep.subr.bf16.mxu0 0
    %1695 = vmatpush2.bf16.msra.mxu0 0
    %1696 = vmatprep.subr.bf16.mxu0 0
    %1697 = vmatpush2.bf16.msra.mxu0 0
    %1698 = vmatprep.subr.bf16.mxu0 0
    %1699 = vmatpush2.bf16.msra.mxu0 0
    %1700 = vmatprep.subr.bf16.mxu0 0
    %1701 = vmatpush2.bf16.msra.mxu0 0
    %1702 = vmatprep.subr.bf16.mxu0 0
    %1703 = vmatpush2.bf16.msra.mxu0 0
    %1704 = vmatprep.subr.bf16.mxu0 0
    %1705 = vmatpush2.bf16.msra.mxu0 0
    %1706 = vmatprep.subr.bf16.mxu0 0
    %1707 = vmatpush2.bf16.msra.mxu0 0
    %1708 = vmatprep.subr.bf16.mxu0 0
    %1709 = vmatpush2.bf16.msra.mxu0 0
    %1710 = vmatprep.mubr.bf16.mxu0 0
    %1711 = vmatmul.mubr.bf16.gmra.mxu0 %v124
    %v1712 = vpop.f32.mrf.mxu0
    %v1713 = vadd.f32 %v1628, %v1712
    %v1714 = vpop.f32.mrf.mxu0
    %v1715 = vpop.f32.mrf.mxu0
    %v1716 = vadd.f32 %v1628, %v1715
    %v1717 = vpop.f32.mrf.mxu0
    %1718 = vdwg.mxu0
    %v1719 = vpack.c.bf16 %v1485, %v1485
    %v1720 = vpack.c.bf16 %v1488, %v1488
    %v1721 = vpack.c.bf16 %v1599, %v1599
    %v1722 = vpack.c.bf16 %v1602, %v1602
    %v1724 = vsel %vm465, %v1719, 0
    %v1727 = vsel %vm465, %v1721, 0
    %1729 = vmatprep.subr.bf16.mxu0 0
    %1730 = vmatpush1.bf16.xpose.msra.mxu0 0
    %1731 = vmatprep.subr.bf16.mxu0 0
    %1732 = vmatpush1.bf16.xpose.msra.mxu0 0
    %1733 = vmatprep.subr.bf16.mxu0 0
    %1734 = vmatpush1.bf16.xpose.msra.mxu0 0
    %1735 = vmatprep.subr.bf16.mxu0 0
    %1736 = vmatpush1.bf16.xpose.msra.mxu0 0
    %1737 = vmatprep.subr.bf16.mxu0 0
    %1738 = vmatpush1.bf16.xpose.msra.mxu0 0
    %1739 = vmatprep.subr.bf16.mxu0 0
    %1740 = vmatpush1.bf16.xpose.msra.mxu0 0
    %1741 = vmatprep.subr.bf16.mxu0 0
    %1742 = vmatpush1.bf16.xpose.msra.mxu0 0
    %1743 = vmatprep.subr.bf16.mxu0 0
    %1744 = vmatpush1.bf16.xpose.msra.mxu0 %v1727
    %1745 = vmatprep.subr.bf16.mxu0 0
    %1746 = vmatpush2.bf16.xpose.msra.mxu0 0
    %1747 = vmatprep.subr.bf16.mxu0 0
    %1748 = vmatpush2.bf16.xpose.msra.mxu0 0
    %1749 = vmatprep.subr.bf16.mxu0 0
    %1750 = vmatpush2.bf16.xpose.msra.mxu0 0
    %1751 = vmatprep.subr.bf16.mxu0 0
    %1752 = vmatpush2.bf16.xpose.msra.mxu0 0
    %1753 = vmatprep.subr.bf16.mxu0 0
    %1754 = vmatpush2.bf16.xpose.msra.mxu0 0
    %1755 = vmatprep.subr.bf16.mxu0 0
    %1756 = vmatpush2.bf16.xpose.msra.mxu0 0
    %1757 = vmatprep.subr.bf16.mxu0 0
    %1758 = vmatpush2.bf16.xpose.msra.mxu0 0
    %1759 = vmatprep.subr.bf16.mxu0 0
    %1760 = vmatpush2.bf16.xpose.msra.mxu0 0
    %1761 = vmatprep.mubr.bf16.mxu0 0
    %1762 = vmatmul.mubr.bf16.gmra.mxu0 %v1724
    %v1763 = vpop.f32.mrf.mxu0
    %v1764 = vadd.f32 0.0, %v1763
    %v1765 = vpop.f32.mrf.mxu0
    %v1766 = vpop.f32.mrf.mxu0
    %v1767 = vpop.f32.mrf.mxu0
    %1768 = vdwg.mxu0
    %v1770 = vsel %vm465, %v1720, 0
    %v1773 = vsel %vm465, %v1722, 0
    %1775 = vmatprep.subr.bf16.mxu0 0
    %1776 = vmatpush1.bf16.xpose.msra.mxu0 0
    %1777 = vmatprep.subr.bf16.mxu0 0
    %1778 = vmatpush1.bf16.xpose.msra.mxu0 0
    %1779 = vmatprep.subr.bf16.mxu0 0
    %1780 = vmatpush1.bf16.xpose.msra.mxu0 0
    %1781 = vmatprep.subr.bf16.mxu0 0
    %1782 = vmatpush1.bf16.xpose.msra.mxu0 0
    %1783 = vmatprep.subr.bf16.mxu0 0
    %1784 = vmatpush1.bf16.xpose.msra.mxu0 0
    %1785 = vmatprep.subr.bf16.mxu0 0
    %1786 = vmatpush1.bf16.xpose.msra.mxu0 0
    %1787 = vmatprep.subr.bf16.mxu0 0
    %1788 = vmatpush1.bf16.xpose.msra.mxu0 0
    %1789 = vmatprep.subr.bf16.mxu0 0
    %1790 = vmatpush1.bf16.xpose.msra.mxu0 %v1773
    %1791 = vmatprep.subr.bf16.mxu0 0
    %1792 = vmatpush2.bf16.xpose.msra.mxu0 0
    %1793 = vmatprep.subr.bf16.mxu0 0
    %1794 = vmatpush2.bf16.xpose.msra.mxu0 0
    %1795 = vmatprep.subr.bf16.mxu0 0
    %1796 = vmatpush2.bf16.xpose.msra.mxu0 0
    %1797 = vmatprep.subr.bf16.mxu0 0
    %1798 = vmatpush2.bf16.xpose.msra.mxu0 0
    %1799 = vmatprep.subr.bf16.mxu0 0
    %1800 = vmatpush2.bf16.xpose.msra.mxu0 0
    %1801 = vmatprep.subr.bf16.mxu0 0
    %1802 = vmatpush2.bf16.xpose.msra.mxu0 0
    %1803 = vmatprep.subr.bf16.mxu0 0
    %1804 = vmatpush2.bf16.xpose.msra.mxu0 0
    %1805 = vmatprep.subr.bf16.mxu0 0
    %1806 = vmatpush2.bf16.xpose.msra.mxu0 0
    %1807 = vmatprep.mubr.bf16.mxu0 0
    %1808 = vmatmul.mubr.bf16.gmra.mxu0 %v1770
    %v1809 = vpop.f32.mrf.mxu0
    %v1810 = vadd.f32 0.0, %v1809
    %v1811 = vpop.f32.mrf.mxu0
    %v1812 = vpop.f32.mrf.mxu0
    %v1813 = vpop.f32.mrf.mxu0
    %1814 = vdwg.mxu0
    %v1815 = vmul.f32 %v1764, 0.17677669
    %v1816 = vmul.f32 %v1810, 0.17677669
    %v1817 = vadd.f32 %v1815, %v565
    %v1818 = vadd.f32 %v1816, %v569
    %v1819 = vsel %vm574, %v1817, -inf
    %1820 = vmax.xlane.f32.xlu0 %v1819
    %v1821 = vpop.xlane.xlu0 %1820
    %v1822 = vsel %vm574, %v1818, -inf
    %1823 = vmax.xlane.f32.xlu0 %v1822
    %v1824 = vpop.xlane.xlu0 %1823
    %v1825 = vsub.f32 %v1817, %v1821
    %v1826 = vsub.f32 %v1818, %v1824
    %v1827 = vmul.f32 %v1825, 1.442695
    %v1828 = vpow.pop %v1827
    %v1829 = vmul.f32 %v1826, 1.442695
    %v1830 = vpow.pop %v1829
    %v1831 = vsel %vm574, %v1828, 0.0
    %1832 = vadd.xlane.f32.xlu0 %v1831
    %v1833 = vpop.xlane.xlu0 %1832
    %v1834 = vsel %vm574, %v1830, 0.0
    %1835 = vadd.xlane.f32.xlu0 %v1834
    %v1836 = vpop.xlane.xlu0 %1835
    %v1837 = vrcp.pop %v1833
    %v1838 = vrcp.pop %v1836
    %v1839 = vmul.f32 %v1828, %v1837
    %v1840 = vmul.f32 %v1830, %v1838
    %v1841 = vpack.c.bf16 %v1839, %v1839
    %v1842 = vpack.c.bf16 %v1840, %v1840
    %v1843 = vpack.c.bf16 %v1713, %v1713
    %v1844 = vpack.c.bf16 %v1716, %v1716
    %v1846 = vsel %vm574, %v1841, 0
    %v1849 = vsel %vm604, %v1843, 0
    %1851 = vmatprep.subr.bf16.mxu0 0
    %1852 = vmatpush1.bf16.msra.mxu0 0
    %1853 = vmatprep.subr.bf16.mxu0 0
    %1854 = vmatpush1.bf16.msra.mxu0 0
    %1855 = vmatprep.subr.bf16.mxu0 0
    %1856 = vmatpush1.bf16.msra.mxu0 0
    %1857 = vmatprep.subr.bf16.mxu0 0
    %1858 = vmatpush1.bf16.msra.mxu0 0
    %1859 = vmatprep.subr.bf16.mxu0 0
    %1860 = vmatpush1.bf16.msra.mxu0 0
    %1861 = vmatprep.subr.bf16.mxu0 0
    %1862 = vmatpush1.bf16.msra.mxu0 0
    %1863 = vmatprep.subr.bf16.mxu0 0
    %1864 = vmatpush1.bf16.msra.mxu0 0
    %1865 = vmatprep.subr.bf16.mxu0 0
    %1866 = vmatpush1.bf16.msra.mxu0 %v1849
    %1867 = vmatprep.subr.bf16.mxu0 0
    %1868 = vmatpush2.bf16.msra.mxu0 0
    %1869 = vmatprep.subr.bf16.mxu0 0
    %1870 = vmatpush2.bf16.msra.mxu0 0
    %1871 = vmatprep.subr.bf16.mxu0 0
    %1872 = vmatpush2.bf16.msra.mxu0 0
    %1873 = vmatprep.subr.bf16.mxu0 0
    %1874 = vmatpush2.bf16.msra.mxu0 0
    %1875 = vmatprep.subr.bf16.mxu0 0
    %1876 = vmatpush2.bf16.msra.mxu0 0
    %1877 = vmatprep.subr.bf16.mxu0 0
    %1878 = vmatpush2.bf16.msra.mxu0 0
    %1879 = vmatprep.subr.bf16.mxu0 0
    %1880 = vmatpush2.bf16.msra.mxu0 0
    %1881 = vmatprep.subr.bf16.mxu0 0
    %1882 = vmatpush2.bf16.msra.mxu0 0
    %1883 = vmatprep.mubr.bf16.mxu0 0
    %1884 = vmatmul.mubr.bf16.gmra.mxu0 %v1846
    %v1885 = vpop.f32.mrf.mxu0
    %v1886 = vadd.f32 0.0, %v1885
    %v1887 = vpop.f32.mrf.mxu0
    %v1888 = vpop.f32.mrf.mxu0
    %v1889 = vpop.f32.mrf.mxu0
    %1890 = vdwg.mxu0
    %v1892 = vsel %vm574, %v1842, 0
    %v1895 = vsel %vm604, %v1844, 0
    %1897 = vmatprep.subr.bf16.mxu0 0
    %1898 = vmatpush1.bf16.msra.mxu0 0
    %1899 = vmatprep.subr.bf16.mxu0 0
    %1900 = vmatpush1.bf16.msra.mxu0 0
    %1901 = vmatprep.subr.bf16.mxu0 0
    %1902 = vmatpush1.bf16.msra.mxu0 0
    %1903 = vmatprep.subr.bf16.mxu0 0
    %1904 = vmatpush1.bf16.msra.mxu0 0
    %1905 = vmatprep.subr.bf16.mxu0 0
    %1906 = vmatpush1.bf16.msra.mxu0 0
    %1907 = vmatprep.subr.bf16.mxu0 0
    %1908 = vmatpush1.bf16.msra.mxu0 0
    %1909 = vmatprep.subr.bf16.mxu0 0
    %1910 = vmatpush1.bf16.msra.mxu0 0
    %1911 = vmatprep.subr.bf16.mxu0 0
    %1912 = vmatpush1.bf16.msra.mxu0 %v1895
    %1913 = vmatprep.subr.bf16.mxu0 0
    %1914 = vmatpush2.bf16.msra.mxu0 0
    %1915 = vmatprep.subr.bf16.mxu0 0
    %1916 = vmatpush2.bf16.msra.mxu0 0
    %1917 = vmatprep.subr.bf16.mxu0 0
    %1918 = vmatpush2.bf16.msra.mxu0 0
    %1919 = vmatprep.subr.bf16.mxu0 0
    %1920 = vmatpush2.bf16.msra.mxu0 0
    %1921 = vmatprep.subr.bf16.mxu0 0
    %1922 = vmatpush2.bf16.msra.mxu0 0
    %1923 = vmatprep.subr.bf16.mxu0 0
    %1924 = vmatpush2.bf16.msra.mxu0 0
    %1925 = vmatprep.subr.bf16.mxu0 0
    %1926 = vmatpush2.bf16.msra.mxu0 0
    %1927 = vmatprep.subr.bf16.mxu0 0
    %1928 = vmatpush2.bf16.msra.mxu0 0
    %1929 = vmatprep.mubr.bf16.mxu0 0
    %1930 = vmatmul.mubr.bf16.gmra.mxu0 %v1892
    %v1931 = vpop.f32.mrf.mxu0
    %v1932 = vadd.f32 0.0, %v1931
    %v1933 = vpop.f32.mrf.mxu0
    %v1934 = vpop.f32.mrf.mxu0
    %v1935 = vpop.f32.mrf.mxu0
    %1936 = vdwg.mxu0
    %v1937 = vpack.c.bf16 %v1932, %v1886
    %s1938 = scalar_lea.vmem %s10, 32
    %v1939 = vld [vmem:[%s1938] sm:$0xf]
    %v1940 = vld [vmem:[%s1938 + $0x4] sm:$0xf]
    %v1941 = vld [vmem:[%s1938 + $0x8] sm:$0xf]
    %v1942 = vld [vmem:[%s1938 + $0xc] sm:$0xf]
    %v1947 = vunpack.c.l.b16 %v1939
    %v1948 = vunpack.c.l.b16 %v1940
    %v1949 = vunpack.c.l.b16 %v1941
    %v1950 = vunpack.c.l.b16 %v1942
    %v1951 = vpack.c.b16 %v1948, %v1947
    %v1952 = vpack.c.b16 %v1950, %v1949
    %v1956 = vsel %vm465, %v1937, 0
    %1958 = vmatprep.subr.bf16.mxu0 0
    %1959 = vmatpush1.bf16.msra.mxu0 0
    %1960 = vmatprep.subr.bf16.mxu0 0
    %1961 = vmatpush1.bf16.msra.mxu0 0
    %1962 = vmatprep.subr.bf16.mxu0 0
    %1963 = vmatpush1.bf16.msra.mxu0 0
    %1964 = vmatprep.subr.bf16.mxu0 0
    %1965 = vmatpush1.bf16.msra.mxu0 0
    %1966 = vmatprep.subr.bf16.mxu0 0
    %1967 = vmatpush1.bf16.msra.mxu0 0
    %1968 = vmatprep.subr.bf16.mxu0 0
    %1969 = vmatpush1.bf16.msra.mxu0 0
    %1970 = vmatprep.subr.bf16.mxu0 0
    %1971 = vmatpush1.bf16.msra.mxu0 %v1952
    %1972 = vmatprep.subr.bf16.mxu0 0
    %1973 = vmatpush1.bf16.msra.mxu0 %v1951
    %1974 = vmatprep.subr.bf16.mxu0 0
    %1975 = vmatpush2.bf16.msra.mxu0 0
    %1976 = vmatprep.subr.bf16.mxu0 0
    %1977 = vmatpush2.bf16.msra.mxu0 0
    %1978 = vmatprep.subr.bf16.mxu0 0
    %1979 = vmatpush2.bf16.msra.mxu0 0
    %1980 = vmatprep.subr.bf16.mxu0 0
    %1981 = vmatpush2.bf16.msra.mxu0 0
    %1982 = vmatprep.subr.bf16.mxu0 0
    %1983 = vmatpush2.bf16.msra.mxu0 0
    %1984 = vmatprep.subr.bf16.mxu0 0
    %1985 = vmatpush2.bf16.msra.mxu0 0
    %1986 = vmatprep.subr.bf16.mxu0 0
    %1987 = vmatpush2.bf16.msra.mxu0 0
    %1988 = vmatprep.subr.bf16.mxu0 0
    %1989 = vmatpush2.bf16.msra.mxu0 0
    %1990 = vmatprep.mubr.bf16.mxu0 0
    %1991 = vmatmul.mubr.bf16.gmra.mxu0 %v1956
    %v1992 = vpop.f32.mrf.mxu0
    %v1993 = vadd.f32 0.0, %v1992
    %v1994 = vpop.f32.mrf.mxu0
    %v1995 = vpop.f32.mrf.mxu0
    %v1996 = vadd.f32 0.0, %v1995
    %v1997 = vpop.f32.mrf.mxu0
    %1998 = vdwg.mxu0
    %v1999 = vadd.f32 %v1371, %v1993
    %v2000 = vadd.f32 %v1374, %v1996
    %s2001 = scalar_lea.vmem %s4, 192
    %v2002 = vld [vmem:[%s2001] sm:$0xf]
    %v2003 = vld [vmem:[%s2001 + $0x4] sm:$0xf]
    %v2004 = vld [vmem:[%s2001 + $0x8] sm:$0xf]
    %v2005 = vld [vmem:[%s2001 + $0xc] sm:$0xf]
    %v2006 = vld [vmem:[%s2001 + $0x10] sm:$0xf]
    %v2007 = vld [vmem:[%s2001 + $0x14] sm:$0xf]
    %v2008 = vld [vmem:[%s2001 + $0x18] sm:$0xf]
    %v2009 = vld [vmem:[%s2001 + $0x1c] sm:$0xf]
    %v2010 = vld [vmem:[%s2001 + $0x20] sm:$0xf]
    %v2011 = vld [vmem:[%s2001 + $0x24] sm:$0xf]
    %v2012 = vld [vmem:[%s2001 + $0x28] sm:$0xf]
    %v2013 = vld [vmem:[%s2001 + $0x2c] sm:$0xf]
    %v2014 = vld [vmem:[%s2001 + $0x30] sm:$0xf]
    %v2015 = vld [vmem:[%s2001 + $0x34] sm:$0xf]
    %v2016 = vld [vmem:[%s2001 + $0x38] sm:$0xf]
    %v2017 = vld [vmem:[%s2001 + $0x3c] sm:$0xf]
    %s2018 = scalar_lea.vmem %s7, 3
    %v2019 = vld [vmem:[%s2018] sm:$0x1]
    %v2021 = vlaneseq
    %v2022 = vshrl.u32 %v2021, 7
    %v2023 = vsub.s32 0, %v2022
    %v2024 = vrot.slane %v2019, %v2023
    %v2042 = vunpack.c.l.b16 %v2002
    %v2043 = vunpack.c.l.b16 %v2003
    %v2044 = vunpack.c.l.b16 %v2004
    %v2045 = vunpack.c.l.b16 %v2005
    %v2046 = vunpack.c.l.b16 %v2006
    %v2047 = vunpack.c.l.b16 %v2007
    %v2048 = vunpack.c.l.b16 %v2008
    %v2049 = vunpack.c.l.b16 %v2009
    %v2050 = vunpack.c.l.b16 %v2010
    %v2051 = vunpack.c.l.b16 %v2011
    %v2052 = vunpack.c.l.b16 %v2012
    %v2053 = vunpack.c.l.b16 %v2013
    %v2054 = vunpack.c.l.b16 %v2014
    %v2055 = vunpack.c.l.b16 %v2015
    %v2056 = vunpack.c.l.b16 %v2016
    %v2057 = vunpack.c.l.b16 %v2017
    %v2058 = vpack.c.b16 %v2043, %v2042
    %v2059 = vpack.c.b16 %v2045, %v2044
    %v2060 = vpack.c.b16 %v2047, %v2046
    %v2061 = vpack.c.b16 %v2049, %v2048
    %v2062 = vpack.c.b16 %v2051, %v2050
    %v2063 = vpack.c.b16 %v2053, %v2052
    %v2064 = vpack.c.b16 %v2055, %v2054
    %v2065 = vpack.c.b16 %v2057, %v2056
    %2074 = vmatprep.subr.bf16.mxu0 0
    %2075 = vmatpush1.bf16.msra.mxu0 %v2065
    %2076 = vmatprep.subr.bf16.mxu0 0
    %2077 = vmatpush1.bf16.msra.mxu0 %v2064
    %2078 = vmatprep.subr.bf16.mxu0 0
    %2079 = vmatpush1.bf16.msra.mxu0 %v2063
    %2080 = vmatprep.subr.bf16.mxu0 0
    %2081 = vmatpush1.bf16.msra.mxu0 %v2062
    %2082 = vmatprep.subr.bf16.mxu0 0
    %2083 = vmatpush1.bf16.msra.mxu0 %v2061
    %2084 = vmatprep.subr.bf16.mxu0 0
    %2085 = vmatpush1.bf16.msra.mxu0 %v2060
    %2086 = vmatprep.subr.bf16.mxu0 0
    %2087 = vmatpush1.bf16.msra.mxu0 %v2059
    %2088 = vmatprep.subr.bf16.mxu0 0
    %2089 = vmatpush1.bf16.msra.mxu0 %v2058
    %2090 = vmatprep.subr.bf16.mxu0 0
    %2091 = vmatpush2.bf16.msra.mxu0 0
    %2092 = vmatprep.subr.bf16.mxu0 0
    %2093 = vmatpush2.bf16.msra.mxu0 0
    %2094 = vmatprep.subr.bf16.mxu0 0
    %2095 = vmatpush2.bf16.msra.mxu0 0
    %2096 = vmatprep.subr.bf16.mxu0 0
    %2097 = vmatpush2.bf16.msra.mxu0 0
    %2098 = vmatprep.subr.bf16.mxu0 0
    %2099 = vmatpush2.bf16.msra.mxu0 0
    %2100 = vmatprep.subr.bf16.mxu0 0
    %2101 = vmatpush2.bf16.msra.mxu0 0
    %2102 = vmatprep.subr.bf16.mxu0 0
    %2103 = vmatpush2.bf16.msra.mxu0 0
    %2104 = vmatprep.subr.bf16.mxu0 0
    %2105 = vmatpush2.bf16.msra.mxu0 0
    %2106 = vmatprep.mubr.bf16.mxu0 0
    %2107 = vmatmul.mubr.bf16.gmra.mxu0 %v124
    %v2108 = vpop.f32.mrf.mxu0
    %v2109 = vadd.f32 %v2024, %v2108
    %v2110 = vpop.f32.mrf.mxu0
    %v2111 = vpop.f32.mrf.mxu0
    %v2112 = vadd.f32 %v2024, %v2111
    %v2113 = vpop.f32.mrf.mxu0
    %2114 = vdwg.mxu0
    %s2115 = scalar_lea.vmem %s5, 192
    %v2116 = vld [vmem:[%s2115] sm:$0xf]
    %v2117 = vld [vmem:[%s2115 + $0x4] sm:$0xf]
    %v2118 = vld [vmem:[%s2115 + $0x8] sm:$0xf]
    %v2119 = vld [vmem:[%s2115 + $0xc] sm:$0xf]
    %v2120 = vld [vmem:[%s2115 + $0x10] sm:$0xf]
    %v2121 = vld [vmem:[%s2115 + $0x14] sm:$0xf]
    %v2122 = vld [vmem:[%s2115 + $0x18] sm:$0xf]
    %v2123 = vld [vmem:[%s2115 + $0x1c] sm:$0xf]
    %v2124 = vld [vmem:[%s2115 + $0x20] sm:$0xf]
    %v2125 = vld [vmem:[%s2115 + $0x24] sm:$0xf]
    %v2126 = vld [vmem:[%s2115 + $0x28] sm:$0xf]
    %v2127 = vld [vmem:[%s2115 + $0x2c] sm:$0xf]
    %v2128 = vld [vmem:[%s2115 + $0x30] sm:$0xf]
    %v2129 = vld [vmem:[%s2115 + $0x34] sm:$0xf]
    %v2130 = vld [vmem:[%s2115 + $0x38] sm:$0xf]
    %v2131 = vld [vmem:[%s2115 + $0x3c] sm:$0xf]
    %s2132 = scalar_lea.vmem %s8, 3
    %v2133 = vld [vmem:[%s2132] sm:$0x1]
    %v2135 = vlaneseq
    %v2136 = vshrl.u32 %v2135, 7
    %v2137 = vsub.s32 0, %v2136
    %v2138 = vrot.slane %v2133, %v2137
    %v2156 = vunpack.c.l.b16 %v2116
    %v2157 = vunpack.c.l.b16 %v2117
    %v2158 = vunpack.c.l.b16 %v2118
    %v2159 = vunpack.c.l.b16 %v2119
    %v2160 = vunpack.c.l.b16 %v2120
    %v2161 = vunpack.c.l.b16 %v2121
    %v2162 = vunpack.c.l.b16 %v2122
    %v2163 = vunpack.c.l.b16 %v2123
    %v2164 = vunpack.c.l.b16 %v2124
    %v2165 = vunpack.c.l.b16 %v2125
    %v2166 = vunpack.c.l.b16 %v2126
    %v2167 = vunpack.c.l.b16 %v2127
    %v2168 = vunpack.c.l.b16 %v2128
    %v2169 = vunpack.c.l.b16 %v2129
    %v2170 = vunpack.c.l.b16 %v2130
    %v2171 = vunpack.c.l.b16 %v2131
    %v2172 = vpack.c.b16 %v2157, %v2156
    %v2173 = vpack.c.b16 %v2159, %v2158
    %v2174 = vpack.c.b16 %v2161, %v2160
    %v2175 = vpack.c.b16 %v2163, %v2162
    %v2176 = vpack.c.b16 %v2165, %v2164
    %v2177 = vpack.c.b16 %v2167, %v2166
    %v2178 = vpack.c.b16 %v2169, %v2168
    %v2179 = vpack.c.b16 %v2171, %v2170
    %2188 = vmatprep.subr.bf16.mxu0 0
    %2189 = vmatpush1.bf16.msra.mxu0 %v2179
    %2190 = vmatprep.subr.bf16.mxu0 0
    %2191 = vmatpush1.bf16.msra.mxu0 %v2178
    %2192 = vmatprep.subr.bf16.mxu0 0
    %2193 = vmatpush1.bf16.msra.mxu0 %v2177
    %2194 = vmatprep.subr.bf16.mxu0 0
    %2195 = vmatpush1.bf16.msra.mxu0 %v2176
    %2196 = vmatprep.subr.bf16.mxu0 0
    %2197 = vmatpush1.bf16.msra.mxu0 %v2175
    %2198 = vmatprep.subr.bf16.mxu0 0
    %2199 = vmatpush1.bf16.msra.mxu0 %v2174
    %2200 = vmatprep.subr.bf16.mxu0 0
    %2201 = vmatpush1.bf16.msra.mxu0 %v2173
    %2202 = vmatprep.subr.bf16.mxu0 0
    %2203 = vmatpush1.bf16.msra.mxu0 %v2172
    %2204 = vmatprep.subr.bf16.mxu0 0
    %2205 = vmatpush2.bf16.msra.mxu0 0
    %2206 = vmatprep.subr.bf16.mxu0 0
    %2207 = vmatpush2.bf16.msra.mxu0 0
    %2208 = vmatprep.subr.bf16.mxu0 0
    %2209 = vmatpush2.bf16.msra.mxu0 0
    %2210 = vmatprep.subr.bf16.mxu0 0
    %2211 = vmatpush2.bf16.msra.mxu0 0
    %2212 = vmatprep.subr.bf16.mxu0 0
    %2213 = vmatpush2.bf16.msra.mxu0 0
    %2214 = vmatprep.subr.bf16.mxu0 0
    %2215 = vmatpush2.bf16.msra.mxu0 0
    %2216 = vmatprep.subr.bf16.mxu0 0
    %2217 = vmatpush2.bf16.msra.mxu0 0
    %2218 = vmatprep.subr.bf16.mxu0 0
    %2219 = vmatpush2.bf16.msra.mxu0 0
    %2220 = vmatprep.mubr.bf16.mxu0 0
    %2221 = vmatmul.mubr.bf16.gmra.mxu0 %v124
    %v2222 = vpop.f32.mrf.mxu0
    %v2223 = vadd.f32 %v2138, %v2222
    %v2224 = vpop.f32.mrf.mxu0
    %v2225 = vpop.f32.mrf.mxu0
    %v2226 = vadd.f32 %v2138, %v2225
    %v2227 = vpop.f32.mrf.mxu0
    %2228 = vdwg.mxu0
    %s2229 = scalar_lea.vmem %s6, 192
    %v2230 = vld [vmem:[%s2229] sm:$0xf]
    %v2231 = vld [vmem:[%s2229 + $0x4] sm:$0xf]
    %v2232 = vld [vmem:[%s2229 + $0x8] sm:$0xf]
    %v2233 = vld [vmem:[%s2229 + $0xc] sm:$0xf]
    %v2234 = vld [vmem:[%s2229 + $0x10] sm:$0xf]
    %v2235 = vld [vmem:[%s2229 + $0x14] sm:$0xf]
    %v2236 = vld [vmem:[%s2229 + $0x18] sm:$0xf]
    %v2237 = vld [vmem:[%s2229 + $0x1c] sm:$0xf]
    %v2238 = vld [vmem:[%s2229 + $0x20] sm:$0xf]
    %v2239 = vld [vmem:[%s2229 + $0x24] sm:$0xf]
    %v2240 = vld [vmem:[%s2229 + $0x28] sm:$0xf]
    %v2241 = vld [vmem:[%s2229 + $0x2c] sm:$0xf]
    %v2242 = vld [vmem:[%s2229 + $0x30] sm:$0xf]
    %v2243 = vld [vmem:[%s2229 + $0x34] sm:$0xf]
    %v2244 = vld [vmem:[%s2229 + $0x38] sm:$0xf]
    %v2245 = vld [vmem:[%s2229 + $0x3c] sm:$0xf]
    %s2246 = scalar_lea.vmem %s9, 3
    %v2247 = vld [vmem:[%s2246] sm:$0x1]
    %v2249 = vlaneseq
    %v2250 = vshrl.u32 %v2249, 7
    %v2251 = vsub.s32 0, %v2250
    %v2252 = vrot.slane %v2247, %v2251
    %v2270 = vunpack.c.l.b16 %v2230
    %v2271 = vunpack.c.l.b16 %v2231
    %v2272 = vunpack.c.l.b16 %v2232
    %v2273 = vunpack.c.l.b16 %v2233
    %v2274 = vunpack.c.l.b16 %v2234
    %v2275 = vunpack.c.l.b16 %v2235
    %v2276 = vunpack.c.l.b16 %v2236
    %v2277 = vunpack.c.l.b16 %v2237
    %v2278 = vunpack.c.l.b16 %v2238
    %v2279 = vunpack.c.l.b16 %v2239
    %v2280 = vunpack.c.l.b16 %v2240
    %v2281 = vunpack.c.l.b16 %v2241
    %v2282 = vunpack.c.l.b16 %v2242
    %v2283 = vunpack.c.l.b16 %v2243
    %v2284 = vunpack.c.l.b16 %v2244
    %v2285 = vunpack.c.l.b16 %v2245
    %v2286 = vpack.c.b16 %v2271, %v2270
    %v2287 = vpack.c.b16 %v2273, %v2272
    %v2288 = vpack.c.b16 %v2275, %v2274
    %v2289 = vpack.c.b16 %v2277, %v2276
    %v2290 = vpack.c.b16 %v2279, %v2278
    %v2291 = vpack.c.b16 %v2281, %v2280
    %v2292 = vpack.c.b16 %v2283, %v2282
    %v2293 = vpack.c.b16 %v2285, %v2284
    %2302 = vmatprep.subr.bf16.mxu0 0
    %2303 = vmatpush1.bf16.msra.mxu0 %v2293
    %2304 = vmatprep.subr.bf16.mxu0 0
    %2305 = vmatpush1.bf16.msra.mxu0 %v2292
    %2306 = vmatprep.subr.bf16.mxu0 0
    %2307 = vmatpush1.bf16.msra.mxu0 %v2291
    %2308 = vmatprep.subr.bf16.mxu0 0
    %2309 = vmatpush1.bf16.msra.mxu0 %v2290
    %2310 = vmatprep.subr.bf16.mxu0 0
    %2311 = vmatpush1.bf16.msra.mxu0 %v2289
    %2312 = vmatprep.subr.bf16.mxu0 0
    %2313 = vmatpush1.bf16.msra.mxu0 %v2288
    %2314 = vmatprep.subr.bf16.mxu0 0
    %2315 = vmatpush1.bf16.msra.mxu0 %v2287
    %2316 = vmatprep.subr.bf16.mxu0 0
    %2317 = vmatpush1.bf16.msra.mxu0 %v2286
    %2318 = vmatprep.subr.bf16.mxu0 0
    %2319 = vmatpush2.bf16.msra.mxu0 0
    %2320 = vmatprep.subr.bf16.mxu0 0
    %2321 = vmatpush2.bf16.msra.mxu0 0
    %2322 = vmatprep.subr.bf16.mxu0 0
    %2323 = vmatpush2.bf16.msra.mxu0 0
    %2324 = vmatprep.subr.bf16.mxu0 0
    %2325 = vmatpush2.bf16.msra.mxu0 0
    %2326 = vmatprep.subr.bf16.mxu0 0
    %2327 = vmatpush2.bf16.msra.mxu0 0
    %2328 = vmatprep.subr.bf16.mxu0 0
    %2329 = vmatpush2.bf16.msra.mxu0 0
    %2330 = vmatprep.subr.bf16.mxu0 0
    %2331 = vmatpush2.bf16.msra.mxu0 0
    %2332 = vmatprep.subr.bf16.mxu0 0
    %2333 = vmatpush2.bf16.msra.mxu0 0
    %2334 = vmatprep.mubr.bf16.mxu0 0
    %2335 = vmatmul.mubr.bf16.gmra.mxu0 %v124
    %v2336 = vpop.f32.mrf.mxu0
    %v2337 = vadd.f32 %v2252, %v2336
    %v2338 = vpop.f32.mrf.mxu0
    %v2339 = vpop.f32.mrf.mxu0
    %v2340 = vadd.f32 %v2252, %v2339
    %v2341 = vpop.f32.mrf.mxu0
    %2342 = vdwg.mxu0
    %v2343 = vpack.c.bf16 %v2109, %v2109
    %v2344 = vpack.c.bf16 %v2112, %v2112
    %v2345 = vpack.c.bf16 %v2223, %v2223
    %v2346 = vpack.c.bf16 %v2226, %v2226
    %v2348 = vsel %vm465, %v2343, 0
    %v2351 = vsel %vm465, %v2345, 0
    %2353 = vmatprep.subr.bf16.mxu0 0
    %2354 = vmatpush1.bf16.xpose.msra.mxu0 0
    %2355 = vmatprep.subr.bf16.mxu0 0
    %2356 = vmatpush1.bf16.xpose.msra.mxu0 0
    %2357 = vmatprep.subr.bf16.mxu0 0
    %2358 = vmatpush1.bf16.xpose.msra.mxu0 0
    %2359 = vmatprep.subr.bf16.mxu0 0
    %2360 = vmatpush1.bf16.xpose.msra.mxu0 0
    %2361 = vmatprep.subr.bf16.mxu0 0
    %2362 = vmatpush1.bf16.xpose.msra.mxu0 0
    %2363 = vmatprep.subr.bf16.mxu0 0
    %2364 = vmatpush1.bf16.xpose.msra.mxu0 0
    %2365 = vmatprep.subr.bf16.mxu0 0
    %2366 = vmatpush1.bf16.xpose.msra.mxu0 0
    %2367 = vmatprep.subr.bf16.mxu0 0
    %2368 = vmatpush1.bf16.xpose.msra.mxu0 %v2351
    %2369 = vmatprep.subr.bf16.mxu0 0
    %2370 = vmatpush2.bf16.xpose.msra.mxu0 0
    %2371 = vmatprep.subr.bf16.mxu0 0
    %2372 = vmatpush2.bf16.xpose.msra.mxu0 0
    %2373 = vmatprep.subr.bf16.mxu0 0
    %2374 = vmatpush2.bf16.xpose.msra.mxu0 0
    %2375 = vmatprep.subr.bf16.mxu0 0
    %2376 = vmatpush2.bf16.xpose.msra.mxu0 0
    %2377 = vmatprep.subr.bf16.mxu0 0
    %2378 = vmatpush2.bf16.xpose.msra.mxu0 0
    %2379 = vmatprep.subr.bf16.mxu0 0
    %2380 = vmatpush2.bf16.xpose.msra.mxu0 0
    %2381 = vmatprep.subr.bf16.mxu0 0
    %2382 = vmatpush2.bf16.xpose.msra.mxu0 0
    %2383 = vmatprep.subr.bf16.mxu0 0
    %2384 = vmatpush2.bf16.xpose.msra.mxu0 0
    %2385 = vmatprep.mubr.bf16.mxu0 0
    %2386 = vmatmul.mubr.bf16.gmra.mxu0 %v2348
    %v2387 = vpop.f32.mrf.mxu0
    %v2388 = vadd.f32 0.0, %v2387
    %v2389 = vpop.f32.mrf.mxu0
    %v2390 = vpop.f32.mrf.mxu0
    %v2391 = vpop.f32.mrf.mxu0
    %2392 = vdwg.mxu0
    %v2394 = vsel %vm465, %v2344, 0
    %v2397 = vsel %vm465, %v2346, 0
    %2399 = vmatprep.subr.bf16.mxu0 0
    %2400 = vmatpush1.bf16.xpose.msra.mxu0 0
    %2401 = vmatprep.subr.bf16.mxu0 0
    %2402 = vmatpush1.bf16.xpose.msra.mxu0 0
    %2403 = vmatprep.subr.bf16.mxu0 0
    %2404 = vmatpush1.bf16.xpose.msra.mxu0 0
    %2405 = vmatprep.subr.bf16.mxu0 0
    %2406 = vmatpush1.bf16.xpose.msra.mxu0 0
    %2407 = vmatprep.subr.bf16.mxu0 0
    %2408 = vmatpush1.bf16.xpose.msra.mxu0 0
    %2409 = vmatprep.subr.bf16.mxu0 0
    %2410 = vmatpush1.bf16.xpose.msra.mxu0 0
    %2411 = vmatprep.subr.bf16.mxu0 0
    %2412 = vmatpush1.bf16.xpose.msra.mxu0 0
    %2413 = vmatprep.subr.bf16.mxu0 0
    %2414 = vmatpush1.bf16.xpose.msra.mxu0 %v2397
    %2415 = vmatprep.subr.bf16.mxu0 0
    %2416 = vmatpush2.bf16.xpose.msra.mxu0 0
    %2417 = vmatprep.subr.bf16.mxu0 0
    %2418 = vmatpush2.bf16.xpose.msra.mxu0 0
    %2419 = vmatprep.subr.bf16.mxu0 0
    %2420 = vmatpush2.bf16.xpose.msra.mxu0 0
    %2421 = vmatprep.subr.bf16.mxu0 0
    %2422 = vmatpush2.bf16.xpose.msra.mxu0 0
    %2423 = vmatprep.subr.bf16.mxu0 0
    %2424 = vmatpush2.bf16.xpose.msra.mxu0 0
    %2425 = vmatprep.subr.bf16.mxu0 0
    %2426 = vmatpush2.bf16.xpose.msra.mxu0 0
    %2427 = vmatprep.subr.bf16.mxu0 0
    %2428 = vmatpush2.bf16.xpose.msra.mxu0 0
    %2429 = vmatprep.subr.bf16.mxu0 0
    %2430 = vmatpush2.bf16.xpose.msra.mxu0 0
    %2431 = vmatprep.mubr.bf16.mxu0 0
    %2432 = vmatmul.mubr.bf16.gmra.mxu0 %v2394
    %v2433 = vpop.f32.mrf.mxu0
    %v2434 = vadd.f32 0.0, %v2433
    %v2435 = vpop.f32.mrf.mxu0
    %v2436 = vpop.f32.mrf.mxu0
    %v2437 = vpop.f32.mrf.mxu0
    %2438 = vdwg.mxu0
    %v2439 = vmul.f32 %v2388, 0.17677669
    %v2440 = vmul.f32 %v2434, 0.17677669
    %v2441 = vadd.f32 %v2439, %v565
    %v2442 = vadd.f32 %v2440, %v569
    %v2443 = vsel %vm574, %v2441, -inf
    %2444 = vmax.xlane.f32.xlu0 %v2443
    %v2445 = vpop.xlane.xlu0 %2444
    %v2446 = vsel %vm574, %v2442, -inf
    %2447 = vmax.xlane.f32.xlu0 %v2446
    %v2448 = vpop.xlane.xlu0 %2447
    %v2449 = vsub.f32 %v2441, %v2445
    %v2450 = vsub.f32 %v2442, %v2448
    %v2451 = vmul.f32 %v2449, 1.442695
    %v2452 = vpow.pop %v2451
    %v2453 = vmul.f32 %v2450, 1.442695
    %v2454 = vpow.pop %v2453
    %v2455 = vsel %vm574, %v2452, 0.0
    %2456 = vadd.xlane.f32.xlu0 %v2455
    %v2457 = vpop.xlane.xlu0 %2456
    %v2458 = vsel %vm574, %v2454, 0.0
    %2459 = vadd.xlane.f32.xlu0 %v2458
    %v2460 = vpop.xlane.xlu0 %2459
    %v2461 = vrcp.pop %v2457
    %v2462 = vrcp.pop %v2460
    %v2463 = vmul.f32 %v2452, %v2461
    %v2464 = vmul.f32 %v2454, %v2462
    %v2465 = vpack.c.bf16 %v2463, %v2463
    %v2466 = vpack.c.bf16 %v2464, %v2464
    %v2467 = vpack.c.bf16 %v2337, %v2337
    %v2468 = vpack.c.bf16 %v2340, %v2340
    %v2470 = vsel %vm574, %v2465, 0
    %v2473 = vsel %vm604, %v2467, 0
    %2475 = vmatprep.subr.bf16.mxu0 0
    %2476 = vmatpush1.bf16.msra.mxu0 0
    %2477 = vmatprep.subr.bf16.mxu0 0
    %2478 = vmatpush1.bf16.msra.mxu0 0
    %2479 = vmatprep.subr.bf16.mxu0 0
    %2480 = vmatpush1.bf16.msra.mxu0 0
    %2481 = vmatprep.subr.bf16.mxu0 0
    %2482 = vmatpush1.bf16.msra.mxu0 0
    %2483 = vmatprep.subr.bf16.mxu0 0
    %2484 = vmatpush1.bf16.msra.mxu0 0
    %2485 = vmatprep.subr.bf16.mxu0 0
    %2486 = vmatpush1.bf16.msra.mxu0 0
    %2487 = vmatprep.subr.bf16.mxu0 0
    %2488 = vmatpush1.bf16.msra.mxu0 0
    %2489 = vmatprep.subr.bf16.mxu0 0
    %2490 = vmatpush1.bf16.msra.mxu0 %v2473
    %2491 = vmatprep.subr.bf16.mxu0 0
    %2492 = vmatpush2.bf16.msra.mxu0 0
    %2493 = vmatprep.subr.bf16.mxu0 0
    %2494 = vmatpush2.bf16.msra.mxu0 0
    %2495 = vmatprep.subr.bf16.mxu0 0
    %2496 = vmatpush2.bf16.msra.mxu0 0
    %2497 = vmatprep.subr.bf16.mxu0 0
    %2498 = vmatpush2.bf16.msra.mxu0 0
    %2499 = vmatprep.subr.bf16.mxu0 0
    %2500 = vmatpush2.bf16.msra.mxu0 0
    %2501 = vmatprep.subr.bf16.mxu0 0
    %2502 = vmatpush2.bf16.msra.mxu0 0
    %2503 = vmatprep.subr.bf16.mxu0 0
    %2504 = vmatpush2.bf16.msra.mxu0 0
    %2505 = vmatprep.subr.bf16.mxu0 0
    %2506 = vmatpush2.bf16.msra.mxu0 0
    %2507 = vmatprep.mubr.bf16.mxu0 0
    %2508 = vmatmul.mubr.bf16.gmra.mxu0 %v2470
    %v2509 = vpop.f32.mrf.mxu0
    %v2510 = vadd.f32 0.0, %v2509
    %v2511 = vpop.f32.mrf.mxu0
    %v2512 = vpop.f32.mrf.mxu0
    %v2513 = vpop.f32.mrf.mxu0
    %2514 = vdwg.mxu0
    %v2516 = vsel %vm574, %v2466, 0
    %v2519 = vsel %vm604, %v2468, 0
    %2521 = vmatprep.subr.bf16.mxu0 0
    %2522 = vmatpush1.bf16.msra.mxu0 0
    %2523 = vmatprep.subr.bf16.mxu0 0
    %2524 = vmatpush1.bf16.msra.mxu0 0
    %2525 = vmatprep.subr.bf16.mxu0 0
    %2526 = vmatpush1.bf16.msra.mxu0 0
    %2527 = vmatprep.subr.bf16.mxu0 0
    %2528 = vmatpush1.bf16.msra.mxu0 0
    %2529 = vmatprep.subr.bf16.mxu0 0
    %2530 = vmatpush1.bf16.msra.mxu0 0
    %2531 = vmatprep.subr.bf16.mxu0 0
    %2532 = vmatpush1.bf16.msra.mxu0 0
    %2533 = vmatprep.subr.bf16.mxu0 0
    %2534 = vmatpush1.bf16.msra.mxu0 0
    %2535 = vmatprep.subr.bf16.mxu0 0
    %2536 = vmatpush1.bf16.msra.mxu0 %v2519
    %2537 = vmatprep.subr.bf16.mxu0 0
    %2538 = vmatpush2.bf16.msra.mxu0 0
    %2539 = vmatprep.subr.bf16.mxu0 0
    %2540 = vmatpush2.bf16.msra.mxu0 0
    %2541 = vmatprep.subr.bf16.mxu0 0
    %2542 = vmatpush2.bf16.msra.mxu0 0
    %2543 = vmatprep.subr.bf16.mxu0 0
    %2544 = vmatpush2.bf16.msra.mxu0 0
    %2545 = vmatprep.subr.bf16.mxu0 0
    %2546 = vmatpush2.bf16.msra.mxu0 0
    %2547 = vmatprep.subr.bf16.mxu0 0
    %2548 = vmatpush2.bf16.msra.mxu0 0
    %2549 = vmatprep.subr.bf16.mxu0 0
    %2550 = vmatpush2.bf16.msra.mxu0 0
    %2551 = vmatprep.subr.bf16.mxu0 0
    %2552 = vmatpush2.bf16.msra.mxu0 0
    %2553 = vmatprep.mubr.bf16.mxu0 0
    %2554 = vmatmul.mubr.bf16.gmra.mxu0 %v2516
    %v2555 = vpop.f32.mrf.mxu0
    %v2556 = vadd.f32 0.0, %v2555
    %v2557 = vpop.f32.mrf.mxu0
    %v2558 = vpop.f32.mrf.mxu0
    %v2559 = vpop.f32.mrf.mxu0
    %2560 = vdwg.mxu0
    %v2561 = vpack.c.bf16 %v2556, %v2510
    %s2562 = scalar_lea.vmem %s10, 48
    %v2563 = vld [vmem:[%s2562] sm:$0xf]
    %v2564 = vld [vmem:[%s2562 + $0x4] sm:$0xf]
    %v2565 = vld [vmem:[%s2562 + $0x8] sm:$0xf]
    %v2566 = vld [vmem:[%s2562 + $0xc] sm:$0xf]
    %v2571 = vunpack.c.l.b16 %v2563
    %v2572 = vunpack.c.l.b16 %v2564
    %v2573 = vunpack.c.l.b16 %v2565
    %v2574 = vunpack.c.l.b16 %v2566
    %v2575 = vpack.c.b16 %v2572, %v2571
    %v2576 = vpack.c.b16 %v2574, %v2573
    %v2580 = vsel %vm465, %v2561, 0
    %2582 = vmatprep.subr.bf16.mxu0 0
    %2583 = vmatpush1.bf16.msra.mxu0 0
    %2584 = vmatprep.subr.bf16.mxu0 0
    %2585 = vmatpush1.bf16.msra.mxu0 0
    %2586 = vmatprep.subr.bf16.mxu0 0
    %2587 = vmatpush1.bf16.msra.mxu0 0
    %2588 = vmatprep.subr.bf16.mxu0 0
    %2589 = vmatpush1.bf16.msra.mxu0 0
    %2590 = vmatprep.subr.bf16.mxu0 0
    %2591 = vmatpush1.bf16.msra.mxu0 0
    %2592 = vmatprep.subr.bf16.mxu0 0
    %2593 = vmatpush1.bf16.msra.mxu0 0
    %2594 = vmatprep.subr.bf16.mxu0 0
    %2595 = vmatpush1.bf16.msra.mxu0 %v2576
    %2596 = vmatprep.subr.bf16.mxu0 0
    %2597 = vmatpush1.bf16.msra.mxu0 %v2575
    %2598 = vmatprep.subr.bf16.mxu0 0
    %2599 = vmatpush2.bf16.msra.mxu0 0
    %2600 = vmatprep.subr.bf16.mxu0 0
    %2601 = vmatpush2.bf16.msra.mxu0 0
    %2602 = vmatprep.subr.bf16.mxu0 0
    %2603 = vmatpush2.bf16.msra.mxu0 0
    %2604 = vmatprep.subr.bf16.mxu0 0
    %2605 = vmatpush2.bf16.msra.mxu0 0
    %2606 = vmatprep.subr.bf16.mxu0 0
    %2607 = vmatpush2.bf16.msra.mxu0 0
    %2608 = vmatprep.subr.bf16.mxu0 0
    %2609 = vmatpush2.bf16.msra.mxu0 0
    %2610 = vmatprep.subr.bf16.mxu0 0
    %2611 = vmatpush2.bf16.msra.mxu0 0
    %2612 = vmatprep.subr.bf16.mxu0 0
    %2613 = vmatpush2.bf16.msra.mxu0 0
    %2614 = vmatprep.mubr.bf16.mxu0 0
    %2615 = vmatmul.mubr.bf16.gmra.mxu0 %v2580
    %v2616 = vpop.f32.mrf.mxu0
    %v2617 = vadd.f32 0.0, %v2616
    %v2618 = vpop.f32.mrf.mxu0
    %v2619 = vpop.f32.mrf.mxu0
    %v2620 = vadd.f32 0.0, %v2619
    %v2621 = vpop.f32.mrf.mxu0
    %2622 = vdwg.mxu0
    %v2623 = vadd.f32 %v1999, %v2617
    %v2624 = vadd.f32 %v2000, %v2620
    %v2625 = vld [vmem:[%s11] sm:$0x1]
    %v2627 = vlaneseq
    %v2628 = vshrl.u32 %v2627, 7
    %v2629 = vsub.s32 0, %v2628
    %v2630 = vrot.slane %v2625, %v2629
    %v2632 = vadd.f32 %v2623, %v2630
    %v2633 = vadd.f32 %v2624, %v2630
    %v2634 = vadd.f32 %v120, %v2632
    %v2635 = vadd.f32 %v121, %v2633
    %v2636 = vld [vmem:[%s12] sm:$0x1]
    %v2637 = vld [vmem:[%s13] sm:$0x1]
    %2638 = vadd.xlane.f32.xlu0 %v2634
    %v2639 = vpop.xlane.xlu0 %2638
    %2640 = vadd.xlane.f32.xlu0 %v2635
    %v2641 = vpop.xlane.xlu0 %2640
    %v2642 = vmul.f32 %v2639, %v87
    %v2643 = vmul.f32 %v2641, %v87
    %v2644 = vsub.f32 %v2634, %v2642
    %v2645 = vsub.f32 %v2635, %v2643
    %v2646 = vmul.f32 %v2644, %v2644
    %v2647 = vmul.f32 %v2645, %v2645
    %2648 = vadd.xlane.f32.xlu0 %v2646
    %v2649 = vpop.xlane.xlu0 %2648
    %2650 = vadd.xlane.f32.xlu0 %v2647
    %v2651 = vpop.xlane.xlu0 %2650
    %v2652 = vmul.f32 %v2649, %v87
    %v2653 = vmul.f32 %v2651, %v87
    %v2654 = vadd.f32 %v2652, 1e-12
    %v2655 = vadd.f32 %v2653, 1e-12
    %v2656 = vrsqrt.pop %v2654
    %v2657 = vrsqrt.pop %v2655
    %v2658 = vmul.f32 %v2644, %v2656
    %v2659 = vmul.f32 %v2645, %v2657
    %v2661 = vlaneseq
    %v2662 = vshrl.u32 %v2661, 7
    %v2663 = vsub.s32 0, %v2662
    %v2664 = vrot.slane %v2636, %v2663
    %v2666 = vmul.f32 %v2658, %v2664
    %v2667 = vmul.f32 %v2659, %v2664
    %v2669 = vlaneseq
    %v2670 = vshrl.u32 %v2669, 7
    %v2671 = vsub.s32 0, %v2670
    %v2672 = vrot.slane %v2637, %v2671
    %v2674 = vadd.f32 %v2666, %v2672
    %v2675 = vadd.f32 %v2667, %v2672
    %v2676 = vpack.c.bf16 %v2675, %v2674
    %v2677 = vld [vmem:[%s14] sm:$0xff]
    %v2678 = vld [vmem:[%s14 + $0x8] sm:$0xff]
    %v2679 = vld [vmem:[%s14 + $0x10] sm:$0xff]
    %v2680 = vld [vmem:[%s14 + $0x18] sm:$0xff]
    %v2681 = vld [vmem:[%s14 + $0x20] sm:$0xff]
    %v2682 = vld [vmem:[%s14 + $0x28] sm:$0xff]
    %v2683 = vld [vmem:[%s14 + $0x30] sm:$0xff]
    %v2684 = vld [vmem:[%s14 + $0x38] sm:$0xff]
    %v2685 = vld [vmem:[%s14 + $0x40] sm:$0xff]
    %v2686 = vld [vmem:[%s14 + $0x48] sm:$0xff]
    %v2687 = vld [vmem:[%s14 + $0x50] sm:$0xff]
    %v2688 = vld [vmem:[%s14 + $0x58] sm:$0xff]
    %v2689 = vld [vmem:[%s14 + $0x60] sm:$0xff]
    %v2690 = vld [vmem:[%s14 + $0x68] sm:$0xff]
    %v2691 = vld [vmem:[%s14 + $0x70] sm:$0xff]
    %v2692 = vld [vmem:[%s14 + $0x78] sm:$0xff]
    %v2693 = vld [vmem:[%s15] sm:$0x3]
    %v2695 = vlaneseq
    %v2696 = vshrl.u32 %v2695, 7
    %v2697 = vsub.s32 0, %v2696
    %v2698 = vrot.slane %v2693, %v2697
    %v2699 = vlaneseq
    %v2700 = vshrl.u32 %v2699, 7
    %v2701 = vsub.s32 1, %v2700
    %v2702 = vrot.slane %v2693, %v2701
    %v2721 = vunpack.c.l.b16 %v2677
    %v2722 = vunpack.c.h.b16 %v2677
    %v2723 = vunpack.c.l.b16 %v2678
    %v2724 = vunpack.c.h.b16 %v2678
    %v2725 = vunpack.c.l.b16 %v2679
    %v2726 = vunpack.c.h.b16 %v2679
    %v2727 = vunpack.c.l.b16 %v2680
    %v2728 = vunpack.c.h.b16 %v2680
    %v2729 = vunpack.c.l.b16 %v2681
    %v2730 = vunpack.c.h.b16 %v2681
    %v2731 = vunpack.c.l.b16 %v2682
    %v2732 = vunpack.c.h.b16 %v2682
    %v2733 = vunpack.c.l.b16 %v2683
    %v2734 = vunpack.c.h.b16 %v2683
    %v2735 = vunpack.c.l.b16 %v2684
    %v2736 = vunpack.c.h.b16 %v2684
    %v2737 = vunpack.c.l.b16 %v2685
    %v2738 = vunpack.c.h.b16 %v2685
    %v2739 = vunpack.c.l.b16 %v2686
    %v2740 = vunpack.c.h.b16 %v2686
    %v2741 = vunpack.c.l.b16 %v2687
    %v2742 = vunpack.c.h.b16 %v2687
    %v2743 = vunpack.c.l.b16 %v2688
    %v2744 = vunpack.c.h.b16 %v2688
    %v2745 = vunpack.c.l.b16 %v2689
    %v2746 = vunpack.c.h.b16 %v2689
    %v2747 = vunpack.c.l.b16 %v2690
    %v2748 = vunpack.c.h.b16 %v2690
    %v2749 = vunpack.c.l.b16 %v2691
    %v2750 = vunpack.c.h.b16 %v2691
    %v2751 = vunpack.c.l.b16 %v2692
    %v2752 = vunpack.c.h.b16 %v2692
    %v2753 = vpack.c.b16 %v2723, %v2721
    %v2754 = vpack.c.b16 %v2724, %v2722
    %v2755 = vpack.c.b16 %v2727, %v2725
    %v2756 = vpack.c.b16 %v2728, %v2726
    %v2757 = vpack.c.b16 %v2731, %v2729
    %v2758 = vpack.c.b16 %v2732, %v2730
    %v2759 = vpack.c.b16 %v2735, %v2733
    %v2760 = vpack.c.b16 %v2736, %v2734
    %v2761 = vpack.c.b16 %v2739, %v2737
    %v2762 = vpack.c.b16 %v2740, %v2738
    %v2763 = vpack.c.b16 %v2743, %v2741
    %v2764 = vpack.c.b16 %v2744, %v2742
    %v2765 = vpack.c.b16 %v2747, %v2745
    %v2766 = vpack.c.b16 %v2748, %v2746
    %v2767 = vpack.c.b16 %v2751, %v2749
    %v2768 = vpack.c.b16 %v2752, %v2750
    %2785 = vmatprep.subr.bf16.mxu0 %v2768
    %2786 = vmatpush1.bf16.msra.mxu0 %v2767
    %2787 = vmatprep.subr.bf16.mxu0 %v2766
    %2788 = vmatpush1.bf16.msra.mxu0 %v2765
    %2789 = vmatprep.subr.bf16.mxu0 %v2764
    %2790 = vmatpush1.bf16.msra.mxu0 %v2763
    %2791 = vmatprep.subr.bf16.mxu0 %v2762
    %2792 = vmatpush1.bf16.msra.mxu0 %v2761
    %2793 = vmatprep.subr.bf16.mxu0 %v2760
    %2794 = vmatpush1.bf16.msra.mxu0 %v2759
    %2795 = vmatprep.subr.bf16.mxu0 %v2758
    %2796 = vmatpush1.bf16.msra.mxu0 %v2757
    %2797 = vmatprep.subr.bf16.mxu0 %v2756
    %2798 = vmatpush1.bf16.msra.mxu0 %v2755
    %2799 = vmatprep.subr.bf16.mxu0 %v2754
    %2800 = vmatpush1.bf16.msra.mxu0 %v2753
    %2801 = vmatprep.subr.bf16.mxu0 0
    %2802 = vmatpush2.bf16.msra.mxu0 0
    %2803 = vmatprep.subr.bf16.mxu0 0
    %2804 = vmatpush2.bf16.msra.mxu0 0
    %2805 = vmatprep.subr.bf16.mxu0 0
    %2806 = vmatpush2.bf16.msra.mxu0 0
    %2807 = vmatprep.subr.bf16.mxu0 0
    %2808 = vmatpush2.bf16.msra.mxu0 0
    %2809 = vmatprep.subr.bf16.mxu0 0
    %2810 = vmatpush2.bf16.msra.mxu0 0
    %2811 = vmatprep.subr.bf16.mxu0 0
    %2812 = vmatpush2.bf16.msra.mxu0 0
    %2813 = vmatprep.subr.bf16.mxu0 0
    %2814 = vmatpush2.bf16.msra.mxu0 0
    %2815 = vmatprep.subr.bf16.mxu0 0
    %2816 = vmatpush2.bf16.msra.mxu0 0
    %2817 = vmatprep.mubr.bf16.mxu0 0
    %2818 = vmatmul.mubr.bf16.gmra.mxu0 %v2676
    %v2819 = vpop.f32.mrf.mxu0
    %v2820 = vadd.f32 %v2698, %v2819
    %v2821 = vpop.f32.mrf.mxu0
    %v2822 = vadd.f32 %v2702, %v2821
    %v2823 = vpop.f32.mrf.mxu0
    %v2824 = vadd.f32 %v2698, %v2823
    %v2825 = vpop.f32.mrf.mxu0
    %v2826 = vadd.f32 %v2702, %v2825
    %2827 = vdwg.mxu0
    %v2828 = vmul.f32 %v2820, 0.5
    %v2829 = vmul.f32 %v2822, 0.5
    %v2830 = vmul.f32 %v2824, 0.5
    %v2831 = vmul.f32 %v2826, 0.5
    %v2832 = vmul.f32 %v2820, 0.044715
    %v2833 = vmul.f32 %v2822, 0.044715
    %v2834 = vmul.f32 %v2824, 0.044715
    %v2835 = vmul.f32 %v2826, 0.044715
    %v2836 = vmul.f32 %v2832, %v2820
    %v2837 = vmul.f32 %v2833, %v2822
    %v2838 = vmul.f32 %v2834, %v2824
    %v2839 = vmul.f32 %v2835, %v2826
    %v2840 = vmul.f32 %v2836, %v2820
    %v2841 = vmul.f32 %v2837, %v2822
    %v2842 = vmul.f32 %v2838, %v2824
    %v2843 = vmul.f32 %v2839, %v2826
    %v2844 = vadd.f32 %v2820, %v2840
    %v2845 = vadd.f32 %v2822, %v2841
    %v2846 = vadd.f32 %v2824, %v2842
    %v2847 = vadd.f32 %v2826, %v2843
    %v2848 = vmul.f32 %v2844, 0.7978846
    %v2849 = vmul.f32 %v2845, 0.7978846
    %v2850 = vmul.f32 %v2846, 0.7978846
    %v2851 = vmul.f32 %v2847, 0.7978846
    %v2852 = vtanh.pop %v2848
    %v2853 = vtanh.pop %v2849
    %v2854 = vtanh.pop %v2850
    %v2855 = vtanh.pop %v2851
    %v2856 = vadd.f32 %v2852, 1.0
    %v2857 = vadd.f32 %v2853, 1.0
    %v2858 = vadd.f32 %v2854, 1.0
    %v2859 = vadd.f32 %v2855, 1.0
    %v2860 = vmul.f32 %v2828, %v2856
    %v2861 = vmul.f32 %v2829, %v2857
    %v2862 = vmul.f32 %v2830, %v2858
    %v2863 = vmul.f32 %v2831, %v2859
    %v2864 = vpack.c.bf16 %v2862, %v2860
    %v2865 = vpack.c.bf16 %v2863, %v2861
    %v2866 = vld [vmem:[%s16] sm:$0xf]
    %v2867 = vld [vmem:[%s16 + $0x4] sm:$0xf]
    %v2868 = vld [vmem:[%s16 + $0x8] sm:$0xf]
    %v2869 = vld [vmem:[%s16 + $0xc] sm:$0xf]
    %v2870 = vld [vmem:[%s16 + $0x10] sm:$0xf]
    %v2871 = vld [vmem:[%s16 + $0x14] sm:$0xf]
    %v2872 = vld [vmem:[%s16 + $0x18] sm:$0xf]
    %v2873 = vld [vmem:[%s16 + $0x1c] sm:$0xf]
    %v2874 = vld [vmem:[%s16 + $0x20] sm:$0xf]
    %v2875 = vld [vmem:[%s16 + $0x24] sm:$0xf]
    %v2876 = vld [vmem:[%s16 + $0x28] sm:$0xf]
    %v2877 = vld [vmem:[%s16 + $0x2c] sm:$0xf]
    %v2878 = vld [vmem:[%s16 + $0x30] sm:$0xf]
    %v2879 = vld [vmem:[%s16 + $0x34] sm:$0xf]
    %v2880 = vld [vmem:[%s16 + $0x38] sm:$0xf]
    %v2881 = vld [vmem:[%s16 + $0x3c] sm:$0xf]
    %v2882 = vld [vmem:[%s16 + $0x40] sm:$0xf]
    %v2883 = vld [vmem:[%s16 + $0x44] sm:$0xf]
    %v2884 = vld [vmem:[%s16 + $0x48] sm:$0xf]
    %v2885 = vld [vmem:[%s16 + $0x4c] sm:$0xf]
    %v2886 = vld [vmem:[%s16 + $0x50] sm:$0xf]
    %v2887 = vld [vmem:[%s16 + $0x54] sm:$0xf]
    %v2888 = vld [vmem:[%s16 + $0x58] sm:$0xf]
    %v2889 = vld [vmem:[%s16 + $0x5c] sm:$0xf]
    %v2890 = vld [vmem:[%s16 + $0x60] sm:$0xf]
    %v2891 = vld [vmem:[%s16 + $0x64] sm:$0xf]
    %v2892 = vld [vmem:[%s16 + $0x68] sm:$0xf]
    %v2893 = vld [vmem:[%s16 + $0x6c] sm:$0xf]
    %v2894 = vld [vmem:[%s16 + $0x70] sm:$0xf]
    %v2895 = vld [vmem:[%s16 + $0x74] sm:$0xf]
    %v2896 = vld [vmem:[%s16 + $0x78] sm:$0xf]
    %v2897 = vld [vmem:[%s16 + $0x7c] sm:$0xf]
    %v2898 = vld [vmem:[%s17] sm:$0x1]
    %v2900 = vlaneseq
    %v2901 = vshrl.u32 %v2900, 7
    %v2902 = vsub.s32 0, %v2901
    %v2903 = vrot.slane %v2898, %v2902
    %v2937 = vunpack.c.l.b16 %v2866
    %v2938 = vunpack.c.l.b16 %v2867
    %v2939 = vunpack.c.l.b16 %v2868
    %v2940 = vunpack.c.l.b16 %v2869
    %v2941 = vunpack.c.l.b16 %v2870
    %v2942 = vunpack.c.l.b16 %v2871
    %v2943 = vunpack.c.l.b16 %v2872
    %v2944 = vunpack.c.l.b16 %v2873
    %v2945 = vunpack.c.l.b16 %v2874
    %v2946 = vunpack.c.l.b16 %v2875
    %v2947 = vunpack.c.l.b16 %v2876
    %v2948 = vunpack.c.l.b16 %v2877
    %v2949 = vunpack.c.l.b16 %v2878
    %v2950 = vunpack.c.l.b16 %v2879
    %v2951 = vunpack.c.l.b16 %v2880
    %v2952 = vunpack.c.l.b16 %v2881
    %v2953 = vunpack.c.l.b16 %v2882
    %v2954 = vunpack.c.l.b16 %v2883
    %v2955 = vunpack.c.l.b16 %v2884
    %v2956 = vunpack.c.l.b16 %v2885
    %v2957 = vunpack.c.l.b16 %v2886
    %v2958 = vunpack.c.l.b16 %v2887
    %v2959 = vunpack.c.l.b16 %v2888
    %v2960 = vunpack.c.l.b16 %v2889
    %v2961 = vunpack.c.l.b16 %v2890
    %v2962 = vunpack.c.l.b16 %v2891
    %v2963 = vunpack.c.l.b16 %v2892
    %v2964 = vunpack.c.l.b16 %v2893
    %v2965 = vunpack.c.l.b16 %v2894
    %v2966 = vunpack.c.l.b16 %v2895
    %v2967 = vunpack.c.l.b16 %v2896
    %v2968 = vunpack.c.l.b16 %v2897
    %v2969 = vpack.c.b16 %v2938, %v2937
    %v2970 = vpack.c.b16 %v2940, %v2939
    %v2971 = vpack.c.b16 %v2942, %v2941
    %v2972 = vpack.c.b16 %v2944, %v2943
    %v2973 = vpack.c.b16 %v2946, %v2945
    %v2974 = vpack.c.b16 %v2948, %v2947
    %v2975 = vpack.c.b16 %v2950, %v2949
    %v2976 = vpack.c.b16 %v2952, %v2951
    %v2977 = vpack.c.b16 %v2954, %v2953
    %v2978 = vpack.c.b16 %v2956, %v2955
    %v2979 = vpack.c.b16 %v2958, %v2957
    %v2980 = vpack.c.b16 %v2960, %v2959
    %v2981 = vpack.c.b16 %v2962, %v2961
    %v2982 = vpack.c.b16 %v2964, %v2963
    %v2983 = vpack.c.b16 %v2966, %v2965
    %v2984 = vpack.c.b16 %v2968, %v2967
    %3001 = vmatprep.subr.bf16.mxu0 0
    %3002 = vmatpush1.bf16.msra.mxu0 %v2976
    %3003 = vmatprep.subr.bf16.mxu0 0
    %3004 = vmatpush1.bf16.msra.mxu0 %v2975
    %3005 = vmatprep.subr.bf16.mxu0 0
    %3006 = vmatpush1.bf16.msra.mxu0 %v2974
    %3007 = vmatprep.subr.bf16.mxu0 0
    %3008 = vmatpush1.bf16.msra.mxu0 %v2973
    %3009 = vmatprep.subr.bf16.mxu0 0
    %3010 = vmatpush1.bf16.msra.mxu0 %v2972
    %3011 = vmatprep.subr.bf16.mxu0 0
    %3012 = vmatpush1.bf16.msra.mxu0 %v2971
    %3013 = vmatprep.subr.bf16.mxu0 0
    %3014 = vmatpush1.bf16.msra.mxu0 %v2970
    %3015 = vmatprep.subr.bf16.mxu0 0
    %3016 = vmatpush1.bf16.msra.mxu0 %v2969
    %3017 = vmatprep.subr.bf16.mxu0 0
    %3018 = vmatpush2.bf16.msra.mxu0 %v2984
    %3019 = vmatprep.subr.bf16.mxu0 0
    %3020 = vmatpush2.bf16.msra.mxu0 %v2983
    %3021 = vmatprep.subr.bf16.mxu0 0
    %3022 = vmatpush2.bf16.msra.mxu0 %v2982
    %3023 = vmatprep.subr.bf16.mxu0 0
    %3024 = vmatpush2.bf16.msra.mxu0 %v2981
    %3025 = vmatprep.subr.bf16.mxu0 0
    %3026 = vmatpush2.bf16.msra.mxu0 %v2980
    %3027 = vmatprep.subr.bf16.mxu0 0
    %3028 = vmatpush2.bf16.msra.mxu0 %v2979
    %3029 = vmatprep.subr.bf16.mxu0 0
    %3030 = vmatpush2.bf16.msra.mxu0 %v2978
    %3031 = vmatprep.subr.bf16.mxu0 0
    %3032 = vmatpush2.bf16.msra.mxu0 %v2977
    %3033 = vmatprep.mubr.bf16.mxu0 %v2865
    %3034 = vmatmul.mubr.bf16.gmra.mxu0 %v2864
    %v3035 = vpop.f32.mrf.mxu0
    %v3036 = vadd.f32 %v2903, %v3035
    %v3037 = vpop.f32.mrf.mxu0
    %v3038 = vpop.f32.mrf.mxu0
    %v3039 = vadd.f32 %v2903, %v3038
    %v3040 = vpop.f32.mrf.mxu0
    %3041 = vdwg.mxu0
    %v3042 = vadd.f32 %v2674, %v3036
    %v3043 = vadd.f32 %v2675, %v3039
    %v3044 = vld [vmem:[%s18] sm:$0x1]
    %v3045 = vld [vmem:[%s19] sm:$0x1]
    %3046 = vadd.xlane.f32.xlu0 %v3042
    %v3047 = vpop.xlane.xlu0 %3046
    %3048 = vadd.xlane.f32.xlu0 %v3043
    %v3049 = vpop.xlane.xlu0 %3048
    %v3050 = vmul.f32 %v3047, %v87
    %v3051 = vmul.f32 %v3049, %v87
    %v3052 = vsub.f32 %v3042, %v3050
    %v3053 = vsub.f32 %v3043, %v3051
    %v3054 = vmul.f32 %v3052, %v3052
    %v3055 = vmul.f32 %v3053, %v3053
    %3056 = vadd.xlane.f32.xlu0 %v3054
    %v3057 = vpop.xlane.xlu0 %3056
    %3058 = vadd.xlane.f32.xlu0 %v3055
    %v3059 = vpop.xlane.xlu0 %3058
    %v3060 = vmul.f32 %v3057, %v87
    %v3061 = vmul.f32 %v3059, %v87
    %v3062 = vadd.f32 %v3060, 1e-12
    %v3063 = vadd.f32 %v3061, 1e-12
    %v3064 = vrsqrt.pop %v3062
    %v3065 = vrsqrt.pop %v3063
    %v3066 = vmul.f32 %v3052, %v3064
    %v3067 = vmul.f32 %v3053, %v3065
    %v3069 = vlaneseq
    %v3070 = vshrl.u32 %v3069, 7
    %v3071 = vsub.s32 0, %v3070
    %v3072 = vrot.slane %v3044, %v3071
    %v3074 = vmul.f32 %v3066, %v3072
    %v3075 = vmul.f32 %v3067, %v3072
    %v3077 = vlaneseq
    %v3078 = vshrl.u32 %v3077, 7
    %v3079 = vsub.s32 0, %v3078
    %v3080 = vrot.slane %v3045, %v3079
    %v3082 = vadd.f32 %v3074, %v3080
    %v3083 = vadd.f32 %v3075, %v3080
    %v3084 = vpack.c.bf16 %v3083, %v3082
    %s3085 = scalar_lea.vmem %s4, 256
    %v3086 = vld [vmem:[%s3085] sm:$0xf]
    %v3087 = vld [vmem:[%s3085 + $0x4] sm:$0xf]
    %v3088 = vld [vmem:[%s3085 + $0x8] sm:$0xf]
    %v3089 = vld [vmem:[%s3085 + $0xc] sm:$0xf]
    %v3090 = vld [vmem:[%s3085 + $0x10] sm:$0xf]
    %v3091 = vld [vmem:[%s3085 + $0x14] sm:$0xf]
    %v3092 = vld [vmem:[%s3085 + $0x18] sm:$0xf]
    %v3093 = vld [vmem:[%s3085 + $0x1c] sm:$0xf]
    %v3094 = vld [vmem:[%s3085 + $0x20] sm:$0xf]
    %v3095 = vld [vmem:[%s3085 + $0x24] sm:$0xf]
    %v3096 = vld [vmem:[%s3085 + $0x28] sm:$0xf]
    %v3097 = vld [vmem:[%s3085 + $0x2c] sm:$0xf]
    %v3098 = vld [vmem:[%s3085 + $0x30] sm:$0xf]
    %v3099 = vld [vmem:[%s3085 + $0x34] sm:$0xf]
    %v3100 = vld [vmem:[%s3085 + $0x38] sm:$0xf]
    %v3101 = vld [vmem:[%s3085 + $0x3c] sm:$0xf]
    %s3102 = scalar_lea.vmem %s7, 4
    %v3103 = vld [vmem:[%s3102] sm:$0x1]
    %v3105 = vlaneseq
    %v3106 = vshrl.u32 %v3105, 7
    %v3107 = vsub.s32 0, %v3106
    %v3108 = vrot.slane %v3103, %v3107
    %v3126 = vunpack.c.l.b16 %v3086
    %v3127 = vunpack.c.l.b16 %v3087
    %v3128 = vunpack.c.l.b16 %v3088
    %v3129 = vunpack.c.l.b16 %v3089
    %v3130 = vunpack.c.l.b16 %v3090
    %v3131 = vunpack.c.l.b16 %v3091
    %v3132 = vunpack.c.l.b16 %v3092
    %v3133 = vunpack.c.l.b16 %v3093
    %v3134 = vunpack.c.l.b16 %v3094
    %v3135 = vunpack.c.l.b16 %v3095
    %v3136 = vunpack.c.l.b16 %v3096
    %v3137 = vunpack.c.l.b16 %v3097
    %v3138 = vunpack.c.l.b16 %v3098
    %v3139 = vunpack.c.l.b16 %v3099
    %v3140 = vunpack.c.l.b16 %v3100
    %v3141 = vunpack.c.l.b16 %v3101
    %v3142 = vpack.c.b16 %v3127, %v3126
    %v3143 = vpack.c.b16 %v3129, %v3128
    %v3144 = vpack.c.b16 %v3131, %v3130
    %v3145 = vpack.c.b16 %v3133, %v3132
    %v3146 = vpack.c.b16 %v3135, %v3134
    %v3147 = vpack.c.b16 %v3137, %v3136
    %v3148 = vpack.c.b16 %v3139, %v3138
    %v3149 = vpack.c.b16 %v3141, %v3140
    %3158 = vmatprep.subr.bf16.mxu0 0
    %3159 = vmatpush1.bf16.msra.mxu0 %v3149
    %3160 = vmatprep.subr.bf16.mxu0 0
    %3161 = vmatpush1.bf16.msra.mxu0 %v3148
    %3162 = vmatprep.subr.bf16.mxu0 0
    %3163 = vmatpush1.bf16.msra.mxu0 %v3147
    %3164 = vmatprep.subr.bf16.mxu0 0
    %3165 = vmatpush1.bf16.msra.mxu0 %v3146
    %3166 = vmatprep.subr.bf16.mxu0 0
    %3167 = vmatpush1.bf16.msra.mxu0 %v3145
    %3168 = vmatprep.subr.bf16.mxu0 0
    %3169 = vmatpush1.bf16.msra.mxu0 %v3144
    %3170 = vmatprep.subr.bf16.mxu0 0
    %3171 = vmatpush1.bf16.msra.mxu0 %v3143
    %3172 = vmatprep.subr.bf16.mxu0 0
    %3173 = vmatpush1.bf16.msra.mxu0 %v3142
    %3174 = vmatprep.subr.bf16.mxu0 0
    %3175 = vmatpush2.bf16.msra.mxu0 0
    %3176 = vmatprep.subr.bf16.mxu0 0
    %3177 = vmatpush2.bf16.msra.mxu0 0
    %3178 = vmatprep.subr.bf16.mxu0 0
    %3179 = vmatpush2.bf16.msra.mxu0 0
    %3180 = vmatprep.subr.bf16.mxu0 0
    %3181 = vmatpush2.bf16.msra.mxu0 0
    %3182 = vmatprep.subr.bf16.mxu0 0
    %3183 = vmatpush2.bf16.msra.mxu0 0
    %3184 = vmatprep.subr.bf16.mxu0 0
    %3185 = vmatpush2.bf16.msra.mxu0 0
    %3186 = vmatprep.subr.bf16.mxu0 0
    %3187 = vmatpush2.bf16.msra.mxu0 0
    %3188 = vmatprep.subr.bf16.mxu0 0
    %3189 = vmatpush2.bf16.msra.mxu0 0
    %3190 = vmatprep.mubr.bf16.mxu0 0
    %3191 = vmatmul.mubr.bf16.gmra.mxu0 %v3084
    %v3192 = vpop.f32.mrf.mxu0
    %v3193 = vadd.f32 %v3108, %v3192
    %v3194 = vpop.f32.mrf.mxu0
    %v3195 = vpop.f32.mrf.mxu0
    %v3196 = vadd.f32 %v3108, %v3195
    %v3197 = vpop.f32.mrf.mxu0
    %3198 = vdwg.mxu0
    %s3199 = scalar_lea.vmem %s5, 256
    %v3200 = vld [vmem:[%s3199] sm:$0xf]
    %v3201 = vld [vmem:[%s3199 + $0x4] sm:$0xf]
    %v3202 = vld [vmem:[%s3199 + $0x8] sm:$0xf]
    %v3203 = vld [vmem:[%s3199 + $0xc] sm:$0xf]
    %v3204 = vld [vmem:[%s3199 + $0x10] sm:$0xf]
    %v3205 = vld [vmem:[%s3199 + $0x14] sm:$0xf]
    %v3206 = vld [vmem:[%s3199 + $0x18] sm:$0xf]
    %v3207 = vld [vmem:[%s3199 + $0x1c] sm:$0xf]
    %v3208 = vld [vmem:[%s3199 + $0x20] sm:$0xf]
    %v3209 = vld [vmem:[%s3199 + $0x24] sm:$0xf]
    %v3210 = vld [vmem:[%s3199 + $0x28] sm:$0xf]
    %v3211 = vld [vmem:[%s3199 + $0x2c] sm:$0xf]
    %v3212 = vld [vmem:[%s3199 + $0x30] sm:$0xf]
    %v3213 = vld [vmem:[%s3199 + $0x34] sm:$0xf]
    %v3214 = vld [vmem:[%s3199 + $0x38] sm:$0xf]
    %v3215 = vld [vmem:[%s3199 + $0x3c] sm:$0xf]
    %s3216 = scalar_lea.vmem %s8, 4
    %v3217 = vld [vmem:[%s3216] sm:$0x1]
    %v3219 = vlaneseq
    %v3220 = vshrl.u32 %v3219, 7
    %v3221 = vsub.s32 0, %v3220
    %v3222 = vrot.slane %v3217, %v3221
    %v3240 = vunpack.c.l.b16 %v3200
    %v3241 = vunpack.c.l.b16 %v3201
    %v3242 = vunpack.c.l.b16 %v3202
    %v3243 = vunpack.c.l.b16 %v3203
    %v3244 = vunpack.c.l.b16 %v3204
    %v3245 = vunpack.c.l.b16 %v3205
    %v3246 = vunpack.c.l.b16 %v3206
    %v3247 = vunpack.c.l.b16 %v3207
    %v3248 = vunpack.c.l.b16 %v3208
    %v3249 = vunpack.c.l.b16 %v3209
    %v3250 = vunpack.c.l.b16 %v3210
    %v3251 = vunpack.c.l.b16 %v3211
    %v3252 = vunpack.c.l.b16 %v3212
    %v3253 = vunpack.c.l.b16 %v3213
    %v3254 = vunpack.c.l.b16 %v3214
    %v3255 = vunpack.c.l.b16 %v3215
    %v3256 = vpack.c.b16 %v3241, %v3240
    %v3257 = vpack.c.b16 %v3243, %v3242
    %v3258 = vpack.c.b16 %v3245, %v3244
    %v3259 = vpack.c.b16 %v3247, %v3246
    %v3260 = vpack.c.b16 %v3249, %v3248
    %v3261 = vpack.c.b16 %v3251, %v3250
    %v3262 = vpack.c.b16 %v3253, %v3252
    %v3263 = vpack.c.b16 %v3255, %v3254
    %3272 = vmatprep.subr.bf16.mxu0 0
    %3273 = vmatpush1.bf16.msra.mxu0 %v3263
    %3274 = vmatprep.subr.bf16.mxu0 0
    %3275 = vmatpush1.bf16.msra.mxu0 %v3262
    %3276 = vmatprep.subr.bf16.mxu0 0
    %3277 = vmatpush1.bf16.msra.mxu0 %v3261
    %3278 = vmatprep.subr.bf16.mxu0 0
    %3279 = vmatpush1.bf16.msra.mxu0 %v3260
    %3280 = vmatprep.subr.bf16.mxu0 0
    %3281 = vmatpush1.bf16.msra.mxu0 %v3259
    %3282 = vmatprep.subr.bf16.mxu0 0
    %3283 = vmatpush1.bf16.msra.mxu0 %v3258
    %3284 = vmatprep.subr.bf16.mxu0 0
    %3285 = vmatpush1.bf16.msra.mxu0 %v3257
    %3286 = vmatprep.subr.bf16.mxu0 0
    %3287 = vmatpush1.bf16.msra.mxu0 %v3256
    %3288 = vmatprep.subr.bf16.mxu0 0
    %3289 = vmatpush2.bf16.msra.mxu0 0
    %3290 = vmatprep.subr.bf16.mxu0 0
    %3291 = vmatpush2.bf16.msra.mxu0 0
    %3292 = vmatprep.subr.bf16.mxu0 0
    %3293 = vmatpush2.bf16.msra.mxu0 0
    %3294 = vmatprep.subr.bf16.mxu0 0
    %3295 = vmatpush2.bf16.msra.mxu0 0
    %3296 = vmatprep.subr.bf16.mxu0 0
    %3297 = vmatpush2.bf16.msra.mxu0 0
    %3298 = vmatprep.subr.bf16.mxu0 0
    %3299 = vmatpush2.bf16.msra.mxu0 0
    %3300 = vmatprep.subr.bf16.mxu0 0
    %3301 = vmatpush2.bf16.msra.mxu0 0
    %3302 = vmatprep.subr.bf16.mxu0 0
    %3303 = vmatpush2.bf16.msra.mxu0 0
    %3304 = vmatprep.mubr.bf16.mxu0 0
    %3305 = vmatmul.mubr.bf16.gmra.mxu0 %v3084
    %v3306 = vpop.f32.mrf.mxu0
    %v3307 = vadd.f32 %v3222, %v3306
    %v3308 = vpop.f32.mrf.mxu0
    %v3309 = vpop.f32.mrf.mxu0
    %v3310 = vadd.f32 %v3222, %v3309
    %v3311 = vpop.f32.mrf.mxu0
    %3312 = vdwg.mxu0
    %s3313 = scalar_lea.vmem %s6, 256
    %v3314 = vld [vmem:[%s3313] sm:$0xf]
    %v3315 = vld [vmem:[%s3313 + $0x4] sm:$0xf]
    %v3316 = vld [vmem:[%s3313 + $0x8] sm:$0xf]
    %v3317 = vld [vmem:[%s3313 + $0xc] sm:$0xf]
    %v3318 = vld [vmem:[%s3313 + $0x10] sm:$0xf]
    %v3319 = vld [vmem:[%s3313 + $0x14] sm:$0xf]
    %v3320 = vld [vmem:[%s3313 + $0x18] sm:$0xf]
    %v3321 = vld [vmem:[%s3313 + $0x1c] sm:$0xf]
    %v3322 = vld [vmem:[%s3313 + $0x20] sm:$0xf]
    %v3323 = vld [vmem:[%s3313 + $0x24] sm:$0xf]
    %v3324 = vld [vmem:[%s3313 + $0x28] sm:$0xf]
    %v3325 = vld [vmem:[%s3313 + $0x2c] sm:$0xf]
    %v3326 = vld [vmem:[%s3313 + $0x30] sm:$0xf]
    %v3327 = vld [vmem:[%s3313 + $0x34] sm:$0xf]
    %v3328 = vld [vmem:[%s3313 + $0x38] sm:$0xf]
    %v3329 = vld [vmem:[%s3313 + $0x3c] sm:$0xf]
    %s3330 = scalar_lea.vmem %s9, 4
    %v3331 = vld [vmem:[%s3330] sm:$0x1]
    %v3333 = vlaneseq
    %v3334 = vshrl.u32 %v3333, 7
    %v3335 = vsub.s32 0, %v3334
    %v3336 = vrot.slane %v3331, %v3335
    %v3354 = vunpack.c.l.b16 %v3314
    %v3355 = vunpack.c.l.b16 %v3315
    %v3356 = vunpack.c.l.b16 %v3316
    %v3357 = vunpack.c.l.b16 %v3317
    %v3358 = vunpack.c.l.b16 %v3318
    %v3359 = vunpack.c.l.b16 %v3319
    %v3360 = vunpack.c.l.b16 %v3320
    %v3361 = vunpack.c.l.b16 %v3321
    %v3362 = vunpack.c.l.b16 %v3322
    %v3363 = vunpack.c.l.b16 %v3323
    %v3364 = vunpack.c.l.b16 %v3324
    %v3365 = vunpack.c.l.b16 %v3325
    %v3366 = vunpack.c.l.b16 %v3326
    %v3367 = vunpack.c.l.b16 %v3327
    %v3368 = vunpack.c.l.b16 %v3328
    %v3369 = vunpack.c.l.b16 %v3329
    %v3370 = vpack.c.b16 %v3355, %v3354
    %v3371 = vpack.c.b16 %v3357, %v3356
    %v3372 = vpack.c.b16 %v3359, %v3358
    %v3373 = vpack.c.b16 %v3361, %v3360
    %v3374 = vpack.c.b16 %v3363, %v3362
    %v3375 = vpack.c.b16 %v3365, %v3364
    %v3376 = vpack.c.b16 %v3367, %v3366
    %v3377 = vpack.c.b16 %v3369, %v3368
    %3386 = vmatprep.subr.bf16.mxu0 0
    %3387 = vmatpush1.bf16.msra.mxu0 %v3377
    %3388 = vmatprep.subr.bf16.mxu0 0
    %3389 = vmatpush1.bf16.msra.mxu0 %v3376
    %3390 = vmatprep.subr.bf16.mxu0 0
    %3391 = vmatpush1.bf16.msra.mxu0 %v3375
    %3392 = vmatprep.subr.bf16.mxu0 0
    %3393 = vmatpush1.bf16.msra.mxu0 %v3374
    %3394 = vmatprep.subr.bf16.mxu0 0
    %3395 = vmatpush1.bf16.msra.mxu0 %v3373
    %3396 = vmatprep.subr.bf16.mxu0 0
    %3397 = vmatpush1.bf16.msra.mxu0 %v3372
    %3398 = vmatprep.subr.bf16.mxu0 0
    %3399 = vmatpush1.bf16.msra.mxu0 %v3371
    %3400 = vmatprep.subr.bf16.mxu0 0
    %3401 = vmatpush1.bf16.msra.mxu0 %v3370
    %3402 = vmatprep.subr.bf16.mxu0 0
    %3403 = vmatpush2.bf16.msra.mxu0 0
    %3404 = vmatprep.subr.bf16.mxu0 0
    %3405 = vmatpush2.bf16.msra.mxu0 0
    %3406 = vmatprep.subr.bf16.mxu0 0
    %3407 = vmatpush2.bf16.msra.mxu0 0
    %3408 = vmatprep.subr.bf16.mxu0 0
    %3409 = vmatpush2.bf16.msra.mxu0 0
    %3410 = vmatprep.subr.bf16.mxu0 0
    %3411 = vmatpush2.bf16.msra.mxu0 0
    %3412 = vmatprep.subr.bf16.mxu0 0
    %3413 = vmatpush2.bf16.msra.mxu0 0
    %3414 = vmatprep.subr.bf16.mxu0 0
    %3415 = vmatpush2.bf16.msra.mxu0 0
    %3416 = vmatprep.subr.bf16.mxu0 0
    %3417 = vmatpush2.bf16.msra.mxu0 0
    %3418 = vmatprep.mubr.bf16.mxu0 0
    %3419 = vmatmul.mubr.bf16.gmra.mxu0 %v3084
    %v3420 = vpop.f32.mrf.mxu0
    %v3421 = vadd.f32 %v3336, %v3420
    %v3422 = vpop.f32.mrf.mxu0
    %v3423 = vpop.f32.mrf.mxu0
    %v3424 = vadd.f32 %v3336, %v3423
    %v3425 = vpop.f32.mrf.mxu0
    %3426 = vdwg.mxu0
    %v3427 = vpack.c.bf16 %v3193, %v3193
    %v3428 = vpack.c.bf16 %v3196, %v3196
    %v3429 = vpack.c.bf16 %v3307, %v3307
    %v3430 = vpack.c.bf16 %v3310, %v3310
    %v3432 = vsel %vm465, %v3427, 0
    %v3435 = vsel %vm465, %v3429, 0
    %3437 = vmatprep.subr.bf16.mxu0 0
    %3438 = vmatpush1.bf16.xpose.msra.mxu0 0
    %3439 = vmatprep.subr.bf16.mxu0 0
    %3440 = vmatpush1.bf16.xpose.msra.mxu0 0
    %3441 = vmatprep.subr.bf16.mxu0 0
    %3442 = vmatpush1.bf16.xpose.msra.mxu0 0
    %3443 = vmatprep.subr.bf16.mxu0 0
    %3444 = vmatpush1.bf16.xpose.msra.mxu0 0
    %3445 = vmatprep.subr.bf16.mxu0 0
    %3446 = vmatpush1.bf16.xpose.msra.mxu0 0
    %3447 = vmatprep.subr.bf16.mxu0 0
    %3448 = vmatpush1.bf16.xpose.msra.mxu0 0
    %3449 = vmatprep.subr.bf16.mxu0 0
    %3450 = vmatpush1.bf16.xpose.msra.mxu0 0
    %3451 = vmatprep.subr.bf16.mxu0 0
    %3452 = vmatpush1.bf16.xpose.msra.mxu0 %v3435
    %3453 = vmatprep.subr.bf16.mxu0 0
    %3454 = vmatpush2.bf16.xpose.msra.mxu0 0
    %3455 = vmatprep.subr.bf16.mxu0 0
    %3456 = vmatpush2.bf16.xpose.msra.mxu0 0
    %3457 = vmatprep.subr.bf16.mxu0 0
    %3458 = vmatpush2.bf16.xpose.msra.mxu0 0
    %3459 = vmatprep.subr.bf16.mxu0 0
    %3460 = vmatpush2.bf16.xpose.msra.mxu0 0
    %3461 = vmatprep.subr.bf16.mxu0 0
    %3462 = vmatpush2.bf16.xpose.msra.mxu0 0
    %3463 = vmatprep.subr.bf16.mxu0 0
    %3464 = vmatpush2.bf16.xpose.msra.mxu0 0
    %3465 = vmatprep.subr.bf16.mxu0 0
    %3466 = vmatpush2.bf16.xpose.msra.mxu0 0
    %3467 = vmatprep.subr.bf16.mxu0 0
    %3468 = vmatpush2.bf16.xpose.msra.mxu0 0
    %3469 = vmatprep.mubr.bf16.mxu0 0
    %3470 = vmatmul.mubr.bf16.gmra.mxu0 %v3432
    %v3471 = vpop.f32.mrf.mxu0
    %v3472 = vadd.f32 0.0, %v3471
    %v3473 = vpop.f32.mrf.mxu0
    %v3474 = vpop.f32.mrf.mxu0
    %v3475 = vpop.f32.mrf.mxu0
    %3476 = vdwg.mxu0
    %v3478 = vsel %vm465, %v3428, 0
    %v3481 = vsel %vm465, %v3430, 0
    %3483 = vmatprep.subr.bf16.mxu0 0
    %3484 = vmatpush1.bf16.xpose.msra.mxu0 0
    %3485 = vmatprep.subr.bf16.mxu0 0
    %3486 = vmatpush1.bf16.xpose.msra.mxu0 0
    %3487 = vmatprep.subr.bf16.mxu0 0
    %3488 = vmatpush1.bf16.xpose.msra.mxu0 0
    %3489 = vmatprep.subr.bf16.mxu0 0
    %3490 = vmatpush1.bf16.xpose.msra.mxu0 0
    %3491 = vmatprep.subr.bf16.mxu0 0
    %3492 = vmatpush1.bf16.xpose.msra.mxu0 0
    %3493 = vmatprep.subr.bf16.mxu0 0
    %3494 = vmatpush1.bf16.xpose.msra.mxu0 0
    %3495 = vmatprep.subr.bf16.mxu0 0
    %3496 = vmatpush1.bf16.xpose.msra.mxu0 0
    %3497 = vmatprep.subr.bf16.mxu0 0
    %3498 = vmatpush1.bf16.xpose.msra.mxu0 %v3481
    %3499 = vmatprep.subr.bf16.mxu0 0
    %3500 = vmatpush2.bf16.xpose.msra.mxu0 0
    %3501 = vmatprep.subr.bf16.mxu0 0
    %3502 = vmatpush2.bf16.xpose.msra.mxu0 0
    %3503 = vmatprep.subr.bf16.mxu0 0
    %3504 = vmatpush2.bf16.xpose.msra.mxu0 0
    %3505 = vmatprep.subr.bf16.mxu0 0
    %3506 = vmatpush2.bf16.xpose.msra.mxu0 0
    %3507 = vmatprep.subr.bf16.mxu0 0
    %3508 = vmatpush2.bf16.xpose.msra.mxu0 0
    %3509 = vmatprep.subr.bf16.mxu0 0
    %3510 = vmatpush2.bf16.xpose.msra.mxu0 0
    %3511 = vmatprep.subr.bf16.mxu0 0
    %3512 = vmatpush2.bf16.xpose.msra.mxu0 0
    %3513 = vmatprep.subr.bf16.mxu0 0
    %3514 = vmatpush2.bf16.xpose.msra.mxu0 0
    %3515 = vmatprep.mubr.bf16.mxu0 0
    %3516 = vmatmul.mubr.bf16.gmra.mxu0 %v3478
    %v3517 = vpop.f32.mrf.mxu0
    %v3518 = vadd.f32 0.0, %v3517
    %v3519 = vpop.f32.mrf.mxu0
    %v3520 = vpop.f32.mrf.mxu0
    %v3521 = vpop.f32.mrf.mxu0
    %3522 = vdwg.mxu0
    %v3523 = vmul.f32 %v3472, 0.17677669
    %v3524 = vmul.f32 %v3518, 0.17677669
    %v3525 = vadd.f32 %v3523, %v565
    %v3526 = vadd.f32 %v3524, %v569
    %v3527 = vsel %vm574, %v3525, -inf
    %3528 = vmax.xlane.f32.xlu0 %v3527
    %v3529 = vpop.xlane.xlu0 %3528
    %v3530 = vsel %vm574, %v3526, -inf
    %3531 = vmax.xlane.f32.xlu0 %v3530
    %v3532 = vpop.xlane.xlu0 %3531
    %v3533 = vsub.f32 %v3525, %v3529
    %v3534 = vsub.f32 %v3526, %v3532
    %v3535 = vmul.f32 %v3533, 1.442695
    %v3536 = vpow.pop %v3535
    %v3537 = vmul.f32 %v3534, 1.442695
    %v3538 = vpow.pop %v3537
    %v3539 = vsel %vm574, %v3536, 0.0
    %3540 = vadd.xlane.f32.xlu0 %v3539
    %v3541 = vpop.xlane.xlu0 %3540
    %v3542 = vsel %vm574, %v3538, 0.0
    %3543 = vadd.xlane.f32.xlu0 %v3542
    %v3544 = vpop.xlane.xlu0 %3543
    %v3545 = vrcp.pop %v3541
    %v3546 = vrcp.pop %v3544
    %v3547 = vmul.f32 %v3536, %v3545
    %v3548 = vmul.f32 %v3538, %v3546
    %v3549 = vpack.c.bf16 %v3547, %v3547
    %v3550 = vpack.c.bf16 %v3548, %v3548
    %v3551 = vpack.c.bf16 %v3421, %v3421
    %v3552 = vpack.c.bf16 %v3424, %v3424
    %v3554 = vsel %vm574, %v3549, 0
    %v3557 = vsel %vm604, %v3551, 0
    %3559 = vmatprep.subr.bf16.mxu0 0
    %3560 = vmatpush1.bf16.msra.mxu0 0
    %3561 = vmatprep.subr.bf16.mxu0 0
    %3562 = vmatpush1.bf16.msra.mxu0 0
    %3563 = vmatprep.subr.bf16.mxu0 0
    %3564 = vmatpush1.bf16.msra.mxu0 0
    %3565 = vmatprep.subr.bf16.mxu0 0
    %3566 = vmatpush1.bf16.msra.mxu0 0
    %3567 = vmatprep.subr.bf16.mxu0 0
    %3568 = vmatpush1.bf16.msra.mxu0 0
    %3569 = vmatprep.subr.bf16.mxu0 0
    %3570 = vmatpush1.bf16.msra.mxu0 0
    %3571 = vmatprep.subr.bf16.mxu0 0
    %3572 = vmatpush1.bf16.msra.mxu0 0
    %3573 = vmatprep.subr.bf16.mxu0 0
    %3574 = vmatpush1.bf16.msra.mxu0 %v3557
    %3575 = vmatprep.subr.bf16.mxu0 0
    %3576 = vmatpush2.bf16.msra.mxu0 0
    %3577 = vmatprep.subr.bf16.mxu0 0
    %3578 = vmatpush2.bf16.msra.mxu0 0
    %3579 = vmatprep.subr.bf16.mxu0 0
    %3580 = vmatpush2.bf16.msra.mxu0 0
    %3581 = vmatprep.subr.bf16.mxu0 0
    %3582 = vmatpush2.bf16.msra.mxu0 0
    %3583 = vmatprep.subr.bf16.mxu0 0
    %3584 = vmatpush2.bf16.msra.mxu0 0
    %3585 = vmatprep.subr.bf16.mxu0 0
    %3586 = vmatpush2.bf16.msra.mxu0 0
    %3587 = vmatprep.subr.bf16.mxu0 0
    %3588 = vmatpush2.bf16.msra.mxu0 0
    %3589 = vmatprep.subr.bf16.mxu0 0
    %3590 = vmatpush2.bf16.msra.mxu0 0
    %3591 = vmatprep.mubr.bf16.mxu0 0
    %3592 = vmatmul.mubr.bf16.gmra.mxu0 %v3554
    %v3593 = vpop.f32.mrf.mxu0
    %v3594 = vadd.f32 0.0, %v3593
    %v3595 = vpop.f32.mrf.mxu0
    %v3596 = vpop.f32.mrf.mxu0
    %v3597 = vpop.f32.mrf.mxu0
    %3598 = vdwg.mxu0
    %v3600 = vsel %vm574, %v3550, 0
    %v3603 = vsel %vm604, %v3552, 0
    %3605 = vmatprep.subr.bf16.mxu0 0
    %3606 = vmatpush1.bf16.msra.mxu0 0
    %3607 = vmatprep.subr.bf16.mxu0 0
    %3608 = vmatpush1.bf16.msra.mxu0 0
    %3609 = vmatprep.subr.bf16.mxu0 0
    %3610 = vmatpush1.bf16.msra.mxu0 0
    %3611 = vmatprep.subr.bf16.mxu0 0
    %3612 = vmatpush1.bf16.msra.mxu0 0
    %3613 = vmatprep.subr.bf16.mxu0 0
    %3614 = vmatpush1.bf16.msra.mxu0 0
    %3615 = vmatprep.subr.bf16.mxu0 0
    %3616 = vmatpush1.bf16.msra.mxu0 0
    %3617 = vmatprep.subr.bf16.mxu0 0
    %3618 = vmatpush1.bf16.msra.mxu0 0
    %3619 = vmatprep.subr.bf16.mxu0 0
    %3620 = vmatpush1.bf16.msra.mxu0 %v3603
    %3621 = vmatprep.subr.bf16.mxu0 0
    %3622 = vmatpush2.bf16.msra.mxu0 0
    %3623 = vmatprep.subr.bf16.mxu0 0
    %3624 = vmatpush2.bf16.msra.mxu0 0
    %3625 = vmatprep.subr.bf16.mxu0 0
    %3626 = vmatpush2.bf16.msra.mxu0 0
    %3627 = vmatprep.subr.bf16.mxu0 0
    %3628 = vmatpush2.bf16.msra.mxu0 0
    %3629 = vmatprep.subr.bf16.mxu0 0
    %3630 = vmatpush2.bf16.msra.mxu0 0
    %3631 = vmatprep.subr.bf16.mxu0 0
    %3632 = vmatpush2.bf16.msra.mxu0 0
    %3633 = vmatprep.subr.bf16.mxu0 0
    %3634 = vmatpush2.bf16.msra.mxu0 0
    %3635 = vmatprep.subr.bf16.mxu0 0
    %3636 = vmatpush2.bf16.msra.mxu0 0
    %3637 = vmatprep.mubr.bf16.mxu0 0
    %3638 = vmatmul.mubr.bf16.gmra.mxu0 %v3600
    %v3639 = vpop.f32.mrf.mxu0
    %v3640 = vadd.f32 0.0, %v3639
    %v3641 = vpop.f32.mrf.mxu0
    %v3642 = vpop.f32.mrf.mxu0
    %v3643 = vpop.f32.mrf.mxu0
    %3644 = vdwg.mxu0
    %v3645 = vpack.c.bf16 %v3640, %v3594
    %s3646 = scalar_lea.vmem %s10, 64
    %v3647 = vld [vmem:[%s3646] sm:$0xf]
    %v3648 = vld [vmem:[%s3646 + $0x4] sm:$0xf]
    %v3649 = vld [vmem:[%s3646 + $0x8] sm:$0xf]
    %v3650 = vld [vmem:[%s3646 + $0xc] sm:$0xf]
    %s3651 = scalar_lea.vmem %s4, 320
    %v3652 = vld [vmem:[%s3651] sm:$0xf]
    %v3653 = vld [vmem:[%s3651 + $0x4] sm:$0xf]
    %v3654 = vld [vmem:[%s3651 + $0x8] sm:$0xf]
    %v3655 = vld [vmem:[%s3651 + $0xc] sm:$0xf]
    %v3656 = vld [vmem:[%s3651 + $0x10] sm:$0xf]
    %v3657 = vld [vmem:[%s3651 + $0x14] sm:$0xf]
    %v3658 = vld [vmem:[%s3651 + $0x18] sm:$0xf]
    %v3659 = vld [vmem:[%s3651 + $0x1c] sm:$0xf]
    %v3660 = vld [vmem:[%s3651 + $0x20] sm:$0xf]
    %v3661 = vld [vmem:[%s3651 + $0x24] sm:$0xf]
    %v3662 = vld [vmem:[%s3651 + $0x28] sm:$0xf]
    %v3663 = vld [vmem:[%s3651 + $0x2c] sm:$0xf]
    %v3664 = vld [vmem:[%s3651 + $0x30] sm:$0xf]
    %v3665 = vld [vmem:[%s3651 + $0x34] sm:$0xf]
    %v3666 = vld [vmem:[%s3651 + $0x38] sm:$0xf]
    %v3667 = vld [vmem:[%s3651 + $0x3c] sm:$0xf]
    %s3668 = scalar_lea.vmem %s7, 5
    %v3669 = vld [vmem:[%s3668] sm:$0x1]
    %v3671 = vlaneseq
    %v3672 = vshrl.u32 %v3671, 7
    %v3673 = vsub.s32 0, %v3672
    %v3674 = vrot.slane %v3669, %v3673
    %v3692 = vunpack.c.l.b16 %v3652
    %v3693 = vunpack.c.l.b16 %v3653
    %v3694 = vunpack.c.l.b16 %v3654
    %v3695 = vunpack.c.l.b16 %v3655
    %v3696 = vunpack.c.l.b16 %v3656
    %v3697 = vunpack.c.l.b16 %v3657
    %v3698 = vunpack.c.l.b16 %v3658
    %v3699 = vunpack.c.l.b16 %v3659
    %v3700 = vunpack.c.l.b16 %v3660
    %v3701 = vunpack.c.l.b16 %v3661
    %v3702 = vunpack.c.l.b16 %v3662
    %v3703 = vunpack.c.l.b16 %v3663
    %v3704 = vunpack.c.l.b16 %v3664
    %v3705 = vunpack.c.l.b16 %v3665
    %v3706 = vunpack.c.l.b16 %v3666
    %v3707 = vunpack.c.l.b16 %v3667
    %v3708 = vpack.c.b16 %v3693, %v3692
    %v3709 = vpack.c.b16 %v3695, %v3694
    %v3710 = vpack.c.b16 %v3697, %v3696
    %v3711 = vpack.c.b16 %v3699, %v3698
    %v3712 = vpack.c.b16 %v3701, %v3700
    %v3713 = vpack.c.b16 %v3703, %v3702
    %v3714 = vpack.c.b16 %v3705, %v3704
    %v3715 = vpack.c.b16 %v3707, %v3706
    %3724 = vmatprep.subr.bf16.mxu0 0
    %3725 = vmatpush1.bf16.msra.mxu0 %v3715
    %3726 = vmatprep.subr.bf16.mxu0 0
    %3727 = vmatpush1.bf16.msra.mxu0 %v3714
    %3728 = vmatprep.subr.bf16.mxu0 0
    %3729 = vmatpush1.bf16.msra.mxu0 %v3713
    %3730 = vmatprep.subr.bf16.mxu0 0
    %3731 = vmatpush1.bf16.msra.mxu0 %v3712
    %3732 = vmatprep.subr.bf16.mxu0 0
    %3733 = vmatpush1.bf16.msra.mxu0 %v3711
    %3734 = vmatprep.subr.bf16.mxu0 0
    %3735 = vmatpush1.bf16.msra.mxu0 %v3710
    %3736 = vmatprep.subr.bf16.mxu0 0
    %3737 = vmatpush1.bf16.msra.mxu0 %v3709
    %3738 = vmatprep.subr.bf16.mxu0 0
    %3739 = vmatpush1.bf16.msra.mxu0 %v3708
    %3740 = vmatprep.subr.bf16.mxu0 0
    %3741 = vmatpush2.bf16.msra.mxu0 0
    %3742 = vmatprep.subr.bf16.mxu0 0
    %3743 = vmatpush2.bf16.msra.mxu0 0
    %3744 = vmatprep.subr.bf16.mxu0 0
    %3745 = vmatpush2.bf16.msra.mxu0 0
    %3746 = vmatprep.subr.bf16.mxu0 0
    %3747 = vmatpush2.bf16.msra.mxu0 0
    %3748 = vmatprep.subr.bf16.mxu0 0
    %3749 = vmatpush2.bf16.msra.mxu0 0
    %3750 = vmatprep.subr.bf16.mxu0 0
    %3751 = vmatpush2.bf16.msra.mxu0 0
    %3752 = vmatprep.subr.bf16.mxu0 0
    %3753 = vmatpush2.bf16.msra.mxu0 0
    %3754 = vmatprep.subr.bf16.mxu0 0
    %3755 = vmatpush2.bf16.msra.mxu0 0
    %3756 = vmatprep.mubr.bf16.mxu0 0
    %3757 = vmatmul.mubr.bf16.gmra.mxu0 %v3084
    %v3758 = vpop.f32.mrf.mxu0
    %v3759 = vadd.f32 %v3674, %v3758
    %v3760 = vpop.f32.mrf.mxu0
    %v3761 = vpop.f32.mrf.mxu0
    %v3762 = vadd.f32 %v3674, %v3761
    %v3763 = vpop.f32.mrf.mxu0
    %3764 = vdwg.mxu0
    %s3765 = scalar_lea.vmem %s5, 320
    %v3766 = vld [vmem:[%s3765] sm:$0xf]
    %v3767 = vld [vmem:[%s3765 + $0x4] sm:$0xf]
    %v3768 = vld [vmem:[%s3765 + $0x8] sm:$0xf]
    %v3769 = vld [vmem:[%s3765 + $0xc] sm:$0xf]
    %v3770 = vld [vmem:[%s3765 + $0x10] sm:$0xf]
    %v3771 = vld [vmem:[%s3765 + $0x14] sm:$0xf]
    %v3772 = vld [vmem:[%s3765 + $0x18] sm:$0xf]
    %v3773 = vld [vmem:[%s3765 + $0x1c] sm:$0xf]
    %v3774 = vld [vmem:[%s3765 + $0x20] sm:$0xf]
    %v3775 = vld [vmem:[%s3765 + $0x24] sm:$0xf]
    %v3776 = vld [vmem:[%s3765 + $0x28] sm:$0xf]
    %v3777 = vld [vmem:[%s3765 + $0x2c] sm:$0xf]
    %v3778 = vld [vmem:[%s3765 + $0x30] sm:$0xf]
    %v3779 = vld [vmem:[%s3765 + $0x34] sm:$0xf]
    %v3780 = vld [vmem:[%s3765 + $0x38] sm:$0xf]
    %v3781 = vld [vmem:[%s3765 + $0x3c] sm:$0xf]
    %s3782 = scalar_lea.vmem %s8, 5
    %v3783 = vld [vmem:[%s3782] sm:$0x1]
    %v3785 = vlaneseq
    %v3786 = vshrl.u32 %v3785, 7
    %v3787 = vsub.s32 0, %v3786
    %v3788 = vrot.slane %v3783, %v3787
    %v3806 = vunpack.c.l.b16 %v3766
    %v3807 = vunpack.c.l.b16 %v3767
    %v3808 = vunpack.c.l.b16 %v3768
    %v3809 = vunpack.c.l.b16 %v3769
    %v3810 = vunpack.c.l.b16 %v3770
    %v3811 = vunpack.c.l.b16 %v3771
    %v3812 = vunpack.c.l.b16 %v3772
    %v3813 = vunpack.c.l.b16 %v3773
    %v3814 = vunpack.c.l.b16 %v3774
    %v3815 = vunpack.c.l.b16 %v3775
    %v3816 = vunpack.c.l.b16 %v3776
    %v3817 = vunpack.c.l.b16 %v3777
    %v3818 = vunpack.c.l.b16 %v3778
    %v3819 = vunpack.c.l.b16 %v3779
    %v3820 = vunpack.c.l.b16 %v3780
    %v3821 = vunpack.c.l.b16 %v3781
    %v3822 = vpack.c.b16 %v3807, %v3806
    %v3823 = vpack.c.b16 %v3809, %v3808
    %v3824 = vpack.c.b16 %v3811, %v3810
    %v3825 = vpack.c.b16 %v3813, %v3812
    %v3826 = vpack.c.b16 %v3815, %v3814
    %v3827 = vpack.c.b16 %v3817, %v3816
    %v3828 = vpack.c.b16 %v3819, %v3818
    %v3829 = vpack.c.b16 %v3821, %v3820
    %3838 = vmatprep.subr.bf16.mxu0 0
    %3839 = vmatpush1.bf16.msra.mxu0 %v3829
    %3840 = vmatprep.subr.bf16.mxu0 0
    %3841 = vmatpush1.bf16.msra.mxu0 %v3828
    %3842 = vmatprep.subr.bf16.mxu0 0
    %3843 = vmatpush1.bf16.msra.mxu0 %v3827
    %3844 = vmatprep.subr.bf16.mxu0 0
    %3845 = vmatpush1.bf16.msra.mxu0 %v3826
    %3846 = vmatprep.subr.bf16.mxu0 0
    %3847 = vmatpush1.bf16.msra.mxu0 %v3825
    %3848 = vmatprep.subr.bf16.mxu0 0
    %3849 = vmatpush1.bf16.msra.mxu0 %v3824
    %3850 = vmatprep.subr.bf16.mxu0 0
    %3851 = vmatpush1.bf16.msra.mxu0 %v3823
    %3852 = vmatprep.subr.bf16.mxu0 0
    %3853 = vmatpush1.bf16.msra.mxu0 %v3822
    %3854 = vmatprep.subr.bf16.mxu0 0
    %3855 = vmatpush2.bf16.msra.mxu0 0
    %3856 = vmatprep.subr.bf16.mxu0 0
    %3857 = vmatpush2.bf16.msra.mxu0 0
    %3858 = vmatprep.subr.bf16.mxu0 0
    %3859 = vmatpush2.bf16.msra.mxu0 0
    %3860 = vmatprep.subr.bf16.mxu0 0
    %3861 = vmatpush2.bf16.msra.mxu0 0
    %3862 = vmatprep.subr.bf16.mxu0 0
    %3863 = vmatpush2.bf16.msra.mxu0 0
    %3864 = vmatprep.subr.bf16.mxu0 0
    %3865 = vmatpush2.bf16.msra.mxu0 0
    %3866 = vmatprep.subr.bf16.mxu0 0
    %3867 = vmatpush2.bf16.msra.mxu0 0
    %3868 = vmatprep.subr.bf16.mxu0 0
    %3869 = vmatpush2.bf16.msra.mxu0 0
    %3870 = vmatprep.mubr.bf16.mxu0 0
    %3871 = vmatmul.mubr.bf16.gmra.mxu0 %v3084
    %v3872 = vpop.f32.mrf.mxu0
    %v3873 = vadd.f32 %v3788, %v3872
    %v3874 = vpop.f32.mrf.mxu0
    %v3875 = vpop.f32.mrf.mxu0
    %v3876 = vadd.f32 %v3788, %v3875
    %v3877 = vpop.f32.mrf.mxu0
    %3878 = vdwg.mxu0
    %s3879 = scalar_lea.vmem %s6, 320
    %v3880 = vld [vmem:[%s3879] sm:$0xf]
    %v3881 = vld [vmem:[%s3879 + $0x4] sm:$0xf]
    %v3882 = vld [vmem:[%s3879 + $0x8] sm:$0xf]
    %v3883 = vld [vmem:[%s3879 + $0xc] sm:$0xf]
    %v3884 = vld [vmem:[%s3879 + $0x10] sm:$0xf]
    %v3885 = vld [vmem:[%s3879 + $0x14] sm:$0xf]
    %v3886 = vld [vmem:[%s3879 + $0x18] sm:$0xf]
    %v3887 = vld [vmem:[%s3879 + $0x1c] sm:$0xf]
    %v3888 = vld [vmem:[%s3879 + $0x20] sm:$0xf]
    %v3889 = vld [vmem:[%s3879 + $0x24] sm:$0xf]
    %v3890 = vld [vmem:[%s3879 + $0x28] sm:$0xf]
    %v3891 = vld [vmem:[%s3879 + $0x2c] sm:$0xf]
    %v3892 = vld [vmem:[%s3879 + $0x30] sm:$0xf]
    %v3893 = vld [vmem:[%s3879 + $0x34] sm:$0xf]
    %v3894 = vld [vmem:[%s3879 + $0x38] sm:$0xf]
    %v3895 = vld [vmem:[%s3879 + $0x3c] sm:$0xf]
    %s3896 = scalar_lea.vmem %s9, 5
    %v3897 = vld [vmem:[%s3896] sm:$0x1]
    %v3899 = vlaneseq
    %v3900 = vshrl.u32 %v3899, 7
    %v3901 = vsub.s32 0, %v3900
    %v3902 = vrot.slane %v3897, %v3901
    %v3920 = vunpack.c.l.b16 %v3880
    %v3921 = vunpack.c.l.b16 %v3881
    %v3922 = vunpack.c.l.b16 %v3882
    %v3923 = vunpack.c.l.b16 %v3883
    %v3924 = vunpack.c.l.b16 %v3884
    %v3925 = vunpack.c.l.b16 %v3885
    %v3926 = vunpack.c.l.b16 %v3886
    %v3927 = vunpack.c.l.b16 %v3887
    %v3928 = vunpack.c.l.b16 %v3888
    %v3929 = vunpack.c.l.b16 %v3889
    %v3930 = vunpack.c.l.b16 %v3890
    %v3931 = vunpack.c.l.b16 %v3891
    %v3932 = vunpack.c.l.b16 %v3892
    %v3933 = vunpack.c.l.b16 %v3893
    %v3934 = vunpack.c.l.b16 %v3894
    %v3935 = vunpack.c.l.b16 %v3895
    %v3936 = vpack.c.b16 %v3921, %v3920
    %v3937 = vpack.c.b16 %v3923, %v3922
    %v3938 = vpack.c.b16 %v3925, %v3924
    %v3939 = vpack.c.b16 %v3927, %v3926
    %v3940 = vpack.c.b16 %v3929, %v3928
    %v3941 = vpack.c.b16 %v3931, %v3930
    %v3942 = vpack.c.b16 %v3933, %v3932
    %v3943 = vpack.c.b16 %v3935, %v3934
    %3952 = vmatprep.subr.bf16.mxu0 0
    %3953 = vmatpush1.bf16.msra.mxu0 %v3943
    %3954 = vmatprep.subr.bf16.mxu0 0
    %3955 = vmatpush1.bf16.msra.mxu0 %v3942
    %3956 = vmatprep.subr.bf16.mxu0 0
    %3957 = vmatpush1.bf16.msra.mxu0 %v3941
    %3958 = vmatprep.subr.bf16.mxu0 0
    %3959 = vmatpush1.bf16.msra.mxu0 %v3940
    %3960 = vmatprep.subr.bf16.mxu0 0
    %3961 = vmatpush1.bf16.msra.mxu0 %v3939
    %3962 = vmatprep.subr.bf16.mxu0 0
    %3963 = vmatpush1.bf16.msra.mxu0 %v3938
    %3964 = vmatprep.subr.bf16.mxu0 0
    %3965 = vmatpush1.bf16.msra.mxu0 %v3937
    %3966 = vmatprep.subr.bf16.mxu0 0
    %3967 = vmatpush1.bf16.msra.mxu0 %v3936
    %3968 = vmatprep.subr.bf16.mxu0 0
    %3969 = vmatpush2.bf16.msra.mxu0 0
    %3970 = vmatprep.subr.bf16.mxu0 0
    %3971 = vmatpush2.bf16.msra.mxu0 0
    %3972 = vmatprep.subr.bf16.mxu0 0
    %3973 = vmatpush2.bf16.msra.mxu0 0
    %3974 = vmatprep.subr.bf16.mxu0 0
    %3975 = vmatpush2.bf16.msra.mxu0 0
    %3976 = vmatprep.subr.bf16.mxu0 0
    %3977 = vmatpush2.bf16.msra.mxu0 0
    %3978 = vmatprep.subr.bf16.mxu0 0
    %3979 = vmatpush2.bf16.msra.mxu0 0
    %3980 = vmatprep.subr.bf16.mxu0 0
    %3981 = vmatpush2.bf16.msra.mxu0 0
    %3982 = vmatprep.subr.bf16.mxu0 0
    %3983 = vmatpush2.bf16.msra.mxu0 0
    %3984 = vmatprep.mubr.bf16.mxu0 0
    %3985 = vmatmul.mubr.bf16.gmra.mxu0 %v3084
    %v3986 = vpop.f32.mrf.mxu0
    %v3987 = vadd.f32 %v3902, %v3986
    %v3988 = vpop.f32.mrf.mxu0
    %v3989 = vpop.f32.mrf.mxu0
    %v3990 = vadd.f32 %v3902, %v3989
    %v3991 = vpop.f32.mrf.mxu0
    %3992 = vdwg.mxu0
    %v3993 = vpack.c.bf16 %v3759, %v3759
    %v3994 = vpack.c.bf16 %v3762, %v3762
    %v3995 = vpack.c.bf16 %v3873, %v3873
    %v3996 = vpack.c.bf16 %v3876, %v3876
    %v3998 = vsel %vm465, %v3993, 0
    %v4001 = vsel %vm465, %v3995, 0
    %4003 = vmatprep.subr.bf16.mxu0 0
    %4004 = vmatpush1.bf16.xpose.msra.mxu0 0
    %4005 = vmatprep.subr.bf16.mxu0 0
    %4006 = vmatpush1.bf16.xpose.msra.mxu0 0
    %4007 = vmatprep.subr.bf16.mxu0 0
    %4008 = vmatpush1.bf16.xpose.msra.mxu0 0
    %4009 = vmatprep.subr.bf16.mxu0 0
    %4010 = vmatpush1.bf16.xpose.msra.mxu0 0
    %4011 = vmatprep.subr.bf16.mxu0 0
    %4012 = vmatpush1.bf16.xpose.msra.mxu0 0
    %4013 = vmatprep.subr.bf16.mxu0 0
    %4014 = vmatpush1.bf16.xpose.msra.mxu0 0
    %4015 = vmatprep.subr.bf16.mxu0 0
    %4016 = vmatpush1.bf16.xpose.msra.mxu0 0
    %4017 = vmatprep.subr.bf16.mxu0 0
    %4018 = vmatpush1.bf16.xpose.msra.mxu0 %v4001
    %4019 = vmatprep.subr.bf16.mxu0 0
    %4020 = vmatpush2.bf16.xpose.msra.mxu0 0
    %4021 = vmatprep.subr.bf16.mxu0 0
    %4022 = vmatpush2.bf16.xpose.msra.mxu0 0
    %4023 = vmatprep.subr.bf16.mxu0 0
    %4024 = vmatpush2.bf16.xpose.msra.mxu0 0
    %4025 = vmatprep.subr.bf16.mxu0 0
    %4026 = vmatpush2.bf16.xpose.msra.mxu0 0
    %4027 = vmatprep.subr.bf16.mxu0 0
    %4028 = vmatpush2.bf16.xpose.msra.mxu0 0
    %4029 = vmatprep.subr.bf16.mxu0 0
    %4030 = vmatpush2.bf16.xpose.msra.mxu0 0
    %4031 = vmatprep.subr.bf16.mxu0 0
    %4032 = vmatpush2.bf16.xpose.msra.mxu0 0
    %4033 = vmatprep.subr.bf16.mxu0 0
    %4034 = vmatpush2.bf16.xpose.msra.mxu0 0
    %4035 = vmatprep.mubr.bf16.mxu0 0
    %4036 = vmatmul.mubr.bf16.gmra.mxu0 %v3998
    %v4037 = vpop.f32.mrf.mxu0
    %v4038 = vadd.f32 0.0, %v4037
    %v4039 = vpop.f32.mrf.mxu0
    %v4040 = vpop.f32.mrf.mxu0
    %v4041 = vpop.f32.mrf.mxu0
    %4042 = vdwg.mxu0
    %v4044 = vsel %vm465, %v3994, 0
    %v4047 = vsel %vm465, %v3996, 0
    %4049 = vmatprep.subr.bf16.mxu0 0
    %4050 = vmatpush1.bf16.xpose.msra.mxu0 0
    %4051 = vmatprep.subr.bf16.mxu0 0
    %4052 = vmatpush1.bf16.xpose.msra.mxu0 0
    %4053 = vmatprep.subr.bf16.mxu0 0
    %4054 = vmatpush1.bf16.xpose.msra.mxu0 0
    %4055 = vmatprep.subr.bf16.mxu0 0
    %4056 = vmatpush1.bf16.xpose.msra.mxu0 0
    %4057 = vmatprep.subr.bf16.mxu0 0
    %4058 = vmatpush1.bf16.xpose.msra.mxu0 0
    %4059 = vmatprep.subr.bf16.mxu0 0
    %4060 = vmatpush1.bf16.xpose.msra.mxu0 0
    %4061 = vmatprep.subr.bf16.mxu0 0
    %4062 = vmatpush1.bf16.xpose.msra.mxu0 0
    %4063 = vmatprep.subr.bf16.mxu0 0
    %4064 = vmatpush1.bf16.xpose.msra.mxu0 %v4047
    %4065 = vmatprep.subr.bf16.mxu0 0
    %4066 = vmatpush2.bf16.xpose.msra.mxu0 0
    %4067 = vmatprep.subr.bf16.mxu0 0
    %4068 = vmatpush2.bf16.xpose.msra.mxu0 0
    %4069 = vmatprep.subr.bf16.mxu0 0
    %4070 = vmatpush2.bf16.xpose.msra.mxu0 0
    %4071 = vmatprep.subr.bf16.mxu0 0
    %4072 = vmatpush2.bf16.xpose.msra.mxu0 0
    %4073 = vmatprep.subr.bf16.mxu0 0
    %4074 = vmatpush2.bf16.xpose.msra.mxu0 0
    %4075 = vmatprep.subr.bf16.mxu0 0
    %4076 = vmatpush2.bf16.xpose.msra.mxu0 0
    %4077 = vmatprep.subr.bf16.mxu0 0
    %4078 = vmatpush2.bf16.xpose.msra.mxu0 0
    %4079 = vmatprep.subr.bf16.mxu0 0
    %4080 = vmatpush2.bf16.xpose.msra.mxu0 0
    %4081 = vmatprep.mubr.bf16.mxu0 0
    %4082 = vmatmul.mubr.bf16.gmra.mxu0 %v4044
    %v4083 = vpop.f32.mrf.mxu0
    %v4084 = vadd.f32 0.0, %v4083
    %v4085 = vpop.f32.mrf.mxu0
    %v4086 = vpop.f32.mrf.mxu0
    %v4087 = vpop.f32.mrf.mxu0
    %4088 = vdwg.mxu0
    %v4089 = vmul.f32 %v4038, 0.17677669
    %v4090 = vmul.f32 %v4084, 0.17677669
    %v4091 = vadd.f32 %v4089, %v565
    %v4092 = vadd.f32 %v4090, %v569
    %v4093 = vsel %vm574, %v4091, -inf
    %4094 = vmax.xlane.f32.xlu0 %v4093
    %v4095 = vpop.xlane.xlu0 %4094
    %v4096 = vsel %vm574, %v4092, -inf
    %4097 = vmax.xlane.f32.xlu0 %v4096
    %v4098 = vpop.xlane.xlu0 %4097
    %v4099 = vsub.f32 %v4091, %v4095
    %v4100 = vsub.f32 %v4092, %v4098
    %v4101 = vmul.f32 %v4099, 1.442695
    %v4102 = vpow.pop %v4101
    %v4103 = vmul.f32 %v4100, 1.442695
    %v4104 = vpow.pop %v4103
    %v4105 = vsel %vm574, %v4102, 0.0
    %4106 = vadd.xlane.f32.xlu0 %v4105
    %v4107 = vpop.xlane.xlu0 %4106
    %v4108 = vsel %vm574, %v4104, 0.0
    %4109 = vadd.xlane.f32.xlu0 %v4108
    %v4110 = vpop.xlane.xlu0 %4109
    %v4111 = vrcp.pop %v4107
    %v4112 = vrcp.pop %v4110
    %v4113 = vmul.f32 %v4102, %v4111
    %v4114 = vmul.f32 %v4104, %v4112
    %v4115 = vpack.c.bf16 %v4113, %v4113
    %v4116 = vpack.c.bf16 %v4114, %v4114
    %v4117 = vpack.c.bf16 %v3987, %v3987
    %v4118 = vpack.c.bf16 %v3990, %v3990
    %v4120 = vsel %vm574, %v4115, 0
    %v4123 = vsel %vm604, %v4117, 0
    %4125 = vmatprep.subr.bf16.mxu0 0
    %4126 = vmatpush1.bf16.msra.mxu0 0
    %4127 = vmatprep.subr.bf16.mxu0 0
    %4128 = vmatpush1.bf16.msra.mxu0 0
    %4129 = vmatprep.subr.bf16.mxu0 0
    %4130 = vmatpush1.bf16.msra.mxu0 0
    %4131 = vmatprep.subr.bf16.mxu0 0
    %4132 = vmatpush1.bf16.msra.mxu0 0
    %4133 = vmatprep.subr.bf16.mxu0 0
    %4134 = vmatpush1.bf16.msra.mxu0 0
    %4135 = vmatprep.subr.bf16.mxu0 0
    %4136 = vmatpush1.bf16.msra.mxu0 0
    %4137 = vmatprep.subr.bf16.mxu0 0
    %4138 = vmatpush1.bf16.msra.mxu0 0
    %4139 = vmatprep.subr.bf16.mxu0 0
    %4140 = vmatpush1.bf16.msra.mxu0 %v4123
    %4141 = vmatprep.subr.bf16.mxu0 0
    %4142 = vmatpush2.bf16.msra.mxu0 0
    %4143 = vmatprep.subr.bf16.mxu0 0
    %4144 = vmatpush2.bf16.msra.mxu0 0
    %4145 = vmatprep.subr.bf16.mxu0 0
    %4146 = vmatpush2.bf16.msra.mxu0 0
    %4147 = vmatprep.subr.bf16.mxu0 0
    %4148 = vmatpush2.bf16.msra.mxu0 0
    %4149 = vmatprep.subr.bf16.mxu0 0
    %4150 = vmatpush2.bf16.msra.mxu0 0
    %4151 = vmatprep.subr.bf16.mxu0 0
    %4152 = vmatpush2.bf16.msra.mxu0 0
    %4153 = vmatprep.subr.bf16.mxu0 0
    %4154 = vmatpush2.bf16.msra.mxu0 0
    %4155 = vmatprep.subr.bf16.mxu0 0
    %4156 = vmatpush2.bf16.msra.mxu0 0
    %4157 = vmatprep.mubr.bf16.mxu0 0
    %4158 = vmatmul.mubr.bf16.gmra.mxu0 %v4120
    %v4159 = vpop.f32.mrf.mxu0
    %v4160 = vadd.f32 0.0, %v4159
    %v4161 = vpop.f32.mrf.mxu0
    %v4162 = vpop.f32.mrf.mxu0
    %v4163 = vpop.f32.mrf.mxu0
    %4164 = vdwg.mxu0
    %v4166 = vsel %vm574, %v4116, 0
    %v4169 = vsel %vm604, %v4118, 0
    %4171 = vmatprep.subr.bf16.mxu0 0
    %4172 = vmatpush1.bf16.msra.mxu0 0
    %4173 = vmatprep.subr.bf16.mxu0 0
    %4174 = vmatpush1.bf16.msra.mxu0 0
    %4175 = vmatprep.subr.bf16.mxu0 0
    %4176 = vmatpush1.bf16.msra.mxu0 0
    %4177 = vmatprep.subr.bf16.mxu0 0
    %4178 = vmatpush1.bf16.msra.mxu0 0
    %4179 = vmatprep.subr.bf16.mxu0 0
    %4180 = vmatpush1.bf16.msra.mxu0 0
    %4181 = vmatprep.subr.bf16.mxu0 0
    %4182 = vmatpush1.bf16.msra.mxu0 0
    %4183 = vmatprep.subr.bf16.mxu0 0
    %4184 = vmatpush1.bf16.msra.mxu0 0
    %4185 = vmatprep.subr.bf16.mxu0 0
    %4186 = vmatpush1.bf16.msra.mxu0 %v4169
    %4187 = vmatprep.subr.bf16.mxu0 0
    %4188 = vmatpush2.bf16.msra.mxu0 0
    %4189 = vmatprep.subr.bf16.mxu0 0
    %4190 = vmatpush2.bf16.msra.mxu0 0
    %4191 = vmatprep.subr.bf16.mxu0 0
    %4192 = vmatpush2.bf16.msra.mxu0 0
    %4193 = vmatprep.subr.bf16.mxu0 0
    %4194 = vmatpush2.bf16.msra.mxu0 0
    %4195 = vmatprep.subr.bf16.mxu0 0
    %4196 = vmatpush2.bf16.msra.mxu0 0
    %4197 = vmatprep.subr.bf16.mxu0 0
    %4198 = vmatpush2.bf16.msra.mxu0 0
    %4199 = vmatprep.subr.bf16.mxu0 0
    %4200 = vmatpush2.bf16.msra.mxu0 0
    %4201 = vmatprep.subr.bf16.mxu0 0
    %4202 = vmatpush2.bf16.msra.mxu0 0
    %4203 = vmatprep.mubr.bf16.mxu0 0
    %4204 = vmatmul.mubr.bf16.gmra.mxu0 %v4166
    %v4205 = vpop.f32.mrf.mxu0
    %v4206 = vadd.f32 0.0, %v4205
    %v4207 = vpop.f32.mrf.mxu0
    %v4208 = vpop.f32.mrf.mxu0
    %v4209 = vpop.f32.mrf.mxu0
    %4210 = vdwg.mxu0
    %v4211 = vpack.c.bf16 %v4206, %v4160
    %s4212 = scalar_lea.vmem %s10, 80
    %v4213 = vld [vmem:[%s4212] sm:$0xf]
    %v4214 = vld [vmem:[%s4212 + $0x4] sm:$0xf]
    %v4215 = vld [vmem:[%s4212 + $0x8] sm:$0xf]
    %v4216 = vld [vmem:[%s4212 + $0xc] sm:$0xf]
    %v4221 = vunpack.c.l.b16 %v4213
    %v4222 = vunpack.c.l.b16 %v4214
    %v4223 = vunpack.c.l.b16 %v4215
    %v4224 = vunpack.c.l.b16 %v4216
    %v4225 = vpack.c.b16 %v4222, %v4221
    %v4226 = vpack.c.b16 %v4224, %v4223
    %v4230 = vsel %vm465, %v4211, 0
    %4232 = vmatprep.subr.bf16.mxu0 0
    %4233 = vmatpush1.bf16.msra.mxu0 0
    %4234 = vmatprep.subr.bf16.mxu0 0
    %4235 = vmatpush1.bf16.msra.mxu0 0
    %4236 = vmatprep.subr.bf16.mxu0 0
    %4237 = vmatpush1.bf16.msra.mxu0 0
    %4238 = vmatprep.subr.bf16.mxu0 0
    %4239 = vmatpush1.bf16.msra.mxu0 0
    %4240 = vmatprep.subr.bf16.mxu0 0
    %4241 = vmatpush1.bf16.msra.mxu0 0
    %4242 = vmatprep.subr.bf16.mxu0 0
    %4243 = vmatpush1.bf16.msra.mxu0 0
    %4244 = vmatprep.subr.bf16.mxu0 0
    %4245 = vmatpush1.bf16.msra.mxu0 %v4226
    %4246 = vmatprep.subr.bf16.mxu0 0
    %4247 = vmatpush1.bf16.msra.mxu0 %v4225
    %4248 = vmatprep.subr.bf16.mxu0 0
    %4249 = vmatpush2.bf16.msra.mxu0 0
    %4250 = vmatprep.subr.bf16.mxu0 0
    %4251 = vmatpush2.bf16.msra.mxu0 0
    %4252 = vmatprep.subr.bf16.mxu0 0
    %4253 = vmatpush2.bf16.msra.mxu0 0
    %4254 = vmatprep.subr.bf16.mxu0 0
    %4255 = vmatpush2.bf16.msra.mxu0 0
    %4256 = vmatprep.subr.bf16.mxu0 0
    %4257 = vmatpush2.bf16.msra.mxu0 0
    %4258 = vmatprep.subr.bf16.mxu0 0
    %4259 = vmatpush2.bf16.msra.mxu0 0
    %4260 = vmatprep.subr.bf16.mxu0 0
    %4261 = vmatpush2.bf16.msra.mxu0 0
    %4262 = vmatprep.subr.bf16.mxu0 0
    %4263 = vmatpush2.bf16.msra.mxu0 0
    %4264 = vmatprep.mubr.bf16.mxu0 0
    %4265 = vmatmul.mubr.bf16.gmra.mxu0 %v4230
    %v4266 = vpop.f32.mrf.mxu0
    %v4267 = vadd.f32 0.0, %v4266
    %v4268 = vpop.f32.mrf.mxu0
    %v4269 = vpop.f32.mrf.mxu0
    %v4270 = vadd.f32 0.0, %v4269
    %v4271 = vpop.f32.mrf.mxu0
    %4272 = vdwg.mxu0
    %v4277 = vunpack.c.l.b16 %v3647
    %v4278 = vunpack.c.l.b16 %v3648
    %v4279 = vunpack.c.l.b16 %v3649
    %v4280 = vunpack.c.l.b16 %v3650
    %v4281 = vpack.c.b16 %v4278, %v4277
    %v4282 = vpack.c.b16 %v4280, %v4279
    %v4286 = vsel %vm465, %v3645, 0
    %4288 = vmatprep.subr.bf16.mxu0 0
    %4289 = vmatpush1.bf16.msra.mxu0 0
    %4290 = vmatprep.subr.bf16.mxu0 0
    %4291 = vmatpush1.bf16.msra.mxu0 0
    %4292 = vmatprep.subr.bf16.mxu0 0
    %4293 = vmatpush1.bf16.msra.mxu0 0
    %4294 = vmatprep.subr.bf16.mxu0 0
    %4295 = vmatpush1.bf16.msra.mxu0 0
    %4296 = vmatprep.subr.bf16.mxu0 0
    %4297 = vmatpush1.bf16.msra.mxu0 0
    %4298 = vmatprep.subr.bf16.mxu0 0
    %4299 = vmatpush1.bf16.msra.mxu0 0
    %4300 = vmatprep.subr.bf16.mxu0 0
    %4301 = vmatpush1.bf16.msra.mxu0 %v4282
    %4302 = vmatprep.subr.bf16.mxu0 0
    %4303 = vmatpush1.bf16.msra.mxu0 %v4281
    %4304 = vmatprep.subr.bf16.mxu0 0
    %4305 = vmatpush2.bf16.msra.mxu0 0
    %4306 = vmatprep.subr.bf16.mxu0 0
    %4307 = vmatpush2.bf16.msra.mxu0 0
    %4308 = vmatprep.subr.bf16.mxu0 0
    %4309 = vmatpush2.bf16.msra.mxu0 0
    %4310 = vmatprep.subr.bf16.mxu0 0
    %4311 = vmatpush2.bf16.msra.mxu0 0
    %4312 = vmatprep.subr.bf16.mxu0 0
    %4313 = vmatpush2.bf16.msra.mxu0 0
    %4314 = vmatprep.subr.bf16.mxu0 0
    %4315 = vmatpush2.bf16.msra.mxu0 0
    %4316 = vmatprep.subr.bf16.mxu0 0
    %4317 = vmatpush2.bf16.msra.mxu0 0
    %4318 = vmatprep.subr.bf16.mxu0 0
    %4319 = vmatpush2.bf16.msra.mxu0 0
    %4320 = vmatprep.mubr.bf16.mxu0 0
    %4321 = vmatmul.mubr.bf16.gmra.mxu0 %v4286
    %v4322 = vpop.f32.mrf.mxu0
    %v4323 = vadd.f32 %v4267, %v4322
    %v4324 = vpop.f32.mrf.mxu0
    %v4325 = vpop.f32.mrf.mxu0
    %v4326 = vadd.f32 %v4270, %v4325
    %v4327 = vpop.f32.mrf.mxu0
    %4328 = vdwg.mxu0
    %s4329 = scalar_lea.vmem %s4, 384
    %v4330 = vld [vmem:[%s4329] sm:$0xf]
    %v4331 = vld [vmem:[%s4329 + $0x4] sm:$0xf]
    %v4332 = vld [vmem:[%s4329 + $0x8] sm:$0xf]
    %v4333 = vld [vmem:[%s4329 + $0xc] sm:$0xf]
    %v4334 = vld [vmem:[%s4329 + $0x10] sm:$0xf]
    %v4335 = vld [vmem:[%s4329 + $0x14] sm:$0xf]
    %v4336 = vld [vmem:[%s4329 + $0x18] sm:$0xf]
    %v4337 = vld [vmem:[%s4329 + $0x1c] sm:$0xf]
    %v4338 = vld [vmem:[%s4329 + $0x20] sm:$0xf]
    %v4339 = vld [vmem:[%s4329 + $0x24] sm:$0xf]
    %v4340 = vld [vmem:[%s4329 + $0x28] sm:$0xf]
    %v4341 = vld [vmem:[%s4329 + $0x2c] sm:$0xf]
    %v4342 = vld [vmem:[%s4329 + $0x30] sm:$0xf]
    %v4343 = vld [vmem:[%s4329 + $0x34] sm:$0xf]
    %v4344 = vld [vmem:[%s4329 + $0x38] sm:$0xf]
    %v4345 = vld [vmem:[%s4329 + $0x3c] sm:$0xf]
    %s4346 = scalar_lea.vmem %s7, 6
    %v4347 = vld [vmem:[%s4346] sm:$0x1]
    %v4349 = vlaneseq
    %v4350 = vshrl.u32 %v4349, 7
    %v4351 = vsub.s32 0, %v4350
    %v4352 = vrot.slane %v4347, %v4351
    %v4370 = vunpack.c.l.b16 %v4330
    %v4371 = vunpack.c.l.b16 %v4331
    %v4372 = vunpack.c.l.b16 %v4332
    %v4373 = vunpack.c.l.b16 %v4333
    %v4374 = vunpack.c.l.b16 %v4334
    %v4375 = vunpack.c.l.b16 %v4335
    %v4376 = vunpack.c.l.b16 %v4336
    %v4377 = vunpack.c.l.b16 %v4337
    %v4378 = vunpack.c.l.b16 %v4338
    %v4379 = vunpack.c.l.b16 %v4339
    %v4380 = vunpack.c.l.b16 %v4340
    %v4381 = vunpack.c.l.b16 %v4341
    %v4382 = vunpack.c.l.b16 %v4342
    %v4383 = vunpack.c.l.b16 %v4343
    %v4384 = vunpack.c.l.b16 %v4344
    %v4385 = vunpack.c.l.b16 %v4345
    %v4386 = vpack.c.b16 %v4371, %v4370
    %v4387 = vpack.c.b16 %v4373, %v4372
    %v4388 = vpack.c.b16 %v4375, %v4374
    %v4389 = vpack.c.b16 %v4377, %v4376
    %v4390 = vpack.c.b16 %v4379, %v4378
    %v4391 = vpack.c.b16 %v4381, %v4380
    %v4392 = vpack.c.b16 %v4383, %v4382
    %v4393 = vpack.c.b16 %v4385, %v4384
    %4402 = vmatprep.subr.bf16.mxu0 0
    %4403 = vmatpush1.bf16.msra.mxu0 %v4393
    %4404 = vmatprep.subr.bf16.mxu0 0
    %4405 = vmatpush1.bf16.msra.mxu0 %v4392
    %4406 = vmatprep.subr.bf16.mxu0 0
    %4407 = vmatpush1.bf16.msra.mxu0 %v4391
    %4408 = vmatprep.subr.bf16.mxu0 0
    %4409 = vmatpush1.bf16.msra.mxu0 %v4390
    %4410 = vmatprep.subr.bf16.mxu0 0
    %4411 = vmatpush1.bf16.msra.mxu0 %v4389
    %4412 = vmatprep.subr.bf16.mxu0 0
    %4413 = vmatpush1.bf16.msra.mxu0 %v4388
    %4414 = vmatprep.subr.bf16.mxu0 0
    %4415 = vmatpush1.bf16.msra.mxu0 %v4387
    %4416 = vmatprep.subr.bf16.mxu0 0
    %4417 = vmatpush1.bf16.msra.mxu0 %v4386
    %4418 = vmatprep.subr.bf16.mxu0 0
    %4419 = vmatpush2.bf16.msra.mxu0 0
    %4420 = vmatprep.subr.bf16.mxu0 0
    %4421 = vmatpush2.bf16.msra.mxu0 0
    %4422 = vmatprep.subr.bf16.mxu0 0
    %4423 = vmatpush2.bf16.msra.mxu0 0
    %4424 = vmatprep.subr.bf16.mxu0 0
    %4425 = vmatpush2.bf16.msra.mxu0 0
    %4426 = vmatprep.subr.bf16.mxu0 0
    %4427 = vmatpush2.bf16.msra.mxu0 0
    %4428 = vmatprep.subr.bf16.mxu0 0
    %4429 = vmatpush2.bf16.msra.mxu0 0
    %4430 = vmatprep.subr.bf16.mxu0 0
    %4431 = vmatpush2.bf16.msra.mxu0 0
    %4432 = vmatprep.subr.bf16.mxu0 0
    %4433 = vmatpush2.bf16.msra.mxu0 0
    %4434 = vmatprep.mubr.bf16.mxu0 0
    %4435 = vmatmul.mubr.bf16.gmra.mxu0 %v3084
    %v4436 = vpop.f32.mrf.mxu0
    %v4437 = vadd.f32 %v4352, %v4436
    %v4438 = vpop.f32.mrf.mxu0
    %v4439 = vpop.f32.mrf.mxu0
    %v4440 = vadd.f32 %v4352, %v4439
    %v4441 = vpop.f32.mrf.mxu0
    %4442 = vdwg.mxu0
    %s4443 = scalar_lea.vmem %s5, 384
    %v4444 = vld [vmem:[%s4443] sm:$0xf]
    %v4445 = vld [vmem:[%s4443 + $0x4] sm:$0xf]
    %v4446 = vld [vmem:[%s4443 + $0x8] sm:$0xf]
    %v4447 = vld [vmem:[%s4443 + $0xc] sm:$0xf]
    %v4448 = vld [vmem:[%s4443 + $0x10] sm:$0xf]
    %v4449 = vld [vmem:[%s4443 + $0x14] sm:$0xf]
    %v4450 = vld [vmem:[%s4443 + $0x18] sm:$0xf]
    %v4451 = vld [vmem:[%s4443 + $0x1c] sm:$0xf]
    %v4452 = vld [vmem:[%s4443 + $0x20] sm:$0xf]
    %v4453 = vld [vmem:[%s4443 + $0x24] sm:$0xf]
    %v4454 = vld [vmem:[%s4443 + $0x28] sm:$0xf]
    %v4455 = vld [vmem:[%s4443 + $0x2c] sm:$0xf]
    %v4456 = vld [vmem:[%s4443 + $0x30] sm:$0xf]
    %v4457 = vld [vmem:[%s4443 + $0x34] sm:$0xf]
    %v4458 = vld [vmem:[%s4443 + $0x38] sm:$0xf]
    %v4459 = vld [vmem:[%s4443 + $0x3c] sm:$0xf]
    %s4460 = scalar_lea.vmem %s8, 6
    %v4461 = vld [vmem:[%s4460] sm:$0x1]
    %v4463 = vlaneseq
    %v4464 = vshrl.u32 %v4463, 7
    %v4465 = vsub.s32 0, %v4464
    %v4466 = vrot.slane %v4461, %v4465
    %v4484 = vunpack.c.l.b16 %v4444
    %v4485 = vunpack.c.l.b16 %v4445
    %v4486 = vunpack.c.l.b16 %v4446
    %v4487 = vunpack.c.l.b16 %v4447
    %v4488 = vunpack.c.l.b16 %v4448
    %v4489 = vunpack.c.l.b16 %v4449
    %v4490 = vunpack.c.l.b16 %v4450
    %v4491 = vunpack.c.l.b16 %v4451
    %v4492 = vunpack.c.l.b16 %v4452
    %v4493 = vunpack.c.l.b16 %v4453
    %v4494 = vunpack.c.l.b16 %v4454
    %v4495 = vunpack.c.l.b16 %v4455
    %v4496 = vunpack.c.l.b16 %v4456
    %v4497 = vunpack.c.l.b16 %v4457
    %v4498 = vunpack.c.l.b16 %v4458
    %v4499 = vunpack.c.l.b16 %v4459
    %v4500 = vpack.c.b16 %v4485, %v4484
    %v4501 = vpack.c.b16 %v4487, %v4486
    %v4502 = vpack.c.b16 %v4489, %v4488
    %v4503 = vpack.c.b16 %v4491, %v4490
    %v4504 = vpack.c.b16 %v4493, %v4492
    %v4505 = vpack.c.b16 %v4495, %v4494
    %v4506 = vpack.c.b16 %v4497, %v4496
    %v4507 = vpack.c.b16 %v4499, %v4498
    %4516 = vmatprep.subr.bf16.mxu0 0
    %4517 = vmatpush1.bf16.msra.mxu0 %v4507
    %4518 = vmatprep.subr.bf16.mxu0 0
    %4519 = vmatpush1.bf16.msra.mxu0 %v4506
    %4520 = vmatprep.subr.bf16.mxu0 0
    %4521 = vmatpush1.bf16.msra.mxu0 %v4505
    %4522 = vmatprep.subr.bf16.mxu0 0
    %4523 = vmatpush1.bf16.msra.mxu0 %v4504
    %4524 = vmatprep.subr.bf16.mxu0 0
    %4525 = vmatpush1.bf16.msra.mxu0 %v4503
    %4526 = vmatprep.subr.bf16.mxu0 0
    %4527 = vmatpush1.bf16.msra.mxu0 %v4502
    %4528 = vmatprep.subr.bf16.mxu0 0
    %4529 = vmatpush1.bf16.msra.mxu0 %v4501
    %4530 = vmatprep.subr.bf16.mxu0 0
    %4531 = vmatpush1.bf16.msra.mxu0 %v4500
    %4532 = vmatprep.subr.bf16.mxu0 0
    %4533 = vmatpush2.bf16.msra.mxu0 0
    %4534 = vmatprep.subr.bf16.mxu0 0
    %4535 = vmatpush2.bf16.msra.mxu0 0
    %4536 = vmatprep.subr.bf16.mxu0 0
    %4537 = vmatpush2.bf16.msra.mxu0 0
    %4538 = vmatprep.subr.bf16.mxu0 0
    %4539 = vmatpush2.bf16.msra.mxu0 0
    %4540 = vmatprep.subr.bf16.mxu0 0
    %4541 = vmatpush2.bf16.msra.mxu0 0
    %4542 = vmatprep.subr.bf16.mxu0 0
    %4543 = vmatpush2.bf16.msra.mxu0 0
    %4544 = vmatprep.subr.bf16.mxu0 0
    %4545 = vmatpush2.bf16.msra.mxu0 0
    %4546 = vmatprep.subr.bf16.mxu0 0
    %4547 = vmatpush2.bf16.msra.mxu0 0
    %4548 = vmatprep.mubr.bf16.mxu0 0
    %4549 = vmatmul.mubr.bf16.gmra.mxu0 %v3084
    %v4550 = vpop.f32.mrf.mxu0
    %v4551 = vadd.f32 %v4466, %v4550
    %v4552 = vpop.f32.mrf.mxu0
    %v4553 = vpop.f32.mrf.mxu0
    %v4554 = vadd.f32 %v4466, %v4553
    %v4555 = vpop.f32.mrf.mxu0
    %4556 = vdwg.mxu0
    %s4557 = scalar_lea.vmem %s6, 384
    %v4558 = vld [vmem:[%s4557] sm:$0xf]
    %v4559 = vld [vmem:[%s4557 + $0x4] sm:$0xf]
    %v4560 = vld [vmem:[%s4557 + $0x8] sm:$0xf]
    %v4561 = vld [vmem:[%s4557 + $0xc] sm:$0xf]
    %v4562 = vld [vmem:[%s4557 + $0x10] sm:$0xf]
    %v4563 = vld [vmem:[%s4557 + $0x14] sm:$0xf]
    %v4564 = vld [vmem:[%s4557 + $0x18] sm:$0xf]
    %v4565 = vld [vmem:[%s4557 + $0x1c] sm:$0xf]
    %v4566 = vld [vmem:[%s4557 + $0x20] sm:$0xf]
    %v4567 = vld [vmem:[%s4557 + $0x24] sm:$0xf]
    %v4568 = vld [vmem:[%s4557 + $0x28] sm:$0xf]
    %v4569 = vld [vmem:[%s4557 + $0x2c] sm:$0xf]
    %v4570 = vld [vmem:[%s4557 + $0x30] sm:$0xf]
    %v4571 = vld [vmem:[%s4557 + $0x34] sm:$0xf]
    %v4572 = vld [vmem:[%s4557 + $0x38] sm:$0xf]
    %v4573 = vld [vmem:[%s4557 + $0x3c] sm:$0xf]
    %s4574 = scalar_lea.vmem %s9, 6
    %v4575 = vld [vmem:[%s4574] sm:$0x1]
    %v4577 = vlaneseq
    %v4578 = vshrl.u32 %v4577, 7
    %v4579 = vsub.s32 0, %v4578
    %v4580 = vrot.slane %v4575, %v4579
    %v4598 = vunpack.c.l.b16 %v4558
    %v4599 = vunpack.c.l.b16 %v4559
    %v4600 = vunpack.c.l.b16 %v4560
    %v4601 = vunpack.c.l.b16 %v4561
    %v4602 = vunpack.c.l.b16 %v4562
    %v4603 = vunpack.c.l.b16 %v4563
    %v4604 = vunpack.c.l.b16 %v4564
    %v4605 = vunpack.c.l.b16 %v4565
    %v4606 = vunpack.c.l.b16 %v4566
    %v4607 = vunpack.c.l.b16 %v4567
    %v4608 = vunpack.c.l.b16 %v4568
    %v4609 = vunpack.c.l.b16 %v4569
    %v4610 = vunpack.c.l.b16 %v4570
    %v4611 = vunpack.c.l.b16 %v4571
    %v4612 = vunpack.c.l.b16 %v4572
    %v4613 = vunpack.c.l.b16 %v4573
    %v4614 = vpack.c.b16 %v4599, %v4598
    %v4615 = vpack.c.b16 %v4601, %v4600
    %v4616 = vpack.c.b16 %v4603, %v4602
    %v4617 = vpack.c.b16 %v4605, %v4604
    %v4618 = vpack.c.b16 %v4607, %v4606
    %v4619 = vpack.c.b16 %v4609, %v4608
    %v4620 = vpack.c.b16 %v4611, %v4610
    %v4621 = vpack.c.b16 %v4613, %v4612
    %4630 = vmatprep.subr.bf16.mxu0 0
    %4631 = vmatpush1.bf16.msra.mxu0 %v4621
    %4632 = vmatprep.subr.bf16.mxu0 0
    %4633 = vmatpush1.bf16.msra.mxu0 %v4620
    %4634 = vmatprep.subr.bf16.mxu0 0
    %4635 = vmatpush1.bf16.msra.mxu0 %v4619
    %4636 = vmatprep.subr.bf16.mxu0 0
    %4637 = vmatpush1.bf16.msra.mxu0 %v4618
    %4638 = vmatprep.subr.bf16.mxu0 0
    %4639 = vmatpush1.bf16.msra.mxu0 %v4617
    %4640 = vmatprep.subr.bf16.mxu0 0
    %4641 = vmatpush1.bf16.msra.mxu0 %v4616
    %4642 = vmatprep.subr.bf16.mxu0 0
    %4643 = vmatpush1.bf16.msra.mxu0 %v4615
    %4644 = vmatprep.subr.bf16.mxu0 0
    %4645 = vmatpush1.bf16.msra.mxu0 %v4614
    %4646 = vmatprep.subr.bf16.mxu0 0
    %4647 = vmatpush2.bf16.msra.mxu0 0
    %4648 = vmatprep.subr.bf16.mxu0 0
    %4649 = vmatpush2.bf16.msra.mxu0 0
    %4650 = vmatprep.subr.bf16.mxu0 0
    %4651 = vmatpush2.bf16.msra.mxu0 0
    %4652 = vmatprep.subr.bf16.mxu0 0
    %4653 = vmatpush2.bf16.msra.mxu0 0
    %4654 = vmatprep.subr.bf16.mxu0 0
    %4655 = vmatpush2.bf16.msra.mxu0 0
    %4656 = vmatprep.subr.bf16.mxu0 0
    %4657 = vmatpush2.bf16.msra.mxu0 0
    %4658 = vmatprep.subr.bf16.mxu0 0
    %4659 = vmatpush2.bf16.msra.mxu0 0
    %4660 = vmatprep.subr.bf16.mxu0 0
    %4661 = vmatpush2.bf16.msra.mxu0 0
    %4662 = vmatprep.mubr.bf16.mxu0 0
    %4663 = vmatmul.mubr.bf16.gmra.mxu0 %v3084
    %v4664 = vpop.f32.mrf.mxu0
    %v4665 = vadd.f32 %v4580, %v4664
    %v4666 = vpop.f32.mrf.mxu0
    %v4667 = vpop.f32.mrf.mxu0
    %v4668 = vadd.f32 %v4580, %v4667
    %v4669 = vpop.f32.mrf.mxu0
    %4670 = vdwg.mxu0
    %v4671 = vpack.c.bf16 %v4437, %v4437
    %v4672 = vpack.c.bf16 %v4440, %v4440
    %v4673 = vpack.c.bf16 %v4551, %v4551
    %v4674 = vpack.c.bf16 %v4554, %v4554
    %v4676 = vsel %vm465, %v4671, 0
    %v4679 = vsel %vm465, %v4673, 0
    %4681 = vmatprep.subr.bf16.mxu0 0
    %4682 = vmatpush1.bf16.xpose.msra.mxu0 0
    %4683 = vmatprep.subr.bf16.mxu0 0
    %4684 = vmatpush1.bf16.xpose.msra.mxu0 0
    %4685 = vmatprep.subr.bf16.mxu0 0
    %4686 = vmatpush1.bf16.xpose.msra.mxu0 0
    %4687 = vmatprep.subr.bf16.mxu0 0
    %4688 = vmatpush1.bf16.xpose.msra.mxu0 0
    %4689 = vmatprep.subr.bf16.mxu0 0
    %4690 = vmatpush1.bf16.xpose.msra.mxu0 0
    %4691 = vmatprep.subr.bf16.mxu0 0
    %4692 = vmatpush1.bf16.xpose.msra.mxu0 0
    %4693 = vmatprep.subr.bf16.mxu0 0
    %4694 = vmatpush1.bf16.xpose.msra.mxu0 0
    %4695 = vmatprep.subr.bf16.mxu0 0
    %4696 = vmatpush1.bf16.xpose.msra.mxu0 %v4679
    %4697 = vmatprep.subr.bf16.mxu0 0
    %4698 = vmatpush2.bf16.xpose.msra.mxu0 0
    %4699 = vmatprep.subr.bf16.mxu0 0
    %4700 = vmatpush2.bf16.xpose.msra.mxu0 0
    %4701 = vmatprep.subr.bf16.mxu0 0
    %4702 = vmatpush2.bf16.xpose.msra.mxu0 0
    %4703 = vmatprep.subr.bf16.mxu0 0
    %4704 = vmatpush2.bf16.xpose.msra.mxu0 0
    %4705 = vmatprep.subr.bf16.mxu0 0
    %4706 = vmatpush2.bf16.xpose.msra.mxu0 0
    %4707 = vmatprep.subr.bf16.mxu0 0
    %4708 = vmatpush2.bf16.xpose.msra.mxu0 0
    %4709 = vmatprep.subr.bf16.mxu0 0
    %4710 = vmatpush2.bf16.xpose.msra.mxu0 0
    %4711 = vmatprep.subr.bf16.mxu0 0
    %4712 = vmatpush2.bf16.xpose.msra.mxu0 0
    %4713 = vmatprep.mubr.bf16.mxu0 0
    %4714 = vmatmul.mubr.bf16.gmra.mxu0 %v4676
    %v4715 = vpop.f32.mrf.mxu0
    %v4716 = vadd.f32 0.0, %v4715
    %v4717 = vpop.f32.mrf.mxu0
    %v4718 = vpop.f32.mrf.mxu0
    %v4719 = vpop.f32.mrf.mxu0
    %4720 = vdwg.mxu0
    %v4722 = vsel %vm465, %v4672, 0
    %v4725 = vsel %vm465, %v4674, 0
    %4727 = vmatprep.subr.bf16.mxu0 0
    %4728 = vmatpush1.bf16.xpose.msra.mxu0 0
    %4729 = vmatprep.subr.bf16.mxu0 0
    %4730 = vmatpush1.bf16.xpose.msra.mxu0 0
    %4731 = vmatprep.subr.bf16.mxu0 0
    %4732 = vmatpush1.bf16.xpose.msra.mxu0 0
    %4733 = vmatprep.subr.bf16.mxu0 0
    %4734 = vmatpush1.bf16.xpose.msra.mxu0 0
    %4735 = vmatprep.subr.bf16.mxu0 0
    %4736 = vmatpush1.bf16.xpose.msra.mxu0 0
    %4737 = vmatprep.subr.bf16.mxu0 0
    %4738 = vmatpush1.bf16.xpose.msra.mxu0 0
    %4739 = vmatprep.subr.bf16.mxu0 0
    %4740 = vmatpush1.bf16.xpose.msra.mxu0 0
    %4741 = vmatprep.subr.bf16.mxu0 0
    %4742 = vmatpush1.bf16.xpose.msra.mxu0 %v4725
    %4743 = vmatprep.subr.bf16.mxu0 0
    %4744 = vmatpush2.bf16.xpose.msra.mxu0 0
    %4745 = vmatprep.subr.bf16.mxu0 0
    %4746 = vmatpush2.bf16.xpose.msra.mxu0 0
    %4747 = vmatprep.subr.bf16.mxu0 0
    %4748 = vmatpush2.bf16.xpose.msra.mxu0 0
    %4749 = vmatprep.subr.bf16.mxu0 0
    %4750 = vmatpush2.bf16.xpose.msra.mxu0 0
    %4751 = vmatprep.subr.bf16.mxu0 0
    %4752 = vmatpush2.bf16.xpose.msra.mxu0 0
    %4753 = vmatprep.subr.bf16.mxu0 0
    %4754 = vmatpush2.bf16.xpose.msra.mxu0 0
    %4755 = vmatprep.subr.bf16.mxu0 0
    %4756 = vmatpush2.bf16.xpose.msra.mxu0 0
    %4757 = vmatprep.subr.bf16.mxu0 0
    %4758 = vmatpush2.bf16.xpose.msra.mxu0 0
    %4759 = vmatprep.mubr.bf16.mxu0 0
    %4760 = vmatmul.mubr.bf16.gmra.mxu0 %v4722
    %v4761 = vpop.f32.mrf.mxu0
    %v4762 = vadd.f32 0.0, %v4761
    %v4763 = vpop.f32.mrf.mxu0
    %v4764 = vpop.f32.mrf.mxu0
    %v4765 = vpop.f32.mrf.mxu0
    %4766 = vdwg.mxu0
    %v4767 = vmul.f32 %v4716, 0.17677669
    %v4768 = vmul.f32 %v4762, 0.17677669
    %v4769 = vadd.f32 %v4767, %v565
    %v4770 = vadd.f32 %v4768, %v569
    %v4771 = vsel %vm574, %v4769, -inf
    %4772 = vmax.xlane.f32.xlu0 %v4771
    %v4773 = vpop.xlane.xlu0 %4772
    %v4774 = vsel %vm574, %v4770, -inf
    %4775 = vmax.xlane.f32.xlu0 %v4774
    %v4776 = vpop.xlane.xlu0 %4775
    %v4777 = vsub.f32 %v4769, %v4773
    %v4778 = vsub.f32 %v4770, %v4776
    %v4779 = vmul.f32 %v4777, 1.442695
    %v4780 = vpow.pop %v4779
    %v4781 = vmul.f32 %v4778, 1.442695
    %v4782 = vpow.pop %v4781
    %v4783 = vsel %vm574, %v4780, 0.0
    %4784 = vadd.xlane.f32.xlu0 %v4783
    %v4785 = vpop.xlane.xlu0 %4784
    %v4786 = vsel %vm574, %v4782, 0.0
    %4787 = vadd.xlane.f32.xlu0 %v4786
    %v4788 = vpop.xlane.xlu0 %4787
    %v4789 = vrcp.pop %v4785
    %v4790 = vrcp.pop %v4788
    %v4791 = vmul.f32 %v4780, %v4789
    %v4792 = vmul.f32 %v4782, %v4790
    %v4793 = vpack.c.bf16 %v4791, %v4791
    %v4794 = vpack.c.bf16 %v4792, %v4792
    %v4795 = vpack.c.bf16 %v4665, %v4665
    %v4796 = vpack.c.bf16 %v4668, %v4668
    %v4798 = vsel %vm574, %v4793, 0
    %v4801 = vsel %vm604, %v4795, 0
    %4803 = vmatprep.subr.bf16.mxu0 0
    %4804 = vmatpush1.bf16.msra.mxu0 0
    %4805 = vmatprep.subr.bf16.mxu0 0
    %4806 = vmatpush1.bf16.msra.mxu0 0
    %4807 = vmatprep.subr.bf16.mxu0 0
    %4808 = vmatpush1.bf16.msra.mxu0 0
    %4809 = vmatprep.subr.bf16.mxu0 0
    %4810 = vmatpush1.bf16.msra.mxu0 0
    %4811 = vmatprep.subr.bf16.mxu0 0
    %4812 = vmatpush1.bf16.msra.mxu0 0
    %4813 = vmatprep.subr.bf16.mxu0 0
    %4814 = vmatpush1.bf16.msra.mxu0 0
    %4815 = vmatprep.subr.bf16.mxu0 0
    %4816 = vmatpush1.bf16.msra.mxu0 0
    %4817 = vmatprep.subr.bf16.mxu0 0
    %4818 = vmatpush1.bf16.msra.mxu0 %v4801
    %4819 = vmatprep.subr.bf16.mxu0 0
    %4820 = vmatpush2.bf16.msra.mxu0 0
    %4821 = vmatprep.subr.bf16.mxu0 0
    %4822 = vmatpush2.bf16.msra.mxu0 0
    %4823 = vmatprep.subr.bf16.mxu0 0
    %4824 = vmatpush2.bf16.msra.mxu0 0
    %4825 = vmatprep.subr.bf16.mxu0 0
    %4826 = vmatpush2.bf16.msra.mxu0 0
    %4827 = vmatprep.subr.bf16.mxu0 0
    %4828 = vmatpush2.bf16.msra.mxu0 0
    %4829 = vmatprep.subr.bf16.mxu0 0
    %4830 = vmatpush2.bf16.msra.mxu0 0
    %4831 = vmatprep.subr.bf16.mxu0 0
    %4832 = vmatpush2.bf16.msra.mxu0 0
    %4833 = vmatprep.subr.bf16.mxu0 0
    %4834 = vmatpush2.bf16.msra.mxu0 0
    %4835 = vmatprep.mubr.bf16.mxu0 0
    %4836 = vmatmul.mubr.bf16.gmra.mxu0 %v4798
    %v4837 = vpop.f32.mrf.mxu0
    %v4838 = vadd.f32 0.0, %v4837
    %v4839 = vpop.f32.mrf.mxu0
    %v4840 = vpop.f32.mrf.mxu0
    %v4841 = vpop.f32.mrf.mxu0
    %4842 = vdwg.mxu0
    %v4844 = vsel %vm574, %v4794, 0
    %v4847 = vsel %vm604, %v4796, 0
    %4849 = vmatprep.subr.bf16.mxu0 0
    %4850 = vmatpush1.bf16.msra.mxu0 0
    %4851 = vmatprep.subr.bf16.mxu0 0
    %4852 = vmatpush1.bf16.msra.mxu0 0
    %4853 = vmatprep.subr.bf16.mxu0 0
    %4854 = vmatpush1.bf16.msra.mxu0 0
    %4855 = vmatprep.subr.bf16.mxu0 0
    %4856 = vmatpush1.bf16.msra.mxu0 0
    %4857 = vmatprep.subr.bf16.mxu0 0
    %4858 = vmatpush1.bf16.msra.mxu0 0
    %4859 = vmatprep.subr.bf16.mxu0 0
    %4860 = vmatpush1.bf16.msra.mxu0 0
    %4861 = vmatprep.subr.bf16.mxu0 0
    %4862 = vmatpush1.bf16.msra.mxu0 0
    %4863 = vmatprep.subr.bf16.mxu0 0
    %4864 = vmatpush1.bf16.msra.mxu0 %v4847
    %4865 = vmatprep.subr.bf16.mxu0 0
    %4866 = vmatpush2.bf16.msra.mxu0 0
    %4867 = vmatprep.subr.bf16.mxu0 0
    %4868 = vmatpush2.bf16.msra.mxu0 0
    %4869 = vmatprep.subr.bf16.mxu0 0
    %4870 = vmatpush2.bf16.msra.mxu0 0
    %4871 = vmatprep.subr.bf16.mxu0 0
    %4872 = vmatpush2.bf16.msra.mxu0 0
    %4873 = vmatprep.subr.bf16.mxu0 0
    %4874 = vmatpush2.bf16.msra.mxu0 0
    %4875 = vmatprep.subr.bf16.mxu0 0
    %4876 = vmatpush2.bf16.msra.mxu0 0
    %4877 = vmatprep.subr.bf16.mxu0 0
    %4878 = vmatpush2.bf16.msra.mxu0 0
    %4879 = vmatprep.subr.bf16.mxu0 0
    %4880 = vmatpush2.bf16.msra.mxu0 0
    %4881 = vmatprep.mubr.bf16.mxu0 0
    %4882 = vmatmul.mubr.bf16.gmra.mxu0 %v4844
    %v4883 = vpop.f32.mrf.mxu0
    %v4884 = vadd.f32 0.0, %v4883
    %v4885 = vpop.f32.mrf.mxu0
    %v4886 = vpop.f32.mrf.mxu0
    %v4887 = vpop.f32.mrf.mxu0
    %4888 = vdwg.mxu0
    %v4889 = vpack.c.bf16 %v4884, %v4838
    %s4890 = scalar_lea.vmem %s10, 96
    %v4891 = vld [vmem:[%s4890] sm:$0xf]
    %v4892 = vld [vmem:[%s4890 + $0x4] sm:$0xf]
    %v4893 = vld [vmem:[%s4890 + $0x8] sm:$0xf]
    %v4894 = vld [vmem:[%s4890 + $0xc] sm:$0xf]
    %v4899 = vunpack.c.l.b16 %v4891
    %v4900 = vunpack.c.l.b16 %v4892
    %v4901 = vunpack.c.l.b16 %v4893
    %v4902 = vunpack.c.l.b16 %v4894
    %v4903 = vpack.c.b16 %v4900, %v4899
    %v4904 = vpack.c.b16 %v4902, %v4901
    %v4908 = vsel %vm465, %v4889, 0
    %4910 = vmatprep.subr.bf16.mxu0 0
    %4911 = vmatpush1.bf16.msra.mxu0 0
    %4912 = vmatprep.subr.bf16.mxu0 0
    %4913 = vmatpush1.bf16.msra.mxu0 0
    %4914 = vmatprep.subr.bf16.mxu0 0
    %4915 = vmatpush1.bf16.msra.mxu0 0
    %4916 = vmatprep.subr.bf16.mxu0 0
    %4917 = vmatpush1.bf16.msra.mxu0 0
    %4918 = vmatprep.subr.bf16.mxu0 0
    %4919 = vmatpush1.bf16.msra.mxu0 0
    %4920 = vmatprep.subr.bf16.mxu0 0
    %4921 = vmatpush1.bf16.msra.mxu0 0
    %4922 = vmatprep.subr.bf16.mxu0 0
    %4923 = vmatpush1.bf16.msra.mxu0 %v4904
    %4924 = vmatprep.subr.bf16.mxu0 0
    %4925 = vmatpush1.bf16.msra.mxu0 %v4903
    %4926 = vmatprep.subr.bf16.mxu0 0
    %4927 = vmatpush2.bf16.msra.mxu0 0
    %4928 = vmatprep.subr.bf16.mxu0 0
    %4929 = vmatpush2.bf16.msra.mxu0 0
    %4930 = vmatprep.subr.bf16.mxu0 0
    %4931 = vmatpush2.bf16.msra.mxu0 0
    %4932 = vmatprep.subr.bf16.mxu0 0
    %4933 = vmatpush2.bf16.msra.mxu0 0
    %4934 = vmatprep.subr.bf16.mxu0 0
    %4935 = vmatpush2.bf16.msra.mxu0 0
    %4936 = vmatprep.subr.bf16.mxu0 0
    %4937 = vmatpush2.bf16.msra.mxu0 0
    %4938 = vmatprep.subr.bf16.mxu0 0
    %4939 = vmatpush2.bf16.msra.mxu0 0
    %4940 = vmatprep.subr.bf16.mxu0 0
    %4941 = vmatpush2.bf16.msra.mxu0 0
    %4942 = vmatprep.mubr.bf16.mxu0 0
    %4943 = vmatmul.mubr.bf16.gmra.mxu0 %v4908
    %v4944 = vpop.f32.mrf.mxu0
    %v4945 = vadd.f32 0.0, %v4944
    %v4946 = vpop.f32.mrf.mxu0
    %v4947 = vpop.f32.mrf.mxu0
    %v4948 = vadd.f32 0.0, %v4947
    %v4949 = vpop.f32.mrf.mxu0
    %4950 = vdwg.mxu0
    %v4951 = vadd.f32 %v4323, %v4945
    %v4952 = vadd.f32 %v4326, %v4948
    %s4953 = scalar_lea.vmem %s4, 448
    %v4954 = vld [vmem:[%s4953] sm:$0xf]
    %v4955 = vld [vmem:[%s4953 + $0x4] sm:$0xf]
    %v4956 = vld [vmem:[%s4953 + $0x8] sm:$0xf]
    %v4957 = vld [vmem:[%s4953 + $0xc] sm:$0xf]
    %v4958 = vld [vmem:[%s4953 + $0x10] sm:$0xf]
    %v4959 = vld [vmem:[%s4953 + $0x14] sm:$0xf]
    %v4960 = vld [vmem:[%s4953 + $0x18] sm:$0xf]
    %v4961 = vld [vmem:[%s4953 + $0x1c] sm:$0xf]
    %v4962 = vld [vmem:[%s4953 + $0x20] sm:$0xf]
    %v4963 = vld [vmem:[%s4953 + $0x24] sm:$0xf]
    %v4964 = vld [vmem:[%s4953 + $0x28] sm:$0xf]
    %v4965 = vld [vmem:[%s4953 + $0x2c] sm:$0xf]
    %v4966 = vld [vmem:[%s4953 + $0x30] sm:$0xf]
    %v4967 = vld [vmem:[%s4953 + $0x34] sm:$0xf]
    %v4968 = vld [vmem:[%s4953 + $0x38] sm:$0xf]
    %v4969 = vld [vmem:[%s4953 + $0x3c] sm:$0xf]
    %s4970 = scalar_lea.vmem %s7, 7
    %v4971 = vld [vmem:[%s4970] sm:$0x1]
    %v4973 = vlaneseq
    %v4974 = vshrl.u32 %v4973, 7
    %v4975 = vsub.s32 0, %v4974
    %v4976 = vrot.slane %v4971, %v4975
    %v4994 = vunpack.c.l.b16 %v4954
    %v4995 = vunpack.c.l.b16 %v4955
    %v4996 = vunpack.c.l.b16 %v4956
    %v4997 = vunpack.c.l.b16 %v4957
    %v4998 = vunpack.c.l.b16 %v4958
    %v4999 = vunpack.c.l.b16 %v4959
    %v5000 = vunpack.c.l.b16 %v4960
    %v5001 = vunpack.c.l.b16 %v4961
    %v5002 = vunpack.c.l.b16 %v4962
    %v5003 = vunpack.c.l.b16 %v4963
    %v5004 = vunpack.c.l.b16 %v4964
    %v5005 = vunpack.c.l.b16 %v4965
    %v5006 = vunpack.c.l.b16 %v4966
    %v5007 = vunpack.c.l.b16 %v4967
    %v5008 = vunpack.c.l.b16 %v4968
    %v5009 = vunpack.c.l.b16 %v4969
    %v5010 = vpack.c.b16 %v4995, %v4994
    %v5011 = vpack.c.b16 %v4997, %v4996
    %v5012 = vpack.c.b16 %v4999, %v4998
    %v5013 = vpack.c.b16 %v5001, %v5000
    %v5014 = vpack.c.b16 %v5003, %v5002
    %v5015 = vpack.c.b16 %v5005, %v5004
    %v5016 = vpack.c.b16 %v5007, %v5006
    %v5017 = vpack.c.b16 %v5009, %v5008
    %5026 = vmatprep.subr.bf16.mxu0 0
    %5027 = vmatpush1.bf16.msra.mxu0 %v5017
    %5028 = vmatprep.subr.bf16.mxu0 0
    %5029 = vmatpush1.bf16.msra.mxu0 %v5016
    %5030 = vmatprep.subr.bf16.mxu0 0
    %5031 = vmatpush1.bf16.msra.mxu0 %v5015
    %5032 = vmatprep.subr.bf16.mxu0 0
    %5033 = vmatpush1.bf16.msra.mxu0 %v5014
    %5034 = vmatprep.subr.bf16.mxu0 0
    %5035 = vmatpush1.bf16.msra.mxu0 %v5013
    %5036 = vmatprep.subr.bf16.mxu0 0
    %5037 = vmatpush1.bf16.msra.mxu0 %v5012
    %5038 = vmatprep.subr.bf16.mxu0 0
    %5039 = vmatpush1.bf16.msra.mxu0 %v5011
    %5040 = vmatprep.subr.bf16.mxu0 0
    %5041 = vmatpush1.bf16.msra.mxu0 %v5010
    %5042 = vmatprep.subr.bf16.mxu0 0
    %5043 = vmatpush2.bf16.msra.mxu0 0
    %5044 = vmatprep.subr.bf16.mxu0 0
    %5045 = vmatpush2.bf16.msra.mxu0 0
    %5046 = vmatprep.subr.bf16.mxu0 0
    %5047 = vmatpush2.bf16.msra.mxu0 0
    %5048 = vmatprep.subr.bf16.mxu0 0
    %5049 = vmatpush2.bf16.msra.mxu0 0
    %5050 = vmatprep.subr.bf16.mxu0 0
    %5051 = vmatpush2.bf16.msra.mxu0 0
    %5052 = vmatprep.subr.bf16.mxu0 0
    %5053 = vmatpush2.bf16.msra.mxu0 0
    %5054 = vmatprep.subr.bf16.mxu0 0
    %5055 = vmatpush2.bf16.msra.mxu0 0
    %5056 = vmatprep.subr.bf16.mxu0 0
    %5057 = vmatpush2.bf16.msra.mxu0 0
    %5058 = vmatprep.mubr.bf16.mxu0 0
    %5059 = vmatmul.mubr.bf16.gmra.mxu0 %v3084
    %v5060 = vpop.f32.mrf.mxu0
    %v5061 = vadd.f32 %v4976, %v5060
    %v5062 = vpop.f32.mrf.mxu0
    %v5063 = vpop.f32.mrf.mxu0
    %v5064 = vadd.f32 %v4976, %v5063
    %v5065 = vpop.f32.mrf.mxu0
    %5066 = vdwg.mxu0
    %s5067 = scalar_lea.vmem %s5, 448
    %v5068 = vld [vmem:[%s5067] sm:$0xf]
    %v5069 = vld [vmem:[%s5067 + $0x4] sm:$0xf]
    %v5070 = vld [vmem:[%s5067 + $0x8] sm:$0xf]
    %v5071 = vld [vmem:[%s5067 + $0xc] sm:$0xf]
    %v5072 = vld [vmem:[%s5067 + $0x10] sm:$0xf]
    %v5073 = vld [vmem:[%s5067 + $0x14] sm:$0xf]
    %v5074 = vld [vmem:[%s5067 + $0x18] sm:$0xf]
    %v5075 = vld [vmem:[%s5067 + $0x1c] sm:$0xf]
    %v5076 = vld [vmem:[%s5067 + $0x20] sm:$0xf]
    %v5077 = vld [vmem:[%s5067 + $0x24] sm:$0xf]
    %v5078 = vld [vmem:[%s5067 + $0x28] sm:$0xf]
    %v5079 = vld [vmem:[%s5067 + $0x2c] sm:$0xf]
    %v5080 = vld [vmem:[%s5067 + $0x30] sm:$0xf]
    %v5081 = vld [vmem:[%s5067 + $0x34] sm:$0xf]
    %v5082 = vld [vmem:[%s5067 + $0x38] sm:$0xf]
    %v5083 = vld [vmem:[%s5067 + $0x3c] sm:$0xf]
    %s5084 = scalar_lea.vmem %s8, 7
    %v5085 = vld [vmem:[%s5084] sm:$0x1]
    %v5087 = vlaneseq
    %v5088 = vshrl.u32 %v5087, 7
    %v5089 = vsub.s32 0, %v5088
    %v5090 = vrot.slane %v5085, %v5089
    %v5108 = vunpack.c.l.b16 %v5068
    %v5109 = vunpack.c.l.b16 %v5069
    %v5110 = vunpack.c.l.b16 %v5070
    %v5111 = vunpack.c.l.b16 %v5071
    %v5112 = vunpack.c.l.b16 %v5072
    %v5113 = vunpack.c.l.b16 %v5073
    %v5114 = vunpack.c.l.b16 %v5074
    %v5115 = vunpack.c.l.b16 %v5075
    %v5116 = vunpack.c.l.b16 %v5076
    %v5117 = vunpack.c.l.b16 %v5077
    %v5118 = vunpack.c.l.b16 %v5078
    %v5119 = vunpack.c.l.b16 %v5079
    %v5120 = vunpack.c.l.b16 %v5080
    %v5121 = vunpack.c.l.b16 %v5081
    %v5122 = vunpack.c.l.b16 %v5082
    %v5123 = vunpack.c.l.b16 %v5083
    %v5124 = vpack.c.b16 %v5109, %v5108
    %v5125 = vpack.c.b16 %v5111, %v5110
    %v5126 = vpack.c.b16 %v5113, %v5112
    %v5127 = vpack.c.b16 %v5115, %v5114
    %v5128 = vpack.c.b16 %v5117, %v5116
    %v5129 = vpack.c.b16 %v5119, %v5118
    %v5130 = vpack.c.b16 %v5121, %v5120
    %v5131 = vpack.c.b16 %v5123, %v5122
    %5140 = vmatprep.subr.bf16.mxu0 0
    %5141 = vmatpush1.bf16.msra.mxu0 %v5131
    %5142 = vmatprep.subr.bf16.mxu0 0
    %5143 = vmatpush1.bf16.msra.mxu0 %v5130
    %5144 = vmatprep.subr.bf16.mxu0 0
    %5145 = vmatpush1.bf16.msra.mxu0 %v5129
    %5146 = vmatprep.subr.bf16.mxu0 0
    %5147 = vmatpush1.bf16.msra.mxu0 %v5128
    %5148 = vmatprep.subr.bf16.mxu0 0
    %5149 = vmatpush1.bf16.msra.mxu0 %v5127
    %5150 = vmatprep.subr.bf16.mxu0 0
    %5151 = vmatpush1.bf16.msra.mxu0 %v5126
    %5152 = vmatprep.subr.bf16.mxu0 0
    %5153 = vmatpush1.bf16.msra.mxu0 %v5125
    %5154 = vmatprep.subr.bf16.mxu0 0
    %5155 = vmatpush1.bf16.msra.mxu0 %v5124
    %5156 = vmatprep.subr.bf16.mxu0 0
    %5157 = vmatpush2.bf16.msra.mxu0 0
    %5158 = vmatprep.subr.bf16.mxu0 0
    %5159 = vmatpush2.bf16.msra.mxu0 0
    %5160 = vmatprep.subr.bf16.mxu0 0
    %5161 = vmatpush2.bf16.msra.mxu0 0
    %5162 = vmatprep.subr.bf16.mxu0 0
    %5163 = vmatpush2.bf16.msra.mxu0 0
    %5164 = vmatprep.subr.bf16.mxu0 0
    %5165 = vmatpush2.bf16.msra.mxu0 0
    %5166 = vmatprep.subr.bf16.mxu0 0
    %5167 = vmatpush2.bf16.msra.mxu0 0
    %5168 = vmatprep.subr.bf16.mxu0 0
    %5169 = vmatpush2.bf16.msra.mxu0 0
    %5170 = vmatprep.subr.bf16.mxu0 0
    %5171 = vmatpush2.bf16.msra.mxu0 0
    %5172 = vmatprep.mubr.bf16.mxu0 0
    %5173 = vmatmul.mubr.bf16.gmra.mxu0 %v3084
    %v5174 = vpop.f32.mrf.mxu0
    %v5175 = vadd.f32 %v5090, %v5174
    %v5176 = vpop.f32.mrf.mxu0
    %v5177 = vpop.f32.mrf.mxu0
    %v5178 = vadd.f32 %v5090, %v5177
    %v5179 = vpop.f32.mrf.mxu0
    %5180 = vdwg.mxu0
    %s5181 = scalar_lea.vmem %s6, 448
    %v5182 = vld [vmem:[%s5181] sm:$0xf]
    %v5183 = vld [vmem:[%s5181 + $0x4] sm:$0xf]
    %v5184 = vld [vmem:[%s5181 + $0x8] sm:$0xf]
    %v5185 = vld [vmem:[%s5181 + $0xc] sm:$0xf]
    %v5186 = vld [vmem:[%s5181 + $0x10] sm:$0xf]
    %v5187 = vld [vmem:[%s5181 + $0x14] sm:$0xf]
    %v5188 = vld [vmem:[%s5181 + $0x18] sm:$0xf]
    %v5189 = vld [vmem:[%s5181 + $0x1c] sm:$0xf]
    %v5190 = vld [vmem:[%s5181 + $0x20] sm:$0xf]
    %v5191 = vld [vmem:[%s5181 + $0x24] sm:$0xf]
    %v5192 = vld [vmem:[%s5181 + $0x28] sm:$0xf]
    %v5193 = vld [vmem:[%s5181 + $0x2c] sm:$0xf]
    %v5194 = vld [vmem:[%s5181 + $0x30] sm:$0xf]
    %v5195 = vld [vmem:[%s5181 + $0x34] sm:$0xf]
    %v5196 = vld [vmem:[%s5181 + $0x38] sm:$0xf]
    %v5197 = vld [vmem:[%s5181 + $0x3c] sm:$0xf]
    %s5198 = scalar_lea.vmem %s9, 7
    %v5199 = vld [vmem:[%s5198] sm:$0x1]
    %v5201 = vlaneseq
    %v5202 = vshrl.u32 %v5201, 7
    %v5203 = vsub.s32 0, %v5202
    %v5204 = vrot.slane %v5199, %v5203
    %v5222 = vunpack.c.l.b16 %v5182
    %v5223 = vunpack.c.l.b16 %v5183
    %v5224 = vunpack.c.l.b16 %v5184
    %v5225 = vunpack.c.l.b16 %v5185
    %v5226 = vunpack.c.l.b16 %v5186
    %v5227 = vunpack.c.l.b16 %v5187
    %v5228 = vunpack.c.l.b16 %v5188
    %v5229 = vunpack.c.l.b16 %v5189
    %v5230 = vunpack.c.l.b16 %v5190
    %v5231 = vunpack.c.l.b16 %v5191
    %v5232 = vunpack.c.l.b16 %v5192
    %v5233 = vunpack.c.l.b16 %v5193
    %v5234 = vunpack.c.l.b16 %v5194
    %v5235 = vunpack.c.l.b16 %v5195
    %v5236 = vunpack.c.l.b16 %v5196
    %v5237 = vunpack.c.l.b16 %v5197
    %v5238 = vpack.c.b16 %v5223, %v5222
    %v5239 = vpack.c.b16 %v5225, %v5224
    %v5240 = vpack.c.b16 %v5227, %v5226
    %v5241 = vpack.c.b16 %v5229, %v5228
    %v5242 = vpack.c.b16 %v5231, %v5230
    %v5243 = vpack.c.b16 %v5233, %v5232
    %v5244 = vpack.c.b16 %v5235, %v5234
    %v5245 = vpack.c.b16 %v5237, %v5236
    %5254 = vmatprep.subr.bf16.mxu0 0
    %5255 = vmatpush1.bf16.msra.mxu0 %v5245
    %5256 = vmatprep.subr.bf16.mxu0 0
    %5257 = vmatpush1.bf16.msra.mxu0 %v5244
    %5258 = vmatprep.subr.bf16.mxu0 0
    %5259 = vmatpush1.bf16.msra.mxu0 %v5243
    %5260 = vmatprep.subr.bf16.mxu0 0
    %5261 = vmatpush1.bf16.msra.mxu0 %v5242
    %5262 = vmatprep.subr.bf16.mxu0 0
    %5263 = vmatpush1.bf16.msra.mxu0 %v5241
    %5264 = vmatprep.subr.bf16.mxu0 0
    %5265 = vmatpush1.bf16.msra.mxu0 %v5240
    %5266 = vmatprep.subr.bf16.mxu0 0
    %5267 = vmatpush1.bf16.msra.mxu0 %v5239
    %5268 = vmatprep.subr.bf16.mxu0 0
    %5269 = vmatpush1.bf16.msra.mxu0 %v5238
    %5270 = vmatprep.subr.bf16.mxu0 0
    %5271 = vmatpush2.bf16.msra.mxu0 0
    %5272 = vmatprep.subr.bf16.mxu0 0
    %5273 = vmatpush2.bf16.msra.mxu0 0
    %5274 = vmatprep.subr.bf16.mxu0 0
    %5275 = vmatpush2.bf16.msra.mxu0 0
    %5276 = vmatprep.subr.bf16.mxu0 0
    %5277 = vmatpush2.bf16.msra.mxu0 0
    %5278 = vmatprep.subr.bf16.mxu0 0
    %5279 = vmatpush2.bf16.msra.mxu0 0
    %5280 = vmatprep.subr.bf16.mxu0 0
    %5281 = vmatpush2.bf16.msra.mxu0 0
    %5282 = vmatprep.subr.bf16.mxu0 0
    %5283 = vmatpush2.bf16.msra.mxu0 0
    %5284 = vmatprep.subr.bf16.mxu0 0
    %5285 = vmatpush2.bf16.msra.mxu0 0
    %5286 = vmatprep.mubr.bf16.mxu0 0
    %5287 = vmatmul.mubr.bf16.gmra.mxu0 %v3084
    %v5288 = vpop.f32.mrf.mxu0
    %v5289 = vadd.f32 %v5204, %v5288
    %v5290 = vpop.f32.mrf.mxu0
    %v5291 = vpop.f32.mrf.mxu0
    %v5292 = vadd.f32 %v5204, %v5291
    %v5293 = vpop.f32.mrf.mxu0
    %5294 = vdwg.mxu0
    %v5295 = vpack.c.bf16 %v5061, %v5061
    %v5296 = vpack.c.bf16 %v5064, %v5064
    %v5297 = vpack.c.bf16 %v5175, %v5175
    %v5298 = vpack.c.bf16 %v5178, %v5178
    %v5300 = vsel %vm465, %v5295, 0
    %v5303 = vsel %vm465, %v5297, 0
    %5305 = vmatprep.subr.bf16.mxu0 0
    %5306 = vmatpush1.bf16.xpose.msra.mxu0 0
    %5307 = vmatprep.subr.bf16.mxu0 0
    %5308 = vmatpush1.bf16.xpose.msra.mxu0 0
    %5309 = vmatprep.subr.bf16.mxu0 0
    %5310 = vmatpush1.bf16.xpose.msra.mxu0 0
    %5311 = vmatprep.subr.bf16.mxu0 0
    %5312 = vmatpush1.bf16.xpose.msra.mxu0 0
    %5313 = vmatprep.subr.bf16.mxu0 0
    %5314 = vmatpush1.bf16.xpose.msra.mxu0 0
    %5315 = vmatprep.subr.bf16.mxu0 0
    %5316 = vmatpush1.bf16.xpose.msra.mxu0 0
    %5317 = vmatprep.subr.bf16.mxu0 0
    %5318 = vmatpush1.bf16.xpose.msra.mxu0 0
    %5319 = vmatprep.subr.bf16.mxu0 0
    %5320 = vmatpush1.bf16.xpose.msra.mxu0 %v5303
    %5321 = vmatprep.subr.bf16.mxu0 0
    %5322 = vmatpush2.bf16.xpose.msra.mxu0 0
    %5323 = vmatprep.subr.bf16.mxu0 0
    %5324 = vmatpush2.bf16.xpose.msra.mxu0 0
    %5325 = vmatprep.subr.bf16.mxu0 0
    %5326 = vmatpush2.bf16.xpose.msra.mxu0 0
    %5327 = vmatprep.subr.bf16.mxu0 0
    %5328 = vmatpush2.bf16.xpose.msra.mxu0 0
    %5329 = vmatprep.subr.bf16.mxu0 0
    %5330 = vmatpush2.bf16.xpose.msra.mxu0 0
    %5331 = vmatprep.subr.bf16.mxu0 0
    %5332 = vmatpush2.bf16.xpose.msra.mxu0 0
    %5333 = vmatprep.subr.bf16.mxu0 0
    %5334 = vmatpush2.bf16.xpose.msra.mxu0 0
    %5335 = vmatprep.subr.bf16.mxu0 0
    %5336 = vmatpush2.bf16.xpose.msra.mxu0 0
    %5337 = vmatprep.mubr.bf16.mxu0 0
    %5338 = vmatmul.mubr.bf16.gmra.mxu0 %v5300
    %v5339 = vpop.f32.mrf.mxu0
    %v5340 = vadd.f32 0.0, %v5339
    %v5341 = vpop.f32.mrf.mxu0
    %v5342 = vpop.f32.mrf.mxu0
    %v5343 = vpop.f32.mrf.mxu0
    %5344 = vdwg.mxu0
    %v5346 = vsel %vm465, %v5296, 0
    %v5349 = vsel %vm465, %v5298, 0
    %5351 = vmatprep.subr.bf16.mxu0 0
    %5352 = vmatpush1.bf16.xpose.msra.mxu0 0
    %5353 = vmatprep.subr.bf16.mxu0 0
    %5354 = vmatpush1.bf16.xpose.msra.mxu0 0
    %5355 = vmatprep.subr.bf16.mxu0 0
    %5356 = vmatpush1.bf16.xpose.msra.mxu0 0
    %5357 = vmatprep.subr.bf16.mxu0 0
    %5358 = vmatpush1.bf16.xpose.msra.mxu0 0
    %5359 = vmatprep.subr.bf16.mxu0 0
    %5360 = vmatpush1.bf16.xpose.msra.mxu0 0
    %5361 = vmatprep.subr.bf16.mxu0 0
    %5362 = vmatpush1.bf16.xpose.msra.mxu0 0
    %5363 = vmatprep.subr.bf16.mxu0 0
    %5364 = vmatpush1.bf16.xpose.msra.mxu0 0
    %5365 = vmatprep.subr.bf16.mxu0 0
    %5366 = vmatpush1.bf16.xpose.msra.mxu0 %v5349
    %5367 = vmatprep.subr.bf16.mxu0 0
    %5368 = vmatpush2.bf16.xpose.msra.mxu0 0
    %5369 = vmatprep.subr.bf16.mxu0 0
    %5370 = vmatpush2.bf16.xpose.msra.mxu0 0
    %5371 = vmatprep.subr.bf16.mxu0 0
    %5372 = vmatpush2.bf16.xpose.msra.mxu0 0
    %5373 = vmatprep.subr.bf16.mxu0 0
    %5374 = vmatpush2.bf16.xpose.msra.mxu0 0
    %5375 = vmatprep.subr.bf16.mxu0 0
    %5376 = vmatpush2.bf16.xpose.msra.mxu0 0
    %5377 = vmatprep.subr.bf16.mxu0 0
    %5378 = vmatpush2.bf16.xpose.msra.mxu0 0
    %5379 = vmatprep.subr.bf16.mxu0 0
    %5380 = vmatpush2.bf16.xpose.msra.mxu0 0
    %5381 = vmatprep.subr.bf16.mxu0 0
    %5382 = vmatpush2.bf16.xpose.msra.mxu0 0
    %5383 = vmatprep.mubr.bf16.mxu0 0
    %5384 = vmatmul.mubr.bf16.gmra.mxu0 %v5346
    %v5385 = vpop.f32.mrf.mxu0
    %v5386 = vadd.f32 0.0, %v5385
    %v5387 = vpop.f32.mrf.mxu0
    %v5388 = vpop.f32.mrf.mxu0
    %v5389 = vpop.f32.mrf.mxu0
    %5390 = vdwg.mxu0
    %v5391 = vmul.f32 %v5340, 0.17677669
    %v5392 = vmul.f32 %v5386, 0.17677669
    %v5393 = vadd.f32 %v5391, %v565
    %v5394 = vadd.f32 %v5392, %v569
    %v5395 = vsel %vm574, %v5393, -inf
    %5396 = vmax.xlane.f32.xlu0 %v5395
    %v5397 = vpop.xlane.xlu0 %5396
    %v5398 = vsel %vm574, %v5394, -inf
    %5399 = vmax.xlane.f32.xlu0 %v5398
    %v5400 = vpop.xlane.xlu0 %5399
    %v5401 = vsub.f32 %v5393, %v5397
    %v5402 = vsub.f32 %v5394, %v5400
    %v5403 = vmul.f32 %v5401, 1.442695
    %v5404 = vpow.pop %v5403
    %v5405 = vmul.f32 %v5402, 1.442695
    %v5406 = vpow.pop %v5405
    %v5407 = vsel %vm574, %v5404, 0.0
    %5408 = vadd.xlane.f32.xlu0 %v5407
    %v5409 = vpop.xlane.xlu0 %5408
    %v5410 = vsel %vm574, %v5406, 0.0
    %5411 = vadd.xlane.f32.xlu0 %v5410
    %v5412 = vpop.xlane.xlu0 %5411
    %v5413 = vrcp.pop %v5409
    %v5414 = vrcp.pop %v5412
    %v5415 = vmul.f32 %v5404, %v5413
    %v5416 = vmul.f32 %v5406, %v5414
    %v5417 = vpack.c.bf16 %v5415, %v5415
    %v5418 = vpack.c.bf16 %v5416, %v5416
    %v5419 = vpack.c.bf16 %v5289, %v5289
    %v5420 = vpack.c.bf16 %v5292, %v5292
    %v5422 = vsel %vm574, %v5417, 0
    %v5425 = vsel %vm604, %v5419, 0
    %5427 = vmatprep.subr.bf16.mxu0 0
    %5428 = vmatpush1.bf16.msra.mxu0 0
    %5429 = vmatprep.subr.bf16.mxu0 0
    %5430 = vmatpush1.bf16.msra.mxu0 0
    %5431 = vmatprep.subr.bf16.mxu0 0
    %5432 = vmatpush1.bf16.msra.mxu0 0
    %5433 = vmatprep.subr.bf16.mxu0 0
    %5434 = vmatpush1.bf16.msra.mxu0 0
    %5435 = vmatprep.subr.bf16.mxu0 0
    %5436 = vmatpush1.bf16.msra.mxu0 0
    %5437 = vmatprep.subr.bf16.mxu0 0
    %5438 = vmatpush1.bf16.msra.mxu0 0
    %5439 = vmatprep.subr.bf16.mxu0 0
    %5440 = vmatpush1.bf16.msra.mxu0 0
    %5441 = vmatprep.subr.bf16.mxu0 0
    %5442 = vmatpush1.bf16.msra.mxu0 %v5425
    %5443 = vmatprep.subr.bf16.mxu0 0
    %5444 = vmatpush2.bf16.msra.mxu0 0
    %5445 = vmatprep.subr.bf16.mxu0 0
    %5446 = vmatpush2.bf16.msra.mxu0 0
    %5447 = vmatprep.subr.bf16.mxu0 0
    %5448 = vmatpush2.bf16.msra.mxu0 0
    %5449 = vmatprep.subr.bf16.mxu0 0
    %5450 = vmatpush2.bf16.msra.mxu0 0
    %5451 = vmatprep.subr.bf16.mxu0 0
    %5452 = vmatpush2.bf16.msra.mxu0 0
    %5453 = vmatprep.subr.bf16.mxu0 0
    %5454 = vmatpush2.bf16.msra.mxu0 0
    %5455 = vmatprep.subr.bf16.mxu0 0
    %5456 = vmatpush2.bf16.msra.mxu0 0
    %5457 = vmatprep.subr.bf16.mxu0 0
    %5458 = vmatpush2.bf16.msra.mxu0 0
    %5459 = vmatprep.mubr.bf16.mxu0 0
    %5460 = vmatmul.mubr.bf16.gmra.mxu0 %v5422
    %v5461 = vpop.f32.mrf.mxu0
    %v5462 = vadd.f32 0.0, %v5461
    %v5463 = vpop.f32.mrf.mxu0
    %v5464 = vpop.f32.mrf.mxu0
    %v5465 = vpop.f32.mrf.mxu0
    %5466 = vdwg.mxu0
    %v5468 = vsel %vm574, %v5418, 0
    %v5471 = vsel %vm604, %v5420, 0
    %5473 = vmatprep.subr.bf16.mxu0 0
    %5474 = vmatpush1.bf16.msra.mxu0 0
    %5475 = vmatprep.subr.bf16.mxu0 0
    %5476 = vmatpush1.bf16.msra.mxu0 0
    %5477 = vmatprep.subr.bf16.mxu0 0
    %5478 = vmatpush1.bf16.msra.mxu0 0
    %5479 = vmatprep.subr.bf16.mxu0 0
    %5480 = vmatpush1.bf16.msra.mxu0 0
    %5481 = vmatprep.subr.bf16.mxu0 0
    %5482 = vmatpush1.bf16.msra.mxu0 0
    %5483 = vmatprep.subr.bf16.mxu0 0
    %5484 = vmatpush1.bf16.msra.mxu0 0
    %5485 = vmatprep.subr.bf16.mxu0 0
    %5486 = vmatpush1.bf16.msra.mxu0 0
    %5487 = vmatprep.subr.bf16.mxu0 0
    %5488 = vmatpush1.bf16.msra.mxu0 %v5471
    %5489 = vmatprep.subr.bf16.mxu0 0
    %5490 = vmatpush2.bf16.msra.mxu0 0
    %5491 = vmatprep.subr.bf16.mxu0 0
    %5492 = vmatpush2.bf16.msra.mxu0 0
    %5493 = vmatprep.subr.bf16.mxu0 0
    %5494 = vmatpush2.bf16.msra.mxu0 0
    %5495 = vmatprep.subr.bf16.mxu0 0
    %5496 = vmatpush2.bf16.msra.mxu0 0
    %5497 = vmatprep.subr.bf16.mxu0 0
    %5498 = vmatpush2.bf16.msra.mxu0 0
    %5499 = vmatprep.subr.bf16.mxu0 0
    %5500 = vmatpush2.bf16.msra.mxu0 0
    %5501 = vmatprep.subr.bf16.mxu0 0
    %5502 = vmatpush2.bf16.msra.mxu0 0
    %5503 = vmatprep.subr.bf16.mxu0 0
    %5504 = vmatpush2.bf16.msra.mxu0 0
    %5505 = vmatprep.mubr.bf16.mxu0 0
    %5506 = vmatmul.mubr.bf16.gmra.mxu0 %v5468
    %v5507 = vpop.f32.mrf.mxu0
    %v5508 = vadd.f32 0.0, %v5507
    %v5509 = vpop.f32.mrf.mxu0
    %v5510 = vpop.f32.mrf.mxu0
    %v5511 = vpop.f32.mrf.mxu0
    %5512 = vdwg.mxu0
    %v5513 = vpack.c.bf16 %v5508, %v5462
    %s5514 = scalar_lea.vmem %s10, 112
    %v5515 = vld [vmem:[%s5514] sm:$0xf]
    %v5516 = vld [vmem:[%s5514 + $0x4] sm:$0xf]
    %v5517 = vld [vmem:[%s5514 + $0x8] sm:$0xf]
    %v5518 = vld [vmem:[%s5514 + $0xc] sm:$0xf]
    %v5523 = vunpack.c.l.b16 %v5515
    %v5524 = vunpack.c.l.b16 %v5516
    %v5525 = vunpack.c.l.b16 %v5517
    %v5526 = vunpack.c.l.b16 %v5518
    %v5527 = vpack.c.b16 %v5524, %v5523
    %v5528 = vpack.c.b16 %v5526, %v5525
    %v5532 = vsel %vm465, %v5513, 0
    %5534 = vmatprep.subr.bf16.mxu0 0
    %5535 = vmatpush1.bf16.msra.mxu0 0
    %5536 = vmatprep.subr.bf16.mxu0 0
    %5537 = vmatpush1.bf16.msra.mxu0 0
    %5538 = vmatprep.subr.bf16.mxu0 0
    %5539 = vmatpush1.bf16.msra.mxu0 0
    %5540 = vmatprep.subr.bf16.mxu0 0
    %5541 = vmatpush1.bf16.msra.mxu0 0
    %5542 = vmatprep.subr.bf16.mxu0 0
    %5543 = vmatpush1.bf16.msra.mxu0 0
    %5544 = vmatprep.subr.bf16.mxu0 0
    %5545 = vmatpush1.bf16.msra.mxu0 0
    %5546 = vmatprep.subr.bf16.mxu0 0
    %5547 = vmatpush1.bf16.msra.mxu0 %v5528
    %5548 = vmatprep.subr.bf16.mxu0 0
    %5549 = vmatpush1.bf16.msra.mxu0 %v5527
    %5550 = vmatprep.subr.bf16.mxu0 0
    %5551 = vmatpush2.bf16.msra.mxu0 0
    %5552 = vmatprep.subr.bf16.mxu0 0
    %5553 = vmatpush2.bf16.msra.mxu0 0
    %5554 = vmatprep.subr.bf16.mxu0 0
    %5555 = vmatpush2.bf16.msra.mxu0 0
    %5556 = vmatprep.subr.bf16.mxu0 0
    %5557 = vmatpush2.bf16.msra.mxu0 0
    %5558 = vmatprep.subr.bf16.mxu0 0
    %5559 = vmatpush2.bf16.msra.mxu0 0
    %5560 = vmatprep.subr.bf16.mxu0 0
    %5561 = vmatpush2.bf16.msra.mxu0 0
    %5562 = vmatprep.subr.bf16.mxu0 0
    %5563 = vmatpush2.bf16.msra.mxu0 0
    %5564 = vmatprep.subr.bf16.mxu0 0
    %5565 = vmatpush2.bf16.msra.mxu0 0
    %5566 = vmatprep.mubr.bf16.mxu0 0
    %5567 = vmatmul.mubr.bf16.gmra.mxu0 %v5532
    %v5568 = vpop.f32.mrf.mxu0
    %v5569 = vadd.f32 0.0, %v5568
    %v5570 = vpop.f32.mrf.mxu0
    %v5571 = vpop.f32.mrf.mxu0
    %v5572 = vadd.f32 0.0, %v5571
    %v5573 = vpop.f32.mrf.mxu0
    %5574 = vdwg.mxu0
    %v5575 = vadd.f32 %v4951, %v5569
    %v5576 = vadd.f32 %v4952, %v5572
    %s5577 = scalar_lea.vmem %s11, 1
    %v5578 = vld [vmem:[%s5577] sm:$0x1]
    %v5580 = vlaneseq
    %v5581 = vshrl.u32 %v5580, 7
    %v5582 = vsub.s32 0, %v5581
    %v5583 = vrot.slane %v5578, %v5582
    %v5585 = vadd.f32 %v5575, %v5583
    %v5586 = vadd.f32 %v5576, %v5583
    %v5587 = vadd.f32 %v3082, %v5585
    %v5588 = vadd.f32 %v3083, %v5586
    %s5589 = scalar_lea.vmem %s12, 1
    %v5590 = vld [vmem:[%s5589] sm:$0x1]
    %s5591 = scalar_lea.vmem %s13, 1
    %v5592 = vld [vmem:[%s5591] sm:$0x1]
    %5593 = vadd.xlane.f32.xlu0 %v5587
    %v5594 = vpop.xlane.xlu0 %5593
    %5595 = vadd.xlane.f32.xlu0 %v5588
    %v5596 = vpop.xlane.xlu0 %5595
    %v5597 = vmul.f32 %v5594, %v87
    %v5598 = vmul.f32 %v5596, %v87
    %v5599 = vsub.f32 %v5587, %v5597
    %v5600 = vsub.f32 %v5588, %v5598
    %v5601 = vmul.f32 %v5599, %v5599
    %v5602 = vmul.f32 %v5600, %v5600
    %5603 = vadd.xlane.f32.xlu0 %v5601
    %v5604 = vpop.xlane.xlu0 %5603
    %5605 = vadd.xlane.f32.xlu0 %v5602
    %v5606 = vpop.xlane.xlu0 %5605
    %v5607 = vmul.f32 %v5604, %v87
    %v5608 = vmul.f32 %v5606, %v87
    %v5609 = vadd.f32 %v5607, 1e-12
    %v5610 = vadd.f32 %v5608, 1e-12
    %v5611 = vrsqrt.pop %v5609
    %v5612 = vrsqrt.pop %v5610
    %v5613 = vmul.f32 %v5599, %v5611
    %v5614 = vmul.f32 %v5600, %v5612
    %v5616 = vlaneseq
    %v5617 = vshrl.u32 %v5616, 7
    %v5618 = vsub.s32 0, %v5617
    %v5619 = vrot.slane %v5590, %v5618
    %v5621 = vmul.f32 %v5613, %v5619
    %v5622 = vmul.f32 %v5614, %v5619
    %v5624 = vlaneseq
    %v5625 = vshrl.u32 %v5624, 7
    %v5626 = vsub.s32 0, %v5625
    %v5627 = vrot.slane %v5592, %v5626
    %v5629 = vadd.f32 %v5621, %v5627
    %v5630 = vadd.f32 %v5622, %v5627
    %v5631 = vpack.c.bf16 %v5630, %v5629
    %s5632 = scalar_lea.vmem %s14, 128
    %v5633 = vld [vmem:[%s5632] sm:$0xff]
    %v5634 = vld [vmem:[%s5632 + $0x8] sm:$0xff]
    %v5635 = vld [vmem:[%s5632 + $0x10] sm:$0xff]
    %v5636 = vld [vmem:[%s5632 + $0x18] sm:$0xff]
    %v5637 = vld [vmem:[%s5632 + $0x20] sm:$0xff]
    %v5638 = vld [vmem:[%s5632 + $0x28] sm:$0xff]
    %v5639 = vld [vmem:[%s5632 + $0x30] sm:$0xff]
    %v5640 = vld [vmem:[%s5632 + $0x38] sm:$0xff]
    %v5641 = vld [vmem:[%s5632 + $0x40] sm:$0xff]
    %v5642 = vld [vmem:[%s5632 + $0x48] sm:$0xff]
    %v5643 = vld [vmem:[%s5632 + $0x50] sm:$0xff]
    %v5644 = vld [vmem:[%s5632 + $0x58] sm:$0xff]
    %v5645 = vld [vmem:[%s5632 + $0x60] sm:$0xff]
    %v5646 = vld [vmem:[%s5632 + $0x68] sm:$0xff]
    %v5647 = vld [vmem:[%s5632 + $0x70] sm:$0xff]
    %v5648 = vld [vmem:[%s5632 + $0x78] sm:$0xff]
    %s5649 = scalar_lea.vmem %s15, 2
    %v5650 = vld [vmem:[%s5649] sm:$0x3]
    %v5652 = vlaneseq
    %v5653 = vshrl.u32 %v5652, 7
    %v5654 = vsub.s32 0, %v5653
    %v5655 = vrot.slane %v5650, %v5654
    %v5656 = vlaneseq
    %v5657 = vshrl.u32 %v5656, 7
    %v5658 = vsub.s32 1, %v5657
    %v5659 = vrot.slane %v5650, %v5658
    %v5678 = vunpack.c.l.b16 %v5633
    %v5679 = vunpack.c.h.b16 %v5633
    %v5680 = vunpack.c.l.b16 %v5634
    %v5681 = vunpack.c.h.b16 %v5634
    %v5682 = vunpack.c.l.b16 %v5635
    %v5683 = vunpack.c.h.b16 %v5635
    %v5684 = vunpack.c.l.b16 %v5636
    %v5685 = vunpack.c.h.b16 %v5636
    %v5686 = vunpack.c.l.b16 %v5637
    %v5687 = vunpack.c.h.b16 %v5637
    %v5688 = vunpack.c.l.b16 %v5638
    %v5689 = vunpack.c.h.b16 %v5638
    %v5690 = vunpack.c.l.b16 %v5639
    %v5691 = vunpack.c.h.b16 %v5639
    %v5692 = vunpack.c.l.b16 %v5640
    %v5693 = vunpack.c.h.b16 %v5640
    %v5694 = vunpack.c.l.b16 %v5641
    %v5695 = vunpack.c.h.b16 %v5641
    %v5696 = vunpack.c.l.b16 %v5642
    %v5697 = vunpack.c.h.b16 %v5642
    %v5698 = vunpack.c.l.b16 %v5643
    %v5699 = vunpack.c.h.b16 %v5643
    %v5700 = vunpack.c.l.b16 %v5644
    %v5701 = vunpack.c.h.b16 %v5644
    %v5702 = vunpack.c.l.b16 %v5645
    %v5703 = vunpack.c.h.b16 %v5645
    %v5704 = vunpack.c.l.b16 %v5646
    %v5705 = vunpack.c.h.b16 %v5646
    %v5706 = vunpack.c.l.b16 %v5647
    %v5707 = vunpack.c.h.b16 %v5647
    %v5708 = vunpack.c.l.b16 %v5648
    %v5709 = vunpack.c.h.b16 %v5648
    %v5710 = vpack.c.b16 %v5680, %v5678
    %v5711 = vpack.c.b16 %v5681, %v5679
    %v5712 = vpack.c.b16 %v5684, %v5682
    %v5713 = vpack.c.b16 %v5685, %v5683
    %v5714 = vpack.c.b16 %v5688, %v5686
    %v5715 = vpack.c.b16 %v5689, %v5687
    %v5716 = vpack.c.b16 %v5692, %v5690
    %v5717 = vpack.c.b16 %v5693, %v5691
    %v5718 = vpack.c.b16 %v5696, %v5694
    %v5719 = vpack.c.b16 %v5697, %v5695
    %v5720 = vpack.c.b16 %v5700, %v5698
    %v5721 = vpack.c.b16 %v5701, %v5699
    %v5722 = vpack.c.b16 %v5704, %v5702
    %v5723 = vpack.c.b16 %v5705, %v5703
    %v5724 = vpack.c.b16 %v5708, %v5706
    %v5725 = vpack.c.b16 %v5709, %v5707
    %5742 = vmatprep.subr.bf16.mxu0 %v5725
    %5743 = vmatpush1.bf16.msra.mxu0 %v5724
    %5744 = vmatprep.subr.bf16.mxu0 %v5723
    %5745 = vmatpush1.bf16.msra.mxu0 %v5722
    %5746 = vmatprep.subr.bf16.mxu0 %v5721
    %5747 = vmatpush1.bf16.msra.mxu0 %v5720
    %5748 = vmatprep.subr.bf16.mxu0 %v5719
    %5749 = vmatpush1.bf16.msra.mxu0 %v5718
    %5750 = vmatprep.subr.bf16.mxu0 %v5717
    %5751 = vmatpush1.bf16.msra.mxu0 %v5716
    %5752 = vmatprep.subr.bf16.mxu0 %v5715
    %5753 = vmatpush1.bf16.msra.mxu0 %v5714
    %5754 = vmatprep.subr.bf16.mxu0 %v5713
    %5755 = vmatpush1.bf16.msra.mxu0 %v5712
    %5756 = vmatprep.subr.bf16.mxu0 %v5711
    %5757 = vmatpush1.bf16.msra.mxu0 %v5710
    %5758 = vmatprep.subr.bf16.mxu0 0
    %5759 = vmatpush2.bf16.msra.mxu0 0
    %5760 = vmatprep.subr.bf16.mxu0 0
    %5761 = vmatpush2.bf16.msra.mxu0 0
    %5762 = vmatprep.subr.bf16.mxu0 0
    %5763 = vmatpush2.bf16.msra.mxu0 0
    %5764 = vmatprep.subr.bf16.mxu0 0
    %5765 = vmatpush2.bf16.msra.mxu0 0
    %5766 = vmatprep.subr.bf16.mxu0 0
    %5767 = vmatpush2.bf16.msra.mxu0 0
    %5768 = vmatprep.subr.bf16.mxu0 0
    %5769 = vmatpush2.bf16.msra.mxu0 0
    %5770 = vmatprep.subr.bf16.mxu0 0
    %5771 = vmatpush2.bf16.msra.mxu0 0
    %5772 = vmatprep.subr.bf16.mxu0 0
    %5773 = vmatpush2.bf16.msra.mxu0 0
    %5774 = vmatprep.mubr.bf16.mxu0 0
    %5775 = vmatmul.mubr.bf16.gmra.mxu0 %v5631
    %v5776 = vpop.f32.mrf.mxu0
    %v5777 = vadd.f32 %v5655, %v5776
    %v5778 = vpop.f32.mrf.mxu0
    %v5779 = vadd.f32 %v5659, %v5778
    %v5780 = vpop.f32.mrf.mxu0
    %v5781 = vadd.f32 %v5655, %v5780
    %v5782 = vpop.f32.mrf.mxu0
    %v5783 = vadd.f32 %v5659, %v5782
    %5784 = vdwg.mxu0
    %v5785 = vmul.f32 %v5777, 0.5
    %v5786 = vmul.f32 %v5779, 0.5
    %v5787 = vmul.f32 %v5781, 0.5
    %v5788 = vmul.f32 %v5783, 0.5
    %v5789 = vmul.f32 %v5777, 0.044715
    %v5790 = vmul.f32 %v5779, 0.044715
    %v5791 = vmul.f32 %v5781, 0.044715
    %v5792 = vmul.f32 %v5783, 0.044715
    %v5793 = vmul.f32 %v5789, %v5777
    %v5794 = vmul.f32 %v5790, %v5779
    %v5795 = vmul.f32 %v5791, %v5781
    %v5796 = vmul.f32 %v5792, %v5783
    %v5797 = vmul.f32 %v5793, %v5777
    %v5798 = vmul.f32 %v5794, %v5779
    %v5799 = vmul.f32 %v5795, %v5781
    %v5800 = vmul.f32 %v5796, %v5783
    %v5801 = vadd.f32 %v5777, %v5797
    %v5802 = vadd.f32 %v5779, %v5798
    %v5803 = vadd.f32 %v5781, %v5799
    %v5804 = vadd.f32 %v5783, %v5800
    %v5805 = vmul.f32 %v5801, 0.7978846
    %v5806 = vmul.f32 %v5802, 0.7978846
    %v5807 = vmul.f32 %v5803, 0.7978846
    %v5808 = vmul.f32 %v5804, 0.7978846
    %v5809 = vtanh.pop %v5805
    %v5810 = vtanh.pop %v5806
    %v5811 = vtanh.pop %v5807
    %v5812 = vtanh.pop %v5808
    %v5813 = vadd.f32 %v5809, 1.0
    %v5814 = vadd.f32 %v5810, 1.0
    %v5815 = vadd.f32 %v5811, 1.0
    %v5816 = vadd.f32 %v5812, 1.0
    %v5817 = vmul.f32 %v5785, %v5813
    %v5818 = vmul.f32 %v5786, %v5814
    %v5819 = vmul.f32 %v5787, %v5815
    %v5820 = vmul.f32 %v5788, %v5816
    %v5821 = vpack.c.bf16 %v5819, %v5817
    %v5822 = vpack.c.bf16 %v5820, %v5818
    %s5823 = scalar_lea.vmem %s16, 128
    %v5824 = vld [vmem:[%s5823] sm:$0xf]
    %v5825 = vld [vmem:[%s5823 + $0x4] sm:$0xf]
    %v5826 = vld [vmem:[%s5823 + $0x8] sm:$0xf]
    %v5827 = vld [vmem:[%s5823 + $0xc] sm:$0xf]
    %v5828 = vld [vmem:[%s5823 + $0x10] sm:$0xf]
    %v5829 = vld [vmem:[%s5823 + $0x14] sm:$0xf]
    %v5830 = vld [vmem:[%s5823 + $0x18] sm:$0xf]
    %v5831 = vld [vmem:[%s5823 + $0x1c] sm:$0xf]
    %v5832 = vld [vmem:[%s5823 + $0x20] sm:$0xf]
    %v5833 = vld [vmem:[%s5823 + $0x24] sm:$0xf]
    %v5834 = vld [vmem:[%s5823 + $0x28] sm:$0xf]
    %v5835 = vld [vmem:[%s5823 + $0x2c] sm:$0xf]
    %v5836 = vld [vmem:[%s5823 + $0x30] sm:$0xf]
    %v5837 = vld [vmem:[%s5823 + $0x34] sm:$0xf]
    %v5838 = vld [vmem:[%s5823 + $0x38] sm:$0xf]
    %v5839 = vld [vmem:[%s5823 + $0x3c] sm:$0xf]
    %v5840 = vld [vmem:[%s5823 + $0x40] sm:$0xf]
    %v5841 = vld [vmem:[%s5823 + $0x44] sm:$0xf]
    %v5842 = vld [vmem:[%s5823 + $0x48] sm:$0xf]
    %v5843 = vld [vmem:[%s5823 + $0x4c] sm:$0xf]
    %v5844 = vld [vmem:[%s5823 + $0x50] sm:$0xf]
    %v5845 = vld [vmem:[%s5823 + $0x54] sm:$0xf]
    %v5846 = vld [vmem:[%s5823 + $0x58] sm:$0xf]
    %v5847 = vld [vmem:[%s5823 + $0x5c] sm:$0xf]
    %v5848 = vld [vmem:[%s5823 + $0x60] sm:$0xf]
    %v5849 = vld [vmem:[%s5823 + $0x64] sm:$0xf]
    %v5850 = vld [vmem:[%s5823 + $0x68] sm:$0xf]
    %v5851 = vld [vmem:[%s5823 + $0x6c] sm:$0xf]
    %v5852 = vld [vmem:[%s5823 + $0x70] sm:$0xf]
    %v5853 = vld [vmem:[%s5823 + $0x74] sm:$0xf]
    %v5854 = vld [vmem:[%s5823 + $0x78] sm:$0xf]
    %v5855 = vld [vmem:[%s5823 + $0x7c] sm:$0xf]
    %s5856 = scalar_lea.vmem %s17, 1
    %v5857 = vld [vmem:[%s5856] sm:$0x1]
    %v5859 = vlaneseq
    %v5860 = vshrl.u32 %v5859, 7
    %v5861 = vsub.s32 0, %v5860
    %v5862 = vrot.slane %v5857, %v5861
    %v5896 = vunpack.c.l.b16 %v5824
    %v5897 = vunpack.c.l.b16 %v5825
    %v5898 = vunpack.c.l.b16 %v5826
    %v5899 = vunpack.c.l.b16 %v5827
    %v5900 = vunpack.c.l.b16 %v5828
    %v5901 = vunpack.c.l.b16 %v5829
    %v5902 = vunpack.c.l.b16 %v5830
    %v5903 = vunpack.c.l.b16 %v5831
    %v5904 = vunpack.c.l.b16 %v5832
    %v5905 = vunpack.c.l.b16 %v5833
    %v5906 = vunpack.c.l.b16 %v5834
    %v5907 = vunpack.c.l.b16 %v5835
    %v5908 = vunpack.c.l.b16 %v5836
    %v5909 = vunpack.c.l.b16 %v5837
    %v5910 = vunpack.c.l.b16 %v5838
    %v5911 = vunpack.c.l.b16 %v5839
    %v5912 = vunpack.c.l.b16 %v5840
    %v5913 = vunpack.c.l.b16 %v5841
    %v5914 = vunpack.c.l.b16 %v5842
    %v5915 = vunpack.c.l.b16 %v5843
    %v5916 = vunpack.c.l.b16 %v5844
    %v5917 = vunpack.c.l.b16 %v5845
    %v5918 = vunpack.c.l.b16 %v5846
    %v5919 = vunpack.c.l.b16 %v5847
    %v5920 = vunpack.c.l.b16 %v5848
    %v5921 = vunpack.c.l.b16 %v5849
    %v5922 = vunpack.c.l.b16 %v5850
    %v5923 = vunpack.c.l.b16 %v5851
    %v5924 = vunpack.c.l.b16 %v5852
    %v5925 = vunpack.c.l.b16 %v5853
    %v5926 = vunpack.c.l.b16 %v5854
    %v5927 = vunpack.c.l.b16 %v5855
    %v5928 = vpack.c.b16 %v5897, %v5896
    %v5929 = vpack.c.b16 %v5899, %v5898
    %v5930 = vpack.c.b16 %v5901, %v5900
    %v5931 = vpack.c.b16 %v5903, %v5902
    %v5932 = vpack.c.b16 %v5905, %v5904
    %v5933 = vpack.c.b16 %v5907, %v5906
    %v5934 = vpack.c.b16 %v5909, %v5908
    %v5935 = vpack.c.b16 %v5911, %v5910
    %v5936 = vpack.c.b16 %v5913, %v5912
    %v5937 = vpack.c.b16 %v5915, %v5914
    %v5938 = vpack.c.b16 %v5917, %v5916
    %v5939 = vpack.c.b16 %v5919, %v5918
    %v5940 = vpack.c.b16 %v5921, %v5920
    %v5941 = vpack.c.b16 %v5923, %v5922
    %v5942 = vpack.c.b16 %v5925, %v5924
    %v5943 = vpack.c.b16 %v5927, %v5926
    %5960 = vmatprep.subr.bf16.mxu0 0
    %5961 = vmatpush1.bf16.msra.mxu0 %v5935
    %5962 = vmatprep.subr.bf16.mxu0 0
    %5963 = vmatpush1.bf16.msra.mxu0 %v5934
    %5964 = vmatprep.subr.bf16.mxu0 0
    %5965 = vmatpush1.bf16.msra.mxu0 %v5933
    %5966 = vmatprep.subr.bf16.mxu0 0
    %5967 = vmatpush1.bf16.msra.mxu0 %v5932
    %5968 = vmatprep.subr.bf16.mxu0 0
    %5969 = vmatpush1.bf16.msra.mxu0 %v5931
    %5970 = vmatprep.subr.bf16.mxu0 0
    %5971 = vmatpush1.bf16.msra.mxu0 %v5930
    %5972 = vmatprep.subr.bf16.mxu0 0
    %5973 = vmatpush1.bf16.msra.mxu0 %v5929
    %5974 = vmatprep.subr.bf16.mxu0 0
    %5975 = vmatpush1.bf16.msra.mxu0 %v5928
    %5976 = vmatprep.subr.bf16.mxu0 0
    %5977 = vmatpush2.bf16.msra.mxu0 %v5943
    %5978 = vmatprep.subr.bf16.mxu0 0
    %5979 = vmatpush2.bf16.msra.mxu0 %v5942
    %5980 = vmatprep.subr.bf16.mxu0 0
    %5981 = vmatpush2.bf16.msra.mxu0 %v5941
    %5982 = vmatprep.subr.bf16.mxu0 0
    %5983 = vmatpush2.bf16.msra.mxu0 %v5940
    %5984 = vmatprep.subr.bf16.mxu0 0
    %5985 = vmatpush2.bf16.msra.mxu0 %v5939
    %5986 = vmatprep.subr.bf16.mxu0 0
    %5987 = vmatpush2.bf16.msra.mxu0 %v5938
    %5988 = vmatprep.subr.bf16.mxu0 0
    %5989 = vmatpush2.bf16.msra.mxu0 %v5937
    %5990 = vmatprep.subr.bf16.mxu0 0
    %5991 = vmatpush2.bf16.msra.mxu0 %v5936
    %5992 = vmatprep.mubr.bf16.mxu0 %v5822
    %5993 = vmatmul.mubr.bf16.gmra.mxu0 %v5821
    %v5994 = vpop.f32.mrf.mxu0
    %v5995 = vadd.f32 %v5862, %v5994
    %v5996 = vpop.f32.mrf.mxu0
    %v5997 = vpop.f32.mrf.mxu0
    %v5998 = vadd.f32 %v5862, %v5997
    %v5999 = vpop.f32.mrf.mxu0
    %6000 = vdwg.mxu0
    %v6001 = vadd.f32 %v5629, %v5995
    %v6002 = vadd.f32 %v5630, %v5998
    %s6003 = scalar_lea.vmem %s18, 1
    %v6004 = vld [vmem:[%s6003] sm:$0x1]
    %s6005 = scalar_lea.vmem %s19, 1
    %v6006 = vld [vmem:[%s6005] sm:$0x1]
    %6007 = vadd.xlane.f32.xlu0 %v6001
    %v6008 = vpop.xlane.xlu0 %6007
    %6009 = vadd.xlane.f32.xlu0 %v6002
    %v6010 = vpop.xlane.xlu0 %6009
    %v6011 = vmul.f32 %v6008, %v87
    %v6012 = vmul.f32 %v6010, %v87
    %v6013 = vsub.f32 %v6001, %v6011
    %v6014 = vsub.f32 %v6002, %v6012
    %v6015 = vmul.f32 %v6013, %v6013
    %v6016 = vmul.f32 %v6014, %v6014
    %6017 = vadd.xlane.f32.xlu0 %v6015
    %v6018 = vpop.xlane.xlu0 %6017
    %6019 = vadd.xlane.f32.xlu0 %v6016
    %v6020 = vpop.xlane.xlu0 %6019
    %v6021 = vmul.f32 %v6018, %v87
    %v6022 = vmul.f32 %v6020, %v87
    %v6023 = vadd.f32 %v6021, 1e-12
    %v6024 = vadd.f32 %v6022, 1e-12
    %v6025 = vrsqrt.pop %v6023
    %v6026 = vrsqrt.pop %v6024
    %v6027 = vmul.f32 %v6013, %v6025
    %v6028 = vmul.f32 %v6014, %v6026
    %v6030 = vlaneseq
    %v6031 = vshrl.u32 %v6030, 7
    %v6032 = vsub.s32 0, %v6031
    %v6033 = vrot.slane %v6004, %v6032
    %v6035 = vmul.f32 %v6027, %v6033
    %v6036 = vmul.f32 %v6028, %v6033
    %v6038 = vlaneseq
    %v6039 = vshrl.u32 %v6038, 7
    %v6040 = vsub.s32 0, %v6039
    %v6041 = vrot.slane %v6006, %v6040
    %v6043 = vadd.f32 %v6035, %v6041
    %v6044 = vadd.f32 %v6036, %v6041
    %v6045 = vpack.c.bf16 %v6043, %v6043
    %v6046 = vpack.c.bf16 %v6044, %v6044
    %v6047 = vld [vmem:[%s20] sm:$0xf]
    %v6048 = vld [vmem:[%s20 + $0x4] sm:$0xf]
    %v6049 = vld [vmem:[%s20 + $0x8] sm:$0xf]
    %v6050 = vld [vmem:[%s20 + $0xc] sm:$0xf]
    %v6051 = vld [vmem:[%s20 + $0x10] sm:$0xf]
    %v6052 = vld [vmem:[%s20 + $0x14] sm:$0xf]
    %v6053 = vld [vmem:[%s20 + $0x18] sm:$0xf]
    %v6054 = vld [vmem:[%s20 + $0x1c] sm:$0xf]
    %v6055 = vld [vmem:[%s20 + $0x20] sm:$0xf]
    %v6056 = vld [vmem:[%s20 + $0x24] sm:$0xf]
    %v6057 = vld [vmem:[%s20 + $0x28] sm:$0xf]
    %v6058 = vld [vmem:[%s20 + $0x2c] sm:$0xf]
    %v6059 = vld [vmem:[%s20 + $0x30] sm:$0xf]
    %v6060 = vld [vmem:[%s20 + $0x34] sm:$0xf]
    %v6061 = vld [vmem:[%s20 + $0x38] sm:$0xf]
    %v6062 = vld [vmem:[%s20 + $0x3c] sm:$0xf]
    %v6063 = vld [vmem:[%s21] sm:$0x1]
    %v6065 = vlaneseq
    %v6066 = vshrl.u32 %v6065, 7
    %v6067 = vsub.s32 0, %v6066
    %v6068 = vrot.slane %v6063, %v6067
    %v6072 = vunpack.c.l.b16 %v6045
    %v6073 = vunpack.c.l.b16 %v6046
    %v6074 = vrot.slane %v6073, 7
    %vm6075 = vcmask 1041409
    %v6076 = vsel %vm6075, %v6074, %v6072
    %v6077 = vpack.c.b16 %v6076, %v6076
    %v6095 = vunpack.c.l.b16 %v6047
    %v6096 = vunpack.c.l.b16 %v6048
    %v6097 = vunpack.c.l.b16 %v6049
    %v6098 = vunpack.c.l.b16 %v6050
    %v6099 = vunpack.c.l.b16 %v6051
    %v6100 = vunpack.c.l.b16 %v6052
    %v6101 = vunpack.c.l.b16 %v6053
    %v6102 = vunpack.c.l.b16 %v6054
    %v6103 = vunpack.c.l.b16 %v6055
    %v6104 = vunpack.c.l.b16 %v6056
    %v6105 = vunpack.c.l.b16 %v6057
    %v6106 = vunpack.c.l.b16 %v6058
    %v6107 = vunpack.c.l.b16 %v6059
    %v6108 = vunpack.c.l.b16 %v6060
    %v6109 = vunpack.c.l.b16 %v6061
    %v6110 = vunpack.c.l.b16 %v6062
    %v6111 = vpack.c.b16 %v6096, %v6095
    %v6112 = vpack.c.b16 %v6098, %v6097
    %v6113 = vpack.c.b16 %v6100, %v6099
    %v6114 = vpack.c.b16 %v6102, %v6101
    %v6115 = vpack.c.b16 %v6104, %v6103
    %v6116 = vpack.c.b16 %v6106, %v6105
    %v6117 = vpack.c.b16 %v6108, %v6107
    %v6118 = vpack.c.b16 %v6110, %v6109
    %6127 = vmatprep.subr.bf16.mxu0 0
    %6128 = vmatpush1.bf16.msra.mxu0 %v6118
    %6129 = vmatprep.subr.bf16.mxu0 0
    %6130 = vmatpush1.bf16.msra.mxu0 %v6117
    %6131 = vmatprep.subr.bf16.mxu0 0
    %6132 = vmatpush1.bf16.msra.mxu0 %v6116
    %6133 = vmatprep.subr.bf16.mxu0 0
    %6134 = vmatpush1.bf16.msra.mxu0 %v6115
    %6135 = vmatprep.subr.bf16.mxu0 0
    %6136 = vmatpush1.bf16.msra.mxu0 %v6114
    %6137 = vmatprep.subr.bf16.mxu0 0
    %6138 = vmatpush1.bf16.msra.mxu0 %v6113
    %6139 = vmatprep.subr.bf16.mxu0 0
    %6140 = vmatpush1.bf16.msra.mxu0 %v6112
    %6141 = vmatprep.subr.bf16.mxu0 0
    %6142 = vmatpush1.bf16.msra.mxu0 %v6111
    %6143 = vmatprep.subr.bf16.mxu0 0
    %6144 = vmatpush2.bf16.msra.mxu0 0
    %6145 = vmatprep.subr.bf16.mxu0 0
    %6146 = vmatpush2.bf16.msra.mxu0 0
    %6147 = vmatprep.subr.bf16.mxu0 0
    %6148 = vmatpush2.bf16.msra.mxu0 0
    %6149 = vmatprep.subr.bf16.mxu0 0
    %6150 = vmatpush2.bf16.msra.mxu0 0
    %6151 = vmatprep.subr.bf16.mxu0 0
    %6152 = vmatpush2.bf16.msra.mxu0 0
    %6153 = vmatprep.subr.bf16.mxu0 0
    %6154 = vmatpush2.bf16.msra.mxu0 0
    %6155 = vmatprep.subr.bf16.mxu0 0
    %6156 = vmatpush2.bf16.msra.mxu0 0
    %6157 = vmatprep.subr.bf16.mxu0 0
    %6158 = vmatpush2.bf16.msra.mxu0 0
    %6159 = vmatprep.mubr.bf16.mxu0 0
    %6160 = vmatmul.mubr.bf16.gmra.mxu0 %v6077
    %v6161 = vpop.f32.mrf.mxu0
    %v6162 = vadd.f32 %v6068, %v6161
    %v6163 = vpop.f32.mrf.mxu0
    %v6164 = vpop.f32.mrf.mxu0
    %v6165 = vpop.f32.mrf.mxu0
    %6166 = vdwg.mxu0
    %v6167 = vtanh.pop %v6162
    %v6168 = vpack.c.bf16 %v6167, %v6167
    %v6169 = vld [vmem:[%s22] sm:$0xf]
    %v6170 = vld [vmem:[%s22 + $0x4] sm:$0xf]
    %v6171 = vld [vmem:[%s22 + $0x8] sm:$0xf]
    %v6172 = vld [vmem:[%s22 + $0xc] sm:$0xf]
    %v6173 = vld [vmem:[%s22 + $0x10] sm:$0xf]
    %v6174 = vld [vmem:[%s22 + $0x14] sm:$0xf]
    %v6175 = vld [vmem:[%s22 + $0x18] sm:$0xf]
    %v6176 = vld [vmem:[%s22 + $0x1c] sm:$0xf]
    %v6177 = vld [vmem:[%s22 + $0x20] sm:$0xf]
    %v6178 = vld [vmem:[%s22 + $0x24] sm:$0xf]
    %v6179 = vld [vmem:[%s22 + $0x28] sm:$0xf]
    %v6180 = vld [vmem:[%s22 + $0x2c] sm:$0xf]
    %v6181 = vld [vmem:[%s22 + $0x30] sm:$0xf]
    %v6182 = vld [vmem:[%s22 + $0x34] sm:$0xf]
    %v6183 = vld [vmem:[%s22 + $0x38] sm:$0xf]
    %v6184 = vld [vmem:[%s22 + $0x3c] sm:$0xf]
    %v6185 = vld [vmem:[%s23] sm:$0x1]
    %v6187 = vlaneseq
    %v6188 = vshrl.u32 %v6187, 7
    %v6189 = vsub.s32 0, %v6188
    %v6190 = vrot.slane %v6185, %v6189
    %v6208 = vunpack.c.l.b16 %v6169
    %v6209 = vunpack.c.l.b16 %v6170
    %v6210 = vunpack.c.l.b16 %v6171
    %v6211 = vunpack.c.l.b16 %v6172
    %v6212 = vunpack.c.l.b16 %v6173
    %v6213 = vunpack.c.l.b16 %v6174
    %v6214 = vunpack.c.l.b16 %v6175
    %v6215 = vunpack.c.l.b16 %v6176
    %v6216 = vunpack.c.l.b16 %v6177
    %v6217 = vunpack.c.l.b16 %v6178
    %v6218 = vunpack.c.l.b16 %v6179
    %v6219 = vunpack.c.l.b16 %v6180
    %v6220 = vunpack.c.l.b16 %v6181
    %v6221 = vunpack.c.l.b16 %v6182
    %v6222 = vunpack.c.l.b16 %v6183
    %v6223 = vunpack.c.l.b16 %v6184
    %v6224 = vpack.c.b16 %v6209, %v6208
    %v6225 = vpack.c.b16 %v6211, %v6210
    %v6226 = vpack.c.b16 %v6213, %v6212
    %v6227 = vpack.c.b16 %v6215, %v6214
    %v6228 = vpack.c.b16 %v6217, %v6216
    %v6229 = vpack.c.b16 %v6219, %v6218
    %v6230 = vpack.c.b16 %v6221, %v6220
    %v6231 = vpack.c.b16 %v6223, %v6222
    %6240 = vmatprep.subr.bf16.mxu0 0
    %6241 = vmatpush1.bf16.msra.mxu0 %v6231
    %6242 = vmatprep.subr.bf16.mxu0 0
    %6243 = vmatpush1.bf16.msra.mxu0 %v6230
    %6244 = vmatprep.subr.bf16.mxu0 0
    %6245 = vmatpush1.bf16.msra.mxu0 %v6229
    %6246 = vmatprep.subr.bf16.mxu0 0
    %6247 = vmatpush1.bf16.msra.mxu0 %v6228
    %6248 = vmatprep.subr.bf16.mxu0 0
    %6249 = vmatpush1.bf16.msra.mxu0 %v6227
    %6250 = vmatprep.subr.bf16.mxu0 0
    %6251 = vmatpush1.bf16.msra.mxu0 %v6226
    %6252 = vmatprep.subr.bf16.mxu0 0
    %6253 = vmatpush1.bf16.msra.mxu0 %v6225
    %6254 = vmatprep.subr.bf16.mxu0 0
    %6255 = vmatpush1.bf16.msra.mxu0 %v6224
    %6256 = vmatprep.subr.bf16.mxu0 0
    %6257 = vmatpush2.bf16.msra.mxu0 0
    %6258 = vmatprep.subr.bf16.mxu0 0
    %6259 = vmatpush2.bf16.msra.mxu0 0
    %6260 = vmatprep.subr.bf16.mxu0 0
    %6261 = vmatpush2.bf16.msra.mxu0 0
    %6262 = vmatprep.subr.bf16.mxu0 0
    %6263 = vmatpush2.bf16.msra.mxu0 0
    %6264 = vmatprep.subr.bf16.mxu0 0
    %6265 = vmatpush2.bf16.msra.mxu0 0
    %6266 = vmatprep.subr.bf16.mxu0 0
    %6267 = vmatpush2.bf16.msra.mxu0 0
    %6268 = vmatprep.subr.bf16.mxu0 0
    %6269 = vmatpush2.bf16.msra.mxu0 0
    %6270 = vmatprep.subr.bf16.mxu0 0
    %6271 = vmatpush2.bf16.msra.mxu0 0
    %6272 = vmatprep.mubr.bf16.mxu0 0
    %6273 = vmatmul.mubr.bf16.gmra.mxu0 %v6168
    %v6274 = vpop.f32.mrf.mxu0
    %v6275 = vadd.f32 %v6190, %v6274
    %v6276 = vpop.f32.mrf.mxu0
    %v6277 = vpop.f32.mrf.mxu0
    %v6278 = vpop.f32.mrf.mxu0
    %6279 = vdwg.mxu0
    %6280 = vst [vmem:[#allocation2] sm:$0x3] %v6275
    // Predicated region
    $region98: #{bert_class_forward.1} parent=1 // pred_check
      _
    $region99: #{bert_class_forward.1} parent=1 // pred_check_branch
      %6282 = sbr.rel (0) target = $region101
    $region100: #{bert_class_forward.1} parent=1 // pred_region
      %s6284 = ssub.s32 32, 32
      %6285 = vsyncadd [#allocation3], %s6284
      %s6287 = sshll.u32 [#allocation2], 4
      %s6288 = int_to_ptr.vmem [resolvable:$true] %s6287
      %6290 = dma.vmem_to_hbm [thread:$0]  %s6288, 32, %s24, [#allocation3]
    $region101: #{bert_class_forward.1} parent=1 // pred_fallthru
      _
    // Predicated region
    $region102: #{bert_class_forward.1} parent=1 // pred_check
      _
    $region103: #{bert_class_forward.1} parent=1 // pred_check_branch
      %6292 = sbr.rel (0) target = $region105
    $region104: #{bert_class_forward.1} parent=1 // pred_region
      %6293 = dma.done [#allocation3], 32
    $region105: #{bert_class_forward.1} parent=1 // pred_fallthru
      _
    %6294 = vsyncpa [#allocation3], 1

</llo_original>
